<compile_context>
chip_gen: v6e
topology: v6e:2x2x1
jax: 0.10.0
libtpu: 0.0.40
codegen_flags: <defaults>
</compile_context>

<pallas_src>
import jax
import jax.numpy as jnp
from jax import lax
from jax.experimental import pallas as pl
from jax.experimental.pallas import tpu as pltpu


def _round_up(v, m):
    return ((v + m - 1) // m) * m


# ------------------------- Fused Pallas kernel -------------------------

def make_fused_lstm_kernel(num_layers, T, B_pad, H_pad, unroll_threshold=16):
    """Builds a kernel closed over static sizes.

    Ref order:
      x(T*B_pad, D) f32,
      [w_ih(Din_pad, 4*H_pad) bf16, w_hh(H_pad, 4*H_pad) bf16, b(1, 4*H_pad) f32] * L,
      w_fc(H_pad, O_pad) bf16, b_fc(1, O_pad) f32,
      out(B_pad, O_pad) f32,
      xg_scratch(T*B_pad, 4*H_pad) f32.
    """
    G_pad = 4 * H_pad

    def kernel(*refs):
        x_ref = refs[0]
        lstm_refs = refs[1:1 + 3 * num_layers]
        w_fc_ref = refs[1 + 3 * num_layers]
        b_fc_ref = refs[2 + 3 * num_layers]
        out_ref = refs[3 + 3 * num_layers]
        xg_ref = refs[4 + 3 * num_layers]

        # --- Layer-0 input projection: ONE big bf16 MXU matmul, outside the
        #     recurrence, written straight into the xg VMEM scratch. ---
        xg_ref[...] = (
            jnp.dot(x_ref[...].astype(jnp.bfloat16), lstm_refs[0][...],
                    preferred_element_type=jnp.float32)
            + lstm_refs[2][...])

        h_last = None
        for layer in range(num_layers):
            w_hh_ref = lstm_refs[3 * layer + 1]
            if layer + 1 < num_layers:
                w_ih_next_ref = lstm_refs[3 * (layer + 1)]
                b_next_ref = lstm_refs[3 * (layer + 1) + 2]
            else:
                w_ih_next_ref = None
                b_next_ref = None

            def step(row, h, c):
                # row = t * B_pad is 8-sublane aligned -> full-vreg, unmasked access.
                xg_t = xg_ref[pl.ds(row, B_pad), :]                # (B_pad, 4*H_pad) f32
                h_bf = h.astype(jnp.bfloat16)
                gates = xg_t + jnp.dot(h_bf, w_hh_ref[...],
                                       preferred_element_type=jnp.float32)
                # Gate slabs are 128-lane aligned: free vreg views (PyTorch order i,f,g,o).
                i_g = jax.nn.sigmoid(gates[:, 0 * H_pad:1 * H_pad])
                f_g = jax.nn.sigmoid(gates[:, 1 * H_pad:2 * H_pad])
                g_g = jnp.tanh(gates[:, 2 * H_pad:3 * H_pad])
                o_g = jax.nn.sigmoid(gates[:, 3 * H_pad:4 * H_pad])
                c_new = f_g * c + i_g * g_g
                h_new = o_g * jnp.tanh(c_new)
                if w_ih_next_ref is not None:
                    # Wavefront fusion: produce the NEXT layer's input projection for
                    # this timestep now, overwriting the (already consumed) xg slot.
                    xg_ref[pl.ds(row, B_pad), :] = (
                        jnp.dot(h_new.astype(jnp.bfloat16), w_ih_next_ref[...],
                                preferred_element_type=jnp.float32)
                        + b_next_ref[...])
                return h_new, c_new

            h = jnp.zeros((B_pad, H_pad), jnp.float32)
            c = jnp.zeros((B_pad, H_pad), jnp.float32)
            if T <= unroll_threshold:
                # Tiny static T: full unroll lets LLO overlap MXU/EUP/VPU across steps.
                for t in range(T):
                    h, c = step(t * B_pad, h, c)
            else:
                # Realistic T: bounded live ranges via fori_loop with modest unroll.
                def body(t, carry):
                    hh, cc = carry
                    row = pl.multiple_of(t * B_pad, B_pad)
                    return step(row, hh, cc)
                h, c = lax.fori_loop(0, T, body, (h, c), unroll=4)
            h_last = h

        # Final fc on the last layer's last-step hidden state (lane-dense padded store).
        # TODO(synk): could hold w_hh in MXU staging regs (matmul_push_rhs/acc_lhs/pop)
        #             across the recurrence; skipped to keep the kernel portable.
        out_ref[...] = (
            jnp.dot(h_last.astype(jnp.bfloat16), w_fc_ref[...],
                    preferred_element_type=jnp.float32)
            + b_fc_ref[...])

    return kernel


# ------------------------- Wrapper -------------------------

def lstm_model_forward(x, params):
    """Equivalent of LSTMModel.forward (inference): multi-layer LSTM, fc on last step."""
    B, T, D = x.shape
    num_layers = len(params["lstm"])
    H = params["lstm"][0][1].shape[0]          # w_hh is (H, 4H)
    w_fc, b_fc = params["fc"]
    O = w_fc.shape[1]

    B_pad = _round_up(B, 8)                    # sublane-aligned batch tile
    H_pad = _round_up(H, 128)                  # lane-aligned hidden (per gate slab)
    O_pad = _round_up(O, 128)                  # lane-dense fc output
    G_pad = 4 * H_pad

    def pad_gate_cols(w):
        # (rows, 4H) -> (rows, 4*H_pad); each gate slab starts on a 128-lane boundary.
        rows = w.shape[0]
        out = jnp.zeros((rows, G_pad), jnp.float32)
        for g in range(4):
            out = out.at[:, g * H_pad:g * H_pad + H].set(w[:, g * H:(g + 1) * H])
        return out

    def pad_rows(w, rows_pad):
        if w.shape[0] == rows_pad:
            return w
        return jnp.zeros((rows_pad, w.shape[1]), w.dtype).at[:w.shape[0], :].set(w)

    # Time-major, batch-padded, flattened sequence: row t*B_pad + b <-> (time t, batch b).
    x_tm = jnp.transpose(x, (1, 0, 2)).astype(jnp.float32)              # (T, B, D)
    x_pad = jnp.zeros((T, B_pad, D), jnp.float32).at[:, :B, :].set(x_tm)
    x_flat = x_pad.reshape(T * B_pad, D)

    args = [x_flat]
    for layer, (w_ih, w_hh, b) in enumerate(params["lstm"]):
        d_in_pad = w_ih.shape[0] if layer == 0 else H_pad
        w_ih_p = pad_rows(pad_gate_cols(w_ih), d_in_pad).astype(jnp.bfloat16)
        w_hh_p = pad_rows(pad_gate_cols(w_hh), H_pad).astype(jnp.bfloat16)
        b_p = pad_gate_cols(b)                                           # stays f32
        args += [w_ih_p, w_hh_p, b_p]
    w_fc_p = jnp.zeros((H_pad, O_pad), jnp.float32).at[:H, :O].set(w_fc).astype(jnp.bfloat16)
    b_fc_p = jnp.zeros((1, O_pad), jnp.float32).at[:, :O].set(b_fc)
    args += [w_fc_p, b_fc_p]

    # Advisory cost estimate so XLA schedules neighboring ops around the long call.
    flops = 2 * T * B_pad * D * G_pad + 2 * B_pad * H_pad * O_pad
    for layer in range(num_layers):
        flops += 2 * T * B_pad * H_pad * G_pad               # recurrence h @ W_hh
        if layer + 1 < num_layers:
            flops += 2 * T * B_pad * H_pad * G_pad           # fused next-layer projection
    transcendentals = num_layers * T * B_pad * H_pad * 5     # 3 sigmoid + 2 tanh per step
    bytes_accessed = int(sum(int(a.size) * a.dtype.itemsize for a in args)
                         + B_pad * O_pad * 4)

    kernel = make_fused_lstm_kernel(num_layers, T, B_pad, H_pad)
    out_pad = pl.pallas_call(
        kernel,
        out_shape=jax.ShapeDtypeStruct((B_pad, O_pad), jnp.float32),
        in_specs=[pl.BlockSpec(memory_space=pltpu.MemorySpace.VMEM)] * len(args),
        out_specs=pl.BlockSpec(memory_space=pltpu.MemorySpace.VMEM),
        scratch_shapes=[pltpu.VMEM((T * B_pad, G_pad), jnp.float32)],
        compiler_params=pltpu.CompilerParams(
            # Explicit scoped-VMEM budget: above the v5e 16 MiB default, well within
            # v7x's 64 MiB physical VMEM.
            vmem_limit_bytes=32 * 1024 * 1024,
        ),
        cost_estimate=pl.CostEstimate(flops=int(flops),
                                      transcendentals=int(transcendentals),
                                      bytes_accessed=bytes_accessed),
    )(*args)
    # TODO(synk): nn.LSTM inter-layer dropout is train-mode only; inference skips it.
    # TODO(synk): for large B, add a batch-block grid with dimension_semantics=("parallel",)
    #             to shard across v7x's 2 TensorCores; for very long T, chunk the xg
    #             scratch over time to respect v7x's 64 MiB VMEM.
    return out_pad[:B, :O]


# ------------------------- Pure-JAX reference (for verification) -------------------------

def lstm_model_reference(x, params):
    out = x
    for (w_ih, w_hh, b) in params["lstm"]:
        B, T, _ = out.shape
        H = w_hh.shape[0]
        h = jnp.zeros((B, H), jnp.float32)
        c = jnp.zeros((B, H), jnp.float32)
        hs = []
        for t in range(T):
            gates = out[:, t, :] @ w_ih + h @ w_hh + b
            i = jax.nn.sigmoid(gates[:, 0 * H:1 * H])
            f = jax.nn.sigmoid(gates[:, 1 * H:2 * H])
            g = jnp.tanh(gates[:, 2 * H:3 * H])
            o = jax.nn.sigmoid(gates[:, 3 * H:4 * H])
            c = f * c + i * g
            h = o * jnp.tanh(c)
            hs.append(h)
        out = jnp.stack(hs, axis=1)
    w_fc, b_fc = params["fc"]
    return out[:, -1, :] @ w_fc + b_fc


# ------------------------- Parameter init -------------------------

def init_params(key, input_size, hidden_size, output_size, num_layers):
    k = 1.0 / jnp.sqrt(hidden_size)
    lstm_params = []
    for layer in range(num_layers):
        d_in = input_size if layer == 0 else hidden_size
        key, k1, k2, k3, k4 = jax.random.split(key, 5)
        w_ih = jax.random.uniform(k1, (d_in, 4 * hidden_size), jnp.float32, -k, k)
        w_hh = jax.random.uniform(k2, (hidden_size, 4 * hidden_size), jnp.float32, -k, k)
        b_ih = jax.random.uniform(k3, (1, 4 * hidden_size), jnp.float32, -k, k)
        b_hh = jax.random.uniform(k4, (1, 4 * hidden_size), jnp.float32, -k, k)
        lstm_params.append((w_ih, w_hh, b_ih + b_hh))
    key, k5, k6 = jax.random.split(key, 3)
    w_fc = jax.random.uniform(k5, (hidden_size, output_size), jnp.float32, -k, k)
    b_fc = jax.random.uniform(k6, (1, output_size), jnp.float32, -k, k)
    return {"lstm": lstm_params, "fc": (w_fc, b_fc)}


# ------------------------- Main -------------------------

if __name__ == "__main__":
    B, T = 2, 8
    input_size, hidden_size, output_size, num_layers = 16, 32, 8, 2
    dropout_rate = 0.1  # train-only in PyTorch; unused in inference forward

    key = jax.random.PRNGKey(0)
    key, kx = jax.random.split(key)
    x = jax.random.normal(kx, (B, T, input_size), jnp.float32)
    params = init_params(key, input_size, hidden_size, output_size, num_layers)

    out = lstm_model_forward(x, params)
    out = jax.block_until_ready(out)

    ref = lstm_model_reference(x, params)
    assert out.shape == (B, output_size)
    # bf16 MXU inputs with f32 accumulation: compare against the f32 reference with a
    # correspondingly relaxed tolerance (structural bugs would blow far past this).
    err = float(jnp.max(jnp.abs(out - ref)))
    assert jnp.allclose(out, ref, atol=2e-2, rtol=2e-2), f"Pallas mismatch, max|err|={err}"

    print("KERNEL_OK")
</pallas_src>

<mosaic_0001>
module attributes {stable_mosaic.version = 11 : i64} {
  func.func @kernel(%arg0: memref<64x16xf32, #tpu.memory_space<vmem>>, %arg1: memref<16x512xbf16, #tpu.memory_space<vmem>>, %arg2: memref<128x512xbf16, #tpu.memory_space<vmem>>, %arg3: memref<1x512xf32, #tpu.memory_space<vmem>>, %arg4: memref<128x512xbf16, #tpu.memory_space<vmem>>, %arg5: memref<128x512xbf16, #tpu.memory_space<vmem>>, %arg6: memref<1x512xf32, #tpu.memory_space<vmem>>, %arg7: memref<128x128xbf16, #tpu.memory_space<vmem>>, %arg8: memref<1x128xf32, #tpu.memory_space<vmem>>, %arg9: memref<8x128xf32, #tpu.memory_space<vmem>>, %arg10: memref<64x512xf32, #tpu.memory_space<vmem>>) attributes {dimension_semantics = [], scalar_prefetch = 0 : i64, scratch_operands = 1 : i64, tpu.core_type = #tpu.core_type<tc>} {
    %c0 = arith.constant 0 : index
    %c0_0 = arith.constant 0 : index
    %0 = vector.load %arg0[%c0, %c0_0] : memref<64x16xf32, #tpu.memory_space<vmem>>, vector<64x16xf32>
    %1 = arith.truncf %0 : vector<64x16xf32> to vector<64x16xbf16>
    %c0_1 = arith.constant 0 : index
    %c0_2 = arith.constant 0 : index
    %2 = vector.load %arg1[%c0_1, %c0_2] : memref<16x512xbf16, #tpu.memory_space<vmem>>, vector<16x512xbf16>
    %cst = arith.constant dense<0.000000e+00> : vector<64x512xf32>
    %3 = tpu.matmul %1, %2, %cst {dimension_numbers = #tpu.dot_dimension_numbers<[1], [0], [0], [1], [0, 0, 1, 1], [], []>} : vector<64x16xbf16>, vector<16x512xbf16>, vector<64x512xf32> -> vector<64x512xf32>
    %c0_3 = arith.constant 0 : index
    %c0_4 = arith.constant 0 : index
    %4 = vector.load %arg3[%c0_3, %c0_4] : memref<1x512xf32, #tpu.memory_space<vmem>>, vector<1x512xf32>
    %5 = vector.broadcast %4 : vector<1x512xf32> to vector<64x512xf32>
    %6 = arith.addf %3, %5 : vector<64x512xf32>
    %c0_5 = arith.constant 0 : index
    %c0_6 = arith.constant 0 : index
    %7 = vector.load %arg10[%c0_5, %c0_6] : memref<64x512xf32, #tpu.memory_space<vmem>>, vector<64x512xf32>
    tpu.vector_store %arg10[%c0_5, %c0_6], %6 {strides = array<i32>} : memref<64x512xf32, #tpu.memory_space<vmem>>, vector<64x512xf32>,
    %cst_7 = arith.constant 0.000000e+00 : f32
    %8 = vector.broadcast %cst_7 : f32 to vector<8x128xf32>
    %cst_8 = arith.constant 0.000000e+00 : f32
    %9 = vector.broadcast %cst_8 : f32 to vector<8x128xf32>
    %c0_9 = arith.constant 0 : index
    %c0_10 = arith.constant 0 : index
    %10 = vector.load %arg10[%c0_9, %c0_10] : memref<64x512xf32, #tpu.memory_space<vmem>>, vector<8x512xf32>
    %11 = arith.truncf %8 : vector<8x128xf32> to vector<8x128xbf16>
    %c0_11 = arith.constant 0 : index
    %c0_12 = arith.constant 0 : index
    %12 = vector.load %arg2[%c0_11, %c0_12] : memref<128x512xbf16, #tpu.memory_space<vmem>>, vector<128x512xbf16>
    %cst_13 = arith.constant dense<0.000000e+00> : vector<8x512xf32>
    %13 = tpu.matmul %11, %12, %cst_13 {dimension_numbers = #tpu.dot_dimension_numbers<[1], [0], [0], [1], [0, 0, 1, 1], [], []>} : vector<8x128xbf16>, vector<128x512xbf16>, vector<8x512xf32> -> vector<8x512xf32>
    %14 = arith.addf %10, %13 : vector<8x512xf32>
    %15 = vector.extract_strided_slice %14 {offsets = [0, 0], sizes = [8, 128], strides = [1, 1]} : vector<8x512xf32> to vector<8x128xf32>
    %16 = arith.negf %15 : vector<8x128xf32>
    %17 = math.exp %16 : vector<8x128xf32>
    %cst_14 = arith.constant 1.000000e+00 : f32
    %18 = vector.broadcast %cst_14 : f32 to vector<8x128xf32>
    %19 = arith.addf %18, %17 : vector<8x128xf32>
    %20 = arith.divf %18, %19 : vector<8x128xf32>
    %21 = vector.extract_strided_slice %14 {offsets = [0, 128], sizes = [8, 128], strides = [1, 1]} : vector<8x512xf32> to vector<8x128xf32>
    %22 = arith.negf %21 : vector<8x128xf32>
    %23 = math.exp %22 : vector<8x128xf32>
    %cst_15 = arith.constant 1.000000e+00 : f32
    %24 = vector.broadcast %cst_15 : f32 to vector<8x128xf32>
    %25 = arith.addf %24, %23 : vector<8x128xf32>
    %26 = arith.divf %24, %25 : vector<8x128xf32>
    %27 = vector.extract_strided_slice %14 {offsets = [0, 256], sizes = [8, 128], strides = [1, 1]} : vector<8x512xf32> to vector<8x128xf32>
    %28 = math.tanh %27 : vector<8x128xf32>
    %29 = vector.extract_strided_slice %14 {offsets = [0, 384], sizes = [8, 128], strides = [1, 1]} : vector<8x512xf32> to vector<8x128xf32>
    %30 = arith.negf %29 : vector<8x128xf32>
    %31 = math.exp %30 : vector<8x128xf32>
    %cst_16 = arith.constant 1.000000e+00 : f32
    %32 = vector.broadcast %cst_16 : f32 to vector<8x128xf32>
    %33 = arith.addf %32, %31 : vector<8x128xf32>
    %34 = arith.divf %32, %33 : vector<8x128xf32>
    %35 = arith.mulf %26, %9 : vector<8x128xf32>
    %36 = arith.mulf %20, %28 : vector<8x128xf32>
    %37 = arith.addf %35, %36 : vector<8x128xf32>
    %38 = math.tanh %37 : vector<8x128xf32>
    %39 = arith.mulf %34, %38 : vector<8x128xf32>
    %40 = arith.truncf %39 : vector<8x128xf32> to vector<8x128xbf16>
    %c0_17 = arith.constant 0 : index
    %c0_18 = arith.constant 0 : index
    %41 = vector.load %arg4[%c0_17, %c0_18] : memref<128x512xbf16, #tpu.memory_space<vmem>>, vector<128x512xbf16>
    %cst_19 = arith.constant dense<0.000000e+00> : vector<8x512xf32>
    %42 = tpu.matmul %40, %41, %cst_19 {dimension_numbers = #tpu.dot_dimension_numbers<[1], [0], [0], [1], [0, 0, 1, 1], [], []>} : vector<8x128xbf16>, vector<128x512xbf16>, vector<8x512xf32> -> vector<8x512xf32>
    %c0_20 = arith.constant 0 : index
    %c0_21 = arith.constant 0 : index
    %43 = vector.load %arg6[%c0_20, %c0_21] : memref<1x512xf32, #tpu.memory_space<vmem>>, vector<1x512xf32>
    %44 = vector.broadcast %43 : vector<1x512xf32> to vector<8x512xf32>
    %45 = arith.addf %42, %44 : vector<8x512xf32>
    %c0_22 = arith.constant 0 : index
    %c0_23 = arith.constant 0 : index
    %46 = vector.load %arg10[%c0_22, %c0_23] : memref<64x512xf32, #tpu.memory_space<vmem>>, vector<8x512xf32>
    tpu.vector_store %arg10[%c0_22, %c0_23], %45 {strides = array<i32>} : memref<64x512xf32, #tpu.memory_space<vmem>>, vector<8x512xf32>,
    %c8 = arith.constant 8 : index
    %c0_24 = arith.constant 0 : index
    %47 = vector.load %arg10[%c8, %c0_24] : memref<64x512xf32, #tpu.memory_space<vmem>>, vector<8x512xf32>
    %48 = arith.truncf %39 : vector<8x128xf32> to vector<8x128xbf16>
    %c0_25 = arith.constant 0 : index
    %c0_26 = arith.constant 0 : index
    %49 = vector.load %arg2[%c0_25, %c0_26] : memref<128x512xbf16, #tpu.memory_space<vmem>>, vector<128x512xbf16>
    %cst_27 = arith.constant dense<0.000000e+00> : vector<8x512xf32>
    %50 = tpu.matmul %48, %49, %cst_27 {dimension_numbers = #tpu.dot_dimension_numbers<[1], [0], [0], [1], [0, 0, 1, 1], [], []>} : vector<8x128xbf16>, vector<128x512xbf16>, vector<8x512xf32> -> vector<8x512xf32>
    %51 = arith.addf %47, %50 : vector<8x512xf32>
    %52 = vector.extract_strided_slice %51 {offsets = [0, 0], sizes = [8, 128], strides = [1, 1]} : vector<8x512xf32> to vector<8x128xf32>
    %53 = arith.negf %52 : vector<8x128xf32>
    %54 = math.exp %53 : vector<8x128xf32>
    %cst_28 = arith.constant 1.000000e+00 : f32
    %55 = vector.broadcast %cst_28 : f32 to vector<8x128xf32>
    %56 = arith.addf %55, %54 : vector<8x128xf32>
    %57 = arith.divf %55, %56 : vector<8x128xf32>
    %58 = vector.extract_strided_slice %51 {offsets = [0, 128], sizes = [8, 128], strides = [1, 1]} : vector<8x512xf32> to vector<8x128xf32>
    %59 = arith.negf %58 : vector<8x128xf32>
    %60 = math.exp %59 : vector<8x128xf32>
    %cst_29 = arith.constant 1.000000e+00 : f32
    %61 = vector.broadcast %cst_29 : f32 to vector<8x128xf32>
    %62 = arith.addf %61, %60 : vector<8x128xf32>
    %63 = arith.divf %61, %62 : vector<8x128xf32>
    %64 = vector.extract_strided_slice %51 {offsets = [0, 256], sizes = [8, 128], strides = [1, 1]} : vector<8x512xf32> to vector<8x128xf32>
    %65 = math.tanh %64 : vector<8x128xf32>
    %66 = vector.extract_strided_slice %51 {offsets = [0, 384], sizes = [8, 128], strides = [1, 1]} : vector<8x512xf32> to vector<8x128xf32>
    %67 = arith.negf %66 : vector<8x128xf32>
    %68 = math.exp %67 : vector<8x128xf32>
    %cst_30 = arith.constant 1.000000e+00 : f32
    %69 = vector.broadcast %cst_30 : f32 to vector<8x128xf32>
    %70 = arith.addf %69, %68 : vector<8x128xf32>
    %71 = arith.divf %69, %70 : vector<8x128xf32>
    %72 = arith.mulf %63, %37 : vector<8x128xf32>
    %73 = arith.mulf %57, %65 : vector<8x128xf32>
    %74 = arith.addf %72, %73 : vector<8x128xf32>
    %75 = math.tanh %74 : vector<8x128xf32>
    %76 = arith.mulf %71, %75 : vector<8x128xf32>
    %77 = arith.truncf %76 : vector<8x128xf32> to vector<8x128xbf16>
    %c0_31 = arith.constant 0 : index
    %c0_32 = arith.constant 0 : index
    %78 = vector.load %arg4[%c0_31, %c0_32] : memref<128x512xbf16, #tpu.memory_space<vmem>>, vector<128x512xbf16>
    %cst_33 = arith.constant dense<0.000000e+00> : vector<8x512xf32>
    %79 = tpu.matmul %77, %78, %cst_33 {dimension_numbers = #tpu.dot_dimension_numbers<[1], [0], [0], [1], [0, 0, 1, 1], [], []>} : vector<8x128xbf16>, vector<128x512xbf16>, vector<8x512xf32> -> vector<8x512xf32>
    %c0_34 = arith.constant 0 : index
    %c0_35 = arith.constant 0 : index
    %80 = vector.load %arg6[%c0_34, %c0_35] : memref<1x512xf32, #tpu.memory_space<vmem>>, vector<1x512xf32>
    %81 = vector.broadcast %80 : vector<1x512xf32> to vector<8x512xf32>
    %82 = arith.addf %79, %81 : vector<8x512xf32>
    %c8_36 = arith.constant 8 : index
    %c0_37 = arith.constant 0 : index
    %83 = vector.load %arg10[%c8_36, %c0_37] : memref<64x512xf32, #tpu.memory_space<vmem>>, vector<8x512xf32>
    tpu.vector_store %arg10[%c8_36, %c0_37], %82 {strides = array<i32>} : memref<64x512xf32, #tpu.memory_space<vmem>>, vector<8x512xf32>,
    %c16 = arith.constant 16 : index
    %c0_38 = arith.constant 0 : index
    %84 = vector.load %arg10[%c16, %c0_38] : memref<64x512xf32, #tpu.memory_space<vmem>>, vector<8x512xf32>
    %85 = arith.truncf %76 : vector<8x128xf32> to vector<8x128xbf16>
    %c0_39 = arith.constant 0 : index
    %c0_40 = arith.constant 0 : index
    %86 = vector.load %arg2[%c0_39, %c0_40] : memref<128x512xbf16, #tpu.memory_space<vmem>>, vector<128x512xbf16>
    %cst_41 = arith.constant dense<0.000000e+00> : vector<8x512xf32>
    %87 = tpu.matmul %85, %86, %cst_41 {dimension_numbers = #tpu.dot_dimension_numbers<[1], [0], [0], [1], [0, 0, 1, 1], [], []>} : vector<8x128xbf16>, vector<128x512xbf16>, vector<8x512xf32> -> vector<8x512xf32>
    %88 = arith.addf %84, %87 : vector<8x512xf32>
    %89 = vector.extract_strided_slice %88 {offsets = [0, 0], sizes = [8, 128], strides = [1, 1]} : vector<8x512xf32> to vector<8x128xf32>
    %90 = arith.negf %89 : vector<8x128xf32>
    %91 = math.exp %90 : vector<8x128xf32>
    %cst_42 = arith.constant 1.000000e+00 : f32
    %92 = vector.broadcast %cst_42 : f32 to vector<8x128xf32>
    %93 = arith.addf %92, %91 : vector<8x128xf32>
    %94 = arith.divf %92, %93 : vector<8x128xf32>
    %95 = vector.extract_strided_slice %88 {offsets = [0, 128], sizes = [8, 128], strides = [1, 1]} : vector<8x512xf32> to vector<8x128xf32>
    %96 = arith.negf %95 : vector<8x128xf32>
    %97 = math.exp %96 : vector<8x128xf32>
    %cst_43 = arith.constant 1.000000e+00 : f32
    %98 = vector.broadcast %cst_43 : f32 to vector<8x128xf32>
    %99 = arith.addf %98, %97 : vector<8x128xf32>
    %100 = arith.divf %98, %99 : vector<8x128xf32>
    %101 = vector.extract_strided_slice %88 {offsets = [0, 256], sizes = [8, 128], strides = [1, 1]} : vector<8x512xf32> to vector<8x128xf32>
    %102 = math.tanh %101 : vector<8x128xf32>
    %103 = vector.extract_strided_slice %88 {offsets = [0, 384], sizes = [8, 128], strides = [1, 1]} : vector<8x512xf32> to vector<8x128xf32>
    %104 = arith.negf %103 : vector<8x128xf32>
    %105 = math.exp %104 : vector<8x128xf32>
    %cst_44 = arith.constant 1.000000e+00 : f32
    %106 = vector.broadcast %cst_44 : f32 to vector<8x128xf32>
    %107 = arith.addf %106, %105 : vector<8x128xf32>
    %108 = arith.divf %106, %107 : vector<8x128xf32>
    %109 = arith.mulf %100, %74 : vector<8x128xf32>
    %110 = arith.mulf %94, %102 : vector<8x128xf32>
    %111 = arith.addf %109, %110 : vector<8x128xf32>
    %112 = math.tanh %111 : vector<8x128xf32>
    %113 = arith.mulf %108, %112 : vector<8x128xf32>
    %114 = arith.truncf %113 : vector<8x128xf32> to vector<8x128xbf16>
    %c0_45 = arith.constant 0 : index
    %c0_46 = arith.constant 0 : index
    %115 = vector.load %arg4[%c0_45, %c0_46] : memref<128x512xbf16, #tpu.memory_space<vmem>>, vector<128x512xbf16>
    %cst_47 = arith.constant dense<0.000000e+00> : vector<8x512xf32>
    %116 = tpu.matmul %114, %115, %cst_47 {dimension_numbers = #tpu.dot_dimension_numbers<[1], [0], [0], [1], [0, 0, 1, 1], [], []>} : vector<8x128xbf16>, vector<128x512xbf16>, vector<8x512xf32> -> vector<8x512xf32>
    %c0_48 = arith.constant 0 : index
    %c0_49 = arith.constant 0 : index
    %117 = vector.load %arg6[%c0_48, %c0_49] : memref<1x512xf32, #tpu.memory_space<vmem>>, vector<1x512xf32>
    %118 = vector.broadcast %117 : vector<1x512xf32> to vector<8x512xf32>
    %119 = arith.addf %116, %118 : vector<8x512xf32>
    %c16_50 = arith.constant 16 : index
    %c0_51 = arith.constant 0 : index
    %120 = vector.load %arg10[%c16_50, %c0_51] : memref<64x512xf32, #tpu.memory_space<vmem>>, vector<8x512xf32>
    tpu.vector_store %arg10[%c16_50, %c0_51], %119 {strides = array<i32>} : memref<64x512xf32, #tpu.memory_space<vmem>>, vector<8x512xf32>,
    %c24 = arith.constant 24 : index
    %c0_52 = arith.constant 0 : index
    %121 = vector.load %arg10[%c24, %c0_52] : memref<64x512xf32, #tpu.memory_space<vmem>>, vector<8x512xf32>
    %122 = arith.truncf %113 : vector<8x128xf32> to vector<8x128xbf16>
    %c0_53 = arith.constant 0 : index
    %c0_54 = arith.constant 0 : index
    %123 = vector.load %arg2[%c0_53, %c0_54] : memref<128x512xbf16, #tpu.memory_space<vmem>>, vector<128x512xbf16>
    %cst_55 = arith.constant dense<0.000000e+00> : vector<8x512xf32>
    %124 = tpu.matmul %122, %123, %cst_55 {dimension_numbers = #tpu.dot_dimension_numbers<[1], [0], [0], [1], [0, 0, 1, 1], [], []>} : vector<8x128xbf16>, vector<128x512xbf16>, vector<8x512xf32> -> vector<8x512xf32>
    %125 = arith.addf %121, %124 : vector<8x512xf32>
    %126 = vector.extract_strided_slice %125 {offsets = [0, 0], sizes = [8, 128], strides = [1, 1]} : vector<8x512xf32> to vector<8x128xf32>
    %127 = arith.negf %126 : vector<8x128xf32>
    %128 = math.exp %127 : vector<8x128xf32>
    %cst_56 = arith.constant 1.000000e+00 : f32
    %129 = vector.broadcast %cst_56 : f32 to vector<8x128xf32>
    %130 = arith.addf %129, %128 : vector<8x128xf32>
    %131 = arith.divf %129, %130 : vector<8x128xf32>
    %132 = vector.extract_strided_slice %125 {offsets = [0, 128], sizes = [8, 128], strides = [1, 1]} : vector<8x512xf32> to vector<8x128xf32>
    %133 = arith.negf %132 : vector<8x128xf32>
    %134 = math.exp %133 : vector<8x128xf32>
    %cst_57 = arith.constant 1.000000e+00 : f32
    %135 = vector.broadcast %cst_57 : f32 to vector<8x128xf32>
    %136 = arith.addf %135, %134 : vector<8x128xf32>
    %137 = arith.divf %135, %136 : vector<8x128xf32>
    %138 = vector.extract_strided_slice %125 {offsets = [0, 256], sizes = [8, 128], strides = [1, 1]} : vector<8x512xf32> to vector<8x128xf32>
    %139 = math.tanh %138 : vector<8x128xf32>
    %140 = vector.extract_strided_slice %125 {offsets = [0, 384], sizes = [8, 128], strides = [1, 1]} : vector<8x512xf32> to vector<8x128xf32>
    %141 = arith.negf %140 : vector<8x128xf32>
    %142 = math.exp %141 : vector<8x128xf32>
    %cst_58 = arith.constant 1.000000e+00 : f32
    %143 = vector.broadcast %cst_58 : f32 to vector<8x128xf32>
    %144 = arith.addf %143, %142 : vector<8x128xf32>
    %145 = arith.divf %143, %144 : vector<8x128xf32>
    %146 = arith.mulf %137, %111 : vector<8x128xf32>
    %147 = arith.mulf %131, %139 : vector<8x128xf32>
    %148 = arith.addf %146, %147 : vector<8x128xf32>
    %149 = math.tanh %148 : vector<8x128xf32>
    %150 = arith.mulf %145, %149 : vector<8x128xf32>
    %151 = arith.truncf %150 : vector<8x128xf32> to vector<8x128xbf16>
    %c0_59 = arith.constant 0 : index
    %c0_60 = arith.constant 0 : index
    %152 = vector.load %arg4[%c0_59, %c0_60] : memref<128x512xbf16, #tpu.memory_space<vmem>>, vector<128x512xbf16>
    %cst_61 = arith.constant dense<0.000000e+00> : vector<8x512xf32>
    %153 = tpu.matmul %151, %152, %cst_61 {dimension_numbers = #tpu.dot_dimension_numbers<[1], [0], [0], [1], [0, 0, 1, 1], [], []>} : vector<8x128xbf16>, vector<128x512xbf16>, vector<8x512xf32> -> vector<8x512xf32>
    %c0_62 = arith.constant 0 : index
    %c0_63 = arith.constant 0 : index
    %154 = vector.load %arg6[%c0_62, %c0_63] : memref<1x512xf32, #tpu.memory_space<vmem>>, vector<1x512xf32>
    %155 = vector.broadcast %154 : vector<1x512xf32> to vector<8x512xf32>
    %156 = arith.addf %153, %155 : vector<8x512xf32>
    %c24_64 = arith.constant 24 : index
    %c0_65 = arith.constant 0 : index
    %157 = vector.load %arg10[%c24_64, %c0_65] : memref<64x512xf32, #tpu.memory_space<vmem>>, vector<8x512xf32>
    tpu.vector_store %arg10[%c24_64, %c0_65], %156 {strides = array<i32>} : memref<64x512xf32, #tpu.memory_space<vmem>>, vector<8x512xf32>,
    %c32 = arith.constant 32 : index
    %c0_66 = arith.constant 0 : index
    %158 = vector.load %arg10[%c32, %c0_66] : memref<64x512xf32, #tpu.memory_space<vmem>>, vector<8x512xf32>
    %159 = arith.truncf %150 : vector<8x128xf32> to vector<8x128xbf16>
    %c0_67 = arith.constant 0 : index
    %c0_68 = arith.constant 0 : index
    %160 = vector.load %arg2[%c0_67, %c0_68] : memref<128x512xbf16, #tpu.memory_space<vmem>>, vector<128x512xbf16>
    %cst_69 = arith.constant dense<0.000000e+00> : vector<8x512xf32>
    %161 = tpu.matmul %159, %160, %cst_69 {dimension_numbers = #tpu.dot_dimension_numbers<[1], [0], [0], [1], [0, 0, 1, 1], [], []>} : vector<8x128xbf16>, vector<128x512xbf16>, vector<8x512xf32> -> vector<8x512xf32>
    %162 = arith.addf %158, %161 : vector<8x512xf32>
    %163 = vector.extract_strided_slice %162 {offsets = [0, 0], sizes = [8, 128], strides = [1, 1]} : vector<8x512xf32> to vector<8x128xf32>
    %164 = arith.negf %163 : vector<8x128xf32>
    %165 = math.exp %164 : vector<8x128xf32>
    %cst_70 = arith.constant 1.000000e+00 : f32
    %166 = vector.broadcast %cst_70 : f32 to vector<8x128xf32>
    %167 = arith.addf %166, %165 : vector<8x128xf32>
    %168 = arith.divf %166, %167 : vector<8x128xf32>
    %169 = vector.extract_strided_slice %162 {offsets = [0, 128], sizes = [8, 128], strides = [1, 1]} : vector<8x512xf32> to vector<8x128xf32>
    %170 = arith.negf %169 : vector<8x128xf32>
    %171 = math.exp %170 : vector<8x128xf32>
    %cst_71 = arith.constant 1.000000e+00 : f32
    %172 = vector.broadcast %cst_71 : f32 to vector<8x128xf32>
    %173 = arith.addf %172, %171 : vector<8x128xf32>
    %174 = arith.divf %172, %173 : vector<8x128xf32>
    %175 = vector.extract_strided_slice %162 {offsets = [0, 256], sizes = [8, 128], strides = [1, 1]} : vector<8x512xf32> to vector<8x128xf32>
    %176 = math.tanh %175 : vector<8x128xf32>
    %177 = vector.extract_strided_slice %162 {offsets = [0, 384], sizes = [8, 128], strides = [1, 1]} : vector<8x512xf32> to vector<8x128xf32>
    %178 = arith.negf %177 : vector<8x128xf32>
    %179 = math.exp %178 : vector<8x128xf32>
    %cst_72 = arith.constant 1.000000e+00 : f32
    %180 = vector.broadcast %cst_72 : f32 to vector<8x128xf32>
    %181 = arith.addf %180, %179 : vector<8x128xf32>
    %182 = arith.divf %180, %181 : vector<8x128xf32>
    %183 = arith.mulf %174, %148 : vector<8x128xf32>
    %184 = arith.mulf %168, %176 : vector<8x128xf32>
    %185 = arith.addf %183, %184 : vector<8x128xf32>
    %186 = math.tanh %185 : vector<8x128xf32>
    %187 = arith.mulf %182, %186 : vector<8x128xf32>
    %188 = arith.truncf %187 : vector<8x128xf32> to vector<8x128xbf16>
    %c0_73 = arith.constant 0 : index
    %c0_74 = arith.constant 0 : index
    %189 = vector.load %arg4[%c0_73, %c0_74] : memref<128x512xbf16, #tpu.memory_space<vmem>>, vector<128x512xbf16>
    %cst_75 = arith.constant dense<0.000000e+00> : vector<8x512xf32>
    %190 = tpu.matmul %188, %189, %cst_75 {dimension_numbers = #tpu.dot_dimension_numbers<[1], [0], [0], [1], [0, 0, 1, 1], [], []>} : vector<8x128xbf16>, vector<128x512xbf16>, vector<8x512xf32> -> vector<8x512xf32>
    %c0_76 = arith.constant 0 : index
    %c0_77 = arith.constant 0 : index
    %191 = vector.load %arg6[%c0_76, %c0_77] : memref<1x512xf32, #tpu.memory_space<vmem>>, vector<1x512xf32>
    %192 = vector.broadcast %191 : vector<1x512xf32> to vector<8x512xf32>
    %193 = arith.addf %190, %192 : vector<8x512xf32>
    %c32_78 = arith.constant 32 : index
    %c0_79 = arith.constant 0 : index
    %194 = vector.load %arg10[%c32_78, %c0_79] : memref<64x512xf32, #tpu.memory_space<vmem>>, vector<8x512xf32>
    tpu.vector_store %arg10[%c32_78, %c0_79], %193 {strides = array<i32>} : memref<64x512xf32, #tpu.memory_space<vmem>>, vector<8x512xf32>,
    %c40 = arith.constant 40 : index
    %c0_80 = arith.constant 0 : index
    %195 = vector.load %arg10[%c40, %c0_80] : memref<64x512xf32, #tpu.memory_space<vmem>>, vector<8x512xf32>
    %196 = arith.truncf %187 : vector<8x128xf32> to vector<8x128xbf16>
    %c0_81 = arith.constant 0 : index
    %c0_82 = arith.constant 0 : index
    %197 = vector.load %arg2[%c0_81, %c0_82] : memref<128x512xbf16, #tpu.memory_space<vmem>>, vector<128x512xbf16>
    %cst_83 = arith.constant dense<0.000000e+00> : vector<8x512xf32>
    %198 = tpu.matmul %196, %197, %cst_83 {dimension_numbers = #tpu.dot_dimension_numbers<[1], [0], [0], [1], [0, 0, 1, 1], [], []>} : vector<8x128xbf16>, vector<128x512xbf16>, vector<8x512xf32> -> vector<8x512xf32>
    %199 = arith.addf %195, %198 : vector<8x512xf32>
    %200 = vector.extract_strided_slice %199 {offsets = [0, 0], sizes = [8, 128], strides = [1, 1]} : vector<8x512xf32> to vector<8x128xf32>
    %201 = arith.negf %200 : vector<8x128xf32>
    %202 = math.exp %201 : vector<8x128xf32>
    %cst_84 = arith.constant 1.000000e+00 : f32
    %203 = vector.broadcast %cst_84 : f32 to vector<8x128xf32>
    %204 = arith.addf %203, %202 : vector<8x128xf32>
    %205 = arith.divf %203, %204 : vector<8x128xf32>
    %206 = vector.extract_strided_slice %199 {offsets = [0, 128], sizes = [8, 128], strides = [1, 1]} : vector<8x512xf32> to vector<8x128xf32>
    %207 = arith.negf %206 : vector<8x128xf32>
    %208 = math.exp %207 : vector<8x128xf32>
    %cst_85 = arith.constant 1.000000e+00 : f32
    %209 = vector.broadcast %cst_85 : f32 to vector<8x128xf32>
    %210 = arith.addf %209, %208 : vector<8x128xf32>
    %211 = arith.divf %209, %210 : vector<8x128xf32>
    %212 = vector.extract_strided_slice %199 {offsets = [0, 256], sizes = [8, 128], strides = [1, 1]} : vector<8x512xf32> to vector<8x128xf32>
    %213 = math.tanh %212 : vector<8x128xf32>
    %214 = vector.extract_strided_slice %199 {offsets = [0, 384], sizes = [8, 128], strides = [1, 1]} : vector<8x512xf32> to vector<8x128xf32>
    %215 = arith.negf %214 : vector<8x128xf32>
    %216 = math.exp %215 : vector<8x128xf32>
    %cst_86 = arith.constant 1.000000e+00 : f32
    %217 = vector.broadcast %cst_86 : f32 to vector<8x128xf32>
    %218 = arith.addf %217, %216 : vector<8x128xf32>
    %219 = arith.divf %217, %218 : vector<8x128xf32>
    %220 = arith.mulf %211, %185 : vector<8x128xf32>
    %221 = arith.mulf %205, %213 : vector<8x128xf32>
    %222 = arith.addf %220, %221 : vector<8x128xf32>
    %223 = math.tanh %222 : vector<8x128xf32>
    %224 = arith.mulf %219, %223 : vector<8x128xf32>
    %225 = arith.truncf %224 : vector<8x128xf32> to vector<8x128xbf16>
    %c0_87 = arith.constant 0 : index
    %c0_88 = arith.constant 0 : index
    %226 = vector.load %arg4[%c0_87, %c0_88] : memref<128x512xbf16, #tpu.memory_space<vmem>>, vector<128x512xbf16>
    %cst_89 = arith.constant dense<0.000000e+00> : vector<8x512xf32>
    %227 = tpu.matmul %225, %226, %cst_89 {dimension_numbers = #tpu.dot_dimension_numbers<[1], [0], [0], [1], [0, 0, 1, 1], [], []>} : vector<8x128xbf16>, vector<128x512xbf16>, vector<8x512xf32> -> vector<8x512xf32>
    %c0_90 = arith.constant 0 : index
    %c0_91 = arith.constant 0 : index
    %228 = vector.load %arg6[%c0_90, %c0_91] : memref<1x512xf32, #tpu.memory_space<vmem>>, vector<1x512xf32>
    %229 = vector.broadcast %228 : vector<1x512xf32> to vector<8x512xf32>
    %230 = arith.addf %227, %229 : vector<8x512xf32>
    %c40_92 = arith.constant 40 : index
    %c0_93 = arith.constant 0 : index
    %231 = vector.load %arg10[%c40_92, %c0_93] : memref<64x512xf32, #tpu.memory_space<vmem>>, vector<8x512xf32>
    tpu.vector_store %arg10[%c40_92, %c0_93], %230 {strides = array<i32>} : memref<64x512xf32, #tpu.memory_space<vmem>>, vector<8x512xf32>,
    %c48 = arith.constant 48 : index
    %c0_94 = arith.constant 0 : index
    %232 = vector.load %arg10[%c48, %c0_94] : memref<64x512xf32, #tpu.memory_space<vmem>>, vector<8x512xf32>
    %233 = arith.truncf %224 : vector<8x128xf32> to vector<8x128xbf16>
    %c0_95 = arith.constant 0 : index
    %c0_96 = arith.constant 0 : index
    %234 = vector.load %arg2[%c0_95, %c0_96] : memref<128x512xbf16, #tpu.memory_space<vmem>>, vector<128x512xbf16>
    %cst_97 = arith.constant dense<0.000000e+00> : vector<8x512xf32>
    %235 = tpu.matmul %233, %234, %cst_97 {dimension_numbers = #tpu.dot_dimension_numbers<[1], [0], [0], [1], [0, 0, 1, 1], [], []>} : vector<8x128xbf16>, vector<128x512xbf16>, vector<8x512xf32> -> vector<8x512xf32>
    %236 = arith.addf %232, %235 : vector<8x512xf32>
    %237 = vector.extract_strided_slice %236 {offsets = [0, 0], sizes = [8, 128], strides = [1, 1]} : vector<8x512xf32> to vector<8x128xf32>
    %238 = arith.negf %237 : vector<8x128xf32>
    %239 = math.exp %238 : vector<8x128xf32>
    %cst_98 = arith.constant 1.000000e+00 : f32
    %240 = vector.broadcast %cst_98 : f32 to vector<8x128xf32>
    %241 = arith.addf %240, %239 : vector<8x128xf32>
    %242 = arith.divf %240, %241 : vector<8x128xf32>
    %243 = vector.extract_strided_slice %236 {offsets = [0, 128], sizes = [8, 128], strides = [1, 1]} : vector<8x512xf32> to vector<8x128xf32>
    %244 = arith.negf %243 : vector<8x128xf32>
    %245 = math.exp %244 : vector<8x128xf32>
    %cst_99 = arith.constant 1.000000e+00 : f32
    %246 = vector.broadcast %cst_99 : f32 to vector<8x128xf32>
    %247 = arith.addf %246, %245 : vector<8x128xf32>
    %248 = arith.divf %246, %247 : vector<8x128xf32>
    %249 = vector.extract_strided_slice %236 {offsets = [0, 256], sizes = [8, 128], strides = [1, 1]} : vector<8x512xf32> to vector<8x128xf32>
    %250 = math.tanh %249 : vector<8x128xf32>
    %251 = vector.extract_strided_slice %236 {offsets = [0, 384], sizes = [8, 128], strides = [1, 1]} : vector<8x512xf32> to vector<8x128xf32>
    %252 = arith.negf %251 : vector<8x128xf32>
    %253 = math.exp %252 : vector<8x128xf32>
    %cst_100 = arith.constant 1.000000e+00 : f32
    %254 = vector.broadcast %cst_100 : f32 to vector<8x128xf32>
    %255 = arith.addf %254, %253 : vector<8x128xf32>
    %256 = arith.divf %254, %255 : vector<8x128xf32>
    %257 = arith.mulf %248, %222 : vector<8x128xf32>
    %258 = arith.mulf %242, %250 : vector<8x128xf32>
    %259 = arith.addf %257, %258 : vector<8x128xf32>
    %260 = math.tanh %259 : vector<8x128xf32>
    %261 = arith.mulf %256, %260 : vector<8x128xf32>
    %262 = arith.truncf %261 : vector<8x128xf32> to vector<8x128xbf16>
    %c0_101 = arith.constant 0 : index
    %c0_102 = arith.constant 0 : index
    %263 = vector.load %arg4[%c0_101, %c0_102] : memref<128x512xbf16, #tpu.memory_space<vmem>>, vector<128x512xbf16>
    %cst_103 = arith.constant dense<0.000000e+00> : vector<8x512xf32>
    %264 = tpu.matmul %262, %263, %cst_103 {dimension_numbers = #tpu.dot_dimension_numbers<[1], [0], [0], [1], [0, 0, 1, 1], [], []>} : vector<8x128xbf16>, vector<128x512xbf16>, vector<8x512xf32> -> vector<8x512xf32>
    %c0_104 = arith.constant 0 : index
    %c0_105 = arith.constant 0 : index
    %265 = vector.load %arg6[%c0_104, %c0_105] : memref<1x512xf32, #tpu.memory_space<vmem>>, vector<1x512xf32>
    %266 = vector.broadcast %265 : vector<1x512xf32> to vector<8x512xf32>
    %267 = arith.addf %264, %266 : vector<8x512xf32>
    %c48_106 = arith.constant 48 : index
    %c0_107 = arith.constant 0 : index
    %268 = vector.load %arg10[%c48_106, %c0_107] : memref<64x512xf32, #tpu.memory_space<vmem>>, vector<8x512xf32>
    tpu.vector_store %arg10[%c48_106, %c0_107], %267 {strides = array<i32>} : memref<64x512xf32, #tpu.memory_space<vmem>>, vector<8x512xf32>,
    %c56 = arith.constant 56 : index
    %c0_108 = arith.constant 0 : index
    %269 = vector.load %arg10[%c56, %c0_108] : memref<64x512xf32, #tpu.memory_space<vmem>>, vector<8x512xf32>
    %270 = arith.truncf %261 : vector<8x128xf32> to vector<8x128xbf16>
    %c0_109 = arith.constant 0 : index
    %c0_110 = arith.constant 0 : index
    %271 = vector.load %arg2[%c0_109, %c0_110] : memref<128x512xbf16, #tpu.memory_space<vmem>>, vector<128x512xbf16>
    %cst_111 = arith.constant dense<0.000000e+00> : vector<8x512xf32>
    %272 = tpu.matmul %270, %271, %cst_111 {dimension_numbers = #tpu.dot_dimension_numbers<[1], [0], [0], [1], [0, 0, 1, 1], [], []>} : vector<8x128xbf16>, vector<128x512xbf16>, vector<8x512xf32> -> vector<8x512xf32>
    %273 = arith.addf %269, %272 : vector<8x512xf32>
    %274 = vector.extract_strided_slice %273 {offsets = [0, 0], sizes = [8, 128], strides = [1, 1]} : vector<8x512xf32> to vector<8x128xf32>
    %275 = arith.negf %274 : vector<8x128xf32>
    %276 = math.exp %275 : vector<8x128xf32>
    %cst_112 = arith.constant 1.000000e+00 : f32
    %277 = vector.broadcast %cst_112 : f32 to vector<8x128xf32>
    %278 = arith.addf %277, %276 : vector<8x128xf32>
    %279 = arith.divf %277, %278 : vector<8x128xf32>
    %280 = vector.extract_strided_slice %273 {offsets = [0, 128], sizes = [8, 128], strides = [1, 1]} : vector<8x512xf32> to vector<8x128xf32>
    %281 = arith.negf %280 : vector<8x128xf32>
    %282 = math.exp %281 : vector<8x128xf32>
    %cst_113 = arith.constant 1.000000e+00 : f32
    %283 = vector.broadcast %cst_113 : f32 to vector<8x128xf32>
    %284 = arith.addf %283, %282 : vector<8x128xf32>
    %285 = arith.divf %283, %284 : vector<8x128xf32>
    %286 = vector.extract_strided_slice %273 {offsets = [0, 256], sizes = [8, 128], strides = [1, 1]} : vector<8x512xf32> to vector<8x128xf32>
    %287 = math.tanh %286 : vector<8x128xf32>
    %288 = vector.extract_strided_slice %273 {offsets = [0, 384], sizes = [8, 128], strides = [1, 1]} : vector<8x512xf32> to vector<8x128xf32>
    %289 = arith.negf %288 : vector<8x128xf32>
    %290 = math.exp %289 : vector<8x128xf32>
    %cst_114 = arith.constant 1.000000e+00 : f32
    %291 = vector.broadcast %cst_114 : f32 to vector<8x128xf32>
    %292 = arith.addf %291, %290 : vector<8x128xf32>
    %293 = arith.divf %291, %292 : vector<8x128xf32>
    %294 = arith.mulf %285, %259 : vector<8x128xf32>
    %295 = arith.mulf %279, %287 : vector<8x128xf32>
    %296 = arith.addf %294, %295 : vector<8x128xf32>
    %297 = math.tanh %296 : vector<8x128xf32>
    %298 = arith.mulf %293, %297 : vector<8x128xf32>
    %299 = arith.truncf %298 : vector<8x128xf32> to vector<8x128xbf16>
    %c0_115 = arith.constant 0 : index
    %c0_116 = arith.constant 0 : index
    %300 = vector.load %arg4[%c0_115, %c0_116] : memref<128x512xbf16, #tpu.memory_space<vmem>>, vector<128x512xbf16>
    %cst_117 = arith.constant dense<0.000000e+00> : vector<8x512xf32>
    %301 = tpu.matmul %299, %300, %cst_117 {dimension_numbers = #tpu.dot_dimension_numbers<[1], [0], [0], [1], [0, 0, 1, 1], [], []>} : vector<8x128xbf16>, vector<128x512xbf16>, vector<8x512xf32> -> vector<8x512xf32>
    %c0_118 = arith.constant 0 : index
    %c0_119 = arith.constant 0 : index
    %302 = vector.load %arg6[%c0_118, %c0_119] : memref<1x512xf32, #tpu.memory_space<vmem>>, vector<1x512xf32>
    %303 = vector.broadcast %302 : vector<1x512xf32> to vector<8x512xf32>
    %304 = arith.addf %301, %303 : vector<8x512xf32>
    %c56_120 = arith.constant 56 : index
    %c0_121 = arith.constant 0 : index
    %305 = vector.load %arg10[%c56_120, %c0_121] : memref<64x512xf32, #tpu.memory_space<vmem>>, vector<8x512xf32>
    tpu.vector_store %arg10[%c56_120, %c0_121], %304 {strides = array<i32>} : memref<64x512xf32, #tpu.memory_space<vmem>>, vector<8x512xf32>,
    %cst_122 = arith.constant 0.000000e+00 : f32
    %306 = vector.broadcast %cst_122 : f32 to vector<8x128xf32>
    %cst_123 = arith.constant 0.000000e+00 : f32
    %307 = vector.broadcast %cst_123 : f32 to vector<8x128xf32>
    %c0_124 = arith.constant 0 : index
    %c0_125 = arith.constant 0 : index
    %308 = vector.load %arg10[%c0_124, %c0_125] : memref<64x512xf32, #tpu.memory_space<vmem>>, vector<8x512xf32>
    %309 = arith.truncf %306 : vector<8x128xf32> to vector<8x128xbf16>
    %c0_126 = arith.constant 0 : index
    %c0_127 = arith.constant 0 : index
    %310 = vector.load %arg5[%c0_126, %c0_127] : memref<128x512xbf16, #tpu.memory_space<vmem>>, vector<128x512xbf16>
    %cst_128 = arith.constant dense<0.000000e+00> : vector<8x512xf32>
    %311 = tpu.matmul %309, %310, %cst_128 {dimension_numbers = #tpu.dot_dimension_numbers<[1], [0], [0], [1], [0, 0, 1, 1], [], []>} : vector<8x128xbf16>, vector<128x512xbf16>, vector<8x512xf32> -> vector<8x512xf32>
    %312 = arith.addf %308, %311 : vector<8x512xf32>
    %313 = vector.extract_strided_slice %312 {offsets = [0, 0], sizes = [8, 128], strides = [1, 1]} : vector<8x512xf32> to vector<8x128xf32>
    %314 = arith.negf %313 : vector<8x128xf32>
    %315 = math.exp %314 : vector<8x128xf32>
    %cst_129 = arith.constant 1.000000e+00 : f32
    %316 = vector.broadcast %cst_129 : f32 to vector<8x128xf32>
    %317 = arith.addf %316, %315 : vector<8x128xf32>
    %318 = arith.divf %316, %317 : vector<8x128xf32>
    %319 = vector.extract_strided_slice %312 {offsets = [0, 128], sizes = [8, 128], strides = [1, 1]} : vector<8x512xf32> to vector<8x128xf32>
    %320 = arith.negf %319 : vector<8x128xf32>
    %321 = math.exp %320 : vector<8x128xf32>
    %cst_130 = arith.constant 1.000000e+00 : f32
    %322 = vector.broadcast %cst_130 : f32 to vector<8x128xf32>
    %323 = arith.addf %322, %321 : vector<8x128xf32>
    %324 = arith.divf %322, %323 : vector<8x128xf32>
    %325 = vector.extract_strided_slice %312 {offsets = [0, 256], sizes = [8, 128], strides = [1, 1]} : vector<8x512xf32> to vector<8x128xf32>
    %326 = math.tanh %325 : vector<8x128xf32>
    %327 = vector.extract_strided_slice %312 {offsets = [0, 384], sizes = [8, 128], strides = [1, 1]} : vector<8x512xf32> to vector<8x128xf32>
    %328 = arith.negf %327 : vector<8x128xf32>
    %329 = math.exp %328 : vector<8x128xf32>
    %cst_131 = arith.constant 1.000000e+00 : f32
    %330 = vector.broadcast %cst_131 : f32 to vector<8x128xf32>
    %331 = arith.addf %330, %329 : vector<8x128xf32>
    %332 = arith.divf %330, %331 : vector<8x128xf32>
    %333 = arith.mulf %324, %307 : vector<8x128xf32>
    %334 = arith.mulf %318, %326 : vector<8x128xf32>
    %335 = arith.addf %333, %334 : vector<8x128xf32>
    %336 = math.tanh %335 : vector<8x128xf32>
    %337 = arith.mulf %332, %336 : vector<8x128xf32>
    %c8_132 = arith.constant 8 : index
    %c0_133 = arith.constant 0 : index
    %338 = vector.load %arg10[%c8_132, %c0_133] : memref<64x512xf32, #tpu.memory_space<vmem>>, vector<8x512xf32>
    %339 = arith.truncf %337 : vector<8x128xf32> to vector<8x128xbf16>
    %c0_134 = arith.constant 0 : index
    %c0_135 = arith.constant 0 : index
    %340 = vector.load %arg5[%c0_134, %c0_135] : memref<128x512xbf16, #tpu.memory_space<vmem>>, vector<128x512xbf16>
    %cst_136 = arith.constant dense<0.000000e+00> : vector<8x512xf32>
    %341 = tpu.matmul %339, %340, %cst_136 {dimension_numbers = #tpu.dot_dimension_numbers<[1], [0], [0], [1], [0, 0, 1, 1], [], []>} : vector<8x128xbf16>, vector<128x512xbf16>, vector<8x512xf32> -> vector<8x512xf32>
    %342 = arith.addf %338, %341 : vector<8x512xf32>
    %343 = vector.extract_strided_slice %342 {offsets = [0, 0], sizes = [8, 128], strides = [1, 1]} : vector<8x512xf32> to vector<8x128xf32>
    %344 = arith.negf %343 : vector<8x128xf32>
    %345 = math.exp %344 : vector<8x128xf32>
    %cst_137 = arith.constant 1.000000e+00 : f32
    %346 = vector.broadcast %cst_137 : f32 to vector<8x128xf32>
    %347 = arith.addf %346, %345 : vector<8x128xf32>
    %348 = arith.divf %346, %347 : vector<8x128xf32>
    %349 = vector.extract_strided_slice %342 {offsets = [0, 128], sizes = [8, 128], strides = [1, 1]} : vector<8x512xf32> to vector<8x128xf32>
    %350 = arith.negf %349 : vector<8x128xf32>
    %351 = math.exp %350 : vector<8x128xf32>
    %cst_138 = arith.constant 1.000000e+00 : f32
    %352 = vector.broadcast %cst_138 : f32 to vector<8x128xf32>
    %353 = arith.addf %352, %351 : vector<8x128xf32>
    %354 = arith.divf %352, %353 : vector<8x128xf32>
    %355 = vector.extract_strided_slice %342 {offsets = [0, 256], sizes = [8, 128], strides = [1, 1]} : vector<8x512xf32> to vector<8x128xf32>
    %356 = math.tanh %355 : vector<8x128xf32>
    %357 = vector.extract_strided_slice %342 {offsets = [0, 384], sizes = [8, 128], strides = [1, 1]} : vector<8x512xf32> to vector<8x128xf32>
    %358 = arith.negf %357 : vector<8x128xf32>
    %359 = math.exp %358 : vector<8x128xf32>
    %cst_139 = arith.constant 1.000000e+00 : f32
    %360 = vector.broadcast %cst_139 : f32 to vector<8x128xf32>
    %361 = arith.addf %360, %359 : vector<8x128xf32>
    %362 = arith.divf %360, %361 : vector<8x128xf32>
    %363 = arith.mulf %354, %335 : vector<8x128xf32>
    %364 = arith.mulf %348, %356 : vector<8x128xf32>
    %365 = arith.addf %363, %364 : vector<8x128xf32>
    %366 = math.tanh %365 : vector<8x128xf32>
    %367 = arith.mulf %362, %366 : vector<8x128xf32>
    %c16_140 = arith.constant 16 : index
    %c0_141 = arith.constant 0 : index
    %368 = vector.load %arg10[%c16_140, %c0_141] : memref<64x512xf32, #tpu.memory_space<vmem>>, vector<8x512xf32>
    %369 = arith.truncf %367 : vector<8x128xf32> to vector<8x128xbf16>
    %c0_142 = arith.constant 0 : index
    %c0_143 = arith.constant 0 : index
    %370 = vector.load %arg5[%c0_142, %c0_143] : memref<128x512xbf16, #tpu.memory_space<vmem>>, vector<128x512xbf16>
    %cst_144 = arith.constant dense<0.000000e+00> : vector<8x512xf32>
    %371 = tpu.matmul %369, %370, %cst_144 {dimension_numbers = #tpu.dot_dimension_numbers<[1], [0], [0], [1], [0, 0, 1, 1], [], []>} : vector<8x128xbf16>, vector<128x512xbf16>, vector<8x512xf32> -> vector<8x512xf32>
    %372 = arith.addf %368, %371 : vector<8x512xf32>
    %373 = vector.extract_strided_slice %372 {offsets = [0, 0], sizes = [8, 128], strides = [1, 1]} : vector<8x512xf32> to vector<8x128xf32>
    %374 = arith.negf %373 : vector<8x128xf32>
    %375 = math.exp %374 : vector<8x128xf32>
    %cst_145 = arith.constant 1.000000e+00 : f32
    %376 = vector.broadcast %cst_145 : f32 to vector<8x128xf32>
    %377 = arith.addf %376, %375 : vector<8x128xf32>
    %378 = arith.divf %376, %377 : vector<8x128xf32>
    %379 = vector.extract_strided_slice %372 {offsets = [0, 128], sizes = [8, 128], strides = [1, 1]} : vector<8x512xf32> to vector<8x128xf32>
    %380 = arith.negf %379 : vector<8x128xf32>
    %381 = math.exp %380 : vector<8x128xf32>
    %cst_146 = arith.constant 1.000000e+00 : f32
    %382 = vector.broadcast %cst_146 : f32 to vector<8x128xf32>
    %383 = arith.addf %382, %381 : vector<8x128xf32>
    %384 = arith.divf %382, %383 : vector<8x128xf32>
    %385 = vector.extract_strided_slice %372 {offsets = [0, 256], sizes = [8, 128], strides = [1, 1]} : vector<8x512xf32> to vector<8x128xf32>
    %386 = math.tanh %385 : vector<8x128xf32>
    %387 = vector.extract_strided_slice %372 {offsets = [0, 384], sizes = [8, 128], strides = [1, 1]} : vector<8x512xf32> to vector<8x128xf32>
    %388 = arith.negf %387 : vector<8x128xf32>
    %389 = math.exp %388 : vector<8x128xf32>
    %cst_147 = arith.constant 1.000000e+00 : f32
    %390 = vector.broadcast %cst_147 : f32 to vector<8x128xf32>
    %391 = arith.addf %390, %389 : vector<8x128xf32>
    %392 = arith.divf %390, %391 : vector<8x128xf32>
    %393 = arith.mulf %384, %365 : vector<8x128xf32>
    %394 = arith.mulf %378, %386 : vector<8x128xf32>
    %395 = arith.addf %393, %394 : vector<8x128xf32>
    %396 = math.tanh %395 : vector<8x128xf32>
    %397 = arith.mulf %392, %396 : vector<8x128xf32>
    %c24_148 = arith.constant 24 : index
    %c0_149 = arith.constant 0 : index
    %398 = vector.load %arg10[%c24_148, %c0_149] : memref<64x512xf32, #tpu.memory_space<vmem>>, vector<8x512xf32>
    %399 = arith.truncf %397 : vector<8x128xf32> to vector<8x128xbf16>
    %c0_150 = arith.constant 0 : index
    %c0_151 = arith.constant 0 : index
    %400 = vector.load %arg5[%c0_150, %c0_151] : memref<128x512xbf16, #tpu.memory_space<vmem>>, vector<128x512xbf16>
    %cst_152 = arith.constant dense<0.000000e+00> : vector<8x512xf32>
    %401 = tpu.matmul %399, %400, %cst_152 {dimension_numbers = #tpu.dot_dimension_numbers<[1], [0], [0], [1], [0, 0, 1, 1], [], []>} : vector<8x128xbf16>, vector<128x512xbf16>, vector<8x512xf32> -> vector<8x512xf32>
    %402 = arith.addf %398, %401 : vector<8x512xf32>
    %403 = vector.extract_strided_slice %402 {offsets = [0, 0], sizes = [8, 128], strides = [1, 1]} : vector<8x512xf32> to vector<8x128xf32>
    %404 = arith.negf %403 : vector<8x128xf32>
    %405 = math.exp %404 : vector<8x128xf32>
    %cst_153 = arith.constant 1.000000e+00 : f32
    %406 = vector.broadcast %cst_153 : f32 to vector<8x128xf32>
    %407 = arith.addf %406, %405 : vector<8x128xf32>
    %408 = arith.divf %406, %407 : vector<8x128xf32>
    %409 = vector.extract_strided_slice %402 {offsets = [0, 128], sizes = [8, 128], strides = [1, 1]} : vector<8x512xf32> to vector<8x128xf32>
    %410 = arith.negf %409 : vector<8x128xf32>
    %411 = math.exp %410 : vector<8x128xf32>
    %cst_154 = arith.constant 1.000000e+00 : f32
    %412 = vector.broadcast %cst_154 : f32 to vector<8x128xf32>
    %413 = arith.addf %412, %411 : vector<8x128xf32>
    %414 = arith.divf %412, %413 : vector<8x128xf32>
    %415 = vector.extract_strided_slice %402 {offsets = [0, 256], sizes = [8, 128], strides = [1, 1]} : vector<8x512xf32> to vector<8x128xf32>
    %416 = math.tanh %415 : vector<8x128xf32>
    %417 = vector.extract_strided_slice %402 {offsets = [0, 384], sizes = [8, 128], strides = [1, 1]} : vector<8x512xf32> to vector<8x128xf32>
    %418 = arith.negf %417 : vector<8x128xf32>
    %419 = math.exp %418 : vector<8x128xf32>
    %cst_155 = arith.constant 1.000000e+00 : f32
    %420 = vector.broadcast %cst_155 : f32 to vector<8x128xf32>
    %421 = arith.addf %420, %419 : vector<8x128xf32>
    %422 = arith.divf %420, %421 : vector<8x128xf32>
    %423 = arith.mulf %414, %395 : vector<8x128xf32>
    %424 = arith.mulf %408, %416 : vector<8x128xf32>
    %425 = arith.addf %423, %424 : vector<8x128xf32>
    %426 = math.tanh %425 : vector<8x128xf32>
    %427 = arith.mulf %422, %426 : vector<8x128xf32>
    %c32_156 = arith.constant 32 : index
    %c0_157 = arith.constant 0 : index
    %428 = vector.load %arg10[%c32_156, %c0_157] : memref<64x512xf32, #tpu.memory_space<vmem>>, vector<8x512xf32>
    %429 = arith.truncf %427 : vector<8x128xf32> to vector<8x128xbf16>
    %c0_158 = arith.constant 0 : index
    %c0_159 = arith.constant 0 : index
    %430 = vector.load %arg5[%c0_158, %c0_159] : memref<128x512xbf16, #tpu.memory_space<vmem>>, vector<128x512xbf16>
    %cst_160 = arith.constant dense<0.000000e+00> : vector<8x512xf32>
    %431 = tpu.matmul %429, %430, %cst_160 {dimension_numbers = #tpu.dot_dimension_numbers<[1], [0], [0], [1], [0, 0, 1, 1], [], []>} : vector<8x128xbf16>, vector<128x512xbf16>, vector<8x512xf32> -> vector<8x512xf32>
    %432 = arith.addf %428, %431 : vector<8x512xf32>
    %433 = vector.extract_strided_slice %432 {offsets = [0, 0], sizes = [8, 128], strides = [1, 1]} : vector<8x512xf32> to vector<8x128xf32>
    %434 = arith.negf %433 : vector<8x128xf32>
    %435 = math.exp %434 : vector<8x128xf32>
    %cst_161 = arith.constant 1.000000e+00 : f32
    %436 = vector.broadcast %cst_161 : f32 to vector<8x128xf32>
    %437 = arith.addf %436, %435 : vector<8x128xf32>
    %438 = arith.divf %436, %437 : vector<8x128xf32>
    %439 = vector.extract_strided_slice %432 {offsets = [0, 128], sizes = [8, 128], strides = [1, 1]} : vector<8x512xf32> to vector<8x128xf32>
    %440 = arith.negf %439 : vector<8x128xf32>
    %441 = math.exp %440 : vector<8x128xf32>
    %cst_162 = arith.constant 1.000000e+00 : f32
    %442 = vector.broadcast %cst_162 : f32 to vector<8x128xf32>
    %443 = arith.addf %442, %441 : vector<8x128xf32>
    %444 = arith.divf %442, %443 : vector<8x128xf32>
    %445 = vector.extract_strided_slice %432 {offsets = [0, 256], sizes = [8, 128], strides = [1, 1]} : vector<8x512xf32> to vector<8x128xf32>
    %446 = math.tanh %445 : vector<8x128xf32>
    %447 = vector.extract_strided_slice %432 {offsets = [0, 384], sizes = [8, 128], strides = [1, 1]} : vector<8x512xf32> to vector<8x128xf32>
    %448 = arith.negf %447 : vector<8x128xf32>
    %449 = math.exp %448 : vector<8x128xf32>
    %cst_163 = arith.constant 1.000000e+00 : f32
    %450 = vector.broadcast %cst_163 : f32 to vector<8x128xf32>
    %451 = arith.addf %450, %449 : vector<8x128xf32>
    %452 = arith.divf %450, %451 : vector<8x128xf32>
    %453 = arith.mulf %444, %425 : vector<8x128xf32>
    %454 = arith.mulf %438, %446 : vector<8x128xf32>
    %455 = arith.addf %453, %454 : vector<8x128xf32>
    %456 = math.tanh %455 : vector<8x128xf32>
    %457 = arith.mulf %452, %456 : vector<8x128xf32>
    %c40_164 = arith.constant 40 : index
    %c0_165 = arith.constant 0 : index
    %458 = vector.load %arg10[%c40_164, %c0_165] : memref<64x512xf32, #tpu.memory_space<vmem>>, vector<8x512xf32>
    %459 = arith.truncf %457 : vector<8x128xf32> to vector<8x128xbf16>
    %c0_166 = arith.constant 0 : index
    %c0_167 = arith.constant 0 : index
    %460 = vector.load %arg5[%c0_166, %c0_167] : memref<128x512xbf16, #tpu.memory_space<vmem>>, vector<128x512xbf16>
    %cst_168 = arith.constant dense<0.000000e+00> : vector<8x512xf32>
    %461 = tpu.matmul %459, %460, %cst_168 {dimension_numbers = #tpu.dot_dimension_numbers<[1], [0], [0], [1], [0, 0, 1, 1], [], []>} : vector<8x128xbf16>, vector<128x512xbf16>, vector<8x512xf32> -> vector<8x512xf32>
    %462 = arith.addf %458, %461 : vector<8x512xf32>
    %463 = vector.extract_strided_slice %462 {offsets = [0, 0], sizes = [8, 128], strides = [1, 1]} : vector<8x512xf32> to vector<8x128xf32>
    %464 = arith.negf %463 : vector<8x128xf32>
    %465 = math.exp %464 : vector<8x128xf32>
    %cst_169 = arith.constant 1.000000e+00 : f32
    %466 = vector.broadcast %cst_169 : f32 to vector<8x128xf32>
    %467 = arith.addf %466, %465 : vector<8x128xf32>
    %468 = arith.divf %466, %467 : vector<8x128xf32>
    %469 = vector.extract_strided_slice %462 {offsets = [0, 128], sizes = [8, 128], strides = [1, 1]} : vector<8x512xf32> to vector<8x128xf32>
    %470 = arith.negf %469 : vector<8x128xf32>
    %471 = math.exp %470 : vector<8x128xf32>
    %cst_170 = arith.constant 1.000000e+00 : f32
    %472 = vector.broadcast %cst_170 : f32 to vector<8x128xf32>
    %473 = arith.addf %472, %471 : vector<8x128xf32>
    %474 = arith.divf %472, %473 : vector<8x128xf32>
    %475 = vector.extract_strided_slice %462 {offsets = [0, 256], sizes = [8, 128], strides = [1, 1]} : vector<8x512xf32> to vector<8x128xf32>
    %476 = math.tanh %475 : vector<8x128xf32>
    %477 = vector.extract_strided_slice %462 {offsets = [0, 384], sizes = [8, 128], strides = [1, 1]} : vector<8x512xf32> to vector<8x128xf32>
    %478 = arith.negf %477 : vector<8x128xf32>
    %479 = math.exp %478 : vector<8x128xf32>
    %cst_171 = arith.constant 1.000000e+00 : f32
    %480 = vector.broadcast %cst_171 : f32 to vector<8x128xf32>
    %481 = arith.addf %480, %479 : vector<8x128xf32>
    %482 = arith.divf %480, %481 : vector<8x128xf32>
    %483 = arith.mulf %474, %455 : vector<8x128xf32>
    %484 = arith.mulf %468, %476 : vector<8x128xf32>
    %485 = arith.addf %483, %484 : vector<8x128xf32>
    %486 = math.tanh %485 : vector<8x128xf32>
    %487 = arith.mulf %482, %486 : vector<8x128xf32>
    %c48_172 = arith.constant 48 : index
    %c0_173 = arith.constant 0 : index
    %488 = vector.load %arg10[%c48_172, %c0_173] : memref<64x512xf32, #tpu.memory_space<vmem>>, vector<8x512xf32>
    %489 = arith.truncf %487 : vector<8x128xf32> to vector<8x128xbf16>
    %c0_174 = arith.constant 0 : index
    %c0_175 = arith.constant 0 : index
    %490 = vector.load %arg5[%c0_174, %c0_175] : memref<128x512xbf16, #tpu.memory_space<vmem>>, vector<128x512xbf16>
    %cst_176 = arith.constant dense<0.000000e+00> : vector<8x512xf32>
    %491 = tpu.matmul %489, %490, %cst_176 {dimension_numbers = #tpu.dot_dimension_numbers<[1], [0], [0], [1], [0, 0, 1, 1], [], []>} : vector<8x128xbf16>, vector<128x512xbf16>, vector<8x512xf32> -> vector<8x512xf32>
    %492 = arith.addf %488, %491 : vector<8x512xf32>
    %493 = vector.extract_strided_slice %492 {offsets = [0, 0], sizes = [8, 128], strides = [1, 1]} : vector<8x512xf32> to vector<8x128xf32>
    %494 = arith.negf %493 : vector<8x128xf32>
    %495 = math.exp %494 : vector<8x128xf32>
    %cst_177 = arith.constant 1.000000e+00 : f32
    %496 = vector.broadcast %cst_177 : f32 to vector<8x128xf32>
    %497 = arith.addf %496, %495 : vector<8x128xf32>
    %498 = arith.divf %496, %497 : vector<8x128xf32>
    %499 = vector.extract_strided_slice %492 {offsets = [0, 128], sizes = [8, 128], strides = [1, 1]} : vector<8x512xf32> to vector<8x128xf32>
    %500 = arith.negf %499 : vector<8x128xf32>
    %501 = math.exp %500 : vector<8x128xf32>
    %cst_178 = arith.constant 1.000000e+00 : f32
    %502 = vector.broadcast %cst_178 : f32 to vector<8x128xf32>
    %503 = arith.addf %502, %501 : vector<8x128xf32>
    %504 = arith.divf %502, %503 : vector<8x128xf32>
    %505 = vector.extract_strided_slice %492 {offsets = [0, 256], sizes = [8, 128], strides = [1, 1]} : vector<8x512xf32> to vector<8x128xf32>
    %506 = math.tanh %505 : vector<8x128xf32>
    %507 = vector.extract_strided_slice %492 {offsets = [0, 384], sizes = [8, 128], strides = [1, 1]} : vector<8x512xf32> to vector<8x128xf32>
    %508 = arith.negf %507 : vector<8x128xf32>
    %509 = math.exp %508 : vector<8x128xf32>
    %cst_179 = arith.constant 1.000000e+00 : f32
    %510 = vector.broadcast %cst_179 : f32 to vector<8x128xf32>
    %511 = arith.addf %510, %509 : vector<8x128xf32>
    %512 = arith.divf %510, %511 : vector<8x128xf32>
    %513 = arith.mulf %504, %485 : vector<8x128xf32>
    %514 = arith.mulf %498, %506 : vector<8x128xf32>
    %515 = arith.addf %513, %514 : vector<8x128xf32>
    %516 = math.tanh %515 : vector<8x128xf32>
    %517 = arith.mulf %512, %516 : vector<8x128xf32>
    %c56_180 = arith.constant 56 : index
    %c0_181 = arith.constant 0 : index
    %518 = vector.load %arg10[%c56_180, %c0_181] : memref<64x512xf32, #tpu.memory_space<vmem>>, vector<8x512xf32>
    %519 = arith.truncf %517 : vector<8x128xf32> to vector<8x128xbf16>
    %c0_182 = arith.constant 0 : index
    %c0_183 = arith.constant 0 : index
    %520 = vector.load %arg5[%c0_182, %c0_183] : memref<128x512xbf16, #tpu.memory_space<vmem>>, vector<128x512xbf16>
    %cst_184 = arith.constant dense<0.000000e+00> : vector<8x512xf32>
    %521 = tpu.matmul %519, %520, %cst_184 {dimension_numbers = #tpu.dot_dimension_numbers<[1], [0], [0], [1], [0, 0, 1, 1], [], []>} : vector<8x128xbf16>, vector<128x512xbf16>, vector<8x512xf32> -> vector<8x512xf32>
    %522 = arith.addf %518, %521 : vector<8x512xf32>
    %523 = vector.extract_strided_slice %522 {offsets = [0, 0], sizes = [8, 128], strides = [1, 1]} : vector<8x512xf32> to vector<8x128xf32>
    %524 = arith.negf %523 : vector<8x128xf32>
    %525 = math.exp %524 : vector<8x128xf32>
    %cst_185 = arith.constant 1.000000e+00 : f32
    %526 = vector.broadcast %cst_185 : f32 to vector<8x128xf32>
    %527 = arith.addf %526, %525 : vector<8x128xf32>
    %528 = arith.divf %526, %527 : vector<8x128xf32>
    %529 = vector.extract_strided_slice %522 {offsets = [0, 128], sizes = [8, 128], strides = [1, 1]} : vector<8x512xf32> to vector<8x128xf32>
    %530 = arith.negf %529 : vector<8x128xf32>
    %531 = math.exp %530 : vector<8x128xf32>
    %cst_186 = arith.constant 1.000000e+00 : f32
    %532 = vector.broadcast %cst_186 : f32 to vector<8x128xf32>
    %533 = arith.addf %532, %531 : vector<8x128xf32>
    %534 = arith.divf %532, %533 : vector<8x128xf32>
    %535 = vector.extract_strided_slice %522 {offsets = [0, 256], sizes = [8, 128], strides = [1, 1]} : vector<8x512xf32> to vector<8x128xf32>
    %536 = math.tanh %535 : vector<8x128xf32>
    %537 = vector.extract_strided_slice %522 {offsets = [0, 384], sizes = [8, 128], strides = [1, 1]} : vector<8x512xf32> to vector<8x128xf32>
    %538 = arith.negf %537 : vector<8x128xf32>
    %539 = math.exp %538 : vector<8x128xf32>
    %cst_187 = arith.constant 1.000000e+00 : f32
    %540 = vector.broadcast %cst_187 : f32 to vector<8x128xf32>
    %541 = arith.addf %540, %539 : vector<8x128xf32>
    %542 = arith.divf %540, %541 : vector<8x128xf32>
    %543 = arith.mulf %534, %515 : vector<8x128xf32>
    %544 = arith.mulf %528, %536 : vector<8x128xf32>
    %545 = arith.addf %543, %544 : vector<8x128xf32>
    %546 = math.tanh %545 : vector<8x128xf32>
    %547 = arith.mulf %542, %546 : vector<8x128xf32>
    %548 = arith.truncf %547 : vector<8x128xf32> to vector<8x128xbf16>
    %c0_188 = arith.constant 0 : index
    %c0_189 = arith.constant 0 : index
    %549 = vector.load %arg7[%c0_188, %c0_189] : memref<128x128xbf16, #tpu.memory_space<vmem>>, vector<128x128xbf16>
    %cst_190 = arith.constant dense<0.000000e+00> : vector<8x128xf32>
    %550 = tpu.matmul %548, %549, %cst_190 {dimension_numbers = #tpu.dot_dimension_numbers<[1], [0], [0], [1], [0, 0, 1, 1], [], []>} : vector<8x128xbf16>, vector<128x128xbf16>, vector<8x128xf32> -> vector<8x128xf32>
    %c0_191 = arith.constant 0 : index
    %c0_192 = arith.constant 0 : index
    %551 = vector.load %arg8[%c0_191, %c0_192] : memref<1x128xf32, #tpu.memory_space<vmem>>, vector<1x128xf32>
    %552 = vector.broadcast %551 : vector<1x128xf32> to vector<8x128xf32>
    %553 = arith.addf %550, %552 : vector<8x128xf32>
    %c0_193 = arith.constant 0 : index
    %c0_194 = arith.constant 0 : index
    %554 = vector.load %arg9[%c0_193, %c0_194] : memref<8x128xf32, #tpu.memory_space<vmem>>, vector<8x128xf32>
    tpu.vector_store %arg9[%c0_193, %c0_194], %553 {strides = array<i32>} : memref<8x128xf32, #tpu.memory_space<vmem>>, vector<8x128xf32>,
    return
  }
}

</mosaic_0001>

<llo_original>
// kernel: tpu_custom_call.1
$region0: #{tpu_custom_call.1}
  #allocation0 [shape = 'u32[]', space=smem, size = 0x4, offset = 0x4, fixed_abs, tag = 'smem constant byte address 0x4 - core index']
  #allocation1 [shape = 'u32[144,128]{1,0:T(1,128)}', space=vmem, size = 0x12000, scoped, tag = 'internal scratch']
  #allocation2 [shape = 'f32[64,512]{1,0:T(8,128)}', space=vmem, size = 0x20000, scoped, tag = 'scratch operand']
  %s0 = inlined_call_operand.vmem [shape: f32[64,16], index: 0, kind: input, shape index: {}]
  %s1 = inlined_call_operand.hbm [shape: bf16[16,512], index: 1, kind: input, shape index: {}]
  %s2 = inlined_call_operand.hbm [shape: bf16[128,512], index: 2, kind: input, shape index: {}]
  %s3 = inlined_call_operand.vmem [shape: f32[1,512], index: 3, kind: input, shape index: {}]
  %s4 = inlined_call_operand.hbm [shape: bf16[128,512], index: 4, kind: input, shape index: {}]
  %s5 = inlined_call_operand.hbm [shape: bf16[128,512], index: 5, kind: input, shape index: {}]
  %s6 = inlined_call_operand.vmem [shape: f32[1,512], index: 6, kind: input, shape index: {}]
  %s7 = inlined_call_operand.vmem [shape: bf16[128,128], index: 7, kind: input, shape index: {}]
  %s8 = inlined_call_operand.vmem [shape: f32[1,128], index: 8, kind: input, shape index: {}]
  %s9 = inlined_call_operand.hbm [shape: f32[8,128], index: 9, kind: output, shape index: {}]
  %s10 = sld [smem:[#allocation0]]
  $region62: #{tpu_custom_call.1} parent=0
    _
  %s12 = ssub.s32 1, %s10
  %s13 = scalar_select 0, %s12, %s10
  $region1: #{tpu_custom_call.1} parent=0
    #allocation3 [shape = 'u8[16384]{0}', space=vmem, size = 0x4000, scoped, tag = 'input window, operand 1, single buffered']
    #allocation4 [shape = 's32[1]{0}', space=sflag, size = 0x4, scoped, tag = 'scoped memory for tpu_custom_call.1']
    #allocation5 [shape = 's32[1]{0}', space=sflag, size = 0x4, scoped, tag = 'scoped memory for tpu_custom_call.1']
    #allocation6 [shape = 'u8[131072]{0}', space=vmem, size = 0x20000, scoped, tag = 'input window, operand 2, single buffered']
    #allocation7 [shape = 's32[1]{0}', space=sflag, size = 0x4, scoped, tag = 'scoped memory for tpu_custom_call.1']
    #allocation8 [shape = 'u8[131072]{0}', space=vmem, size = 0x20000, scoped, tag = 'input window, operand 4, single buffered']
    #allocation9 [shape = 'u8[131072]{0}', space=vmem, size = 0x20000, scoped, tag = 'input window, operand 5, single buffered']
    #allocation10 [shape = 's32[1]{0}', space=sflag, size = 0x4, scoped, tag = 'scoped memory for tpu_custom_call.1']
    #allocation11 [shape = 'u8[4096]{0}', space=vmem, size = 0x1000, scoped, tag = 'output window, operand 0, single buffered']
    %14 = vsyncpa [#allocation4], 0
    %15 = vsyncpa [#allocation7], 0
    %16 = vsyncpa [#allocation10], 0
    %17 = vsyncpa [#allocation5], 0
    // Predicated region
    $region2: #{tpu_custom_call.1} parent=1 // pred_check
      _
    $region3: #{tpu_custom_call.1} parent=1 // pred_check_branch
      %19 = sbr.rel (0) target = $region5
    $region4: #{tpu_custom_call.1} parent=1 // pred_region
      _
    $region5: #{tpu_custom_call.1} parent=1 // pred_fallthru
      _
    // Predicated region
    $region6: #{tpu_custom_call.1} parent=1 // pred_check
      _
    $region7: #{tpu_custom_call.1} parent=1 // pred_check_branch
      %21 = sbr.rel (0) target = $region9
    $region8: #{tpu_custom_call.1} parent=1 // pred_region
      %s23 = ssub.s32 512, 512
      %24 = vsyncadd [#allocation4], %s23
      %s25 = sshll.u32 [#allocation3], 4
      %s26 = int_to_ptr.vmem [resolvable:$true] %s25
      %31 = dma.hbm_to_vmem [thread:$0]  %s1, 512, %s26, [#allocation4], 256, 256, 16
    $region9: #{tpu_custom_call.1} parent=1 // pred_fallthru
      _
    // Predicated region
    $region10: #{tpu_custom_call.1} parent=1 // pred_check
      _
    $region11: #{tpu_custom_call.1} parent=1 // pred_check_branch
      %33 = sbr.rel (0) target = $region13
    $region12: #{tpu_custom_call.1} parent=1 // pred_region
      %s35 = ssub.s32 4096, 4096
      %36 = vsyncadd [#allocation7], %s35
      %s37 = sshll.u32 [#allocation6], 4
      %s38 = int_to_ptr.vmem [resolvable:$true] %s37
      %43 = dma.hbm_to_vmem [thread:$0]  %s2, 4096, %s38, [#allocation7], 256, 256, 16
    $region13: #{tpu_custom_call.1} parent=1 // pred_fallthru
      _
    // Predicated region
    $region14: #{tpu_custom_call.1} parent=1 // pred_check
      _
    $region15: #{tpu_custom_call.1} parent=1 // pred_check_branch
      %45 = sbr.rel (0) target = $region17
    $region16: #{tpu_custom_call.1} parent=1 // pred_region
      _
    $region17: #{tpu_custom_call.1} parent=1 // pred_fallthru
      _
    // Predicated region
    $region18: #{tpu_custom_call.1} parent=1 // pred_check
      _
    $region19: #{tpu_custom_call.1} parent=1 // pred_check_branch
      %47 = sbr.rel (0) target = $region21
    $region20: #{tpu_custom_call.1} parent=1 // pred_region
      %s49 = ssub.s32 4096, 4096
      %50 = vsyncadd [#allocation7], %s49
      %s51 = sshll.u32 [#allocation8], 4
      %s52 = int_to_ptr.vmem [resolvable:$true] %s51
      %57 = dma.hbm_to_vmem [thread:$0]  %s4, 4096, %s52, [#allocation7], 256, 256, 16
    $region21: #{tpu_custom_call.1} parent=1 // pred_fallthru
      _
    // Predicated region
    $region22: #{tpu_custom_call.1} parent=1 // pred_check
      _
    $region23: #{tpu_custom_call.1} parent=1 // pred_check_branch
      %59 = sbr.rel (0) target = $region25
    $region24: #{tpu_custom_call.1} parent=1 // pred_region
      %s61 = ssub.s32 4096, 4096
      %62 = vsyncadd [#allocation10], %s61
      %s63 = sshll.u32 [#allocation9], 4
      %s64 = int_to_ptr.vmem [resolvable:$true] %s63
      %69 = dma.hbm_to_vmem [thread:$0]  %s5, 4096, %s64, [#allocation10], 256, 256, 16
    $region25: #{tpu_custom_call.1} parent=1 // pred_fallthru
      _
    // Predicated region
    $region26: #{tpu_custom_call.1} parent=1 // pred_check
      _
    $region27: #{tpu_custom_call.1} parent=1 // pred_check_branch
      %71 = sbr.rel (0) target = $region29
    $region28: #{tpu_custom_call.1} parent=1 // pred_region
      _
    $region29: #{tpu_custom_call.1} parent=1 // pred_fallthru
      _
    // Predicated region
    $region30: #{tpu_custom_call.1} parent=1 // pred_check
      _
    $region31: #{tpu_custom_call.1} parent=1 // pred_check_branch
      %73 = sbr.rel (0) target = $region33
    $region32: #{tpu_custom_call.1} parent=1 // pred_region
      _
    $region33: #{tpu_custom_call.1} parent=1 // pred_fallthru
      _
    // Predicated region
    $region34: #{tpu_custom_call.1} parent=1 // pred_check
      _
    $region35: #{tpu_custom_call.1} parent=1 // pred_check_branch
      %75 = sbr.rel (0) target = $region37
    $region36: #{tpu_custom_call.1} parent=1 // pred_region
      _
    $region37: #{tpu_custom_call.1} parent=1 // pred_fallthru
      _
    // Predicated region
    $region38: #{tpu_custom_call.1} parent=1 // pred_check
      _
    $region39: #{tpu_custom_call.1} parent=1 // pred_check_branch
      %77 = sbr.rel (0) target = $region41
    $region40: #{tpu_custom_call.1} parent=1 // pred_region
      %78 = dma.done [#allocation4], 512
    $region41: #{tpu_custom_call.1} parent=1 // pred_fallthru
      _
    // Predicated region
    $region42: #{tpu_custom_call.1} parent=1 // pred_check
      _
    $region43: #{tpu_custom_call.1} parent=1 // pred_check_branch
      %80 = sbr.rel (0) target = $region45
    $region44: #{tpu_custom_call.1} parent=1 // pred_region
      %81 = dma.done [#allocation7], 4096
    $region45: #{tpu_custom_call.1} parent=1 // pred_fallthru
      _
    // Predicated region
    $region46: #{tpu_custom_call.1} parent=1 // pred_check
      _
    $region47: #{tpu_custom_call.1} parent=1 // pred_check_branch
      %83 = sbr.rel (0) target = $region49
    $region48: #{tpu_custom_call.1} parent=1 // pred_region
      %84 = dma.done [#allocation7], 4096
    $region49: #{tpu_custom_call.1} parent=1 // pred_fallthru
      _
    // Predicated region
    $region50: #{tpu_custom_call.1} parent=1 // pred_check
      _
    $region51: #{tpu_custom_call.1} parent=1 // pred_check_branch
      %86 = sbr.rel (0) target = $region53
    $region52: #{tpu_custom_call.1} parent=1 // pred_region
      %87 = dma.done [#allocation10], 4096
    $region53: #{tpu_custom_call.1} parent=1 // pred_fallthru
      _
    %v89 = vld [vmem:[%s0] sm:$0xff]
    %v90 = vld [vmem:[%s0 + $0x8] sm:$0xff]
    %v91 = vld [vmem:[%s0 + $0x10] sm:$0xff]
    %v92 = vld [vmem:[%s0 + $0x18] sm:$0xff]
    %v93 = vld [vmem:[%s0 + $0x20] sm:$0xff]
    %v94 = vld [vmem:[%s0 + $0x28] sm:$0xff]
    %v95 = vld [vmem:[%s0 + $0x30] sm:$0xff]
    %v96 = vld [vmem:[%s0 + $0x38] sm:$0xff]
    %v97 = vpack.c.bf16 %v90, %v89
    %v98 = vpack.c.bf16 %v92, %v91
    %v99 = vpack.c.bf16 %v94, %v93
    %v100 = vpack.c.bf16 %v96, %v95
    %v101 = vld [vmem:[#allocation3] sm:$0xff]
    %v102 = vld [vmem:[#allocation3 + $0x8] sm:$0xff]
    %v103 = vld [vmem:[#allocation3 + $0x10] sm:$0xff]
    %v104 = vld [vmem:[#allocation3 + $0x18] sm:$0xff]
    %v105 = vld [vmem:[%s3] sm:$0xf]
    %v107 = vlaneseq
    %v108 = vshrl.u32 %v107, 7
    %v109 = vsub.s32 0, %v108
    %v110 = vrot.slane %v105, %v109
    %v111 = vlaneseq
    %v112 = vshrl.u32 %v111, 7
    %v113 = vsub.s32 1, %v112
    %v114 = vrot.slane %v105, %v113
    %v115 = vlaneseq
    %v116 = vshrl.u32 %v115, 7
    %v117 = vsub.s32 2, %v116
    %v118 = vrot.slane %v105, %v117
    %v119 = vlaneseq
    %v120 = vshrl.u32 %v119, 7
    %v121 = vsub.s32 3, %v120
    %v122 = vrot.slane %v105, %v121
    %v131 = vunpack.c.l.b16 %v101
    %v132 = vunpack.c.h.b16 %v101
    %v133 = vunpack.c.l.b16 %v102
    %v134 = vunpack.c.h.b16 %v102
    %v135 = vunpack.c.l.b16 %v103
    %v136 = vunpack.c.h.b16 %v103
    %v137 = vunpack.c.l.b16 %v104
    %v138 = vunpack.c.h.b16 %v104
    %v139 = vpack.c.b16 %v135, %v131
    %v140 = vpack.c.b16 %v136, %v132
    %v141 = vpack.c.b16 %v137, %v133
    %v142 = vpack.c.b16 %v138, %v134
    %vm147 = vcmask 130048
    %v149 = vsel %vm147, %v97, 0
    %v152 = vsel %vm147, %v98, 0
    %v155 = vsel %vm147, %v99, 0
    %v158 = vsel %vm147, %v100, 0
    %160 = vmatprep.subr.bf16.mxu0 0
    %161 = vmatpush1.bf16.msra.mxu0 0
    %162 = vmatprep.subr.bf16.mxu0 0
    %163 = vmatpush1.bf16.msra.mxu0 0
    %164 = vmatprep.subr.bf16.mxu0 0
    %165 = vmatpush1.bf16.msra.mxu0 0
    %166 = vmatprep.subr.bf16.mxu0 0
    %167 = vmatpush1.bf16.msra.mxu0 0
    %168 = vmatprep.subr.bf16.mxu0 0
    %169 = vmatpush1.bf16.msra.mxu0 0
    %170 = vmatprep.subr.bf16.mxu0 0
    %171 = vmatpush1.bf16.msra.mxu0 0
    %172 = vmatprep.subr.bf16.mxu0 0
    %173 = vmatpush1.bf16.msra.mxu0 0
    %174 = vmatprep.subr.bf16.mxu0 %v140
    %175 = vmatpush1.bf16.msra.mxu0 %v139
    %176 = vmatprep.subr.bf16.mxu0 0
    %177 = vmatpush2.bf16.msra.mxu0 0
    %178 = vmatprep.subr.bf16.mxu0 0
    %179 = vmatpush2.bf16.msra.mxu0 0
    %180 = vmatprep.subr.bf16.mxu0 0
    %181 = vmatpush2.bf16.msra.mxu0 0
    %182 = vmatprep.subr.bf16.mxu0 0
    %183 = vmatpush2.bf16.msra.mxu0 0
    %184 = vmatprep.subr.bf16.mxu0 0
    %185 = vmatpush2.bf16.msra.mxu0 0
    %186 = vmatprep.subr.bf16.mxu0 0
    %187 = vmatpush2.bf16.msra.mxu0 0
    %188 = vmatprep.subr.bf16.mxu0 0
    %189 = vmatpush2.bf16.msra.mxu0 0
    %190 = vmatprep.subr.bf16.mxu0 0
    %191 = vmatpush2.bf16.msra.mxu0 0
    %192 = vmatprep.mubr.bf16.mxu0 0
    %193 = vmatmul.mubr.bf16.gmra.mxu0 %v149
    %v194 = vpop.f32.mrf.mxu0
    %v195 = vadd.f32 %v110, %v194
    %v196 = vpop.f32.mrf.mxu0
    %v197 = vadd.f32 %v114, %v196
    %v198 = vpop.f32.mrf.mxu0
    %v199 = vadd.f32 %v110, %v198
    %v200 = vpop.f32.mrf.mxu0
    %v201 = vadd.f32 %v114, %v200
    %202 = vmatprep.mubr.bf16.mxu0 0
    %203 = vmatmul.mubr.bf16.gmra.mxu0 %v152
    %v204 = vpop.f32.mrf.mxu0
    %v205 = vadd.f32 %v110, %v204
    %v206 = vpop.f32.mrf.mxu0
    %v207 = vadd.f32 %v114, %v206
    %v208 = vpop.f32.mrf.mxu0
    %v209 = vadd.f32 %v110, %v208
    %v210 = vpop.f32.mrf.mxu0
    %v211 = vadd.f32 %v114, %v210
    %212 = vmatprep.mubr.bf16.mxu0 0
    %213 = vmatmul.mubr.bf16.gmra.mxu0 %v155
    %v214 = vpop.f32.mrf.mxu0
    %v215 = vadd.f32 %v110, %v214
    %v216 = vpop.f32.mrf.mxu0
    %v217 = vadd.f32 %v114, %v216
    %v218 = vpop.f32.mrf.mxu0
    %v219 = vadd.f32 %v110, %v218
    %v220 = vpop.f32.mrf.mxu0
    %v221 = vadd.f32 %v114, %v220
    %222 = vmatprep.mubr.bf16.mxu0 0
    %223 = vmatmul.mubr.bf16.gmra.mxu0 %v158
    %v224 = vpop.f32.mrf.mxu0
    %v225 = vadd.f32 %v110, %v224
    %v226 = vpop.f32.mrf.mxu0
    %v227 = vadd.f32 %v114, %v226
    %v228 = vpop.f32.mrf.mxu0
    %v229 = vadd.f32 %v110, %v228
    %v230 = vpop.f32.mrf.mxu0
    %v231 = vadd.f32 %v114, %v230
    %232 = vdwg.mxu0
    %233 = vmatprep.subr.bf16.mxu0 0
    %234 = vmatpush1.bf16.msra.mxu0 0
    %235 = vmatprep.subr.bf16.mxu0 0
    %236 = vmatpush1.bf16.msra.mxu0 0
    %237 = vmatprep.subr.bf16.mxu0 0
    %238 = vmatpush1.bf16.msra.mxu0 0
    %239 = vmatprep.subr.bf16.mxu0 0
    %240 = vmatpush1.bf16.msra.mxu0 0
    %241 = vmatprep.subr.bf16.mxu0 0
    %242 = vmatpush1.bf16.msra.mxu0 0
    %243 = vmatprep.subr.bf16.mxu0 0
    %244 = vmatpush1.bf16.msra.mxu0 0
    %245 = vmatprep.subr.bf16.mxu0 0
    %246 = vmatpush1.bf16.msra.mxu0 0
    %247 = vmatprep.subr.bf16.mxu0 %v142
    %248 = vmatpush1.bf16.msra.mxu0 %v141
    %249 = vmatprep.subr.bf16.mxu0 0
    %250 = vmatpush2.bf16.msra.mxu0 0
    %251 = vmatprep.subr.bf16.mxu0 0
    %252 = vmatpush2.bf16.msra.mxu0 0
    %253 = vmatprep.subr.bf16.mxu0 0
    %254 = vmatpush2.bf16.msra.mxu0 0
    %255 = vmatprep.subr.bf16.mxu0 0
    %256 = vmatpush2.bf16.msra.mxu0 0
    %257 = vmatprep.subr.bf16.mxu0 0
    %258 = vmatpush2.bf16.msra.mxu0 0
    %259 = vmatprep.subr.bf16.mxu0 0
    %260 = vmatpush2.bf16.msra.mxu0 0
    %261 = vmatprep.subr.bf16.mxu0 0
    %262 = vmatpush2.bf16.msra.mxu0 0
    %263 = vmatprep.subr.bf16.mxu0 0
    %264 = vmatpush2.bf16.msra.mxu0 0
    %265 = vmatprep.mubr.bf16.mxu0 0
    %266 = vmatmul.mubr.bf16.gmra.mxu0 %v149
    %v267 = vpop.f32.mrf.mxu0
    %v268 = vadd.f32 %v118, %v267
    %v269 = vpop.f32.mrf.mxu0
    %v270 = vadd.f32 %v122, %v269
    %v271 = vpop.f32.mrf.mxu0
    %v272 = vadd.f32 %v118, %v271
    %v273 = vpop.f32.mrf.mxu0
    %v274 = vadd.f32 %v122, %v273
    %275 = vmatprep.mubr.bf16.mxu0 0
    %276 = vmatmul.mubr.bf16.gmra.mxu0 %v152
    %v277 = vpop.f32.mrf.mxu0
    %v278 = vadd.f32 %v118, %v277
    %v279 = vpop.f32.mrf.mxu0
    %v280 = vadd.f32 %v122, %v279
    %v281 = vpop.f32.mrf.mxu0
    %v282 = vadd.f32 %v118, %v281
    %v283 = vpop.f32.mrf.mxu0
    %v284 = vadd.f32 %v122, %v283
    %285 = vmatprep.mubr.bf16.mxu0 0
    %286 = vmatmul.mubr.bf16.gmra.mxu0 %v155
    %v287 = vpop.f32.mrf.mxu0
    %v288 = vadd.f32 %v118, %v287
    %v289 = vpop.f32.mrf.mxu0
    %v290 = vadd.f32 %v122, %v289
    %v291 = vpop.f32.mrf.mxu0
    %v292 = vadd.f32 %v118, %v291
    %v293 = vpop.f32.mrf.mxu0
    %v294 = vadd.f32 %v122, %v293
    %295 = vmatprep.mubr.bf16.mxu0 0
    %296 = vmatmul.mubr.bf16.gmra.mxu0 %v158
    %v297 = vpop.f32.mrf.mxu0
    %v298 = vadd.f32 %v118, %v297
    %v299 = vpop.f32.mrf.mxu0
    %v300 = vadd.f32 %v122, %v299
    %v301 = vpop.f32.mrf.mxu0
    %v302 = vadd.f32 %v118, %v301
    %v303 = vpop.f32.mrf.mxu0
    %v304 = vadd.f32 %v122, %v303
    %305 = vdwg.mxu0
    %306 = vst [vmem:[#allocation2] sm:$0xff] %v195
    %307 = vst [vmem:[#allocation2 + $0x8] sm:$0xff] %v197
    %308 = vst [vmem:[#allocation2 + $0x10] sm:$0xff] %v268
    %309 = vst [vmem:[#allocation2 + $0x18] sm:$0xff] %v270
    %310 = vst [vmem:[#allocation2 + $0x20] sm:$0xff] %v199
    %311 = vst [vmem:[#allocation2 + $0x28] sm:$0xff] %v201
    %312 = vst [vmem:[#allocation2 + $0x30] sm:$0xff] %v272
    %313 = vst [vmem:[#allocation2 + $0x38] sm:$0xff] %v274
    %314 = vst [vmem:[#allocation2 + $0x40] sm:$0xff] %v205
    %315 = vst [vmem:[#allocation2 + $0x48] sm:$0xff] %v207
    %316 = vst [vmem:[#allocation2 + $0x50] sm:$0xff] %v278
    %317 = vst [vmem:[#allocation2 + $0x58] sm:$0xff] %v280
    %318 = vst [vmem:[#allocation2 + $0x60] sm:$0xff] %v209
    %319 = vst [vmem:[#allocation2 + $0x68] sm:$0xff] %v211
    %320 = vst [vmem:[#allocation2 + $0x70] sm:$0xff] %v282
    %321 = vst [vmem:[#allocation2 + $0x78] sm:$0xff] %v284
    %322 = vst [vmem:[#allocation2 + $0x80] sm:$0xff] %v215
    %323 = vst [vmem:[#allocation2 + $0x88] sm:$0xff] %v217
    %324 = vst [vmem:[#allocation2 + $0x90] sm:$0xff] %v288
    %325 = vst [vmem:[#allocation2 + $0x98] sm:$0xff] %v290
    %326 = vst [vmem:[#allocation2 + $0xa0] sm:$0xff] %v219
    %327 = vst [vmem:[#allocation2 + $0xa8] sm:$0xff] %v221
    %328 = vst [vmem:[#allocation2 + $0xb0] sm:$0xff] %v292
    %329 = vst [vmem:[#allocation2 + $0xb8] sm:$0xff] %v294
    %330 = vst [vmem:[#allocation2 + $0xc0] sm:$0xff] %v225
    %331 = vst [vmem:[#allocation2 + $0xc8] sm:$0xff] %v227
    %332 = vst [vmem:[#allocation2 + $0xd0] sm:$0xff] %v298
    %333 = vst [vmem:[#allocation2 + $0xd8] sm:$0xff] %v300
    %334 = vst [vmem:[#allocation2 + $0xe0] sm:$0xff] %v229
    %335 = vst [vmem:[#allocation2 + $0xe8] sm:$0xff] %v231
    %336 = vst [vmem:[#allocation2 + $0xf0] sm:$0xff] %v302
    %337 = vst [vmem:[#allocation2 + $0xf8] sm:$0xff] %v304
    %v338 = vld [vmem:[#allocation2] sm:$0xff]
    %v339 = vld [vmem:[#allocation2 + $0x8] sm:$0xff]
    %v340 = vld [vmem:[#allocation2 + $0x10] sm:$0xff]
    %v341 = vld [vmem:[#allocation2 + $0x18] sm:$0xff]
    %v342 = vld [vmem:[#allocation6] sm:$0xff]
    %v343 = vld [vmem:[#allocation6 + $0x8] sm:$0xff]
    %v344 = vld [vmem:[#allocation6 + $0x10] sm:$0xff]
    %v345 = vld [vmem:[#allocation6 + $0x18] sm:$0xff]
    %v346 = vld [vmem:[#allocation6 + $0x20] sm:$0xff]
    %v347 = vld [vmem:[#allocation6 + $0x28] sm:$0xff]
    %v348 = vld [vmem:[#allocation6 + $0x30] sm:$0xff]
    %v349 = vld [vmem:[#allocation6 + $0x38] sm:$0xff]
    %v350 = vld [vmem:[#allocation6 + $0x40] sm:$0xff]
    %v351 = vld [vmem:[#allocation6 + $0x48] sm:$0xff]
    %v352 = vld [vmem:[#allocation6 + $0x50] sm:$0xff]
    %v353 = vld [vmem:[#allocation6 + $0x58] sm:$0xff]
    %v354 = vld [vmem:[#allocation6 + $0x60] sm:$0xff]
    %v355 = vld [vmem:[#allocation6 + $0x68] sm:$0xff]
    %v356 = vld [vmem:[#allocation6 + $0x70] sm:$0xff]
    %v357 = vld [vmem:[#allocation6 + $0x78] sm:$0xff]
    %v358 = vld [vmem:[#allocation6 + $0x80] sm:$0xff]
    %v359 = vld [vmem:[#allocation6 + $0x88] sm:$0xff]
    %v360 = vld [vmem:[#allocation6 + $0x90] sm:$0xff]
    %v361 = vld [vmem:[#allocation6 + $0x98] sm:$0xff]
    %v362 = vld [vmem:[#allocation6 + $0xa0] sm:$0xff]
    %v363 = vld [vmem:[#allocation6 + $0xa8] sm:$0xff]
    %v364 = vld [vmem:[#allocation6 + $0xb0] sm:$0xff]
    %v365 = vld [vmem:[#allocation6 + $0xb8] sm:$0xff]
    %v366 = vld [vmem:[#allocation6 + $0xc0] sm:$0xff]
    %v367 = vld [vmem:[#allocation6 + $0xc8] sm:$0xff]
    %v368 = vld [vmem:[#allocation6 + $0xd0] sm:$0xff]
    %v369 = vld [vmem:[#allocation6 + $0xd8] sm:$0xff]
    %v370 = vld [vmem:[#allocation6 + $0xe0] sm:$0xff]
    %v371 = vld [vmem:[#allocation6 + $0xe8] sm:$0xff]
    %v372 = vld [vmem:[#allocation6 + $0xf0] sm:$0xff]
    %v373 = vld [vmem:[#allocation6 + $0xf8] sm:$0xff]
    %v406 = vunpack.c.l.b16 %v342
    %v407 = vunpack.c.h.b16 %v342
    %v408 = vunpack.c.l.b16 %v343
    %v409 = vunpack.c.h.b16 %v343
    %v410 = vunpack.c.l.b16 %v344
    %v411 = vunpack.c.h.b16 %v344
    %v412 = vunpack.c.l.b16 %v345
    %v413 = vunpack.c.h.b16 %v345
    %v414 = vunpack.c.l.b16 %v346
    %v415 = vunpack.c.h.b16 %v346
    %v416 = vunpack.c.l.b16 %v347
    %v417 = vunpack.c.h.b16 %v347
    %v418 = vunpack.c.l.b16 %v348
    %v419 = vunpack.c.h.b16 %v348
    %v420 = vunpack.c.l.b16 %v349
    %v421 = vunpack.c.h.b16 %v349
    %v422 = vunpack.c.l.b16 %v350
    %v423 = vunpack.c.h.b16 %v350
    %v424 = vunpack.c.l.b16 %v351
    %v425 = vunpack.c.h.b16 %v351
    %v426 = vunpack.c.l.b16 %v352
    %v427 = vunpack.c.h.b16 %v352
    %v428 = vunpack.c.l.b16 %v353
    %v429 = vunpack.c.h.b16 %v353
    %v430 = vunpack.c.l.b16 %v354
    %v431 = vunpack.c.h.b16 %v354
    %v432 = vunpack.c.l.b16 %v355
    %v433 = vunpack.c.h.b16 %v355
    %v434 = vunpack.c.l.b16 %v356
    %v435 = vunpack.c.h.b16 %v356
    %v436 = vunpack.c.l.b16 %v357
    %v437 = vunpack.c.h.b16 %v357
    %v438 = vunpack.c.l.b16 %v358
    %v439 = vunpack.c.h.b16 %v358
    %v440 = vunpack.c.l.b16 %v359
    %v441 = vunpack.c.h.b16 %v359
    %v442 = vunpack.c.l.b16 %v360
    %v443 = vunpack.c.h.b16 %v360
    %v444 = vunpack.c.l.b16 %v361
    %v445 = vunpack.c.h.b16 %v361
    %v446 = vunpack.c.l.b16 %v362
    %v447 = vunpack.c.h.b16 %v362
    %v448 = vunpack.c.l.b16 %v363
    %v449 = vunpack.c.h.b16 %v363
    %v450 = vunpack.c.l.b16 %v364
    %v451 = vunpack.c.h.b16 %v364
    %v452 = vunpack.c.l.b16 %v365
    %v453 = vunpack.c.h.b16 %v365
    %v454 = vunpack.c.l.b16 %v366
    %v455 = vunpack.c.h.b16 %v366
    %v456 = vunpack.c.l.b16 %v367
    %v457 = vunpack.c.h.b16 %v367
    %v458 = vunpack.c.l.b16 %v368
    %v459 = vunpack.c.h.b16 %v368
    %v460 = vunpack.c.l.b16 %v369
    %v461 = vunpack.c.h.b16 %v369
    %v462 = vunpack.c.l.b16 %v370
    %v463 = vunpack.c.h.b16 %v370
    %v464 = vunpack.c.l.b16 %v371
    %v465 = vunpack.c.h.b16 %v371
    %v466 = vunpack.c.l.b16 %v372
    %v467 = vunpack.c.h.b16 %v372
    %v468 = vunpack.c.l.b16 %v373
    %v469 = vunpack.c.h.b16 %v373
    %v470 = vpack.c.b16 %v410, %v406
    %v471 = vpack.c.b16 %v411, %v407
    %v472 = vpack.c.b16 %v412, %v408
    %v473 = vpack.c.b16 %v413, %v409
    %v474 = vpack.c.b16 %v418, %v414
    %v475 = vpack.c.b16 %v419, %v415
    %v476 = vpack.c.b16 %v420, %v416
    %v477 = vpack.c.b16 %v421, %v417
    %v478 = vpack.c.b16 %v426, %v422
    %v479 = vpack.c.b16 %v427, %v423
    %v480 = vpack.c.b16 %v428, %v424
    %v481 = vpack.c.b16 %v429, %v425
    %v482 = vpack.c.b16 %v434, %v430
    %v483 = vpack.c.b16 %v435, %v431
    %v484 = vpack.c.b16 %v436, %v432
    %v485 = vpack.c.b16 %v437, %v433
    %v486 = vpack.c.b16 %v442, %v438
    %v487 = vpack.c.b16 %v443, %v439
    %v488 = vpack.c.b16 %v444, %v440
    %v489 = vpack.c.b16 %v445, %v441
    %v490 = vpack.c.b16 %v450, %v446
    %v491 = vpack.c.b16 %v451, %v447
    %v492 = vpack.c.b16 %v452, %v448
    %v493 = vpack.c.b16 %v453, %v449
    %v494 = vpack.c.b16 %v458, %v454
    %v495 = vpack.c.b16 %v459, %v455
    %v496 = vpack.c.b16 %v460, %v456
    %v497 = vpack.c.b16 %v461, %v457
    %v498 = vpack.c.b16 %v466, %v462
    %v499 = vpack.c.b16 %v467, %v463
    %v500 = vpack.c.b16 %v468, %v464
    %v501 = vpack.c.b16 %v469, %v465
    %534 = vmatprep.subr.bf16.mxu0 %v499
    %535 = vmatpush1.bf16.msra.mxu0 %v498
    %536 = vmatprep.subr.bf16.mxu0 %v495
    %537 = vmatpush1.bf16.msra.mxu0 %v494
    %538 = vmatprep.subr.bf16.mxu0 %v491
    %539 = vmatpush1.bf16.msra.mxu0 %v490
    %540 = vmatprep.subr.bf16.mxu0 %v487
    %541 = vmatpush1.bf16.msra.mxu0 %v486
    %542 = vmatprep.subr.bf16.mxu0 %v483
    %543 = vmatpush1.bf16.msra.mxu0 %v482
    %544 = vmatprep.subr.bf16.mxu0 %v479
    %545 = vmatpush1.bf16.msra.mxu0 %v478
    %546 = vmatprep.subr.bf16.mxu0 %v475
    %547 = vmatpush1.bf16.msra.mxu0 %v474
    %548 = vmatprep.subr.bf16.mxu0 %v471
    %549 = vmatpush1.bf16.msra.mxu0 %v470
    %550 = vmatprep.subr.bf16.mxu0 0
    %551 = vmatpush2.bf16.msra.mxu0 0
    %552 = vmatprep.subr.bf16.mxu0 0
    %553 = vmatpush2.bf16.msra.mxu0 0
    %554 = vmatprep.subr.bf16.mxu0 0
    %555 = vmatpush2.bf16.msra.mxu0 0
    %556 = vmatprep.subr.bf16.mxu0 0
    %557 = vmatpush2.bf16.msra.mxu0 0
    %558 = vmatprep.subr.bf16.mxu0 0
    %559 = vmatpush2.bf16.msra.mxu0 0
    %560 = vmatprep.subr.bf16.mxu0 0
    %561 = vmatpush2.bf16.msra.mxu0 0
    %562 = vmatprep.subr.bf16.mxu0 0
    %563 = vmatpush2.bf16.msra.mxu0 0
    %564 = vmatprep.subr.bf16.mxu0 0
    %565 = vmatpush2.bf16.msra.mxu0 0
    %566 = vmatprep.mubr.bf16.mxu0 0
    %567 = vmatmul.mubr.bf16.gmra.mxu0 0
    %v568 = vpop.f32.mrf.mxu0
    %v569 = vadd.f32 0.0, %v568
    %v570 = vpop.f32.mrf.mxu0
    %v571 = vadd.f32 0.0, %v570
    %v572 = vpop.f32.mrf.mxu0
    %v573 = vpop.f32.mrf.mxu0
    %574 = vdwg.mxu0
    %575 = vmatprep.subr.bf16.mxu0 %v501
    %576 = vmatpush1.bf16.msra.mxu0 %v500
    %577 = vmatprep.subr.bf16.mxu0 %v497
    %578 = vmatpush1.bf16.msra.mxu0 %v496
    %579 = vmatprep.subr.bf16.mxu0 %v493
    %580 = vmatpush1.bf16.msra.mxu0 %v492
    %581 = vmatprep.subr.bf16.mxu0 %v489
    %582 = vmatpush1.bf16.msra.mxu0 %v488
    %583 = vmatprep.subr.bf16.mxu0 %v485
    %584 = vmatpush1.bf16.msra.mxu0 %v484
    %585 = vmatprep.subr.bf16.mxu0 %v481
    %586 = vmatpush1.bf16.msra.mxu0 %v480
    %587 = vmatprep.subr.bf16.mxu0 %v477
    %588 = vmatpush1.bf16.msra.mxu0 %v476
    %589 = vmatprep.subr.bf16.mxu0 %v473
    %590 = vmatpush1.bf16.msra.mxu0 %v472
    %591 = vmatprep.subr.bf16.mxu0 0
    %592 = vmatpush2.bf16.msra.mxu0 0
    %593 = vmatprep.subr.bf16.mxu0 0
    %594 = vmatpush2.bf16.msra.mxu0 0
    %595 = vmatprep.subr.bf16.mxu0 0
    %596 = vmatpush2.bf16.msra.mxu0 0
    %597 = vmatprep.subr.bf16.mxu0 0
    %598 = vmatpush2.bf16.msra.mxu0 0
    %599 = vmatprep.subr.bf16.mxu0 0
    %600 = vmatpush2.bf16.msra.mxu0 0
    %601 = vmatprep.subr.bf16.mxu0 0
    %602 = vmatpush2.bf16.msra.mxu0 0
    %603 = vmatprep.subr.bf16.mxu0 0
    %604 = vmatpush2.bf16.msra.mxu0 0
    %605 = vmatprep.subr.bf16.mxu0 0
    %606 = vmatpush2.bf16.msra.mxu0 0
    %607 = vmatprep.mubr.bf16.mxu0 0
    %608 = vmatmul.mubr.bf16.gmra.mxu0 0
    %v609 = vpop.f32.mrf.mxu0
    %v610 = vadd.f32 0.0, %v609
    %v611 = vpop.f32.mrf.mxu0
    %v612 = vadd.f32 0.0, %v611
    %v613 = vpop.f32.mrf.mxu0
    %v614 = vpop.f32.mrf.mxu0
    %615 = vdwg.mxu0
    %v616 = vadd.f32 %v338, %v569
    %v617 = vadd.f32 %v339, %v571
    %v618 = vadd.f32 %v340, %v610
    %v619 = vadd.f32 %v341, %v612
    %v620 = vxor.u32 %v616, 2147483648
    %v621 = vmul.f32 %v620, 1.442695
    %v622 = vpow.pop %v621
    %v623 = vadd.f32 %v622, 1.0
    %v624 = vrcp.pop %v623
    %v625 = vmul.f32 1.0, %v624
    %v626 = vxor.u32 %v617, 2147483648
    %v627 = vmul.f32 %v626, 1.442695
    %v628 = vpow.pop %v627
    %v629 = vadd.f32 %v628, 1.0
    %v630 = vrcp.pop %v629
    %v631 = vmul.f32 1.0, %v630
    %v632 = vtanh.pop %v618
    %v633 = vxor.u32 %v619, 2147483648
    %v634 = vmul.f32 %v633, 1.442695
    %v635 = vpow.pop %v634
    %v636 = vadd.f32 %v635, 1.0
    %v637 = vrcp.pop %v636
    %v638 = vmul.f32 1.0, %v637
    %v639 = vmul.f32 %v631, 0.0
    %v640 = vmul.f32 %v625, %v632
    %v641 = vadd.f32 %v639, %v640
    %v642 = vtanh.pop %v641
    %v643 = vmul.f32 %v638, %v642
    %v644 = vpack.c.bf16 %v643, %v643
    %v645 = vld [vmem:[#allocation8] sm:$0xff]
    %v646 = vld [vmem:[#allocation8 + $0x8] sm:$0xff]
    %v647 = vld [vmem:[#allocation8 + $0x10] sm:$0xff]
    %v648 = vld [vmem:[#allocation8 + $0x18] sm:$0xff]
    %v649 = vld [vmem:[#allocation8 + $0x20] sm:$0xff]
    %v650 = vld [vmem:[#allocation8 + $0x28] sm:$0xff]
    %v651 = vld [vmem:[#allocation8 + $0x30] sm:$0xff]
    %v652 = vld [vmem:[#allocation8 + $0x38] sm:$0xff]
    %v653 = vld [vmem:[#allocation8 + $0x40] sm:$0xff]
    %v654 = vld [vmem:[#allocation8 + $0x48] sm:$0xff]
    %v655 = vld [vmem:[#allocation8 + $0x50] sm:$0xff]
    %v656 = vld [vmem:[#allocation8 + $0x58] sm:$0xff]
    %v657 = vld [vmem:[#allocation8 + $0x60] sm:$0xff]
    %v658 = vld [vmem:[#allocation8 + $0x68] sm:$0xff]
    %v659 = vld [vmem:[#allocation8 + $0x70] sm:$0xff]
    %v660 = vld [vmem:[#allocation8 + $0x78] sm:$0xff]
    %v661 = vld [vmem:[#allocation8 + $0x80] sm:$0xff]
    %v662 = vld [vmem:[#allocation8 + $0x88] sm:$0xff]
    %v663 = vld [vmem:[#allocation8 + $0x90] sm:$0xff]
    %v664 = vld [vmem:[#allocation8 + $0x98] sm:$0xff]
    %v665 = vld [vmem:[#allocation8 + $0xa0] sm:$0xff]
    %v666 = vld [vmem:[#allocation8 + $0xa8] sm:$0xff]
    %v667 = vld [vmem:[#allocation8 + $0xb0] sm:$0xff]
    %v668 = vld [vmem:[#allocation8 + $0xb8] sm:$0xff]
    %v669 = vld [vmem:[#allocation8 + $0xc0] sm:$0xff]
    %v670 = vld [vmem:[#allocation8 + $0xc8] sm:$0xff]
    %v671 = vld [vmem:[#allocation8 + $0xd0] sm:$0xff]
    %v672 = vld [vmem:[#allocation8 + $0xd8] sm:$0xff]
    %v673 = vld [vmem:[#allocation8 + $0xe0] sm:$0xff]
    %v674 = vld [vmem:[#allocation8 + $0xe8] sm:$0xff]
    %v675 = vld [vmem:[#allocation8 + $0xf0] sm:$0xff]
    %v676 = vld [vmem:[#allocation8 + $0xf8] sm:$0xff]
    %v677 = vld [vmem:[%s6] sm:$0xf]
    %v679 = vlaneseq
    %v680 = vshrl.u32 %v679, 7
    %v681 = vsub.s32 0, %v680
    %v682 = vrot.slane %v677, %v681
    %v683 = vlaneseq
    %v684 = vshrl.u32 %v683, 7
    %v685 = vsub.s32 1, %v684
    %v686 = vrot.slane %v677, %v685
    %v687 = vlaneseq
    %v688 = vshrl.u32 %v687, 7
    %v689 = vsub.s32 2, %v688
    %v690 = vrot.slane %v677, %v689
    %v691 = vlaneseq
    %v692 = vshrl.u32 %v691, 7
    %v693 = vsub.s32 3, %v692
    %v694 = vrot.slane %v677, %v693
    %v731 = vunpack.c.l.b16 %v645
    %v732 = vunpack.c.h.b16 %v645
    %v733 = vunpack.c.l.b16 %v646
    %v734 = vunpack.c.h.b16 %v646
    %v735 = vunpack.c.l.b16 %v647
    %v736 = vunpack.c.h.b16 %v647
    %v737 = vunpack.c.l.b16 %v648
    %v738 = vunpack.c.h.b16 %v648
    %v739 = vunpack.c.l.b16 %v649
    %v740 = vunpack.c.h.b16 %v649
    %v741 = vunpack.c.l.b16 %v650
    %v742 = vunpack.c.h.b16 %v650
    %v743 = vunpack.c.l.b16 %v651
    %v744 = vunpack.c.h.b16 %v651
    %v745 = vunpack.c.l.b16 %v652
    %v746 = vunpack.c.h.b16 %v652
    %v747 = vunpack.c.l.b16 %v653
    %v748 = vunpack.c.h.b16 %v653
    %v749 = vunpack.c.l.b16 %v654
    %v750 = vunpack.c.h.b16 %v654
    %v751 = vunpack.c.l.b16 %v655
    %v752 = vunpack.c.h.b16 %v655
    %v753 = vunpack.c.l.b16 %v656
    %v754 = vunpack.c.h.b16 %v656
    %v755 = vunpack.c.l.b16 %v657
    %v756 = vunpack.c.h.b16 %v657
    %v757 = vunpack.c.l.b16 %v658
    %v758 = vunpack.c.h.b16 %v658
    %v759 = vunpack.c.l.b16 %v659
    %v760 = vunpack.c.h.b16 %v659
    %v761 = vunpack.c.l.b16 %v660
    %v762 = vunpack.c.h.b16 %v660
    %v763 = vunpack.c.l.b16 %v661
    %v764 = vunpack.c.h.b16 %v661
    %v765 = vunpack.c.l.b16 %v662
    %v766 = vunpack.c.h.b16 %v662
    %v767 = vunpack.c.l.b16 %v663
    %v768 = vunpack.c.h.b16 %v663
    %v769 = vunpack.c.l.b16 %v664
    %v770 = vunpack.c.h.b16 %v664
    %v771 = vunpack.c.l.b16 %v665
    %v772 = vunpack.c.h.b16 %v665
    %v773 = vunpack.c.l.b16 %v666
    %v774 = vunpack.c.h.b16 %v666
    %v775 = vunpack.c.l.b16 %v667
    %v776 = vunpack.c.h.b16 %v667
    %v777 = vunpack.c.l.b16 %v668
    %v778 = vunpack.c.h.b16 %v668
    %v779 = vunpack.c.l.b16 %v669
    %v780 = vunpack.c.h.b16 %v669
    %v781 = vunpack.c.l.b16 %v670
    %v782 = vunpack.c.h.b16 %v670
    %v783 = vunpack.c.l.b16 %v671
    %v784 = vunpack.c.h.b16 %v671
    %v785 = vunpack.c.l.b16 %v672
    %v786 = vunpack.c.h.b16 %v672
    %v787 = vunpack.c.l.b16 %v673
    %v788 = vunpack.c.h.b16 %v673
    %v789 = vunpack.c.l.b16 %v674
    %v790 = vunpack.c.h.b16 %v674
    %v791 = vunpack.c.l.b16 %v675
    %v792 = vunpack.c.h.b16 %v675
    %v793 = vunpack.c.l.b16 %v676
    %v794 = vunpack.c.h.b16 %v676
    %v795 = vpack.c.b16 %v735, %v731
    %v796 = vpack.c.b16 %v736, %v732
    %v797 = vpack.c.b16 %v737, %v733
    %v798 = vpack.c.b16 %v738, %v734
    %v799 = vpack.c.b16 %v743, %v739
    %v800 = vpack.c.b16 %v744, %v740
    %v801 = vpack.c.b16 %v745, %v741
    %v802 = vpack.c.b16 %v746, %v742
    %v803 = vpack.c.b16 %v751, %v747
    %v804 = vpack.c.b16 %v752, %v748
    %v805 = vpack.c.b16 %v753, %v749
    %v806 = vpack.c.b16 %v754, %v750
    %v807 = vpack.c.b16 %v759, %v755
    %v808 = vpack.c.b16 %v760, %v756
    %v809 = vpack.c.b16 %v761, %v757
    %v810 = vpack.c.b16 %v762, %v758
    %v811 = vpack.c.b16 %v767, %v763
    %v812 = vpack.c.b16 %v768, %v764
    %v813 = vpack.c.b16 %v769, %v765
    %v814 = vpack.c.b16 %v770, %v766
    %v815 = vpack.c.b16 %v775, %v771
    %v816 = vpack.c.b16 %v776, %v772
    %v817 = vpack.c.b16 %v777, %v773
    %v818 = vpack.c.b16 %v778, %v774
    %v819 = vpack.c.b16 %v783, %v779
    %v820 = vpack.c.b16 %v784, %v780
    %v821 = vpack.c.b16 %v785, %v781
    %v822 = vpack.c.b16 %v786, %v782
    %v823 = vpack.c.b16 %v791, %v787
    %v824 = vpack.c.b16 %v792, %v788
    %v825 = vpack.c.b16 %v793, %v789
    %v826 = vpack.c.b16 %v794, %v790
    %859 = vmatprep.subr.bf16.mxu0 %v824
    %860 = vmatpush1.bf16.msra.mxu0 %v823
    %861 = vmatprep.subr.bf16.mxu0 %v820
    %862 = vmatpush1.bf16.msra.mxu0 %v819
    %863 = vmatprep.subr.bf16.mxu0 %v816
    %864 = vmatpush1.bf16.msra.mxu0 %v815
    %865 = vmatprep.subr.bf16.mxu0 %v812
    %866 = vmatpush1.bf16.msra.mxu0 %v811
    %867 = vmatprep.subr.bf16.mxu0 %v808
    %868 = vmatpush1.bf16.msra.mxu0 %v807
    %869 = vmatprep.subr.bf16.mxu0 %v804
    %870 = vmatpush1.bf16.msra.mxu0 %v803
    %871 = vmatprep.subr.bf16.mxu0 %v800
    %872 = vmatpush1.bf16.msra.mxu0 %v799
    %873 = vmatprep.subr.bf16.mxu0 %v796
    %874 = vmatpush1.bf16.msra.mxu0 %v795
    %875 = vmatprep.subr.bf16.mxu0 0
    %876 = vmatpush2.bf16.msra.mxu0 0
    %877 = vmatprep.subr.bf16.mxu0 0
    %878 = vmatpush2.bf16.msra.mxu0 0
    %879 = vmatprep.subr.bf16.mxu0 0
    %880 = vmatpush2.bf16.msra.mxu0 0
    %881 = vmatprep.subr.bf16.mxu0 0
    %882 = vmatpush2.bf16.msra.mxu0 0
    %883 = vmatprep.subr.bf16.mxu0 0
    %884 = vmatpush2.bf16.msra.mxu0 0
    %885 = vmatprep.subr.bf16.mxu0 0
    %886 = vmatpush2.bf16.msra.mxu0 0
    %887 = vmatprep.subr.bf16.mxu0 0
    %888 = vmatpush2.bf16.msra.mxu0 0
    %889 = vmatprep.subr.bf16.mxu0 0
    %890 = vmatpush2.bf16.msra.mxu0 0
    %891 = vmatprep.mubr.bf16.mxu0 0
    %892 = vmatmul.mubr.bf16.gmra.mxu0 %v644
    %v893 = vpop.f32.mrf.mxu0
    %v894 = vadd.f32 %v682, %v893
    %v895 = vpop.f32.mrf.mxu0
    %v896 = vadd.f32 %v686, %v895
    %v897 = vpop.f32.mrf.mxu0
    %v898 = vpop.f32.mrf.mxu0
    %899 = vdwg.mxu0
    %900 = vmatprep.subr.bf16.mxu0 %v826
    %901 = vmatpush1.bf16.msra.mxu0 %v825
    %902 = vmatprep.subr.bf16.mxu0 %v822
    %903 = vmatpush1.bf16.msra.mxu0 %v821
    %904 = vmatprep.subr.bf16.mxu0 %v818
    %905 = vmatpush1.bf16.msra.mxu0 %v817
    %906 = vmatprep.subr.bf16.mxu0 %v814
    %907 = vmatpush1.bf16.msra.mxu0 %v813
    %908 = vmatprep.subr.bf16.mxu0 %v810
    %909 = vmatpush1.bf16.msra.mxu0 %v809
    %910 = vmatprep.subr.bf16.mxu0 %v806
    %911 = vmatpush1.bf16.msra.mxu0 %v805
    %912 = vmatprep.subr.bf16.mxu0 %v802
    %913 = vmatpush1.bf16.msra.mxu0 %v801
    %914 = vmatprep.subr.bf16.mxu0 %v798
    %915 = vmatpush1.bf16.msra.mxu0 %v797
    %916 = vmatprep.subr.bf16.mxu0 0
    %917 = vmatpush2.bf16.msra.mxu0 0
    %918 = vmatprep.subr.bf16.mxu0 0
    %919 = vmatpush2.bf16.msra.mxu0 0
    %920 = vmatprep.subr.bf16.mxu0 0
    %921 = vmatpush2.bf16.msra.mxu0 0
    %922 = vmatprep.subr.bf16.mxu0 0
    %923 = vmatpush2.bf16.msra.mxu0 0
    %924 = vmatprep.subr.bf16.mxu0 0
    %925 = vmatpush2.bf16.msra.mxu0 0
    %926 = vmatprep.subr.bf16.mxu0 0
    %927 = vmatpush2.bf16.msra.mxu0 0
    %928 = vmatprep.subr.bf16.mxu0 0
    %929 = vmatpush2.bf16.msra.mxu0 0
    %930 = vmatprep.subr.bf16.mxu0 0
    %931 = vmatpush2.bf16.msra.mxu0 0
    %932 = vmatprep.mubr.bf16.mxu0 0
    %933 = vmatmul.mubr.bf16.gmra.mxu0 %v644
    %v934 = vpop.f32.mrf.mxu0
    %v935 = vadd.f32 %v690, %v934
    %v936 = vpop.f32.mrf.mxu0
    %v937 = vadd.f32 %v694, %v936
    %v938 = vpop.f32.mrf.mxu0
    %v939 = vpop.f32.mrf.mxu0
    %940 = vdwg.mxu0
    %941 = vst [vmem:[#allocation2] sm:$0xff] %v894
    %942 = vst [vmem:[#allocation2 + $0x8] sm:$0xff] %v896
    %943 = vst [vmem:[#allocation2 + $0x10] sm:$0xff] %v935
    %944 = vst [vmem:[#allocation2 + $0x18] sm:$0xff] %v937
    %v945 = vld [vmem:[#allocation2 + $0x20] sm:$0xff]
    %v946 = vld [vmem:[#allocation2 + $0x28] sm:$0xff]
    %v947 = vld [vmem:[#allocation2 + $0x30] sm:$0xff]
    %v948 = vld [vmem:[#allocation2 + $0x38] sm:$0xff]
    %v949 = vld [vmem:[#allocation6] sm:$0xff]
    %v950 = vld [vmem:[#allocation6 + $0x8] sm:$0xff]
    %v951 = vld [vmem:[#allocation6 + $0x10] sm:$0xff]
    %v952 = vld [vmem:[#allocation6 + $0x18] sm:$0xff]
    %v953 = vld [vmem:[#allocation6 + $0x20] sm:$0xff]
    %v954 = vld [vmem:[#allocation6 + $0x28] sm:$0xff]
    %v955 = vld [vmem:[#allocation6 + $0x30] sm:$0xff]
    %v956 = vld [vmem:[#allocation6 + $0x38] sm:$0xff]
    %v957 = vld [vmem:[#allocation6 + $0x40] sm:$0xff]
    %v958 = vld [vmem:[#allocation6 + $0x48] sm:$0xff]
    %v959 = vld [vmem:[#allocation6 + $0x50] sm:$0xff]
    %v960 = vld [vmem:[#allocation6 + $0x58] sm:$0xff]
    %v961 = vld [vmem:[#allocation6 + $0x60] sm:$0xff]
    %v962 = vld [vmem:[#allocation6 + $0x68] sm:$0xff]
    %v963 = vld [vmem:[#allocation6 + $0x70] sm:$0xff]
    %v964 = vld [vmem:[#allocation6 + $0x78] sm:$0xff]
    %v965 = vld [vmem:[#allocation6 + $0x80] sm:$0xff]
    %v966 = vld [vmem:[#allocation6 + $0x88] sm:$0xff]
    %v967 = vld [vmem:[#allocation6 + $0x90] sm:$0xff]
    %v968 = vld [vmem:[#allocation6 + $0x98] sm:$0xff]
    %v969 = vld [vmem:[#allocation6 + $0xa0] sm:$0xff]
    %v970 = vld [vmem:[#allocation6 + $0xa8] sm:$0xff]
    %v971 = vld [vmem:[#allocation6 + $0xb0] sm:$0xff]
    %v972 = vld [vmem:[#allocation6 + $0xb8] sm:$0xff]
    %v973 = vld [vmem:[#allocation6 + $0xc0] sm:$0xff]
    %v974 = vld [vmem:[#allocation6 + $0xc8] sm:$0xff]
    %v975 = vld [vmem:[#allocation6 + $0xd0] sm:$0xff]
    %v976 = vld [vmem:[#allocation6 + $0xd8] sm:$0xff]
    %v977 = vld [vmem:[#allocation6 + $0xe0] sm:$0xff]
    %v978 = vld [vmem:[#allocation6 + $0xe8] sm:$0xff]
    %v979 = vld [vmem:[#allocation6 + $0xf0] sm:$0xff]
    %v980 = vld [vmem:[#allocation6 + $0xf8] sm:$0xff]
    %v1013 = vunpack.c.l.b16 %v949
    %v1014 = vunpack.c.h.b16 %v949
    %v1015 = vunpack.c.l.b16 %v950
    %v1016 = vunpack.c.h.b16 %v950
    %v1017 = vunpack.c.l.b16 %v951
    %v1018 = vunpack.c.h.b16 %v951
    %v1019 = vunpack.c.l.b16 %v952
    %v1020 = vunpack.c.h.b16 %v952
    %v1021 = vunpack.c.l.b16 %v953
    %v1022 = vunpack.c.h.b16 %v953
    %v1023 = vunpack.c.l.b16 %v954
    %v1024 = vunpack.c.h.b16 %v954
    %v1025 = vunpack.c.l.b16 %v955
    %v1026 = vunpack.c.h.b16 %v955
    %v1027 = vunpack.c.l.b16 %v956
    %v1028 = vunpack.c.h.b16 %v956
    %v1029 = vunpack.c.l.b16 %v957
    %v1030 = vunpack.c.h.b16 %v957
    %v1031 = vunpack.c.l.b16 %v958
    %v1032 = vunpack.c.h.b16 %v958
    %v1033 = vunpack.c.l.b16 %v959
    %v1034 = vunpack.c.h.b16 %v959
    %v1035 = vunpack.c.l.b16 %v960
    %v1036 = vunpack.c.h.b16 %v960
    %v1037 = vunpack.c.l.b16 %v961
    %v1038 = vunpack.c.h.b16 %v961
    %v1039 = vunpack.c.l.b16 %v962
    %v1040 = vunpack.c.h.b16 %v962
    %v1041 = vunpack.c.l.b16 %v963
    %v1042 = vunpack.c.h.b16 %v963
    %v1043 = vunpack.c.l.b16 %v964
    %v1044 = vunpack.c.h.b16 %v964
    %v1045 = vunpack.c.l.b16 %v965
    %v1046 = vunpack.c.h.b16 %v965
    %v1047 = vunpack.c.l.b16 %v966
    %v1048 = vunpack.c.h.b16 %v966
    %v1049 = vunpack.c.l.b16 %v967
    %v1050 = vunpack.c.h.b16 %v967
    %v1051 = vunpack.c.l.b16 %v968
    %v1052 = vunpack.c.h.b16 %v968
    %v1053 = vunpack.c.l.b16 %v969
    %v1054 = vunpack.c.h.b16 %v969
    %v1055 = vunpack.c.l.b16 %v970
    %v1056 = vunpack.c.h.b16 %v970
    %v1057 = vunpack.c.l.b16 %v971
    %v1058 = vunpack.c.h.b16 %v971
    %v1059 = vunpack.c.l.b16 %v972
    %v1060 = vunpack.c.h.b16 %v972
    %v1061 = vunpack.c.l.b16 %v973
    %v1062 = vunpack.c.h.b16 %v973
    %v1063 = vunpack.c.l.b16 %v974
    %v1064 = vunpack.c.h.b16 %v974
    %v1065 = vunpack.c.l.b16 %v975
    %v1066 = vunpack.c.h.b16 %v975
    %v1067 = vunpack.c.l.b16 %v976
    %v1068 = vunpack.c.h.b16 %v976
    %v1069 = vunpack.c.l.b16 %v977
    %v1070 = vunpack.c.h.b16 %v977
    %v1071 = vunpack.c.l.b16 %v978
    %v1072 = vunpack.c.h.b16 %v978
    %v1073 = vunpack.c.l.b16 %v979
    %v1074 = vunpack.c.h.b16 %v979
    %v1075 = vunpack.c.l.b16 %v980
    %v1076 = vunpack.c.h.b16 %v980
    %v1077 = vpack.c.b16 %v1017, %v1013
    %v1078 = vpack.c.b16 %v1018, %v1014
    %v1079 = vpack.c.b16 %v1019, %v1015
    %v1080 = vpack.c.b16 %v1020, %v1016
    %v1081 = vpack.c.b16 %v1025, %v1021
    %v1082 = vpack.c.b16 %v1026, %v1022
    %v1083 = vpack.c.b16 %v1027, %v1023
    %v1084 = vpack.c.b16 %v1028, %v1024
    %v1085 = vpack.c.b16 %v1033, %v1029
    %v1086 = vpack.c.b16 %v1034, %v1030
    %v1087 = vpack.c.b16 %v1035, %v1031
    %v1088 = vpack.c.b16 %v1036, %v1032
    %v1089 = vpack.c.b16 %v1041, %v1037
    %v1090 = vpack.c.b16 %v1042, %v1038
    %v1091 = vpack.c.b16 %v1043, %v1039
    %v1092 = vpack.c.b16 %v1044, %v1040
    %v1093 = vpack.c.b16 %v1049, %v1045
    %v1094 = vpack.c.b16 %v1050, %v1046
    %v1095 = vpack.c.b16 %v1051, %v1047
    %v1096 = vpack.c.b16 %v1052, %v1048
    %v1097 = vpack.c.b16 %v1057, %v1053
    %v1098 = vpack.c.b16 %v1058, %v1054
    %v1099 = vpack.c.b16 %v1059, %v1055
    %v1100 = vpack.c.b16 %v1060, %v1056
    %v1101 = vpack.c.b16 %v1065, %v1061
    %v1102 = vpack.c.b16 %v1066, %v1062
    %v1103 = vpack.c.b16 %v1067, %v1063
    %v1104 = vpack.c.b16 %v1068, %v1064
    %v1105 = vpack.c.b16 %v1073, %v1069
    %v1106 = vpack.c.b16 %v1074, %v1070
    %v1107 = vpack.c.b16 %v1075, %v1071
    %v1108 = vpack.c.b16 %v1076, %v1072
    %1141 = vmatprep.subr.bf16.mxu0 %v1106
    %1142 = vmatpush1.bf16.msra.mxu0 %v1105
    %1143 = vmatprep.subr.bf16.mxu0 %v1102
    %1144 = vmatpush1.bf16.msra.mxu0 %v1101
    %1145 = vmatprep.subr.bf16.mxu0 %v1098
    %1146 = vmatpush1.bf16.msra.mxu0 %v1097
    %1147 = vmatprep.subr.bf16.mxu0 %v1094
    %1148 = vmatpush1.bf16.msra.mxu0 %v1093
    %1149 = vmatprep.subr.bf16.mxu0 %v1090
    %1150 = vmatpush1.bf16.msra.mxu0 %v1089
    %1151 = vmatprep.subr.bf16.mxu0 %v1086
    %1152 = vmatpush1.bf16.msra.mxu0 %v1085
    %1153 = vmatprep.subr.bf16.mxu0 %v1082
    %1154 = vmatpush1.bf16.msra.mxu0 %v1081
    %1155 = vmatprep.subr.bf16.mxu0 %v1078
    %1156 = vmatpush1.bf16.msra.mxu0 %v1077
    %1157 = vmatprep.subr.bf16.mxu0 0
    %1158 = vmatpush2.bf16.msra.mxu0 0
    %1159 = vmatprep.subr.bf16.mxu0 0
    %1160 = vmatpush2.bf16.msra.mxu0 0
    %1161 = vmatprep.subr.bf16.mxu0 0
    %1162 = vmatpush2.bf16.msra.mxu0 0
    %1163 = vmatprep.subr.bf16.mxu0 0
    %1164 = vmatpush2.bf16.msra.mxu0 0
    %1165 = vmatprep.subr.bf16.mxu0 0
    %1166 = vmatpush2.bf16.msra.mxu0 0
    %1167 = vmatprep.subr.bf16.mxu0 0
    %1168 = vmatpush2.bf16.msra.mxu0 0
    %1169 = vmatprep.subr.bf16.mxu0 0
    %1170 = vmatpush2.bf16.msra.mxu0 0
    %1171 = vmatprep.subr.bf16.mxu0 0
    %1172 = vmatpush2.bf16.msra.mxu0 0
    %1173 = vmatprep.mubr.bf16.mxu0 0
    %1174 = vmatmul.mubr.bf16.gmra.mxu0 %v644
    %v1175 = vpop.f32.mrf.mxu0
    %v1176 = vadd.f32 0.0, %v1175
    %v1177 = vpop.f32.mrf.mxu0
    %v1178 = vadd.f32 0.0, %v1177
    %v1179 = vpop.f32.mrf.mxu0
    %v1180 = vpop.f32.mrf.mxu0
    %1181 = vdwg.mxu0
    %1182 = vmatprep.subr.bf16.mxu0 %v1108
    %1183 = vmatpush1.bf16.msra.mxu0 %v1107
    %1184 = vmatprep.subr.bf16.mxu0 %v1104
    %1185 = vmatpush1.bf16.msra.mxu0 %v1103
    %1186 = vmatprep.subr.bf16.mxu0 %v1100
    %1187 = vmatpush1.bf16.msra.mxu0 %v1099
    %1188 = vmatprep.subr.bf16.mxu0 %v1096
    %1189 = vmatpush1.bf16.msra.mxu0 %v1095
    %1190 = vmatprep.subr.bf16.mxu0 %v1092
    %1191 = vmatpush1.bf16.msra.mxu0 %v1091
    %1192 = vmatprep.subr.bf16.mxu0 %v1088
    %1193 = vmatpush1.bf16.msra.mxu0 %v1087
    %1194 = vmatprep.subr.bf16.mxu0 %v1084
    %1195 = vmatpush1.bf16.msra.mxu0 %v1083
    %1196 = vmatprep.subr.bf16.mxu0 %v1080
    %1197 = vmatpush1.bf16.msra.mxu0 %v1079
    %1198 = vmatprep.subr.bf16.mxu0 0
    %1199 = vmatpush2.bf16.msra.mxu0 0
    %1200 = vmatprep.subr.bf16.mxu0 0
    %1201 = vmatpush2.bf16.msra.mxu0 0
    %1202 = vmatprep.subr.bf16.mxu0 0
    %1203 = vmatpush2.bf16.msra.mxu0 0
    %1204 = vmatprep.subr.bf16.mxu0 0
    %1205 = vmatpush2.bf16.msra.mxu0 0
    %1206 = vmatprep.subr.bf16.mxu0 0
    %1207 = vmatpush2.bf16.msra.mxu0 0
    %1208 = vmatprep.subr.bf16.mxu0 0
    %1209 = vmatpush2.bf16.msra.mxu0 0
    %1210 = vmatprep.subr.bf16.mxu0 0
    %1211 = vmatpush2.bf16.msra.mxu0 0
    %1212 = vmatprep.subr.bf16.mxu0 0
    %1213 = vmatpush2.bf16.msra.mxu0 0
    %1214 = vmatprep.mubr.bf16.mxu0 0
    %1215 = vmatmul.mubr.bf16.gmra.mxu0 %v644
    %v1216 = vpop.f32.mrf.mxu0
    %v1217 = vadd.f32 0.0, %v1216
    %v1218 = vpop.f32.mrf.mxu0
    %v1219 = vadd.f32 0.0, %v1218
    %v1220 = vpop.f32.mrf.mxu0
    %v1221 = vpop.f32.mrf.mxu0
    %1222 = vdwg.mxu0
    %v1223 = vadd.f32 %v945, %v1176
    %v1224 = vadd.f32 %v946, %v1178
    %v1225 = vadd.f32 %v947, %v1217
    %v1226 = vadd.f32 %v948, %v1219
    %v1227 = vxor.u32 %v1223, 2147483648
    %v1228 = vmul.f32 %v1227, 1.442695
    %v1229 = vpow.pop %v1228
    %v1230 = vadd.f32 %v1229, 1.0
    %v1231 = vrcp.pop %v1230
    %v1232 = vmul.f32 1.0, %v1231
    %v1233 = vxor.u32 %v1224, 2147483648
    %v1234 = vmul.f32 %v1233, 1.442695
    %v1235 = vpow.pop %v1234
    %v1236 = vadd.f32 %v1235, 1.0
    %v1237 = vrcp.pop %v1236
    %v1238 = vmul.f32 1.0, %v1237
    %v1239 = vtanh.pop %v1225
    %v1240 = vxor.u32 %v1226, 2147483648
    %v1241 = vmul.f32 %v1240, 1.442695
    %v1242 = vpow.pop %v1241
    %v1243 = vadd.f32 %v1242, 1.0
    %v1244 = vrcp.pop %v1243
    %v1245 = vmul.f32 1.0, %v1244
    %v1246 = vmul.f32 %v1238, %v641
    %v1247 = vmul.f32 %v1232, %v1239
    %v1248 = vadd.f32 %v1246, %v1247
    %v1249 = vtanh.pop %v1248
    %v1250 = vmul.f32 %v1245, %v1249
    %v1251 = vpack.c.bf16 %v1250, %v1250
    %v1252 = vld [vmem:[#allocation8] sm:$0xff]
    %v1253 = vld [vmem:[#allocation8 + $0x8] sm:$0xff]
    %v1254 = vld [vmem:[#allocation8 + $0x10] sm:$0xff]
    %v1255 = vld [vmem:[#allocation8 + $0x18] sm:$0xff]
    %v1256 = vld [vmem:[#allocation8 + $0x20] sm:$0xff]
    %v1257 = vld [vmem:[#allocation8 + $0x28] sm:$0xff]
    %v1258 = vld [vmem:[#allocation8 + $0x30] sm:$0xff]
    %v1259 = vld [vmem:[#allocation8 + $0x38] sm:$0xff]
    %v1260 = vld [vmem:[#allocation8 + $0x40] sm:$0xff]
    %v1261 = vld [vmem:[#allocation8 + $0x48] sm:$0xff]
    %v1262 = vld [vmem:[#allocation8 + $0x50] sm:$0xff]
    %v1263 = vld [vmem:[#allocation8 + $0x58] sm:$0xff]
    %v1264 = vld [vmem:[#allocation8 + $0x60] sm:$0xff]
    %v1265 = vld [vmem:[#allocation8 + $0x68] sm:$0xff]
    %v1266 = vld [vmem:[#allocation8 + $0x70] sm:$0xff]
    %v1267 = vld [vmem:[#allocation8 + $0x78] sm:$0xff]
    %v1268 = vld [vmem:[#allocation8 + $0x80] sm:$0xff]
    %v1269 = vld [vmem:[#allocation8 + $0x88] sm:$0xff]
    %v1270 = vld [vmem:[#allocation8 + $0x90] sm:$0xff]
    %v1271 = vld [vmem:[#allocation8 + $0x98] sm:$0xff]
    %v1272 = vld [vmem:[#allocation8 + $0xa0] sm:$0xff]
    %v1273 = vld [vmem:[#allocation8 + $0xa8] sm:$0xff]
    %v1274 = vld [vmem:[#allocation8 + $0xb0] sm:$0xff]
    %v1275 = vld [vmem:[#allocation8 + $0xb8] sm:$0xff]
    %v1276 = vld [vmem:[#allocation8 + $0xc0] sm:$0xff]
    %v1277 = vld [vmem:[#allocation8 + $0xc8] sm:$0xff]
    %v1278 = vld [vmem:[#allocation8 + $0xd0] sm:$0xff]
    %v1279 = vld [vmem:[#allocation8 + $0xd8] sm:$0xff]
    %v1280 = vld [vmem:[#allocation8 + $0xe0] sm:$0xff]
    %v1281 = vld [vmem:[#allocation8 + $0xe8] sm:$0xff]
    %v1282 = vld [vmem:[#allocation8 + $0xf0] sm:$0xff]
    %v1283 = vld [vmem:[#allocation8 + $0xf8] sm:$0xff]
    %v1284 = vld [vmem:[%s6] sm:$0xf]
    %v1286 = vlaneseq
    %v1287 = vshrl.u32 %v1286, 7
    %v1288 = vsub.s32 0, %v1287
    %v1289 = vrot.slane %v1284, %v1288
    %v1290 = vlaneseq
    %v1291 = vshrl.u32 %v1290, 7
    %v1292 = vsub.s32 1, %v1291
    %v1293 = vrot.slane %v1284, %v1292
    %v1294 = vlaneseq
    %v1295 = vshrl.u32 %v1294, 7
    %v1296 = vsub.s32 2, %v1295
    %v1297 = vrot.slane %v1284, %v1296
    %v1298 = vlaneseq
    %v1299 = vshrl.u32 %v1298, 7
    %v1300 = vsub.s32 3, %v1299
    %v1301 = vrot.slane %v1284, %v1300
    %v1338 = vunpack.c.l.b16 %v1252
    %v1339 = vunpack.c.h.b16 %v1252
    %v1340 = vunpack.c.l.b16 %v1253
    %v1341 = vunpack.c.h.b16 %v1253
    %v1342 = vunpack.c.l.b16 %v1254
    %v1343 = vunpack.c.h.b16 %v1254
    %v1344 = vunpack.c.l.b16 %v1255
    %v1345 = vunpack.c.h.b16 %v1255
    %v1346 = vunpack.c.l.b16 %v1256
    %v1347 = vunpack.c.h.b16 %v1256
    %v1348 = vunpack.c.l.b16 %v1257
    %v1349 = vunpack.c.h.b16 %v1257
    %v1350 = vunpack.c.l.b16 %v1258
    %v1351 = vunpack.c.h.b16 %v1258
    %v1352 = vunpack.c.l.b16 %v1259
    %v1353 = vunpack.c.h.b16 %v1259
    %v1354 = vunpack.c.l.b16 %v1260
    %v1355 = vunpack.c.h.b16 %v1260
    %v1356 = vunpack.c.l.b16 %v1261
    %v1357 = vunpack.c.h.b16 %v1261
    %v1358 = vunpack.c.l.b16 %v1262
    %v1359 = vunpack.c.h.b16 %v1262
    %v1360 = vunpack.c.l.b16 %v1263
    %v1361 = vunpack.c.h.b16 %v1263
    %v1362 = vunpack.c.l.b16 %v1264
    %v1363 = vunpack.c.h.b16 %v1264
    %v1364 = vunpack.c.l.b16 %v1265
    %v1365 = vunpack.c.h.b16 %v1265
    %v1366 = vunpack.c.l.b16 %v1266
    %v1367 = vunpack.c.h.b16 %v1266
    %v1368 = vunpack.c.l.b16 %v1267
    %v1369 = vunpack.c.h.b16 %v1267
    %v1370 = vunpack.c.l.b16 %v1268
    %v1371 = vunpack.c.h.b16 %v1268
    %v1372 = vunpack.c.l.b16 %v1269
    %v1373 = vunpack.c.h.b16 %v1269
    %v1374 = vunpack.c.l.b16 %v1270
    %v1375 = vunpack.c.h.b16 %v1270
    %v1376 = vunpack.c.l.b16 %v1271
    %v1377 = vunpack.c.h.b16 %v1271
    %v1378 = vunpack.c.l.b16 %v1272
    %v1379 = vunpack.c.h.b16 %v1272
    %v1380 = vunpack.c.l.b16 %v1273
    %v1381 = vunpack.c.h.b16 %v1273
    %v1382 = vunpack.c.l.b16 %v1274
    %v1383 = vunpack.c.h.b16 %v1274
    %v1384 = vunpack.c.l.b16 %v1275
    %v1385 = vunpack.c.h.b16 %v1275
    %v1386 = vunpack.c.l.b16 %v1276
    %v1387 = vunpack.c.h.b16 %v1276
    %v1388 = vunpack.c.l.b16 %v1277
    %v1389 = vunpack.c.h.b16 %v1277
    %v1390 = vunpack.c.l.b16 %v1278
    %v1391 = vunpack.c.h.b16 %v1278
    %v1392 = vunpack.c.l.b16 %v1279
    %v1393 = vunpack.c.h.b16 %v1279
    %v1394 = vunpack.c.l.b16 %v1280
    %v1395 = vunpack.c.h.b16 %v1280
    %v1396 = vunpack.c.l.b16 %v1281
    %v1397 = vunpack.c.h.b16 %v1281
    %v1398 = vunpack.c.l.b16 %v1282
    %v1399 = vunpack.c.h.b16 %v1282
    %v1400 = vunpack.c.l.b16 %v1283
    %v1401 = vunpack.c.h.b16 %v1283
    %v1402 = vpack.c.b16 %v1342, %v1338
    %v1403 = vpack.c.b16 %v1343, %v1339
    %v1404 = vpack.c.b16 %v1344, %v1340
    %v1405 = vpack.c.b16 %v1345, %v1341
    %v1406 = vpack.c.b16 %v1350, %v1346
    %v1407 = vpack.c.b16 %v1351, %v1347
    %v1408 = vpack.c.b16 %v1352, %v1348
    %v1409 = vpack.c.b16 %v1353, %v1349
    %v1410 = vpack.c.b16 %v1358, %v1354
    %v1411 = vpack.c.b16 %v1359, %v1355
    %v1412 = vpack.c.b16 %v1360, %v1356
    %v1413 = vpack.c.b16 %v1361, %v1357
    %v1414 = vpack.c.b16 %v1366, %v1362
    %v1415 = vpack.c.b16 %v1367, %v1363
    %v1416 = vpack.c.b16 %v1368, %v1364
    %v1417 = vpack.c.b16 %v1369, %v1365
    %v1418 = vpack.c.b16 %v1374, %v1370
    %v1419 = vpack.c.b16 %v1375, %v1371
    %v1420 = vpack.c.b16 %v1376, %v1372
    %v1421 = vpack.c.b16 %v1377, %v1373
    %v1422 = vpack.c.b16 %v1382, %v1378
    %v1423 = vpack.c.b16 %v1383, %v1379
    %v1424 = vpack.c.b16 %v1384, %v1380
    %v1425 = vpack.c.b16 %v1385, %v1381
    %v1426 = vpack.c.b16 %v1390, %v1386
    %v1427 = vpack.c.b16 %v1391, %v1387
    %v1428 = vpack.c.b16 %v1392, %v1388
    %v1429 = vpack.c.b16 %v1393, %v1389
    %v1430 = vpack.c.b16 %v1398, %v1394
    %v1431 = vpack.c.b16 %v1399, %v1395
    %v1432 = vpack.c.b16 %v1400, %v1396
    %v1433 = vpack.c.b16 %v1401, %v1397
    %1466 = vmatprep.subr.bf16.mxu0 %v1431
    %1467 = vmatpush1.bf16.msra.mxu0 %v1430
    %1468 = vmatprep.subr.bf16.mxu0 %v1427
    %1469 = vmatpush1.bf16.msra.mxu0 %v1426
    %1470 = vmatprep.subr.bf16.mxu0 %v1423
    %1471 = vmatpush1.bf16.msra.mxu0 %v1422
    %1472 = vmatprep.subr.bf16.mxu0 %v1419
    %1473 = vmatpush1.bf16.msra.mxu0 %v1418
    %1474 = vmatprep.subr.bf16.mxu0 %v1415
    %1475 = vmatpush1.bf16.msra.mxu0 %v1414
    %1476 = vmatprep.subr.bf16.mxu0 %v1411
    %1477 = vmatpush1.bf16.msra.mxu0 %v1410
    %1478 = vmatprep.subr.bf16.mxu0 %v1407
    %1479 = vmatpush1.bf16.msra.mxu0 %v1406
    %1480 = vmatprep.subr.bf16.mxu0 %v1403
    %1481 = vmatpush1.bf16.msra.mxu0 %v1402
    %1482 = vmatprep.subr.bf16.mxu0 0
    %1483 = vmatpush2.bf16.msra.mxu0 0
    %1484 = vmatprep.subr.bf16.mxu0 0
    %1485 = vmatpush2.bf16.msra.mxu0 0
    %1486 = vmatprep.subr.bf16.mxu0 0
    %1487 = vmatpush2.bf16.msra.mxu0 0
    %1488 = vmatprep.subr.bf16.mxu0 0
    %1489 = vmatpush2.bf16.msra.mxu0 0
    %1490 = vmatprep.subr.bf16.mxu0 0
    %1491 = vmatpush2.bf16.msra.mxu0 0
    %1492 = vmatprep.subr.bf16.mxu0 0
    %1493 = vmatpush2.bf16.msra.mxu0 0
    %1494 = vmatprep.subr.bf16.mxu0 0
    %1495 = vmatpush2.bf16.msra.mxu0 0
    %1496 = vmatprep.subr.bf16.mxu0 0
    %1497 = vmatpush2.bf16.msra.mxu0 0
    %1498 = vmatprep.mubr.bf16.mxu0 0
    %1499 = vmatmul.mubr.bf16.gmra.mxu0 %v1251
    %v1500 = vpop.f32.mrf.mxu0
    %v1501 = vadd.f32 %v1289, %v1500
    %v1502 = vpop.f32.mrf.mxu0
    %v1503 = vadd.f32 %v1293, %v1502
    %v1504 = vpop.f32.mrf.mxu0
    %v1505 = vpop.f32.mrf.mxu0
    %1506 = vdwg.mxu0
    %1507 = vmatprep.subr.bf16.mxu0 %v1433
    %1508 = vmatpush1.bf16.msra.mxu0 %v1432
    %1509 = vmatprep.subr.bf16.mxu0 %v1429
    %1510 = vmatpush1.bf16.msra.mxu0 %v1428
    %1511 = vmatprep.subr.bf16.mxu0 %v1425
    %1512 = vmatpush1.bf16.msra.mxu0 %v1424
    %1513 = vmatprep.subr.bf16.mxu0 %v1421
    %1514 = vmatpush1.bf16.msra.mxu0 %v1420
    %1515 = vmatprep.subr.bf16.mxu0 %v1417
    %1516 = vmatpush1.bf16.msra.mxu0 %v1416
    %1517 = vmatprep.subr.bf16.mxu0 %v1413
    %1518 = vmatpush1.bf16.msra.mxu0 %v1412
    %1519 = vmatprep.subr.bf16.mxu0 %v1409
    %1520 = vmatpush1.bf16.msra.mxu0 %v1408
    %1521 = vmatprep.subr.bf16.mxu0 %v1405
    %1522 = vmatpush1.bf16.msra.mxu0 %v1404
    %1523 = vmatprep.subr.bf16.mxu0 0
    %1524 = vmatpush2.bf16.msra.mxu0 0
    %1525 = vmatprep.subr.bf16.mxu0 0
    %1526 = vmatpush2.bf16.msra.mxu0 0
    %1527 = vmatprep.subr.bf16.mxu0 0
    %1528 = vmatpush2.bf16.msra.mxu0 0
    %1529 = vmatprep.subr.bf16.mxu0 0
    %1530 = vmatpush2.bf16.msra.mxu0 0
    %1531 = vmatprep.subr.bf16.mxu0 0
    %1532 = vmatpush2.bf16.msra.mxu0 0
    %1533 = vmatprep.subr.bf16.mxu0 0
    %1534 = vmatpush2.bf16.msra.mxu0 0
    %1535 = vmatprep.subr.bf16.mxu0 0
    %1536 = vmatpush2.bf16.msra.mxu0 0
    %1537 = vmatprep.subr.bf16.mxu0 0
    %1538 = vmatpush2.bf16.msra.mxu0 0
    %1539 = vmatprep.mubr.bf16.mxu0 0
    %1540 = vmatmul.mubr.bf16.gmra.mxu0 %v1251
    %v1541 = vpop.f32.mrf.mxu0
    %v1542 = vadd.f32 %v1297, %v1541
    %v1543 = vpop.f32.mrf.mxu0
    %v1544 = vadd.f32 %v1301, %v1543
    %v1545 = vpop.f32.mrf.mxu0
    %v1546 = vpop.f32.mrf.mxu0
    %1547 = vdwg.mxu0
    %1548 = vst [vmem:[#allocation2 + $0x20] sm:$0xff] %v1501
    %1549 = vst [vmem:[#allocation2 + $0x28] sm:$0xff] %v1503
    %1550 = vst [vmem:[#allocation2 + $0x30] sm:$0xff] %v1542
    %1551 = vst [vmem:[#allocation2 + $0x38] sm:$0xff] %v1544
    %v1552 = vld [vmem:[#allocation2 + $0x40] sm:$0xff]
    %v1553 = vld [vmem:[#allocation2 + $0x48] sm:$0xff]
    %v1554 = vld [vmem:[#allocation2 + $0x50] sm:$0xff]
    %v1555 = vld [vmem:[#allocation2 + $0x58] sm:$0xff]
    %v1556 = vld [vmem:[#allocation6] sm:$0xff]
    %v1557 = vld [vmem:[#allocation6 + $0x8] sm:$0xff]
    %v1558 = vld [vmem:[#allocation6 + $0x10] sm:$0xff]
    %v1559 = vld [vmem:[#allocation6 + $0x18] sm:$0xff]
    %v1560 = vld [vmem:[#allocation6 + $0x20] sm:$0xff]
    %v1561 = vld [vmem:[#allocation6 + $0x28] sm:$0xff]
    %v1562 = vld [vmem:[#allocation6 + $0x30] sm:$0xff]
    %v1563 = vld [vmem:[#allocation6 + $0x38] sm:$0xff]
    %v1564 = vld [vmem:[#allocation6 + $0x40] sm:$0xff]
    %v1565 = vld [vmem:[#allocation6 + $0x48] sm:$0xff]
    %v1566 = vld [vmem:[#allocation6 + $0x50] sm:$0xff]
    %v1567 = vld [vmem:[#allocation6 + $0x58] sm:$0xff]
    %v1568 = vld [vmem:[#allocation6 + $0x60] sm:$0xff]
    %v1569 = vld [vmem:[#allocation6 + $0x68] sm:$0xff]
    %v1570 = vld [vmem:[#allocation6 + $0x70] sm:$0xff]
    %v1571 = vld [vmem:[#allocation6 + $0x78] sm:$0xff]
    %v1572 = vld [vmem:[#allocation6 + $0x80] sm:$0xff]
    %v1573 = vld [vmem:[#allocation6 + $0x88] sm:$0xff]
    %v1574 = vld [vmem:[#allocation6 + $0x90] sm:$0xff]
    %v1575 = vld [vmem:[#allocation6 + $0x98] sm:$0xff]
    %v1576 = vld [vmem:[#allocation6 + $0xa0] sm:$0xff]
    %v1577 = vld [vmem:[#allocation6 + $0xa8] sm:$0xff]
    %v1578 = vld [vmem:[#allocation6 + $0xb0] sm:$0xff]
    %v1579 = vld [vmem:[#allocation6 + $0xb8] sm:$0xff]
    %v1580 = vld [vmem:[#allocation6 + $0xc0] sm:$0xff]
    %v1581 = vld [vmem:[#allocation6 + $0xc8] sm:$0xff]
    %v1582 = vld [vmem:[#allocation6 + $0xd0] sm:$0xff]
    %v1583 = vld [vmem:[#allocation6 + $0xd8] sm:$0xff]
    %v1584 = vld [vmem:[#allocation6 + $0xe0] sm:$0xff]
    %v1585 = vld [vmem:[#allocation6 + $0xe8] sm:$0xff]
    %v1586 = vld [vmem:[#allocation6 + $0xf0] sm:$0xff]
    %v1587 = vld [vmem:[#allocation6 + $0xf8] sm:$0xff]
    %v1620 = vunpack.c.l.b16 %v1556
    %v1621 = vunpack.c.h.b16 %v1556
    %v1622 = vunpack.c.l.b16 %v1557
    %v1623 = vunpack.c.h.b16 %v1557
    %v1624 = vunpack.c.l.b16 %v1558
    %v1625 = vunpack.c.h.b16 %v1558
    %v1626 = vunpack.c.l.b16 %v1559
    %v1627 = vunpack.c.h.b16 %v1559
    %v1628 = vunpack.c.l.b16 %v1560
    %v1629 = vunpack.c.h.b16 %v1560
    %v1630 = vunpack.c.l.b16 %v1561
    %v1631 = vunpack.c.h.b16 %v1561
    %v1632 = vunpack.c.l.b16 %v1562
    %v1633 = vunpack.c.h.b16 %v1562
    %v1634 = vunpack.c.l.b16 %v1563
    %v1635 = vunpack.c.h.b16 %v1563
    %v1636 = vunpack.c.l.b16 %v1564
    %v1637 = vunpack.c.h.b16 %v1564
    %v1638 = vunpack.c.l.b16 %v1565
    %v1639 = vunpack.c.h.b16 %v1565
    %v1640 = vunpack.c.l.b16 %v1566
    %v1641 = vunpack.c.h.b16 %v1566
    %v1642 = vunpack.c.l.b16 %v1567
    %v1643 = vunpack.c.h.b16 %v1567
    %v1644 = vunpack.c.l.b16 %v1568
    %v1645 = vunpack.c.h.b16 %v1568
    %v1646 = vunpack.c.l.b16 %v1569
    %v1647 = vunpack.c.h.b16 %v1569
    %v1648 = vunpack.c.l.b16 %v1570
    %v1649 = vunpack.c.h.b16 %v1570
    %v1650 = vunpack.c.l.b16 %v1571
    %v1651 = vunpack.c.h.b16 %v1571
    %v1652 = vunpack.c.l.b16 %v1572
    %v1653 = vunpack.c.h.b16 %v1572
    %v1654 = vunpack.c.l.b16 %v1573
    %v1655 = vunpack.c.h.b16 %v1573
    %v1656 = vunpack.c.l.b16 %v1574
    %v1657 = vunpack.c.h.b16 %v1574
    %v1658 = vunpack.c.l.b16 %v1575
    %v1659 = vunpack.c.h.b16 %v1575
    %v1660 = vunpack.c.l.b16 %v1576
    %v1661 = vunpack.c.h.b16 %v1576
    %v1662 = vunpack.c.l.b16 %v1577
    %v1663 = vunpack.c.h.b16 %v1577
    %v1664 = vunpack.c.l.b16 %v1578
    %v1665 = vunpack.c.h.b16 %v1578
    %v1666 = vunpack.c.l.b16 %v1579
    %v1667 = vunpack.c.h.b16 %v1579
    %v1668 = vunpack.c.l.b16 %v1580
    %v1669 = vunpack.c.h.b16 %v1580
    %v1670 = vunpack.c.l.b16 %v1581
    %v1671 = vunpack.c.h.b16 %v1581
    %v1672 = vunpack.c.l.b16 %v1582
    %v1673 = vunpack.c.h.b16 %v1582
    %v1674 = vunpack.c.l.b16 %v1583
    %v1675 = vunpack.c.h.b16 %v1583
    %v1676 = vunpack.c.l.b16 %v1584
    %v1677 = vunpack.c.h.b16 %v1584
    %v1678 = vunpack.c.l.b16 %v1585
    %v1679 = vunpack.c.h.b16 %v1585
    %v1680 = vunpack.c.l.b16 %v1586
    %v1681 = vunpack.c.h.b16 %v1586
    %v1682 = vunpack.c.l.b16 %v1587
    %v1683 = vunpack.c.h.b16 %v1587
    %v1684 = vpack.c.b16 %v1624, %v1620
    %v1685 = vpack.c.b16 %v1625, %v1621
    %v1686 = vpack.c.b16 %v1626, %v1622
    %v1687 = vpack.c.b16 %v1627, %v1623
    %v1688 = vpack.c.b16 %v1632, %v1628
    %v1689 = vpack.c.b16 %v1633, %v1629
    %v1690 = vpack.c.b16 %v1634, %v1630
    %v1691 = vpack.c.b16 %v1635, %v1631
    %v1692 = vpack.c.b16 %v1640, %v1636
    %v1693 = vpack.c.b16 %v1641, %v1637
    %v1694 = vpack.c.b16 %v1642, %v1638
    %v1695 = vpack.c.b16 %v1643, %v1639
    %v1696 = vpack.c.b16 %v1648, %v1644
    %v1697 = vpack.c.b16 %v1649, %v1645
    %v1698 = vpack.c.b16 %v1650, %v1646
    %v1699 = vpack.c.b16 %v1651, %v1647
    %v1700 = vpack.c.b16 %v1656, %v1652
    %v1701 = vpack.c.b16 %v1657, %v1653
    %v1702 = vpack.c.b16 %v1658, %v1654
    %v1703 = vpack.c.b16 %v1659, %v1655
    %v1704 = vpack.c.b16 %v1664, %v1660
    %v1705 = vpack.c.b16 %v1665, %v1661
    %v1706 = vpack.c.b16 %v1666, %v1662
    %v1707 = vpack.c.b16 %v1667, %v1663
    %v1708 = vpack.c.b16 %v1672, %v1668
    %v1709 = vpack.c.b16 %v1673, %v1669
    %v1710 = vpack.c.b16 %v1674, %v1670
    %v1711 = vpack.c.b16 %v1675, %v1671
    %v1712 = vpack.c.b16 %v1680, %v1676
    %v1713 = vpack.c.b16 %v1681, %v1677
    %v1714 = vpack.c.b16 %v1682, %v1678
    %v1715 = vpack.c.b16 %v1683, %v1679
    %1748 = vmatprep.subr.bf16.mxu0 %v1713
    %1749 = vmatpush1.bf16.msra.mxu0 %v1712
    %1750 = vmatprep.subr.bf16.mxu0 %v1709
    %1751 = vmatpush1.bf16.msra.mxu0 %v1708
    %1752 = vmatprep.subr.bf16.mxu0 %v1705
    %1753 = vmatpush1.bf16.msra.mxu0 %v1704
    %1754 = vmatprep.subr.bf16.mxu0 %v1701
    %1755 = vmatpush1.bf16.msra.mxu0 %v1700
    %1756 = vmatprep.subr.bf16.mxu0 %v1697
    %1757 = vmatpush1.bf16.msra.mxu0 %v1696
    %1758 = vmatprep.subr.bf16.mxu0 %v1693
    %1759 = vmatpush1.bf16.msra.mxu0 %v1692
    %1760 = vmatprep.subr.bf16.mxu0 %v1689
    %1761 = vmatpush1.bf16.msra.mxu0 %v1688
    %1762 = vmatprep.subr.bf16.mxu0 %v1685
    %1763 = vmatpush1.bf16.msra.mxu0 %v1684
    %1764 = vmatprep.subr.bf16.mxu0 0
    %1765 = vmatpush2.bf16.msra.mxu0 0
    %1766 = vmatprep.subr.bf16.mxu0 0
    %1767 = vmatpush2.bf16.msra.mxu0 0
    %1768 = vmatprep.subr.bf16.mxu0 0
    %1769 = vmatpush2.bf16.msra.mxu0 0
    %1770 = vmatprep.subr.bf16.mxu0 0
    %1771 = vmatpush2.bf16.msra.mxu0 0
    %1772 = vmatprep.subr.bf16.mxu0 0
    %1773 = vmatpush2.bf16.msra.mxu0 0
    %1774 = vmatprep.subr.bf16.mxu0 0
    %1775 = vmatpush2.bf16.msra.mxu0 0
    %1776 = vmatprep.subr.bf16.mxu0 0
    %1777 = vmatpush2.bf16.msra.mxu0 0
    %1778 = vmatprep.subr.bf16.mxu0 0
    %1779 = vmatpush2.bf16.msra.mxu0 0
    %1780 = vmatprep.mubr.bf16.mxu0 0
    %1781 = vmatmul.mubr.bf16.gmra.mxu0 %v1251
    %v1782 = vpop.f32.mrf.mxu0
    %v1783 = vadd.f32 0.0, %v1782
    %v1784 = vpop.f32.mrf.mxu0
    %v1785 = vadd.f32 0.0, %v1784
    %v1786 = vpop.f32.mrf.mxu0
    %v1787 = vpop.f32.mrf.mxu0
    %1788 = vdwg.mxu0
    %1789 = vmatprep.subr.bf16.mxu0 %v1715
    %1790 = vmatpush1.bf16.msra.mxu0 %v1714
    %1791 = vmatprep.subr.bf16.mxu0 %v1711
    %1792 = vmatpush1.bf16.msra.mxu0 %v1710
    %1793 = vmatprep.subr.bf16.mxu0 %v1707
    %1794 = vmatpush1.bf16.msra.mxu0 %v1706
    %1795 = vmatprep.subr.bf16.mxu0 %v1703
    %1796 = vmatpush1.bf16.msra.mxu0 %v1702
    %1797 = vmatprep.subr.bf16.mxu0 %v1699
    %1798 = vmatpush1.bf16.msra.mxu0 %v1698
    %1799 = vmatprep.subr.bf16.mxu0 %v1695
    %1800 = vmatpush1.bf16.msra.mxu0 %v1694
    %1801 = vmatprep.subr.bf16.mxu0 %v1691
    %1802 = vmatpush1.bf16.msra.mxu0 %v1690
    %1803 = vmatprep.subr.bf16.mxu0 %v1687
    %1804 = vmatpush1.bf16.msra.mxu0 %v1686
    %1805 = vmatprep.subr.bf16.mxu0 0
    %1806 = vmatpush2.bf16.msra.mxu0 0
    %1807 = vmatprep.subr.bf16.mxu0 0
    %1808 = vmatpush2.bf16.msra.mxu0 0
    %1809 = vmatprep.subr.bf16.mxu0 0
    %1810 = vmatpush2.bf16.msra.mxu0 0
    %1811 = vmatprep.subr.bf16.mxu0 0
    %1812 = vmatpush2.bf16.msra.mxu0 0
    %1813 = vmatprep.subr.bf16.mxu0 0
    %1814 = vmatpush2.bf16.msra.mxu0 0
    %1815 = vmatprep.subr.bf16.mxu0 0
    %1816 = vmatpush2.bf16.msra.mxu0 0
    %1817 = vmatprep.subr.bf16.mxu0 0
    %1818 = vmatpush2.bf16.msra.mxu0 0
    %1819 = vmatprep.subr.bf16.mxu0 0
    %1820 = vmatpush2.bf16.msra.mxu0 0
    %1821 = vmatprep.mubr.bf16.mxu0 0
    %1822 = vmatmul.mubr.bf16.gmra.mxu0 %v1251
    %v1823 = vpop.f32.mrf.mxu0
    %v1824 = vadd.f32 0.0, %v1823
    %v1825 = vpop.f32.mrf.mxu0
    %v1826 = vadd.f32 0.0, %v1825
    %v1827 = vpop.f32.mrf.mxu0
    %v1828 = vpop.f32.mrf.mxu0
    %1829 = vdwg.mxu0
    %v1830 = vadd.f32 %v1552, %v1783
    %v1831 = vadd.f32 %v1553, %v1785
    %v1832 = vadd.f32 %v1554, %v1824
    %v1833 = vadd.f32 %v1555, %v1826
    %v1834 = vxor.u32 %v1830, 2147483648
    %v1835 = vmul.f32 %v1834, 1.442695
    %v1836 = vpow.pop %v1835
    %v1837 = vadd.f32 %v1836, 1.0
    %v1838 = vrcp.pop %v1837
    %v1839 = vmul.f32 1.0, %v1838
    %v1840 = vxor.u32 %v1831, 2147483648
    %v1841 = vmul.f32 %v1840, 1.442695
    %v1842 = vpow.pop %v1841
    %v1843 = vadd.f32 %v1842, 1.0
    %v1844 = vrcp.pop %v1843
    %v1845 = vmul.f32 1.0, %v1844
    %v1846 = vtanh.pop %v1832
    %v1847 = vxor.u32 %v1833, 2147483648
    %v1848 = vmul.f32 %v1847, 1.442695
    %v1849 = vpow.pop %v1848
    %v1850 = vadd.f32 %v1849, 1.0
    %v1851 = vrcp.pop %v1850
    %v1852 = vmul.f32 1.0, %v1851
    %v1853 = vmul.f32 %v1845, %v1248
    %v1854 = vmul.f32 %v1839, %v1846
    %v1855 = vadd.f32 %v1853, %v1854
    %v1856 = vtanh.pop %v1855
    %v1857 = vmul.f32 %v1852, %v1856
    %v1858 = vpack.c.bf16 %v1857, %v1857
    %v1859 = vld [vmem:[#allocation8] sm:$0xff]
    %v1860 = vld [vmem:[#allocation8 + $0x8] sm:$0xff]
    %v1861 = vld [vmem:[#allocation8 + $0x10] sm:$0xff]
    %v1862 = vld [vmem:[#allocation8 + $0x18] sm:$0xff]
    %v1863 = vld [vmem:[#allocation8 + $0x20] sm:$0xff]
    %v1864 = vld [vmem:[#allocation8 + $0x28] sm:$0xff]
    %v1865 = vld [vmem:[#allocation8 + $0x30] sm:$0xff]
    %v1866 = vld [vmem:[#allocation8 + $0x38] sm:$0xff]
    %v1867 = vld [vmem:[#allocation8 + $0x40] sm:$0xff]
    %v1868 = vld [vmem:[#allocation8 + $0x48] sm:$0xff]
    %v1869 = vld [vmem:[#allocation8 + $0x50] sm:$0xff]
    %v1870 = vld [vmem:[#allocation8 + $0x58] sm:$0xff]
    %v1871 = vld [vmem:[#allocation8 + $0x60] sm:$0xff]
    %v1872 = vld [vmem:[#allocation8 + $0x68] sm:$0xff]
    %v1873 = vld [vmem:[#allocation8 + $0x70] sm:$0xff]
    %v1874 = vld [vmem:[#allocation8 + $0x78] sm:$0xff]
    %v1875 = vld [vmem:[#allocation8 + $0x80] sm:$0xff]
    %v1876 = vld [vmem:[#allocation8 + $0x88] sm:$0xff]
    %v1877 = vld [vmem:[#allocation8 + $0x90] sm:$0xff]
    %v1878 = vld [vmem:[#allocation8 + $0x98] sm:$0xff]
    %v1879 = vld [vmem:[#allocation8 + $0xa0] sm:$0xff]
    %v1880 = vld [vmem:[#allocation8 + $0xa8] sm:$0xff]
    %v1881 = vld [vmem:[#allocation8 + $0xb0] sm:$0xff]
    %v1882 = vld [vmem:[#allocation8 + $0xb8] sm:$0xff]
    %v1883 = vld [vmem:[#allocation8 + $0xc0] sm:$0xff]
    %v1884 = vld [vmem:[#allocation8 + $0xc8] sm:$0xff]
    %v1885 = vld [vmem:[#allocation8 + $0xd0] sm:$0xff]
    %v1886 = vld [vmem:[#allocation8 + $0xd8] sm:$0xff]
    %v1887 = vld [vmem:[#allocation8 + $0xe0] sm:$0xff]
    %v1888 = vld [vmem:[#allocation8 + $0xe8] sm:$0xff]
    %v1889 = vld [vmem:[#allocation8 + $0xf0] sm:$0xff]
    %v1890 = vld [vmem:[#allocation8 + $0xf8] sm:$0xff]
    %v1891 = vld [vmem:[%s6] sm:$0xf]
    %v1893 = vlaneseq
    %v1894 = vshrl.u32 %v1893, 7
    %v1895 = vsub.s32 0, %v1894
    %v1896 = vrot.slane %v1891, %v1895
    %v1897 = vlaneseq
    %v1898 = vshrl.u32 %v1897, 7
    %v1899 = vsub.s32 1, %v1898
    %v1900 = vrot.slane %v1891, %v1899
    %v1901 = vlaneseq
    %v1902 = vshrl.u32 %v1901, 7
    %v1903 = vsub.s32 2, %v1902
    %v1904 = vrot.slane %v1891, %v1903
    %v1905 = vlaneseq
    %v1906 = vshrl.u32 %v1905, 7
    %v1907 = vsub.s32 3, %v1906
    %v1908 = vrot.slane %v1891, %v1907
    %v1945 = vunpack.c.l.b16 %v1859
    %v1946 = vunpack.c.h.b16 %v1859
    %v1947 = vunpack.c.l.b16 %v1860
    %v1948 = vunpack.c.h.b16 %v1860
    %v1949 = vunpack.c.l.b16 %v1861
    %v1950 = vunpack.c.h.b16 %v1861
    %v1951 = vunpack.c.l.b16 %v1862
    %v1952 = vunpack.c.h.b16 %v1862
    %v1953 = vunpack.c.l.b16 %v1863
    %v1954 = vunpack.c.h.b16 %v1863
    %v1955 = vunpack.c.l.b16 %v1864
    %v1956 = vunpack.c.h.b16 %v1864
    %v1957 = vunpack.c.l.b16 %v1865
    %v1958 = vunpack.c.h.b16 %v1865
    %v1959 = vunpack.c.l.b16 %v1866
    %v1960 = vunpack.c.h.b16 %v1866
    %v1961 = vunpack.c.l.b16 %v1867
    %v1962 = vunpack.c.h.b16 %v1867
    %v1963 = vunpack.c.l.b16 %v1868
    %v1964 = vunpack.c.h.b16 %v1868
    %v1965 = vunpack.c.l.b16 %v1869
    %v1966 = vunpack.c.h.b16 %v1869
    %v1967 = vunpack.c.l.b16 %v1870
    %v1968 = vunpack.c.h.b16 %v1870
    %v1969 = vunpack.c.l.b16 %v1871
    %v1970 = vunpack.c.h.b16 %v1871
    %v1971 = vunpack.c.l.b16 %v1872
    %v1972 = vunpack.c.h.b16 %v1872
    %v1973 = vunpack.c.l.b16 %v1873
    %v1974 = vunpack.c.h.b16 %v1873
    %v1975 = vunpack.c.l.b16 %v1874
    %v1976 = vunpack.c.h.b16 %v1874
    %v1977 = vunpack.c.l.b16 %v1875
    %v1978 = vunpack.c.h.b16 %v1875
    %v1979 = vunpack.c.l.b16 %v1876
    %v1980 = vunpack.c.h.b16 %v1876
    %v1981 = vunpack.c.l.b16 %v1877
    %v1982 = vunpack.c.h.b16 %v1877
    %v1983 = vunpack.c.l.b16 %v1878
    %v1984 = vunpack.c.h.b16 %v1878
    %v1985 = vunpack.c.l.b16 %v1879
    %v1986 = vunpack.c.h.b16 %v1879
    %v1987 = vunpack.c.l.b16 %v1880
    %v1988 = vunpack.c.h.b16 %v1880
    %v1989 = vunpack.c.l.b16 %v1881
    %v1990 = vunpack.c.h.b16 %v1881
    %v1991 = vunpack.c.l.b16 %v1882
    %v1992 = vunpack.c.h.b16 %v1882
    %v1993 = vunpack.c.l.b16 %v1883
    %v1994 = vunpack.c.h.b16 %v1883
    %v1995 = vunpack.c.l.b16 %v1884
    %v1996 = vunpack.c.h.b16 %v1884
    %v1997 = vunpack.c.l.b16 %v1885
    %v1998 = vunpack.c.h.b16 %v1885
    %v1999 = vunpack.c.l.b16 %v1886
    %v2000 = vunpack.c.h.b16 %v1886
    %v2001 = vunpack.c.l.b16 %v1887
    %v2002 = vunpack.c.h.b16 %v1887
    %v2003 = vunpack.c.l.b16 %v1888
    %v2004 = vunpack.c.h.b16 %v1888
    %v2005 = vunpack.c.l.b16 %v1889
    %v2006 = vunpack.c.h.b16 %v1889
    %v2007 = vunpack.c.l.b16 %v1890
    %v2008 = vunpack.c.h.b16 %v1890
    %v2009 = vpack.c.b16 %v1949, %v1945
    %v2010 = vpack.c.b16 %v1950, %v1946
    %v2011 = vpack.c.b16 %v1951, %v1947
    %v2012 = vpack.c.b16 %v1952, %v1948
    %v2013 = vpack.c.b16 %v1957, %v1953
    %v2014 = vpack.c.b16 %v1958, %v1954
    %v2015 = vpack.c.b16 %v1959, %v1955
    %v2016 = vpack.c.b16 %v1960, %v1956
    %v2017 = vpack.c.b16 %v1965, %v1961
    %v2018 = vpack.c.b16 %v1966, %v1962
    %v2019 = vpack.c.b16 %v1967, %v1963
    %v2020 = vpack.c.b16 %v1968, %v1964
    %v2021 = vpack.c.b16 %v1973, %v1969
    %v2022 = vpack.c.b16 %v1974, %v1970
    %v2023 = vpack.c.b16 %v1975, %v1971
    %v2024 = vpack.c.b16 %v1976, %v1972
    %v2025 = vpack.c.b16 %v1981, %v1977
    %v2026 = vpack.c.b16 %v1982, %v1978
    %v2027 = vpack.c.b16 %v1983, %v1979
    %v2028 = vpack.c.b16 %v1984, %v1980
    %v2029 = vpack.c.b16 %v1989, %v1985
    %v2030 = vpack.c.b16 %v1990, %v1986
    %v2031 = vpack.c.b16 %v1991, %v1987
    %v2032 = vpack.c.b16 %v1992, %v1988
    %v2033 = vpack.c.b16 %v1997, %v1993
    %v2034 = vpack.c.b16 %v1998, %v1994
    %v2035 = vpack.c.b16 %v1999, %v1995
    %v2036 = vpack.c.b16 %v2000, %v1996
    %v2037 = vpack.c.b16 %v2005, %v2001
    %v2038 = vpack.c.b16 %v2006, %v2002
    %v2039 = vpack.c.b16 %v2007, %v2003
    %v2040 = vpack.c.b16 %v2008, %v2004
    %2073 = vmatprep.subr.bf16.mxu0 %v2038
    %2074 = vmatpush1.bf16.msra.mxu0 %v2037
    %2075 = vmatprep.subr.bf16.mxu0 %v2034
    %2076 = vmatpush1.bf16.msra.mxu0 %v2033
    %2077 = vmatprep.subr.bf16.mxu0 %v2030
    %2078 = vmatpush1.bf16.msra.mxu0 %v2029
    %2079 = vmatprep.subr.bf16.mxu0 %v2026
    %2080 = vmatpush1.bf16.msra.mxu0 %v2025
    %2081 = vmatprep.subr.bf16.mxu0 %v2022
    %2082 = vmatpush1.bf16.msra.mxu0 %v2021
    %2083 = vmatprep.subr.bf16.mxu0 %v2018
    %2084 = vmatpush1.bf16.msra.mxu0 %v2017
    %2085 = vmatprep.subr.bf16.mxu0 %v2014
    %2086 = vmatpush1.bf16.msra.mxu0 %v2013
    %2087 = vmatprep.subr.bf16.mxu0 %v2010
    %2088 = vmatpush1.bf16.msra.mxu0 %v2009
    %2089 = vmatprep.subr.bf16.mxu0 0
    %2090 = vmatpush2.bf16.msra.mxu0 0
    %2091 = vmatprep.subr.bf16.mxu0 0
    %2092 = vmatpush2.bf16.msra.mxu0 0
    %2093 = vmatprep.subr.bf16.mxu0 0
    %2094 = vmatpush2.bf16.msra.mxu0 0
    %2095 = vmatprep.subr.bf16.mxu0 0
    %2096 = vmatpush2.bf16.msra.mxu0 0
    %2097 = vmatprep.subr.bf16.mxu0 0
    %2098 = vmatpush2.bf16.msra.mxu0 0
    %2099 = vmatprep.subr.bf16.mxu0 0
    %2100 = vmatpush2.bf16.msra.mxu0 0
    %2101 = vmatprep.subr.bf16.mxu0 0
    %2102 = vmatpush2.bf16.msra.mxu0 0
    %2103 = vmatprep.subr.bf16.mxu0 0
    %2104 = vmatpush2.bf16.msra.mxu0 0
    %2105 = vmatprep.mubr.bf16.mxu0 0
    %2106 = vmatmul.mubr.bf16.gmra.mxu0 %v1858
    %v2107 = vpop.f32.mrf.mxu0
    %v2108 = vadd.f32 %v1896, %v2107
    %v2109 = vpop.f32.mrf.mxu0
    %v2110 = vadd.f32 %v1900, %v2109
    %v2111 = vpop.f32.mrf.mxu0
    %v2112 = vpop.f32.mrf.mxu0
    %2113 = vdwg.mxu0
    %2114 = vmatprep.subr.bf16.mxu0 %v2040
    %2115 = vmatpush1.bf16.msra.mxu0 %v2039
    %2116 = vmatprep.subr.bf16.mxu0 %v2036
    %2117 = vmatpush1.bf16.msra.mxu0 %v2035
    %2118 = vmatprep.subr.bf16.mxu0 %v2032
    %2119 = vmatpush1.bf16.msra.mxu0 %v2031
    %2120 = vmatprep.subr.bf16.mxu0 %v2028
    %2121 = vmatpush1.bf16.msra.mxu0 %v2027
    %2122 = vmatprep.subr.bf16.mxu0 %v2024
    %2123 = vmatpush1.bf16.msra.mxu0 %v2023
    %2124 = vmatprep.subr.bf16.mxu0 %v2020
    %2125 = vmatpush1.bf16.msra.mxu0 %v2019
    %2126 = vmatprep.subr.bf16.mxu0 %v2016
    %2127 = vmatpush1.bf16.msra.mxu0 %v2015
    %2128 = vmatprep.subr.bf16.mxu0 %v2012
    %2129 = vmatpush1.bf16.msra.mxu0 %v2011
    %2130 = vmatprep.subr.bf16.mxu0 0
    %2131 = vmatpush2.bf16.msra.mxu0 0
    %2132 = vmatprep.subr.bf16.mxu0 0
    %2133 = vmatpush2.bf16.msra.mxu0 0
    %2134 = vmatprep.subr.bf16.mxu0 0
    %2135 = vmatpush2.bf16.msra.mxu0 0
    %2136 = vmatprep.subr.bf16.mxu0 0
    %2137 = vmatpush2.bf16.msra.mxu0 0
    %2138 = vmatprep.subr.bf16.mxu0 0
    %2139 = vmatpush2.bf16.msra.mxu0 0
    %2140 = vmatprep.subr.bf16.mxu0 0
    %2141 = vmatpush2.bf16.msra.mxu0 0
    %2142 = vmatprep.subr.bf16.mxu0 0
    %2143 = vmatpush2.bf16.msra.mxu0 0
    %2144 = vmatprep.subr.bf16.mxu0 0
    %2145 = vmatpush2.bf16.msra.mxu0 0
    %2146 = vmatprep.mubr.bf16.mxu0 0
    %2147 = vmatmul.mubr.bf16.gmra.mxu0 %v1858
    %v2148 = vpop.f32.mrf.mxu0
    %v2149 = vadd.f32 %v1904, %v2148
    %v2150 = vpop.f32.mrf.mxu0
    %v2151 = vadd.f32 %v1908, %v2150
    %v2152 = vpop.f32.mrf.mxu0
    %v2153 = vpop.f32.mrf.mxu0
    %2154 = vdwg.mxu0
    %2155 = vst [vmem:[#allocation2 + $0x40] sm:$0xff] %v2108
    %2156 = vst [vmem:[#allocation2 + $0x48] sm:$0xff] %v2110
    %2157 = vst [vmem:[#allocation2 + $0x50] sm:$0xff] %v2149
    %2158 = vst [vmem:[#allocation2 + $0x58] sm:$0xff] %v2151
    %v2159 = vld [vmem:[#allocation2 + $0x60] sm:$0xff]
    %v2160 = vld [vmem:[#allocation2 + $0x68] sm:$0xff]
    %v2161 = vld [vmem:[#allocation2 + $0x70] sm:$0xff]
    %v2162 = vld [vmem:[#allocation2 + $0x78] sm:$0xff]
    %v2163 = vld [vmem:[#allocation6] sm:$0xff]
    %v2164 = vld [vmem:[#allocation6 + $0x8] sm:$0xff]
    %v2165 = vld [vmem:[#allocation6 + $0x10] sm:$0xff]
    %v2166 = vld [vmem:[#allocation6 + $0x18] sm:$0xff]
    %v2167 = vld [vmem:[#allocation6 + $0x20] sm:$0xff]
    %v2168 = vld [vmem:[#allocation6 + $0x28] sm:$0xff]
    %v2169 = vld [vmem:[#allocation6 + $0x30] sm:$0xff]
    %v2170 = vld [vmem:[#allocation6 + $0x38] sm:$0xff]
    %v2171 = vld [vmem:[#allocation6 + $0x40] sm:$0xff]
    %v2172 = vld [vmem:[#allocation6 + $0x48] sm:$0xff]
    %v2173 = vld [vmem:[#allocation6 + $0x50] sm:$0xff]
    %v2174 = vld [vmem:[#allocation6 + $0x58] sm:$0xff]
    %v2175 = vld [vmem:[#allocation6 + $0x60] sm:$0xff]
    %v2176 = vld [vmem:[#allocation6 + $0x68] sm:$0xff]
    %v2177 = vld [vmem:[#allocation6 + $0x70] sm:$0xff]
    %v2178 = vld [vmem:[#allocation6 + $0x78] sm:$0xff]
    %v2179 = vld [vmem:[#allocation6 + $0x80] sm:$0xff]
    %v2180 = vld [vmem:[#allocation6 + $0x88] sm:$0xff]
    %v2181 = vld [vmem:[#allocation6 + $0x90] sm:$0xff]
    %v2182 = vld [vmem:[#allocation6 + $0x98] sm:$0xff]
    %v2183 = vld [vmem:[#allocation6 + $0xa0] sm:$0xff]
    %v2184 = vld [vmem:[#allocation6 + $0xa8] sm:$0xff]
    %v2185 = vld [vmem:[#allocation6 + $0xb0] sm:$0xff]
    %v2186 = vld [vmem:[#allocation6 + $0xb8] sm:$0xff]
    %v2187 = vld [vmem:[#allocation6 + $0xc0] sm:$0xff]
    %v2188 = vld [vmem:[#allocation6 + $0xc8] sm:$0xff]
    %v2189 = vld [vmem:[#allocation6 + $0xd0] sm:$0xff]
    %v2190 = vld [vmem:[#allocation6 + $0xd8] sm:$0xff]
    %v2191 = vld [vmem:[#allocation6 + $0xe0] sm:$0xff]
    %v2192 = vld [vmem:[#allocation6 + $0xe8] sm:$0xff]
    %v2193 = vld [vmem:[#allocation6 + $0xf0] sm:$0xff]
    %v2194 = vld [vmem:[#allocation6 + $0xf8] sm:$0xff]
    %v2227 = vunpack.c.l.b16 %v2163
    %v2228 = vunpack.c.h.b16 %v2163
    %v2229 = vunpack.c.l.b16 %v2164
    %v2230 = vunpack.c.h.b16 %v2164
    %v2231 = vunpack.c.l.b16 %v2165
    %v2232 = vunpack.c.h.b16 %v2165
    %v2233 = vunpack.c.l.b16 %v2166
    %v2234 = vunpack.c.h.b16 %v2166
    %v2235 = vunpack.c.l.b16 %v2167
    %v2236 = vunpack.c.h.b16 %v2167
    %v2237 = vunpack.c.l.b16 %v2168
    %v2238 = vunpack.c.h.b16 %v2168
    %v2239 = vunpack.c.l.b16 %v2169
    %v2240 = vunpack.c.h.b16 %v2169
    %v2241 = vunpack.c.l.b16 %v2170
    %v2242 = vunpack.c.h.b16 %v2170
    %v2243 = vunpack.c.l.b16 %v2171
    %v2244 = vunpack.c.h.b16 %v2171
    %v2245 = vunpack.c.l.b16 %v2172
    %v2246 = vunpack.c.h.b16 %v2172
    %v2247 = vunpack.c.l.b16 %v2173
    %v2248 = vunpack.c.h.b16 %v2173
    %v2249 = vunpack.c.l.b16 %v2174
    %v2250 = vunpack.c.h.b16 %v2174
    %v2251 = vunpack.c.l.b16 %v2175
    %v2252 = vunpack.c.h.b16 %v2175
    %v2253 = vunpack.c.l.b16 %v2176
    %v2254 = vunpack.c.h.b16 %v2176
    %v2255 = vunpack.c.l.b16 %v2177
    %v2256 = vunpack.c.h.b16 %v2177
    %v2257 = vunpack.c.l.b16 %v2178
    %v2258 = vunpack.c.h.b16 %v2178
    %v2259 = vunpack.c.l.b16 %v2179
    %v2260 = vunpack.c.h.b16 %v2179
    %v2261 = vunpack.c.l.b16 %v2180
    %v2262 = vunpack.c.h.b16 %v2180
    %v2263 = vunpack.c.l.b16 %v2181
    %v2264 = vunpack.c.h.b16 %v2181
    %v2265 = vunpack.c.l.b16 %v2182
    %v2266 = vunpack.c.h.b16 %v2182
    %v2267 = vunpack.c.l.b16 %v2183
    %v2268 = vunpack.c.h.b16 %v2183
    %v2269 = vunpack.c.l.b16 %v2184
    %v2270 = vunpack.c.h.b16 %v2184
    %v2271 = vunpack.c.l.b16 %v2185
    %v2272 = vunpack.c.h.b16 %v2185
    %v2273 = vunpack.c.l.b16 %v2186
    %v2274 = vunpack.c.h.b16 %v2186
    %v2275 = vunpack.c.l.b16 %v2187
    %v2276 = vunpack.c.h.b16 %v2187
    %v2277 = vunpack.c.l.b16 %v2188
    %v2278 = vunpack.c.h.b16 %v2188
    %v2279 = vunpack.c.l.b16 %v2189
    %v2280 = vunpack.c.h.b16 %v2189
    %v2281 = vunpack.c.l.b16 %v2190
    %v2282 = vunpack.c.h.b16 %v2190
    %v2283 = vunpack.c.l.b16 %v2191
    %v2284 = vunpack.c.h.b16 %v2191
    %v2285 = vunpack.c.l.b16 %v2192
    %v2286 = vunpack.c.h.b16 %v2192
    %v2287 = vunpack.c.l.b16 %v2193
    %v2288 = vunpack.c.h.b16 %v2193
    %v2289 = vunpack.c.l.b16 %v2194
    %v2290 = vunpack.c.h.b16 %v2194
    %v2291 = vpack.c.b16 %v2231, %v2227
    %v2292 = vpack.c.b16 %v2232, %v2228
    %v2293 = vpack.c.b16 %v2233, %v2229
    %v2294 = vpack.c.b16 %v2234, %v2230
    %v2295 = vpack.c.b16 %v2239, %v2235
    %v2296 = vpack.c.b16 %v2240, %v2236
    %v2297 = vpack.c.b16 %v2241, %v2237
    %v2298 = vpack.c.b16 %v2242, %v2238
    %v2299 = vpack.c.b16 %v2247, %v2243
    %v2300 = vpack.c.b16 %v2248, %v2244
    %v2301 = vpack.c.b16 %v2249, %v2245
    %v2302 = vpack.c.b16 %v2250, %v2246
    %v2303 = vpack.c.b16 %v2255, %v2251
    %v2304 = vpack.c.b16 %v2256, %v2252
    %v2305 = vpack.c.b16 %v2257, %v2253
    %v2306 = vpack.c.b16 %v2258, %v2254
    %v2307 = vpack.c.b16 %v2263, %v2259
    %v2308 = vpack.c.b16 %v2264, %v2260
    %v2309 = vpack.c.b16 %v2265, %v2261
    %v2310 = vpack.c.b16 %v2266, %v2262
    %v2311 = vpack.c.b16 %v2271, %v2267
    %v2312 = vpack.c.b16 %v2272, %v2268
    %v2313 = vpack.c.b16 %v2273, %v2269
    %v2314 = vpack.c.b16 %v2274, %v2270
    %v2315 = vpack.c.b16 %v2279, %v2275
    %v2316 = vpack.c.b16 %v2280, %v2276
    %v2317 = vpack.c.b16 %v2281, %v2277
    %v2318 = vpack.c.b16 %v2282, %v2278
    %v2319 = vpack.c.b16 %v2287, %v2283
    %v2320 = vpack.c.b16 %v2288, %v2284
    %v2321 = vpack.c.b16 %v2289, %v2285
    %v2322 = vpack.c.b16 %v2290, %v2286
    %2355 = vmatprep.subr.bf16.mxu0 %v2320
    %2356 = vmatpush1.bf16.msra.mxu0 %v2319
    %2357 = vmatprep.subr.bf16.mxu0 %v2316
    %2358 = vmatpush1.bf16.msra.mxu0 %v2315
    %2359 = vmatprep.subr.bf16.mxu0 %v2312
    %2360 = vmatpush1.bf16.msra.mxu0 %v2311
    %2361 = vmatprep.subr.bf16.mxu0 %v2308
    %2362 = vmatpush1.bf16.msra.mxu0 %v2307
    %2363 = vmatprep.subr.bf16.mxu0 %v2304
    %2364 = vmatpush1.bf16.msra.mxu0 %v2303
    %2365 = vmatprep.subr.bf16.mxu0 %v2300
    %2366 = vmatpush1.bf16.msra.mxu0 %v2299
    %2367 = vmatprep.subr.bf16.mxu0 %v2296
    %2368 = vmatpush1.bf16.msra.mxu0 %v2295
    %2369 = vmatprep.subr.bf16.mxu0 %v2292
    %2370 = vmatpush1.bf16.msra.mxu0 %v2291
    %2371 = vmatprep.subr.bf16.mxu0 0
    %2372 = vmatpush2.bf16.msra.mxu0 0
    %2373 = vmatprep.subr.bf16.mxu0 0
    %2374 = vmatpush2.bf16.msra.mxu0 0
    %2375 = vmatprep.subr.bf16.mxu0 0
    %2376 = vmatpush2.bf16.msra.mxu0 0
    %2377 = vmatprep.subr.bf16.mxu0 0
    %2378 = vmatpush2.bf16.msra.mxu0 0
    %2379 = vmatprep.subr.bf16.mxu0 0
    %2380 = vmatpush2.bf16.msra.mxu0 0
    %2381 = vmatprep.subr.bf16.mxu0 0
    %2382 = vmatpush2.bf16.msra.mxu0 0
    %2383 = vmatprep.subr.bf16.mxu0 0
    %2384 = vmatpush2.bf16.msra.mxu0 0
    %2385 = vmatprep.subr.bf16.mxu0 0
    %2386 = vmatpush2.bf16.msra.mxu0 0
    %2387 = vmatprep.mubr.bf16.mxu0 0
    %2388 = vmatmul.mubr.bf16.gmra.mxu0 %v1858
    %v2389 = vpop.f32.mrf.mxu0
    %v2390 = vadd.f32 0.0, %v2389
    %v2391 = vpop.f32.mrf.mxu0
    %v2392 = vadd.f32 0.0, %v2391
    %v2393 = vpop.f32.mrf.mxu0
    %v2394 = vpop.f32.mrf.mxu0
    %2395 = vdwg.mxu0
    %2396 = vmatprep.subr.bf16.mxu0 %v2322
    %2397 = vmatpush1.bf16.msra.mxu0 %v2321
    %2398 = vmatprep.subr.bf16.mxu0 %v2318
    %2399 = vmatpush1.bf16.msra.mxu0 %v2317
    %2400 = vmatprep.subr.bf16.mxu0 %v2314
    %2401 = vmatpush1.bf16.msra.mxu0 %v2313
    %2402 = vmatprep.subr.bf16.mxu0 %v2310
    %2403 = vmatpush1.bf16.msra.mxu0 %v2309
    %2404 = vmatprep.subr.bf16.mxu0 %v2306
    %2405 = vmatpush1.bf16.msra.mxu0 %v2305
    %2406 = vmatprep.subr.bf16.mxu0 %v2302
    %2407 = vmatpush1.bf16.msra.mxu0 %v2301
    %2408 = vmatprep.subr.bf16.mxu0 %v2298
    %2409 = vmatpush1.bf16.msra.mxu0 %v2297
    %2410 = vmatprep.subr.bf16.mxu0 %v2294
    %2411 = vmatpush1.bf16.msra.mxu0 %v2293
    %2412 = vmatprep.subr.bf16.mxu0 0
    %2413 = vmatpush2.bf16.msra.mxu0 0
    %2414 = vmatprep.subr.bf16.mxu0 0
    %2415 = vmatpush2.bf16.msra.mxu0 0
    %2416 = vmatprep.subr.bf16.mxu0 0
    %2417 = vmatpush2.bf16.msra.mxu0 0
    %2418 = vmatprep.subr.bf16.mxu0 0
    %2419 = vmatpush2.bf16.msra.mxu0 0
    %2420 = vmatprep.subr.bf16.mxu0 0
    %2421 = vmatpush2.bf16.msra.mxu0 0
    %2422 = vmatprep.subr.bf16.mxu0 0
    %2423 = vmatpush2.bf16.msra.mxu0 0
    %2424 = vmatprep.subr.bf16.mxu0 0
    %2425 = vmatpush2.bf16.msra.mxu0 0
    %2426 = vmatprep.subr.bf16.mxu0 0
    %2427 = vmatpush2.bf16.msra.mxu0 0
    %2428 = vmatprep.mubr.bf16.mxu0 0
    %2429 = vmatmul.mubr.bf16.gmra.mxu0 %v1858
    %v2430 = vpop.f32.mrf.mxu0
    %v2431 = vadd.f32 0.0, %v2430
    %v2432 = vpop.f32.mrf.mxu0
    %v2433 = vadd.f32 0.0, %v2432
    %v2434 = vpop.f32.mrf.mxu0
    %v2435 = vpop.f32.mrf.mxu0
    %2436 = vdwg.mxu0
    %v2437 = vadd.f32 %v2159, %v2390
    %v2438 = vadd.f32 %v2160, %v2392
    %v2439 = vadd.f32 %v2161, %v2431
    %v2440 = vadd.f32 %v2162, %v2433
    %v2441 = vxor.u32 %v2437, 2147483648
    %v2442 = vmul.f32 %v2441, 1.442695
    %v2443 = vpow.pop %v2442
    %v2444 = vadd.f32 %v2443, 1.0
    %v2445 = vrcp.pop %v2444
    %v2446 = vmul.f32 1.0, %v2445
    %v2447 = vxor.u32 %v2438, 2147483648
    %v2448 = vmul.f32 %v2447, 1.442695
    %v2449 = vpow.pop %v2448
    %v2450 = vadd.f32 %v2449, 1.0
    %v2451 = vrcp.pop %v2450
    %v2452 = vmul.f32 1.0, %v2451
    %v2453 = vtanh.pop %v2439
    %v2454 = vxor.u32 %v2440, 2147483648
    %v2455 = vmul.f32 %v2454, 1.442695
    %v2456 = vpow.pop %v2455
    %v2457 = vadd.f32 %v2456, 1.0
    %v2458 = vrcp.pop %v2457
    %v2459 = vmul.f32 1.0, %v2458
    %v2460 = vmul.f32 %v2452, %v1855
    %v2461 = vmul.f32 %v2446, %v2453
    %v2462 = vadd.f32 %v2460, %v2461
    %v2463 = vtanh.pop %v2462
    %v2464 = vmul.f32 %v2459, %v2463
    %v2465 = vpack.c.bf16 %v2464, %v2464
    %v2466 = vld [vmem:[#allocation8] sm:$0xff]
    %v2467 = vld [vmem:[#allocation8 + $0x8] sm:$0xff]
    %v2468 = vld [vmem:[#allocation8 + $0x10] sm:$0xff]
    %v2469 = vld [vmem:[#allocation8 + $0x18] sm:$0xff]
    %v2470 = vld [vmem:[#allocation8 + $0x20] sm:$0xff]
    %v2471 = vld [vmem:[#allocation8 + $0x28] sm:$0xff]
    %v2472 = vld [vmem:[#allocation8 + $0x30] sm:$0xff]
    %v2473 = vld [vmem:[#allocation8 + $0x38] sm:$0xff]
    %v2474 = vld [vmem:[#allocation8 + $0x40] sm:$0xff]
    %v2475 = vld [vmem:[#allocation8 + $0x48] sm:$0xff]
    %v2476 = vld [vmem:[#allocation8 + $0x50] sm:$0xff]
    %v2477 = vld [vmem:[#allocation8 + $0x58] sm:$0xff]
    %v2478 = vld [vmem:[#allocation8 + $0x60] sm:$0xff]
    %v2479 = vld [vmem:[#allocation8 + $0x68] sm:$0xff]
    %v2480 = vld [vmem:[#allocation8 + $0x70] sm:$0xff]
    %v2481 = vld [vmem:[#allocation8 + $0x78] sm:$0xff]
    %v2482 = vld [vmem:[#allocation8 + $0x80] sm:$0xff]
    %v2483 = vld [vmem:[#allocation8 + $0x88] sm:$0xff]
    %v2484 = vld [vmem:[#allocation8 + $0x90] sm:$0xff]
    %v2485 = vld [vmem:[#allocation8 + $0x98] sm:$0xff]
    %v2486 = vld [vmem:[#allocation8 + $0xa0] sm:$0xff]
    %v2487 = vld [vmem:[#allocation8 + $0xa8] sm:$0xff]
    %v2488 = vld [vmem:[#allocation8 + $0xb0] sm:$0xff]
    %v2489 = vld [vmem:[#allocation8 + $0xb8] sm:$0xff]
    %v2490 = vld [vmem:[#allocation8 + $0xc0] sm:$0xff]
    %v2491 = vld [vmem:[#allocation8 + $0xc8] sm:$0xff]
    %v2492 = vld [vmem:[#allocation8 + $0xd0] sm:$0xff]
    %v2493 = vld [vmem:[#allocation8 + $0xd8] sm:$0xff]
    %v2494 = vld [vmem:[#allocation8 + $0xe0] sm:$0xff]
    %v2495 = vld [vmem:[#allocation8 + $0xe8] sm:$0xff]
    %v2496 = vld [vmem:[#allocation8 + $0xf0] sm:$0xff]
    %v2497 = vld [vmem:[#allocation8 + $0xf8] sm:$0xff]
    %v2498 = vld [vmem:[%s6] sm:$0xf]
    %v2500 = vlaneseq
    %v2501 = vshrl.u32 %v2500, 7
    %v2502 = vsub.s32 0, %v2501
    %v2503 = vrot.slane %v2498, %v2502
    %v2504 = vlaneseq
    %v2505 = vshrl.u32 %v2504, 7
    %v2506 = vsub.s32 1, %v2505
    %v2507 = vrot.slane %v2498, %v2506
    %v2508 = vlaneseq
    %v2509 = vshrl.u32 %v2508, 7
    %v2510 = vsub.s32 2, %v2509
    %v2511 = vrot.slane %v2498, %v2510
    %v2512 = vlaneseq
    %v2513 = vshrl.u32 %v2512, 7
    %v2514 = vsub.s32 3, %v2513
    %v2515 = vrot.slane %v2498, %v2514
    %v2552 = vunpack.c.l.b16 %v2466
    %v2553 = vunpack.c.h.b16 %v2466
    %v2554 = vunpack.c.l.b16 %v2467
    %v2555 = vunpack.c.h.b16 %v2467
    %v2556 = vunpack.c.l.b16 %v2468
    %v2557 = vunpack.c.h.b16 %v2468
    %v2558 = vunpack.c.l.b16 %v2469
    %v2559 = vunpack.c.h.b16 %v2469
    %v2560 = vunpack.c.l.b16 %v2470
    %v2561 = vunpack.c.h.b16 %v2470
    %v2562 = vunpack.c.l.b16 %v2471
    %v2563 = vunpack.c.h.b16 %v2471
    %v2564 = vunpack.c.l.b16 %v2472
    %v2565 = vunpack.c.h.b16 %v2472
    %v2566 = vunpack.c.l.b16 %v2473
    %v2567 = vunpack.c.h.b16 %v2473
    %v2568 = vunpack.c.l.b16 %v2474
    %v2569 = vunpack.c.h.b16 %v2474
    %v2570 = vunpack.c.l.b16 %v2475
    %v2571 = vunpack.c.h.b16 %v2475
    %v2572 = vunpack.c.l.b16 %v2476
    %v2573 = vunpack.c.h.b16 %v2476
    %v2574 = vunpack.c.l.b16 %v2477
    %v2575 = vunpack.c.h.b16 %v2477
    %v2576 = vunpack.c.l.b16 %v2478
    %v2577 = vunpack.c.h.b16 %v2478
    %v2578 = vunpack.c.l.b16 %v2479
    %v2579 = vunpack.c.h.b16 %v2479
    %v2580 = vunpack.c.l.b16 %v2480
    %v2581 = vunpack.c.h.b16 %v2480
    %v2582 = vunpack.c.l.b16 %v2481
    %v2583 = vunpack.c.h.b16 %v2481
    %v2584 = vunpack.c.l.b16 %v2482
    %v2585 = vunpack.c.h.b16 %v2482
    %v2586 = vunpack.c.l.b16 %v2483
    %v2587 = vunpack.c.h.b16 %v2483
    %v2588 = vunpack.c.l.b16 %v2484
    %v2589 = vunpack.c.h.b16 %v2484
    %v2590 = vunpack.c.l.b16 %v2485
    %v2591 = vunpack.c.h.b16 %v2485
    %v2592 = vunpack.c.l.b16 %v2486
    %v2593 = vunpack.c.h.b16 %v2486
    %v2594 = vunpack.c.l.b16 %v2487
    %v2595 = vunpack.c.h.b16 %v2487
    %v2596 = vunpack.c.l.b16 %v2488
    %v2597 = vunpack.c.h.b16 %v2488
    %v2598 = vunpack.c.l.b16 %v2489
    %v2599 = vunpack.c.h.b16 %v2489
    %v2600 = vunpack.c.l.b16 %v2490
    %v2601 = vunpack.c.h.b16 %v2490
    %v2602 = vunpack.c.l.b16 %v2491
    %v2603 = vunpack.c.h.b16 %v2491
    %v2604 = vunpack.c.l.b16 %v2492
    %v2605 = vunpack.c.h.b16 %v2492
    %v2606 = vunpack.c.l.b16 %v2493
    %v2607 = vunpack.c.h.b16 %v2493
    %v2608 = vunpack.c.l.b16 %v2494
    %v2609 = vunpack.c.h.b16 %v2494
    %v2610 = vunpack.c.l.b16 %v2495
    %v2611 = vunpack.c.h.b16 %v2495
    %v2612 = vunpack.c.l.b16 %v2496
    %v2613 = vunpack.c.h.b16 %v2496
    %v2614 = vunpack.c.l.b16 %v2497
    %v2615 = vunpack.c.h.b16 %v2497
    %v2616 = vpack.c.b16 %v2556, %v2552
    %v2617 = vpack.c.b16 %v2557, %v2553
    %v2618 = vpack.c.b16 %v2558, %v2554
    %v2619 = vpack.c.b16 %v2559, %v2555
    %v2620 = vpack.c.b16 %v2564, %v2560
    %v2621 = vpack.c.b16 %v2565, %v2561
    %v2622 = vpack.c.b16 %v2566, %v2562
    %v2623 = vpack.c.b16 %v2567, %v2563
    %v2624 = vpack.c.b16 %v2572, %v2568
    %v2625 = vpack.c.b16 %v2573, %v2569
    %v2626 = vpack.c.b16 %v2574, %v2570
    %v2627 = vpack.c.b16 %v2575, %v2571
    %v2628 = vpack.c.b16 %v2580, %v2576
    %v2629 = vpack.c.b16 %v2581, %v2577
    %v2630 = vpack.c.b16 %v2582, %v2578
    %v2631 = vpack.c.b16 %v2583, %v2579
    %v2632 = vpack.c.b16 %v2588, %v2584
    %v2633 = vpack.c.b16 %v2589, %v2585
    %v2634 = vpack.c.b16 %v2590, %v2586
    %v2635 = vpack.c.b16 %v2591, %v2587
    %v2636 = vpack.c.b16 %v2596, %v2592
    %v2637 = vpack.c.b16 %v2597, %v2593
    %v2638 = vpack.c.b16 %v2598, %v2594
    %v2639 = vpack.c.b16 %v2599, %v2595
    %v2640 = vpack.c.b16 %v2604, %v2600
    %v2641 = vpack.c.b16 %v2605, %v2601
    %v2642 = vpack.c.b16 %v2606, %v2602
    %v2643 = vpack.c.b16 %v2607, %v2603
    %v2644 = vpack.c.b16 %v2612, %v2608
    %v2645 = vpack.c.b16 %v2613, %v2609
    %v2646 = vpack.c.b16 %v2614, %v2610
    %v2647 = vpack.c.b16 %v2615, %v2611
    %2680 = vmatprep.subr.bf16.mxu0 %v2645
    %2681 = vmatpush1.bf16.msra.mxu0 %v2644
    %2682 = vmatprep.subr.bf16.mxu0 %v2641
    %2683 = vmatpush1.bf16.msra.mxu0 %v2640
    %2684 = vmatprep.subr.bf16.mxu0 %v2637
    %2685 = vmatpush1.bf16.msra.mxu0 %v2636
    %2686 = vmatprep.subr.bf16.mxu0 %v2633
    %2687 = vmatpush1.bf16.msra.mxu0 %v2632
    %2688 = vmatprep.subr.bf16.mxu0 %v2629
    %2689 = vmatpush1.bf16.msra.mxu0 %v2628
    %2690 = vmatprep.subr.bf16.mxu0 %v2625
    %2691 = vmatpush1.bf16.msra.mxu0 %v2624
    %2692 = vmatprep.subr.bf16.mxu0 %v2621
    %2693 = vmatpush1.bf16.msra.mxu0 %v2620
    %2694 = vmatprep.subr.bf16.mxu0 %v2617
    %2695 = vmatpush1.bf16.msra.mxu0 %v2616
    %2696 = vmatprep.subr.bf16.mxu0 0
    %2697 = vmatpush2.bf16.msra.mxu0 0
    %2698 = vmatprep.subr.bf16.mxu0 0
    %2699 = vmatpush2.bf16.msra.mxu0 0
    %2700 = vmatprep.subr.bf16.mxu0 0
    %2701 = vmatpush2.bf16.msra.mxu0 0
    %2702 = vmatprep.subr.bf16.mxu0 0
    %2703 = vmatpush2.bf16.msra.mxu0 0
    %2704 = vmatprep.subr.bf16.mxu0 0
    %2705 = vmatpush2.bf16.msra.mxu0 0
    %2706 = vmatprep.subr.bf16.mxu0 0
    %2707 = vmatpush2.bf16.msra.mxu0 0
    %2708 = vmatprep.subr.bf16.mxu0 0
    %2709 = vmatpush2.bf16.msra.mxu0 0
    %2710 = vmatprep.subr.bf16.mxu0 0
    %2711 = vmatpush2.bf16.msra.mxu0 0
    %2712 = vmatprep.mubr.bf16.mxu0 0
    %2713 = vmatmul.mubr.bf16.gmra.mxu0 %v2465
    %v2714 = vpop.f32.mrf.mxu0
    %v2715 = vadd.f32 %v2503, %v2714
    %v2716 = vpop.f32.mrf.mxu0
    %v2717 = vadd.f32 %v2507, %v2716
    %v2718 = vpop.f32.mrf.mxu0
    %v2719 = vpop.f32.mrf.mxu0
    %2720 = vdwg.mxu0
    %2721 = vmatprep.subr.bf16.mxu0 %v2647
    %2722 = vmatpush1.bf16.msra.mxu0 %v2646
    %2723 = vmatprep.subr.bf16.mxu0 %v2643
    %2724 = vmatpush1.bf16.msra.mxu0 %v2642
    %2725 = vmatprep.subr.bf16.mxu0 %v2639
    %2726 = vmatpush1.bf16.msra.mxu0 %v2638
    %2727 = vmatprep.subr.bf16.mxu0 %v2635
    %2728 = vmatpush1.bf16.msra.mxu0 %v2634
    %2729 = vmatprep.subr.bf16.mxu0 %v2631
    %2730 = vmatpush1.bf16.msra.mxu0 %v2630
    %2731 = vmatprep.subr.bf16.mxu0 %v2627
    %2732 = vmatpush1.bf16.msra.mxu0 %v2626
    %2733 = vmatprep.subr.bf16.mxu0 %v2623
    %2734 = vmatpush1.bf16.msra.mxu0 %v2622
    %2735 = vmatprep.subr.bf16.mxu0 %v2619
    %2736 = vmatpush1.bf16.msra.mxu0 %v2618
    %2737 = vmatprep.subr.bf16.mxu0 0
    %2738 = vmatpush2.bf16.msra.mxu0 0
    %2739 = vmatprep.subr.bf16.mxu0 0
    %2740 = vmatpush2.bf16.msra.mxu0 0
    %2741 = vmatprep.subr.bf16.mxu0 0
    %2742 = vmatpush2.bf16.msra.mxu0 0
    %2743 = vmatprep.subr.bf16.mxu0 0
    %2744 = vmatpush2.bf16.msra.mxu0 0
    %2745 = vmatprep.subr.bf16.mxu0 0
    %2746 = vmatpush2.bf16.msra.mxu0 0
    %2747 = vmatprep.subr.bf16.mxu0 0
    %2748 = vmatpush2.bf16.msra.mxu0 0
    %2749 = vmatprep.subr.bf16.mxu0 0
    %2750 = vmatpush2.bf16.msra.mxu0 0
    %2751 = vmatprep.subr.bf16.mxu0 0
    %2752 = vmatpush2.bf16.msra.mxu0 0
    %2753 = vmatprep.mubr.bf16.mxu0 0
    %2754 = vmatmul.mubr.bf16.gmra.mxu0 %v2465
    %v2755 = vpop.f32.mrf.mxu0
    %v2756 = vadd.f32 %v2511, %v2755
    %v2757 = vpop.f32.mrf.mxu0
    %v2758 = vadd.f32 %v2515, %v2757
    %v2759 = vpop.f32.mrf.mxu0
    %v2760 = vpop.f32.mrf.mxu0
    %2761 = vdwg.mxu0
    %2762 = vst [vmem:[#allocation2 + $0x60] sm:$0xff] %v2715
    %2763 = vst [vmem:[#allocation2 + $0x68] sm:$0xff] %v2717
    %2764 = vst [vmem:[#allocation2 + $0x70] sm:$0xff] %v2756
    %2765 = vst [vmem:[#allocation2 + $0x78] sm:$0xff] %v2758
    %v2766 = vld [vmem:[#allocation2 + $0x80] sm:$0xff]
    %v2767 = vld [vmem:[#allocation2 + $0x88] sm:$0xff]
    %v2768 = vld [vmem:[#allocation2 + $0x90] sm:$0xff]
    %v2769 = vld [vmem:[#allocation2 + $0x98] sm:$0xff]
    %v2770 = vld [vmem:[#allocation6] sm:$0xff]
    %v2771 = vld [vmem:[#allocation6 + $0x8] sm:$0xff]
    %v2772 = vld [vmem:[#allocation6 + $0x10] sm:$0xff]
    %v2773 = vld [vmem:[#allocation6 + $0x18] sm:$0xff]
    %v2774 = vld [vmem:[#allocation6 + $0x20] sm:$0xff]
    %v2775 = vld [vmem:[#allocation6 + $0x28] sm:$0xff]
    %v2776 = vld [vmem:[#allocation6 + $0x30] sm:$0xff]
    %v2777 = vld [vmem:[#allocation6 + $0x38] sm:$0xff]
    %v2778 = vld [vmem:[#allocation6 + $0x40] sm:$0xff]
    %v2779 = vld [vmem:[#allocation6 + $0x48] sm:$0xff]
    %v2780 = vld [vmem:[#allocation6 + $0x50] sm:$0xff]
    %v2781 = vld [vmem:[#allocation6 + $0x58] sm:$0xff]
    %v2782 = vld [vmem:[#allocation6 + $0x60] sm:$0xff]
    %v2783 = vld [vmem:[#allocation6 + $0x68] sm:$0xff]
    %v2784 = vld [vmem:[#allocation6 + $0x70] sm:$0xff]
    %v2785 = vld [vmem:[#allocation6 + $0x78] sm:$0xff]
    %v2786 = vld [vmem:[#allocation6 + $0x80] sm:$0xff]
    %v2787 = vld [vmem:[#allocation6 + $0x88] sm:$0xff]
    %v2788 = vld [vmem:[#allocation6 + $0x90] sm:$0xff]
    %v2789 = vld [vmem:[#allocation6 + $0x98] sm:$0xff]
    %v2790 = vld [vmem:[#allocation6 + $0xa0] sm:$0xff]
    %v2791 = vld [vmem:[#allocation6 + $0xa8] sm:$0xff]
    %v2792 = vld [vmem:[#allocation6 + $0xb0] sm:$0xff]
    %v2793 = vld [vmem:[#allocation6 + $0xb8] sm:$0xff]
    %v2794 = vld [vmem:[#allocation6 + $0xc0] sm:$0xff]
    %v2795 = vld [vmem:[#allocation6 + $0xc8] sm:$0xff]
    %v2796 = vld [vmem:[#allocation6 + $0xd0] sm:$0xff]
    %v2797 = vld [vmem:[#allocation6 + $0xd8] sm:$0xff]
    %v2798 = vld [vmem:[#allocation6 + $0xe0] sm:$0xff]
    %v2799 = vld [vmem:[#allocation6 + $0xe8] sm:$0xff]
    %v2800 = vld [vmem:[#allocation6 + $0xf0] sm:$0xff]
    %v2801 = vld [vmem:[#allocation6 + $0xf8] sm:$0xff]
    %v2834 = vunpack.c.l.b16 %v2770
    %v2835 = vunpack.c.h.b16 %v2770
    %v2836 = vunpack.c.l.b16 %v2771
    %v2837 = vunpack.c.h.b16 %v2771
    %v2838 = vunpack.c.l.b16 %v2772
    %v2839 = vunpack.c.h.b16 %v2772
    %v2840 = vunpack.c.l.b16 %v2773
    %v2841 = vunpack.c.h.b16 %v2773
    %v2842 = vunpack.c.l.b16 %v2774
    %v2843 = vunpack.c.h.b16 %v2774
    %v2844 = vunpack.c.l.b16 %v2775
    %v2845 = vunpack.c.h.b16 %v2775
    %v2846 = vunpack.c.l.b16 %v2776
    %v2847 = vunpack.c.h.b16 %v2776
    %v2848 = vunpack.c.l.b16 %v2777
    %v2849 = vunpack.c.h.b16 %v2777
    %v2850 = vunpack.c.l.b16 %v2778
    %v2851 = vunpack.c.h.b16 %v2778
    %v2852 = vunpack.c.l.b16 %v2779
    %v2853 = vunpack.c.h.b16 %v2779
    %v2854 = vunpack.c.l.b16 %v2780
    %v2855 = vunpack.c.h.b16 %v2780
    %v2856 = vunpack.c.l.b16 %v2781
    %v2857 = vunpack.c.h.b16 %v2781
    %v2858 = vunpack.c.l.b16 %v2782
    %v2859 = vunpack.c.h.b16 %v2782
    %v2860 = vunpack.c.l.b16 %v2783
    %v2861 = vunpack.c.h.b16 %v2783
    %v2862 = vunpack.c.l.b16 %v2784
    %v2863 = vunpack.c.h.b16 %v2784
    %v2864 = vunpack.c.l.b16 %v2785
    %v2865 = vunpack.c.h.b16 %v2785
    %v2866 = vunpack.c.l.b16 %v2786
    %v2867 = vunpack.c.h.b16 %v2786
    %v2868 = vunpack.c.l.b16 %v2787
    %v2869 = vunpack.c.h.b16 %v2787
    %v2870 = vunpack.c.l.b16 %v2788
    %v2871 = vunpack.c.h.b16 %v2788
    %v2872 = vunpack.c.l.b16 %v2789
    %v2873 = vunpack.c.h.b16 %v2789
    %v2874 = vunpack.c.l.b16 %v2790
    %v2875 = vunpack.c.h.b16 %v2790
    %v2876 = vunpack.c.l.b16 %v2791
    %v2877 = vunpack.c.h.b16 %v2791
    %v2878 = vunpack.c.l.b16 %v2792
    %v2879 = vunpack.c.h.b16 %v2792
    %v2880 = vunpack.c.l.b16 %v2793
    %v2881 = vunpack.c.h.b16 %v2793
    %v2882 = vunpack.c.l.b16 %v2794
    %v2883 = vunpack.c.h.b16 %v2794
    %v2884 = vunpack.c.l.b16 %v2795
    %v2885 = vunpack.c.h.b16 %v2795
    %v2886 = vunpack.c.l.b16 %v2796
    %v2887 = vunpack.c.h.b16 %v2796
    %v2888 = vunpack.c.l.b16 %v2797
    %v2889 = vunpack.c.h.b16 %v2797
    %v2890 = vunpack.c.l.b16 %v2798
    %v2891 = vunpack.c.h.b16 %v2798
    %v2892 = vunpack.c.l.b16 %v2799
    %v2893 = vunpack.c.h.b16 %v2799
    %v2894 = vunpack.c.l.b16 %v2800
    %v2895 = vunpack.c.h.b16 %v2800
    %v2896 = vunpack.c.l.b16 %v2801
    %v2897 = vunpack.c.h.b16 %v2801
    %v2898 = vpack.c.b16 %v2838, %v2834
    %v2899 = vpack.c.b16 %v2839, %v2835
    %v2900 = vpack.c.b16 %v2840, %v2836
    %v2901 = vpack.c.b16 %v2841, %v2837
    %v2902 = vpack.c.b16 %v2846, %v2842
    %v2903 = vpack.c.b16 %v2847, %v2843
    %v2904 = vpack.c.b16 %v2848, %v2844
    %v2905 = vpack.c.b16 %v2849, %v2845
    %v2906 = vpack.c.b16 %v2854, %v2850
    %v2907 = vpack.c.b16 %v2855, %v2851
    %v2908 = vpack.c.b16 %v2856, %v2852
    %v2909 = vpack.c.b16 %v2857, %v2853
    %v2910 = vpack.c.b16 %v2862, %v2858
    %v2911 = vpack.c.b16 %v2863, %v2859
    %v2912 = vpack.c.b16 %v2864, %v2860
    %v2913 = vpack.c.b16 %v2865, %v2861
    %v2914 = vpack.c.b16 %v2870, %v2866
    %v2915 = vpack.c.b16 %v2871, %v2867
    %v2916 = vpack.c.b16 %v2872, %v2868
    %v2917 = vpack.c.b16 %v2873, %v2869
    %v2918 = vpack.c.b16 %v2878, %v2874
    %v2919 = vpack.c.b16 %v2879, %v2875
    %v2920 = vpack.c.b16 %v2880, %v2876
    %v2921 = vpack.c.b16 %v2881, %v2877
    %v2922 = vpack.c.b16 %v2886, %v2882
    %v2923 = vpack.c.b16 %v2887, %v2883
    %v2924 = vpack.c.b16 %v2888, %v2884
    %v2925 = vpack.c.b16 %v2889, %v2885
    %v2926 = vpack.c.b16 %v2894, %v2890
    %v2927 = vpack.c.b16 %v2895, %v2891
    %v2928 = vpack.c.b16 %v2896, %v2892
    %v2929 = vpack.c.b16 %v2897, %v2893
    %2962 = vmatprep.subr.bf16.mxu0 %v2927
    %2963 = vmatpush1.bf16.msra.mxu0 %v2926
    %2964 = vmatprep.subr.bf16.mxu0 %v2923
    %2965 = vmatpush1.bf16.msra.mxu0 %v2922
    %2966 = vmatprep.subr.bf16.mxu0 %v2919
    %2967 = vmatpush1.bf16.msra.mxu0 %v2918
    %2968 = vmatprep.subr.bf16.mxu0 %v2915
    %2969 = vmatpush1.bf16.msra.mxu0 %v2914
    %2970 = vmatprep.subr.bf16.mxu0 %v2911
    %2971 = vmatpush1.bf16.msra.mxu0 %v2910
    %2972 = vmatprep.subr.bf16.mxu0 %v2907
    %2973 = vmatpush1.bf16.msra.mxu0 %v2906
    %2974 = vmatprep.subr.bf16.mxu0 %v2903
    %2975 = vmatpush1.bf16.msra.mxu0 %v2902
    %2976 = vmatprep.subr.bf16.mxu0 %v2899
    %2977 = vmatpush1.bf16.msra.mxu0 %v2898
    %2978 = vmatprep.subr.bf16.mxu0 0
    %2979 = vmatpush2.bf16.msra.mxu0 0
    %2980 = vmatprep.subr.bf16.mxu0 0
    %2981 = vmatpush2.bf16.msra.mxu0 0
    %2982 = vmatprep.subr.bf16.mxu0 0
    %2983 = vmatpush2.bf16.msra.mxu0 0
    %2984 = vmatprep.subr.bf16.mxu0 0
    %2985 = vmatpush2.bf16.msra.mxu0 0
    %2986 = vmatprep.subr.bf16.mxu0 0
    %2987 = vmatpush2.bf16.msra.mxu0 0
    %2988 = vmatprep.subr.bf16.mxu0 0
    %2989 = vmatpush2.bf16.msra.mxu0 0
    %2990 = vmatprep.subr.bf16.mxu0 0
    %2991 = vmatpush2.bf16.msra.mxu0 0
    %2992 = vmatprep.subr.bf16.mxu0 0
    %2993 = vmatpush2.bf16.msra.mxu0 0
    %2994 = vmatprep.mubr.bf16.mxu0 0
    %2995 = vmatmul.mubr.bf16.gmra.mxu0 %v2465
    %v2996 = vpop.f32.mrf.mxu0
    %v2997 = vadd.f32 0.0, %v2996
    %v2998 = vpop.f32.mrf.mxu0
    %v2999 = vadd.f32 0.0, %v2998
    %v3000 = vpop.f32.mrf.mxu0
    %v3001 = vpop.f32.mrf.mxu0
    %3002 = vdwg.mxu0
    %3003 = vmatprep.subr.bf16.mxu0 %v2929
    %3004 = vmatpush1.bf16.msra.mxu0 %v2928
    %3005 = vmatprep.subr.bf16.mxu0 %v2925
    %3006 = vmatpush1.bf16.msra.mxu0 %v2924
    %3007 = vmatprep.subr.bf16.mxu0 %v2921
    %3008 = vmatpush1.bf16.msra.mxu0 %v2920
    %3009 = vmatprep.subr.bf16.mxu0 %v2917
    %3010 = vmatpush1.bf16.msra.mxu0 %v2916
    %3011 = vmatprep.subr.bf16.mxu0 %v2913
    %3012 = vmatpush1.bf16.msra.mxu0 %v2912
    %3013 = vmatprep.subr.bf16.mxu0 %v2909
    %3014 = vmatpush1.bf16.msra.mxu0 %v2908
    %3015 = vmatprep.subr.bf16.mxu0 %v2905
    %3016 = vmatpush1.bf16.msra.mxu0 %v2904
    %3017 = vmatprep.subr.bf16.mxu0 %v2901
    %3018 = vmatpush1.bf16.msra.mxu0 %v2900
    %3019 = vmatprep.subr.bf16.mxu0 0
    %3020 = vmatpush2.bf16.msra.mxu0 0
    %3021 = vmatprep.subr.bf16.mxu0 0
    %3022 = vmatpush2.bf16.msra.mxu0 0
    %3023 = vmatprep.subr.bf16.mxu0 0
    %3024 = vmatpush2.bf16.msra.mxu0 0
    %3025 = vmatprep.subr.bf16.mxu0 0
    %3026 = vmatpush2.bf16.msra.mxu0 0
    %3027 = vmatprep.subr.bf16.mxu0 0
    %3028 = vmatpush2.bf16.msra.mxu0 0
    %3029 = vmatprep.subr.bf16.mxu0 0
    %3030 = vmatpush2.bf16.msra.mxu0 0
    %3031 = vmatprep.subr.bf16.mxu0 0
    %3032 = vmatpush2.bf16.msra.mxu0 0
    %3033 = vmatprep.subr.bf16.mxu0 0
    %3034 = vmatpush2.bf16.msra.mxu0 0
    %3035 = vmatprep.mubr.bf16.mxu0 0
    %3036 = vmatmul.mubr.bf16.gmra.mxu0 %v2465
    %v3037 = vpop.f32.mrf.mxu0
    %v3038 = vadd.f32 0.0, %v3037
    %v3039 = vpop.f32.mrf.mxu0
    %v3040 = vadd.f32 0.0, %v3039
    %v3041 = vpop.f32.mrf.mxu0
    %v3042 = vpop.f32.mrf.mxu0
    %3043 = vdwg.mxu0
    %v3044 = vadd.f32 %v2766, %v2997
    %v3045 = vadd.f32 %v2767, %v2999
    %v3046 = vadd.f32 %v2768, %v3038
    %v3047 = vadd.f32 %v2769, %v3040
    %v3048 = vxor.u32 %v3044, 2147483648
    %v3049 = vmul.f32 %v3048, 1.442695
    %v3050 = vpow.pop %v3049
    %v3051 = vadd.f32 %v3050, 1.0
    %v3052 = vrcp.pop %v3051
    %v3053 = vmul.f32 1.0, %v3052
    %v3054 = vxor.u32 %v3045, 2147483648
    %v3055 = vmul.f32 %v3054, 1.442695
    %v3056 = vpow.pop %v3055
    %v3057 = vadd.f32 %v3056, 1.0
    %v3058 = vrcp.pop %v3057
    %v3059 = vmul.f32 1.0, %v3058
    %v3060 = vtanh.pop %v3046
    %v3061 = vxor.u32 %v3047, 2147483648
    %v3062 = vmul.f32 %v3061, 1.442695
    %v3063 = vpow.pop %v3062
    %v3064 = vadd.f32 %v3063, 1.0
    %v3065 = vrcp.pop %v3064
    %v3066 = vmul.f32 1.0, %v3065
    %v3067 = vmul.f32 %v3059, %v2462
    %v3068 = vmul.f32 %v3053, %v3060
    %v3069 = vadd.f32 %v3067, %v3068
    %v3070 = vtanh.pop %v3069
    %v3071 = vmul.f32 %v3066, %v3070
    %v3072 = vpack.c.bf16 %v3071, %v3071
    %v3073 = vld [vmem:[#allocation8] sm:$0xff]
    %v3074 = vld [vmem:[#allocation8 + $0x8] sm:$0xff]
    %v3075 = vld [vmem:[#allocation8 + $0x10] sm:$0xff]
    %v3076 = vld [vmem:[#allocation8 + $0x18] sm:$0xff]
    %v3077 = vld [vmem:[#allocation8 + $0x20] sm:$0xff]
    %v3078 = vld [vmem:[#allocation8 + $0x28] sm:$0xff]
    %v3079 = vld [vmem:[#allocation8 + $0x30] sm:$0xff]
    %v3080 = vld [vmem:[#allocation8 + $0x38] sm:$0xff]
    %v3081 = vld [vmem:[#allocation8 + $0x40] sm:$0xff]
    %v3082 = vld [vmem:[#allocation8 + $0x48] sm:$0xff]
    %v3083 = vld [vmem:[#allocation8 + $0x50] sm:$0xff]
    %v3084 = vld [vmem:[#allocation8 + $0x58] sm:$0xff]
    %v3085 = vld [vmem:[#allocation8 + $0x60] sm:$0xff]
    %v3086 = vld [vmem:[#allocation8 + $0x68] sm:$0xff]
    %v3087 = vld [vmem:[#allocation8 + $0x70] sm:$0xff]
    %v3088 = vld [vmem:[#allocation8 + $0x78] sm:$0xff]
    %v3089 = vld [vmem:[#allocation8 + $0x80] sm:$0xff]
    %v3090 = vld [vmem:[#allocation8 + $0x88] sm:$0xff]
    %v3091 = vld [vmem:[#allocation8 + $0x90] sm:$0xff]
    %v3092 = vld [vmem:[#allocation8 + $0x98] sm:$0xff]
    %v3093 = vld [vmem:[#allocation8 + $0xa0] sm:$0xff]
    %v3094 = vld [vmem:[#allocation8 + $0xa8] sm:$0xff]
    %v3095 = vld [vmem:[#allocation8 + $0xb0] sm:$0xff]
    %v3096 = vld [vmem:[#allocation8 + $0xb8] sm:$0xff]
    %v3097 = vld [vmem:[#allocation8 + $0xc0] sm:$0xff]
    %v3098 = vld [vmem:[#allocation8 + $0xc8] sm:$0xff]
    %v3099 = vld [vmem:[#allocation8 + $0xd0] sm:$0xff]
    %v3100 = vld [vmem:[#allocation8 + $0xd8] sm:$0xff]
    %v3101 = vld [vmem:[#allocation8 + $0xe0] sm:$0xff]
    %v3102 = vld [vmem:[#allocation8 + $0xe8] sm:$0xff]
    %v3103 = vld [vmem:[#allocation8 + $0xf0] sm:$0xff]
    %v3104 = vld [vmem:[#allocation8 + $0xf8] sm:$0xff]
    %v3105 = vld [vmem:[%s6] sm:$0xf]
    %v3107 = vlaneseq
    %v3108 = vshrl.u32 %v3107, 7
    %v3109 = vsub.s32 0, %v3108
    %v3110 = vrot.slane %v3105, %v3109
    %v3111 = vlaneseq
    %v3112 = vshrl.u32 %v3111, 7
    %v3113 = vsub.s32 1, %v3112
    %v3114 = vrot.slane %v3105, %v3113
    %v3115 = vlaneseq
    %v3116 = vshrl.u32 %v3115, 7
    %v3117 = vsub.s32 2, %v3116
    %v3118 = vrot.slane %v3105, %v3117
    %v3119 = vlaneseq
    %v3120 = vshrl.u32 %v3119, 7
    %v3121 = vsub.s32 3, %v3120
    %v3122 = vrot.slane %v3105, %v3121
    %v3159 = vunpack.c.l.b16 %v3073
    %v3160 = vunpack.c.h.b16 %v3073
    %v3161 = vunpack.c.l.b16 %v3074
    %v3162 = vunpack.c.h.b16 %v3074
    %v3163 = vunpack.c.l.b16 %v3075
    %v3164 = vunpack.c.h.b16 %v3075
    %v3165 = vunpack.c.l.b16 %v3076
    %v3166 = vunpack.c.h.b16 %v3076
    %v3167 = vunpack.c.l.b16 %v3077
    %v3168 = vunpack.c.h.b16 %v3077
    %v3169 = vunpack.c.l.b16 %v3078
    %v3170 = vunpack.c.h.b16 %v3078
    %v3171 = vunpack.c.l.b16 %v3079
    %v3172 = vunpack.c.h.b16 %v3079
    %v3173 = vunpack.c.l.b16 %v3080
    %v3174 = vunpack.c.h.b16 %v3080
    %v3175 = vunpack.c.l.b16 %v3081
    %v3176 = vunpack.c.h.b16 %v3081
    %v3177 = vunpack.c.l.b16 %v3082
    %v3178 = vunpack.c.h.b16 %v3082
    %v3179 = vunpack.c.l.b16 %v3083
    %v3180 = vunpack.c.h.b16 %v3083
    %v3181 = vunpack.c.l.b16 %v3084
    %v3182 = vunpack.c.h.b16 %v3084
    %v3183 = vunpack.c.l.b16 %v3085
    %v3184 = vunpack.c.h.b16 %v3085
    %v3185 = vunpack.c.l.b16 %v3086
    %v3186 = vunpack.c.h.b16 %v3086
    %v3187 = vunpack.c.l.b16 %v3087
    %v3188 = vunpack.c.h.b16 %v3087
    %v3189 = vunpack.c.l.b16 %v3088
    %v3190 = vunpack.c.h.b16 %v3088
    %v3191 = vunpack.c.l.b16 %v3089
    %v3192 = vunpack.c.h.b16 %v3089
    %v3193 = vunpack.c.l.b16 %v3090
    %v3194 = vunpack.c.h.b16 %v3090
    %v3195 = vunpack.c.l.b16 %v3091
    %v3196 = vunpack.c.h.b16 %v3091
    %v3197 = vunpack.c.l.b16 %v3092
    %v3198 = vunpack.c.h.b16 %v3092
    %v3199 = vunpack.c.l.b16 %v3093
    %v3200 = vunpack.c.h.b16 %v3093
    %v3201 = vunpack.c.l.b16 %v3094
    %v3202 = vunpack.c.h.b16 %v3094
    %v3203 = vunpack.c.l.b16 %v3095
    %v3204 = vunpack.c.h.b16 %v3095
    %v3205 = vunpack.c.l.b16 %v3096
    %v3206 = vunpack.c.h.b16 %v3096
    %v3207 = vunpack.c.l.b16 %v3097
    %v3208 = vunpack.c.h.b16 %v3097
    %v3209 = vunpack.c.l.b16 %v3098
    %v3210 = vunpack.c.h.b16 %v3098
    %v3211 = vunpack.c.l.b16 %v3099
    %v3212 = vunpack.c.h.b16 %v3099
    %v3213 = vunpack.c.l.b16 %v3100
    %v3214 = vunpack.c.h.b16 %v3100
    %v3215 = vunpack.c.l.b16 %v3101
    %v3216 = vunpack.c.h.b16 %v3101
    %v3217 = vunpack.c.l.b16 %v3102
    %v3218 = vunpack.c.h.b16 %v3102
    %v3219 = vunpack.c.l.b16 %v3103
    %v3220 = vunpack.c.h.b16 %v3103
    %v3221 = vunpack.c.l.b16 %v3104
    %v3222 = vunpack.c.h.b16 %v3104
    %v3223 = vpack.c.b16 %v3163, %v3159
    %v3224 = vpack.c.b16 %v3164, %v3160
    %v3225 = vpack.c.b16 %v3165, %v3161
    %v3226 = vpack.c.b16 %v3166, %v3162
    %v3227 = vpack.c.b16 %v3171, %v3167
    %v3228 = vpack.c.b16 %v3172, %v3168
    %v3229 = vpack.c.b16 %v3173, %v3169
    %v3230 = vpack.c.b16 %v3174, %v3170
    %v3231 = vpack.c.b16 %v3179, %v3175
    %v3232 = vpack.c.b16 %v3180, %v3176
    %v3233 = vpack.c.b16 %v3181, %v3177
    %v3234 = vpack.c.b16 %v3182, %v3178
    %v3235 = vpack.c.b16 %v3187, %v3183
    %v3236 = vpack.c.b16 %v3188, %v3184
    %v3237 = vpack.c.b16 %v3189, %v3185
    %v3238 = vpack.c.b16 %v3190, %v3186
    %v3239 = vpack.c.b16 %v3195, %v3191
    %v3240 = vpack.c.b16 %v3196, %v3192
    %v3241 = vpack.c.b16 %v3197, %v3193
    %v3242 = vpack.c.b16 %v3198, %v3194
    %v3243 = vpack.c.b16 %v3203, %v3199
    %v3244 = vpack.c.b16 %v3204, %v3200
    %v3245 = vpack.c.b16 %v3205, %v3201
    %v3246 = vpack.c.b16 %v3206, %v3202
    %v3247 = vpack.c.b16 %v3211, %v3207
    %v3248 = vpack.c.b16 %v3212, %v3208
    %v3249 = vpack.c.b16 %v3213, %v3209
    %v3250 = vpack.c.b16 %v3214, %v3210
    %v3251 = vpack.c.b16 %v3219, %v3215
    %v3252 = vpack.c.b16 %v3220, %v3216
    %v3253 = vpack.c.b16 %v3221, %v3217
    %v3254 = vpack.c.b16 %v3222, %v3218
    %3287 = vmatprep.subr.bf16.mxu0 %v3252
    %3288 = vmatpush1.bf16.msra.mxu0 %v3251
    %3289 = vmatprep.subr.bf16.mxu0 %v3248
    %3290 = vmatpush1.bf16.msra.mxu0 %v3247
    %3291 = vmatprep.subr.bf16.mxu0 %v3244
    %3292 = vmatpush1.bf16.msra.mxu0 %v3243
    %3293 = vmatprep.subr.bf16.mxu0 %v3240
    %3294 = vmatpush1.bf16.msra.mxu0 %v3239
    %3295 = vmatprep.subr.bf16.mxu0 %v3236
    %3296 = vmatpush1.bf16.msra.mxu0 %v3235
    %3297 = vmatprep.subr.bf16.mxu0 %v3232
    %3298 = vmatpush1.bf16.msra.mxu0 %v3231
    %3299 = vmatprep.subr.bf16.mxu0 %v3228
    %3300 = vmatpush1.bf16.msra.mxu0 %v3227
    %3301 = vmatprep.subr.bf16.mxu0 %v3224
    %3302 = vmatpush1.bf16.msra.mxu0 %v3223
    %3303 = vmatprep.subr.bf16.mxu0 0
    %3304 = vmatpush2.bf16.msra.mxu0 0
    %3305 = vmatprep.subr.bf16.mxu0 0
    %3306 = vmatpush2.bf16.msra.mxu0 0
    %3307 = vmatprep.subr.bf16.mxu0 0
    %3308 = vmatpush2.bf16.msra.mxu0 0
    %3309 = vmatprep.subr.bf16.mxu0 0
    %3310 = vmatpush2.bf16.msra.mxu0 0
    %3311 = vmatprep.subr.bf16.mxu0 0
    %3312 = vmatpush2.bf16.msra.mxu0 0
    %3313 = vmatprep.subr.bf16.mxu0 0
    %3314 = vmatpush2.bf16.msra.mxu0 0
    %3315 = vmatprep.subr.bf16.mxu0 0
    %3316 = vmatpush2.bf16.msra.mxu0 0
    %3317 = vmatprep.subr.bf16.mxu0 0
    %3318 = vmatpush2.bf16.msra.mxu0 0
    %3319 = vmatprep.mubr.bf16.mxu0 0
    %3320 = vmatmul.mubr.bf16.gmra.mxu0 %v3072
    %v3321 = vpop.f32.mrf.mxu0
    %v3322 = vadd.f32 %v3110, %v3321
    %v3323 = vpop.f32.mrf.mxu0
    %v3324 = vadd.f32 %v3114, %v3323
    %v3325 = vpop.f32.mrf.mxu0
    %v3326 = vpop.f32.mrf.mxu0
    %3327 = vdwg.mxu0
    %3328 = vmatprep.subr.bf16.mxu0 %v3254
    %3329 = vmatpush1.bf16.msra.mxu0 %v3253
    %3330 = vmatprep.subr.bf16.mxu0 %v3250
    %3331 = vmatpush1.bf16.msra.mxu0 %v3249
    %3332 = vmatprep.subr.bf16.mxu0 %v3246
    %3333 = vmatpush1.bf16.msra.mxu0 %v3245
    %3334 = vmatprep.subr.bf16.mxu0 %v3242
    %3335 = vmatpush1.bf16.msra.mxu0 %v3241
    %3336 = vmatprep.subr.bf16.mxu0 %v3238
    %3337 = vmatpush1.bf16.msra.mxu0 %v3237
    %3338 = vmatprep.subr.bf16.mxu0 %v3234
    %3339 = vmatpush1.bf16.msra.mxu0 %v3233
    %3340 = vmatprep.subr.bf16.mxu0 %v3230
    %3341 = vmatpush1.bf16.msra.mxu0 %v3229
    %3342 = vmatprep.subr.bf16.mxu0 %v3226
    %3343 = vmatpush1.bf16.msra.mxu0 %v3225
    %3344 = vmatprep.subr.bf16.mxu0 0
    %3345 = vmatpush2.bf16.msra.mxu0 0
    %3346 = vmatprep.subr.bf16.mxu0 0
    %3347 = vmatpush2.bf16.msra.mxu0 0
    %3348 = vmatprep.subr.bf16.mxu0 0
    %3349 = vmatpush2.bf16.msra.mxu0 0
    %3350 = vmatprep.subr.bf16.mxu0 0
    %3351 = vmatpush2.bf16.msra.mxu0 0
    %3352 = vmatprep.subr.bf16.mxu0 0
    %3353 = vmatpush2.bf16.msra.mxu0 0
    %3354 = vmatprep.subr.bf16.mxu0 0
    %3355 = vmatpush2.bf16.msra.mxu0 0
    %3356 = vmatprep.subr.bf16.mxu0 0
    %3357 = vmatpush2.bf16.msra.mxu0 0
    %3358 = vmatprep.subr.bf16.mxu0 0
    %3359 = vmatpush2.bf16.msra.mxu0 0
    %3360 = vmatprep.mubr.bf16.mxu0 0
    %3361 = vmatmul.mubr.bf16.gmra.mxu0 %v3072
    %v3362 = vpop.f32.mrf.mxu0
    %v3363 = vadd.f32 %v3118, %v3362
    %v3364 = vpop.f32.mrf.mxu0
    %v3365 = vadd.f32 %v3122, %v3364
    %v3366 = vpop.f32.mrf.mxu0
    %v3367 = vpop.f32.mrf.mxu0
    %3368 = vdwg.mxu0
    %3369 = vst [vmem:[#allocation2 + $0x80] sm:$0xff] %v3322
    %3370 = vst [vmem:[#allocation2 + $0x88] sm:$0xff] %v3324
    %3371 = vst [vmem:[#allocation2 + $0x90] sm:$0xff] %v3363
    %3372 = vst [vmem:[#allocation2 + $0x98] sm:$0xff] %v3365
    %v3373 = vld [vmem:[#allocation2 + $0xa0] sm:$0xff]
    %v3374 = vld [vmem:[#allocation2 + $0xa8] sm:$0xff]
    %v3375 = vld [vmem:[#allocation2 + $0xb0] sm:$0xff]
    %v3376 = vld [vmem:[#allocation2 + $0xb8] sm:$0xff]
    %v3377 = vld [vmem:[#allocation6] sm:$0xff]
    %v3378 = vld [vmem:[#allocation6 + $0x8] sm:$0xff]
    %v3379 = vld [vmem:[#allocation6 + $0x10] sm:$0xff]
    %v3380 = vld [vmem:[#allocation6 + $0x18] sm:$0xff]
    %v3381 = vld [vmem:[#allocation6 + $0x20] sm:$0xff]
    %v3382 = vld [vmem:[#allocation6 + $0x28] sm:$0xff]
    %v3383 = vld [vmem:[#allocation6 + $0x30] sm:$0xff]
    %v3384 = vld [vmem:[#allocation6 + $0x38] sm:$0xff]
    %v3385 = vld [vmem:[#allocation6 + $0x40] sm:$0xff]
    %v3386 = vld [vmem:[#allocation6 + $0x48] sm:$0xff]
    %v3387 = vld [vmem:[#allocation6 + $0x50] sm:$0xff]
    %v3388 = vld [vmem:[#allocation6 + $0x58] sm:$0xff]
    %v3389 = vld [vmem:[#allocation6 + $0x60] sm:$0xff]
    %v3390 = vld [vmem:[#allocation6 + $0x68] sm:$0xff]
    %v3391 = vld [vmem:[#allocation6 + $0x70] sm:$0xff]
    %v3392 = vld [vmem:[#allocation6 + $0x78] sm:$0xff]
    %v3393 = vld [vmem:[#allocation6 + $0x80] sm:$0xff]
    %v3394 = vld [vmem:[#allocation6 + $0x88] sm:$0xff]
    %v3395 = vld [vmem:[#allocation6 + $0x90] sm:$0xff]
    %v3396 = vld [vmem:[#allocation6 + $0x98] sm:$0xff]
    %v3397 = vld [vmem:[#allocation6 + $0xa0] sm:$0xff]
    %v3398 = vld [vmem:[#allocation6 + $0xa8] sm:$0xff]
    %v3399 = vld [vmem:[#allocation6 + $0xb0] sm:$0xff]
    %v3400 = vld [vmem:[#allocation6 + $0xb8] sm:$0xff]
    %v3401 = vld [vmem:[#allocation6 + $0xc0] sm:$0xff]
    %v3402 = vld [vmem:[#allocation6 + $0xc8] sm:$0xff]
    %v3403 = vld [vmem:[#allocation6 + $0xd0] sm:$0xff]
    %v3404 = vld [vmem:[#allocation6 + $0xd8] sm:$0xff]
    %v3405 = vld [vmem:[#allocation6 + $0xe0] sm:$0xff]
    %v3406 = vld [vmem:[#allocation6 + $0xe8] sm:$0xff]
    %v3407 = vld [vmem:[#allocation6 + $0xf0] sm:$0xff]
    %v3408 = vld [vmem:[#allocation6 + $0xf8] sm:$0xff]
    %v3441 = vunpack.c.l.b16 %v3377
    %v3442 = vunpack.c.h.b16 %v3377
    %v3443 = vunpack.c.l.b16 %v3378
    %v3444 = vunpack.c.h.b16 %v3378
    %v3445 = vunpack.c.l.b16 %v3379
    %v3446 = vunpack.c.h.b16 %v3379
    %v3447 = vunpack.c.l.b16 %v3380
    %v3448 = vunpack.c.h.b16 %v3380
    %v3449 = vunpack.c.l.b16 %v3381
    %v3450 = vunpack.c.h.b16 %v3381
    %v3451 = vunpack.c.l.b16 %v3382
    %v3452 = vunpack.c.h.b16 %v3382
    %v3453 = vunpack.c.l.b16 %v3383
    %v3454 = vunpack.c.h.b16 %v3383
    %v3455 = vunpack.c.l.b16 %v3384
    %v3456 = vunpack.c.h.b16 %v3384
    %v3457 = vunpack.c.l.b16 %v3385
    %v3458 = vunpack.c.h.b16 %v3385
    %v3459 = vunpack.c.l.b16 %v3386
    %v3460 = vunpack.c.h.b16 %v3386
    %v3461 = vunpack.c.l.b16 %v3387
    %v3462 = vunpack.c.h.b16 %v3387
    %v3463 = vunpack.c.l.b16 %v3388
    %v3464 = vunpack.c.h.b16 %v3388
    %v3465 = vunpack.c.l.b16 %v3389
    %v3466 = vunpack.c.h.b16 %v3389
    %v3467 = vunpack.c.l.b16 %v3390
    %v3468 = vunpack.c.h.b16 %v3390
    %v3469 = vunpack.c.l.b16 %v3391
    %v3470 = vunpack.c.h.b16 %v3391
    %v3471 = vunpack.c.l.b16 %v3392
    %v3472 = vunpack.c.h.b16 %v3392
    %v3473 = vunpack.c.l.b16 %v3393
    %v3474 = vunpack.c.h.b16 %v3393
    %v3475 = vunpack.c.l.b16 %v3394
    %v3476 = vunpack.c.h.b16 %v3394
    %v3477 = vunpack.c.l.b16 %v3395
    %v3478 = vunpack.c.h.b16 %v3395
    %v3479 = vunpack.c.l.b16 %v3396
    %v3480 = vunpack.c.h.b16 %v3396
    %v3481 = vunpack.c.l.b16 %v3397
    %v3482 = vunpack.c.h.b16 %v3397
    %v3483 = vunpack.c.l.b16 %v3398
    %v3484 = vunpack.c.h.b16 %v3398
    %v3485 = vunpack.c.l.b16 %v3399
    %v3486 = vunpack.c.h.b16 %v3399
    %v3487 = vunpack.c.l.b16 %v3400
    %v3488 = vunpack.c.h.b16 %v3400
    %v3489 = vunpack.c.l.b16 %v3401
    %v3490 = vunpack.c.h.b16 %v3401
    %v3491 = vunpack.c.l.b16 %v3402
    %v3492 = vunpack.c.h.b16 %v3402
    %v3493 = vunpack.c.l.b16 %v3403
    %v3494 = vunpack.c.h.b16 %v3403
    %v3495 = vunpack.c.l.b16 %v3404
    %v3496 = vunpack.c.h.b16 %v3404
    %v3497 = vunpack.c.l.b16 %v3405
    %v3498 = vunpack.c.h.b16 %v3405
    %v3499 = vunpack.c.l.b16 %v3406
    %v3500 = vunpack.c.h.b16 %v3406
    %v3501 = vunpack.c.l.b16 %v3407
    %v3502 = vunpack.c.h.b16 %v3407
    %v3503 = vunpack.c.l.b16 %v3408
    %v3504 = vunpack.c.h.b16 %v3408
    %v3505 = vpack.c.b16 %v3445, %v3441
    %v3506 = vpack.c.b16 %v3446, %v3442
    %v3507 = vpack.c.b16 %v3447, %v3443
    %v3508 = vpack.c.b16 %v3448, %v3444
    %v3509 = vpack.c.b16 %v3453, %v3449
    %v3510 = vpack.c.b16 %v3454, %v3450
    %v3511 = vpack.c.b16 %v3455, %v3451
    %v3512 = vpack.c.b16 %v3456, %v3452
    %v3513 = vpack.c.b16 %v3461, %v3457
    %v3514 = vpack.c.b16 %v3462, %v3458
    %v3515 = vpack.c.b16 %v3463, %v3459
    %v3516 = vpack.c.b16 %v3464, %v3460
    %v3517 = vpack.c.b16 %v3469, %v3465
    %v3518 = vpack.c.b16 %v3470, %v3466
    %v3519 = vpack.c.b16 %v3471, %v3467
    %v3520 = vpack.c.b16 %v3472, %v3468
    %v3521 = vpack.c.b16 %v3477, %v3473
    %v3522 = vpack.c.b16 %v3478, %v3474
    %v3523 = vpack.c.b16 %v3479, %v3475
    %v3524 = vpack.c.b16 %v3480, %v3476
    %v3525 = vpack.c.b16 %v3485, %v3481
    %v3526 = vpack.c.b16 %v3486, %v3482
    %v3527 = vpack.c.b16 %v3487, %v3483
    %v3528 = vpack.c.b16 %v3488, %v3484
    %v3529 = vpack.c.b16 %v3493, %v3489
    %v3530 = vpack.c.b16 %v3494, %v3490
    %v3531 = vpack.c.b16 %v3495, %v3491
    %v3532 = vpack.c.b16 %v3496, %v3492
    %v3533 = vpack.c.b16 %v3501, %v3497
    %v3534 = vpack.c.b16 %v3502, %v3498
    %v3535 = vpack.c.b16 %v3503, %v3499
    %v3536 = vpack.c.b16 %v3504, %v3500
    %3569 = vmatprep.subr.bf16.mxu0 %v3534
    %3570 = vmatpush1.bf16.msra.mxu0 %v3533
    %3571 = vmatprep.subr.bf16.mxu0 %v3530
    %3572 = vmatpush1.bf16.msra.mxu0 %v3529
    %3573 = vmatprep.subr.bf16.mxu0 %v3526
    %3574 = vmatpush1.bf16.msra.mxu0 %v3525
    %3575 = vmatprep.subr.bf16.mxu0 %v3522
    %3576 = vmatpush1.bf16.msra.mxu0 %v3521
    %3577 = vmatprep.subr.bf16.mxu0 %v3518
    %3578 = vmatpush1.bf16.msra.mxu0 %v3517
    %3579 = vmatprep.subr.bf16.mxu0 %v3514
    %3580 = vmatpush1.bf16.msra.mxu0 %v3513
    %3581 = vmatprep.subr.bf16.mxu0 %v3510
    %3582 = vmatpush1.bf16.msra.mxu0 %v3509
    %3583 = vmatprep.subr.bf16.mxu0 %v3506
    %3584 = vmatpush1.bf16.msra.mxu0 %v3505
    %3585 = vmatprep.subr.bf16.mxu0 0
    %3586 = vmatpush2.bf16.msra.mxu0 0
    %3587 = vmatprep.subr.bf16.mxu0 0
    %3588 = vmatpush2.bf16.msra.mxu0 0
    %3589 = vmatprep.subr.bf16.mxu0 0
    %3590 = vmatpush2.bf16.msra.mxu0 0
    %3591 = vmatprep.subr.bf16.mxu0 0
    %3592 = vmatpush2.bf16.msra.mxu0 0
    %3593 = vmatprep.subr.bf16.mxu0 0
    %3594 = vmatpush2.bf16.msra.mxu0 0
    %3595 = vmatprep.subr.bf16.mxu0 0
    %3596 = vmatpush2.bf16.msra.mxu0 0
    %3597 = vmatprep.subr.bf16.mxu0 0
    %3598 = vmatpush2.bf16.msra.mxu0 0
    %3599 = vmatprep.subr.bf16.mxu0 0
    %3600 = vmatpush2.bf16.msra.mxu0 0
    %3601 = vmatprep.mubr.bf16.mxu0 0
    %3602 = vmatmul.mubr.bf16.gmra.mxu0 %v3072
    %v3603 = vpop.f32.mrf.mxu0
    %v3604 = vadd.f32 0.0, %v3603
    %v3605 = vpop.f32.mrf.mxu0
    %v3606 = vadd.f32 0.0, %v3605
    %v3607 = vpop.f32.mrf.mxu0
    %v3608 = vpop.f32.mrf.mxu0
    %3609 = vdwg.mxu0
    %3610 = vmatprep.subr.bf16.mxu0 %v3536
    %3611 = vmatpush1.bf16.msra.mxu0 %v3535
    %3612 = vmatprep.subr.bf16.mxu0 %v3532
    %3613 = vmatpush1.bf16.msra.mxu0 %v3531
    %3614 = vmatprep.subr.bf16.mxu0 %v3528
    %3615 = vmatpush1.bf16.msra.mxu0 %v3527
    %3616 = vmatprep.subr.bf16.mxu0 %v3524
    %3617 = vmatpush1.bf16.msra.mxu0 %v3523
    %3618 = vmatprep.subr.bf16.mxu0 %v3520
    %3619 = vmatpush1.bf16.msra.mxu0 %v3519
    %3620 = vmatprep.subr.bf16.mxu0 %v3516
    %3621 = vmatpush1.bf16.msra.mxu0 %v3515
    %3622 = vmatprep.subr.bf16.mxu0 %v3512
    %3623 = vmatpush1.bf16.msra.mxu0 %v3511
    %3624 = vmatprep.subr.bf16.mxu0 %v3508
    %3625 = vmatpush1.bf16.msra.mxu0 %v3507
    %3626 = vmatprep.subr.bf16.mxu0 0
    %3627 = vmatpush2.bf16.msra.mxu0 0
    %3628 = vmatprep.subr.bf16.mxu0 0
    %3629 = vmatpush2.bf16.msra.mxu0 0
    %3630 = vmatprep.subr.bf16.mxu0 0
    %3631 = vmatpush2.bf16.msra.mxu0 0
    %3632 = vmatprep.subr.bf16.mxu0 0
    %3633 = vmatpush2.bf16.msra.mxu0 0
    %3634 = vmatprep.subr.bf16.mxu0 0
    %3635 = vmatpush2.bf16.msra.mxu0 0
    %3636 = vmatprep.subr.bf16.mxu0 0
    %3637 = vmatpush2.bf16.msra.mxu0 0
    %3638 = vmatprep.subr.bf16.mxu0 0
    %3639 = vmatpush2.bf16.msra.mxu0 0
    %3640 = vmatprep.subr.bf16.mxu0 0
    %3641 = vmatpush2.bf16.msra.mxu0 0
    %3642 = vmatprep.mubr.bf16.mxu0 0
    %3643 = vmatmul.mubr.bf16.gmra.mxu0 %v3072
    %v3644 = vpop.f32.mrf.mxu0
    %v3645 = vadd.f32 0.0, %v3644
    %v3646 = vpop.f32.mrf.mxu0
    %v3647 = vadd.f32 0.0, %v3646
    %v3648 = vpop.f32.mrf.mxu0
    %v3649 = vpop.f32.mrf.mxu0
    %3650 = vdwg.mxu0
    %v3651 = vadd.f32 %v3373, %v3604
    %v3652 = vadd.f32 %v3374, %v3606
    %v3653 = vadd.f32 %v3375, %v3645
    %v3654 = vadd.f32 %v3376, %v3647
    %v3655 = vxor.u32 %v3651, 2147483648
    %v3656 = vmul.f32 %v3655, 1.442695
    %v3657 = vpow.pop %v3656
    %v3658 = vadd.f32 %v3657, 1.0
    %v3659 = vrcp.pop %v3658
    %v3660 = vmul.f32 1.0, %v3659
    %v3661 = vxor.u32 %v3652, 2147483648
    %v3662 = vmul.f32 %v3661, 1.442695
    %v3663 = vpow.pop %v3662
    %v3664 = vadd.f32 %v3663, 1.0
    %v3665 = vrcp.pop %v3664
    %v3666 = vmul.f32 1.0, %v3665
    %v3667 = vtanh.pop %v3653
    %v3668 = vxor.u32 %v3654, 2147483648
    %v3669 = vmul.f32 %v3668, 1.442695
    %v3670 = vpow.pop %v3669
    %v3671 = vadd.f32 %v3670, 1.0
    %v3672 = vrcp.pop %v3671
    %v3673 = vmul.f32 1.0, %v3672
    %v3674 = vmul.f32 %v3666, %v3069
    %v3675 = vmul.f32 %v3660, %v3667
    %v3676 = vadd.f32 %v3674, %v3675
    %v3677 = vtanh.pop %v3676
    %v3678 = vmul.f32 %v3673, %v3677
    %v3679 = vpack.c.bf16 %v3678, %v3678
    %v3680 = vld [vmem:[#allocation8] sm:$0xff]
    %v3681 = vld [vmem:[#allocation8 + $0x8] sm:$0xff]
    %v3682 = vld [vmem:[#allocation8 + $0x10] sm:$0xff]
    %v3683 = vld [vmem:[#allocation8 + $0x18] sm:$0xff]
    %v3684 = vld [vmem:[#allocation8 + $0x20] sm:$0xff]
    %v3685 = vld [vmem:[#allocation8 + $0x28] sm:$0xff]
    %v3686 = vld [vmem:[#allocation8 + $0x30] sm:$0xff]
    %v3687 = vld [vmem:[#allocation8 + $0x38] sm:$0xff]
    %v3688 = vld [vmem:[#allocation8 + $0x40] sm:$0xff]
    %v3689 = vld [vmem:[#allocation8 + $0x48] sm:$0xff]
    %v3690 = vld [vmem:[#allocation8 + $0x50] sm:$0xff]
    %v3691 = vld [vmem:[#allocation8 + $0x58] sm:$0xff]
    %v3692 = vld [vmem:[#allocation8 + $0x60] sm:$0xff]
    %v3693 = vld [vmem:[#allocation8 + $0x68] sm:$0xff]
    %v3694 = vld [vmem:[#allocation8 + $0x70] sm:$0xff]
    %v3695 = vld [vmem:[#allocation8 + $0x78] sm:$0xff]
    %v3696 = vld [vmem:[#allocation8 + $0x80] sm:$0xff]
    %v3697 = vld [vmem:[#allocation8 + $0x88] sm:$0xff]
    %v3698 = vld [vmem:[#allocation8 + $0x90] sm:$0xff]
    %v3699 = vld [vmem:[#allocation8 + $0x98] sm:$0xff]
    %v3700 = vld [vmem:[#allocation8 + $0xa0] sm:$0xff]
    %v3701 = vld [vmem:[#allocation8 + $0xa8] sm:$0xff]
    %v3702 = vld [vmem:[#allocation8 + $0xb0] sm:$0xff]
    %v3703 = vld [vmem:[#allocation8 + $0xb8] sm:$0xff]
    %v3704 = vld [vmem:[#allocation8 + $0xc0] sm:$0xff]
    %v3705 = vld [vmem:[#allocation8 + $0xc8] sm:$0xff]
    %v3706 = vld [vmem:[#allocation8 + $0xd0] sm:$0xff]
    %v3707 = vld [vmem:[#allocation8 + $0xd8] sm:$0xff]
    %v3708 = vld [vmem:[#allocation8 + $0xe0] sm:$0xff]
    %v3709 = vld [vmem:[#allocation8 + $0xe8] sm:$0xff]
    %v3710 = vld [vmem:[#allocation8 + $0xf0] sm:$0xff]
    %v3711 = vld [vmem:[#allocation8 + $0xf8] sm:$0xff]
    %v3712 = vld [vmem:[%s6] sm:$0xf]
    %v3714 = vlaneseq
    %v3715 = vshrl.u32 %v3714, 7
    %v3716 = vsub.s32 0, %v3715
    %v3717 = vrot.slane %v3712, %v3716
    %v3718 = vlaneseq
    %v3719 = vshrl.u32 %v3718, 7
    %v3720 = vsub.s32 1, %v3719
    %v3721 = vrot.slane %v3712, %v3720
    %v3722 = vlaneseq
    %v3723 = vshrl.u32 %v3722, 7
    %v3724 = vsub.s32 2, %v3723
    %v3725 = vrot.slane %v3712, %v3724
    %v3726 = vlaneseq
    %v3727 = vshrl.u32 %v3726, 7
    %v3728 = vsub.s32 3, %v3727
    %v3729 = vrot.slane %v3712, %v3728
    %v3766 = vunpack.c.l.b16 %v3680
    %v3767 = vunpack.c.h.b16 %v3680
    %v3768 = vunpack.c.l.b16 %v3681
    %v3769 = vunpack.c.h.b16 %v3681
    %v3770 = vunpack.c.l.b16 %v3682
    %v3771 = vunpack.c.h.b16 %v3682
    %v3772 = vunpack.c.l.b16 %v3683
    %v3773 = vunpack.c.h.b16 %v3683
    %v3774 = vunpack.c.l.b16 %v3684
    %v3775 = vunpack.c.h.b16 %v3684
    %v3776 = vunpack.c.l.b16 %v3685
    %v3777 = vunpack.c.h.b16 %v3685
    %v3778 = vunpack.c.l.b16 %v3686
    %v3779 = vunpack.c.h.b16 %v3686
    %v3780 = vunpack.c.l.b16 %v3687
    %v3781 = vunpack.c.h.b16 %v3687
    %v3782 = vunpack.c.l.b16 %v3688
    %v3783 = vunpack.c.h.b16 %v3688
    %v3784 = vunpack.c.l.b16 %v3689
    %v3785 = vunpack.c.h.b16 %v3689
    %v3786 = vunpack.c.l.b16 %v3690
    %v3787 = vunpack.c.h.b16 %v3690
    %v3788 = vunpack.c.l.b16 %v3691
    %v3789 = vunpack.c.h.b16 %v3691
    %v3790 = vunpack.c.l.b16 %v3692
    %v3791 = vunpack.c.h.b16 %v3692
    %v3792 = vunpack.c.l.b16 %v3693
    %v3793 = vunpack.c.h.b16 %v3693
    %v3794 = vunpack.c.l.b16 %v3694
    %v3795 = vunpack.c.h.b16 %v3694
    %v3796 = vunpack.c.l.b16 %v3695
    %v3797 = vunpack.c.h.b16 %v3695
    %v3798 = vunpack.c.l.b16 %v3696
    %v3799 = vunpack.c.h.b16 %v3696
    %v3800 = vunpack.c.l.b16 %v3697
    %v3801 = vunpack.c.h.b16 %v3697
    %v3802 = vunpack.c.l.b16 %v3698
    %v3803 = vunpack.c.h.b16 %v3698
    %v3804 = vunpack.c.l.b16 %v3699
    %v3805 = vunpack.c.h.b16 %v3699
    %v3806 = vunpack.c.l.b16 %v3700
    %v3807 = vunpack.c.h.b16 %v3700
    %v3808 = vunpack.c.l.b16 %v3701
    %v3809 = vunpack.c.h.b16 %v3701
    %v3810 = vunpack.c.l.b16 %v3702
    %v3811 = vunpack.c.h.b16 %v3702
    %v3812 = vunpack.c.l.b16 %v3703
    %v3813 = vunpack.c.h.b16 %v3703
    %v3814 = vunpack.c.l.b16 %v3704
    %v3815 = vunpack.c.h.b16 %v3704
    %v3816 = vunpack.c.l.b16 %v3705
    %v3817 = vunpack.c.h.b16 %v3705
    %v3818 = vunpack.c.l.b16 %v3706
    %v3819 = vunpack.c.h.b16 %v3706
    %v3820 = vunpack.c.l.b16 %v3707
    %v3821 = vunpack.c.h.b16 %v3707
    %v3822 = vunpack.c.l.b16 %v3708
    %v3823 = vunpack.c.h.b16 %v3708
    %v3824 = vunpack.c.l.b16 %v3709
    %v3825 = vunpack.c.h.b16 %v3709
    %v3826 = vunpack.c.l.b16 %v3710
    %v3827 = vunpack.c.h.b16 %v3710
    %v3828 = vunpack.c.l.b16 %v3711
    %v3829 = vunpack.c.h.b16 %v3711
    %v3830 = vpack.c.b16 %v3770, %v3766
    %v3831 = vpack.c.b16 %v3771, %v3767
    %v3832 = vpack.c.b16 %v3772, %v3768
    %v3833 = vpack.c.b16 %v3773, %v3769
    %v3834 = vpack.c.b16 %v3778, %v3774
    %v3835 = vpack.c.b16 %v3779, %v3775
    %v3836 = vpack.c.b16 %v3780, %v3776
    %v3837 = vpack.c.b16 %v3781, %v3777
    %v3838 = vpack.c.b16 %v3786, %v3782
    %v3839 = vpack.c.b16 %v3787, %v3783
    %v3840 = vpack.c.b16 %v3788, %v3784
    %v3841 = vpack.c.b16 %v3789, %v3785
    %v3842 = vpack.c.b16 %v3794, %v3790
    %v3843 = vpack.c.b16 %v3795, %v3791
    %v3844 = vpack.c.b16 %v3796, %v3792
    %v3845 = vpack.c.b16 %v3797, %v3793
    %v3846 = vpack.c.b16 %v3802, %v3798
    %v3847 = vpack.c.b16 %v3803, %v3799
    %v3848 = vpack.c.b16 %v3804, %v3800
    %v3849 = vpack.c.b16 %v3805, %v3801
    %v3850 = vpack.c.b16 %v3810, %v3806
    %v3851 = vpack.c.b16 %v3811, %v3807
    %v3852 = vpack.c.b16 %v3812, %v3808
    %v3853 = vpack.c.b16 %v3813, %v3809
    %v3854 = vpack.c.b16 %v3818, %v3814
    %v3855 = vpack.c.b16 %v3819, %v3815
    %v3856 = vpack.c.b16 %v3820, %v3816
    %v3857 = vpack.c.b16 %v3821, %v3817
    %v3858 = vpack.c.b16 %v3826, %v3822
    %v3859 = vpack.c.b16 %v3827, %v3823
    %v3860 = vpack.c.b16 %v3828, %v3824
    %v3861 = vpack.c.b16 %v3829, %v3825
    %3894 = vmatprep.subr.bf16.mxu0 %v3859
    %3895 = vmatpush1.bf16.msra.mxu0 %v3858
    %3896 = vmatprep.subr.bf16.mxu0 %v3855
    %3897 = vmatpush1.bf16.msra.mxu0 %v3854
    %3898 = vmatprep.subr.bf16.mxu0 %v3851
    %3899 = vmatpush1.bf16.msra.mxu0 %v3850
    %3900 = vmatprep.subr.bf16.mxu0 %v3847
    %3901 = vmatpush1.bf16.msra.mxu0 %v3846
    %3902 = vmatprep.subr.bf16.mxu0 %v3843
    %3903 = vmatpush1.bf16.msra.mxu0 %v3842
    %3904 = vmatprep.subr.bf16.mxu0 %v3839
    %3905 = vmatpush1.bf16.msra.mxu0 %v3838
    %3906 = vmatprep.subr.bf16.mxu0 %v3835
    %3907 = vmatpush1.bf16.msra.mxu0 %v3834
    %3908 = vmatprep.subr.bf16.mxu0 %v3831
    %3909 = vmatpush1.bf16.msra.mxu0 %v3830
    %3910 = vmatprep.subr.bf16.mxu0 0
    %3911 = vmatpush2.bf16.msra.mxu0 0
    %3912 = vmatprep.subr.bf16.mxu0 0
    %3913 = vmatpush2.bf16.msra.mxu0 0
    %3914 = vmatprep.subr.bf16.mxu0 0
    %3915 = vmatpush2.bf16.msra.mxu0 0
    %3916 = vmatprep.subr.bf16.mxu0 0
    %3917 = vmatpush2.bf16.msra.mxu0 0
    %3918 = vmatprep.subr.bf16.mxu0 0
    %3919 = vmatpush2.bf16.msra.mxu0 0
    %3920 = vmatprep.subr.bf16.mxu0 0
    %3921 = vmatpush2.bf16.msra.mxu0 0
    %3922 = vmatprep.subr.bf16.mxu0 0
    %3923 = vmatpush2.bf16.msra.mxu0 0
    %3924 = vmatprep.subr.bf16.mxu0 0
    %3925 = vmatpush2.bf16.msra.mxu0 0
    %3926 = vmatprep.mubr.bf16.mxu0 0
    %3927 = vmatmul.mubr.bf16.gmra.mxu0 %v3679
    %v3928 = vpop.f32.mrf.mxu0
    %v3929 = vadd.f32 %v3717, %v3928
    %v3930 = vpop.f32.mrf.mxu0
    %v3931 = vadd.f32 %v3721, %v3930
    %v3932 = vpop.f32.mrf.mxu0
    %v3933 = vpop.f32.mrf.mxu0
    %3934 = vdwg.mxu0
    %3935 = vmatprep.subr.bf16.mxu0 %v3861
    %3936 = vmatpush1.bf16.msra.mxu0 %v3860
    %3937 = vmatprep.subr.bf16.mxu0 %v3857
    %3938 = vmatpush1.bf16.msra.mxu0 %v3856
    %3939 = vmatprep.subr.bf16.mxu0 %v3853
    %3940 = vmatpush1.bf16.msra.mxu0 %v3852
    %3941 = vmatprep.subr.bf16.mxu0 %v3849
    %3942 = vmatpush1.bf16.msra.mxu0 %v3848
    %3943 = vmatprep.subr.bf16.mxu0 %v3845
    %3944 = vmatpush1.bf16.msra.mxu0 %v3844
    %3945 = vmatprep.subr.bf16.mxu0 %v3841
    %3946 = vmatpush1.bf16.msra.mxu0 %v3840
    %3947 = vmatprep.subr.bf16.mxu0 %v3837
    %3948 = vmatpush1.bf16.msra.mxu0 %v3836
    %3949 = vmatprep.subr.bf16.mxu0 %v3833
    %3950 = vmatpush1.bf16.msra.mxu0 %v3832
    %3951 = vmatprep.subr.bf16.mxu0 0
    %3952 = vmatpush2.bf16.msra.mxu0 0
    %3953 = vmatprep.subr.bf16.mxu0 0
    %3954 = vmatpush2.bf16.msra.mxu0 0
    %3955 = vmatprep.subr.bf16.mxu0 0
    %3956 = vmatpush2.bf16.msra.mxu0 0
    %3957 = vmatprep.subr.bf16.mxu0 0
    %3958 = vmatpush2.bf16.msra.mxu0 0
    %3959 = vmatprep.subr.bf16.mxu0 0
    %3960 = vmatpush2.bf16.msra.mxu0 0
    %3961 = vmatprep.subr.bf16.mxu0 0
    %3962 = vmatpush2.bf16.msra.mxu0 0
    %3963 = vmatprep.subr.bf16.mxu0 0
    %3964 = vmatpush2.bf16.msra.mxu0 0
    %3965 = vmatprep.subr.bf16.mxu0 0
    %3966 = vmatpush2.bf16.msra.mxu0 0
    %3967 = vmatprep.mubr.bf16.mxu0 0
    %3968 = vmatmul.mubr.bf16.gmra.mxu0 %v3679
    %v3969 = vpop.f32.mrf.mxu0
    %v3970 = vadd.f32 %v3725, %v3969
    %v3971 = vpop.f32.mrf.mxu0
    %v3972 = vadd.f32 %v3729, %v3971
    %v3973 = vpop.f32.mrf.mxu0
    %v3974 = vpop.f32.mrf.mxu0
    %3975 = vdwg.mxu0
    %3976 = vst [vmem:[#allocation2 + $0xa0] sm:$0xff] %v3929
    %3977 = vst [vmem:[#allocation2 + $0xa8] sm:$0xff] %v3931
    %3978 = vst [vmem:[#allocation2 + $0xb0] sm:$0xff] %v3970
    %3979 = vst [vmem:[#allocation2 + $0xb8] sm:$0xff] %v3972
    %v3980 = vld [vmem:[#allocation2 + $0xc0] sm:$0xff]
    %v3981 = vld [vmem:[#allocation2 + $0xc8] sm:$0xff]
    %v3982 = vld [vmem:[#allocation2 + $0xd0] sm:$0xff]
    %v3983 = vld [vmem:[#allocation2 + $0xd8] sm:$0xff]
    %v3984 = vld [vmem:[#allocation6] sm:$0xff]
    %v3985 = vld [vmem:[#allocation6 + $0x8] sm:$0xff]
    %v3986 = vld [vmem:[#allocation6 + $0x10] sm:$0xff]
    %v3987 = vld [vmem:[#allocation6 + $0x18] sm:$0xff]
    %v3988 = vld [vmem:[#allocation6 + $0x20] sm:$0xff]
    %v3989 = vld [vmem:[#allocation6 + $0x28] sm:$0xff]
    %v3990 = vld [vmem:[#allocation6 + $0x30] sm:$0xff]
    %v3991 = vld [vmem:[#allocation6 + $0x38] sm:$0xff]
    %v3992 = vld [vmem:[#allocation6 + $0x40] sm:$0xff]
    %v3993 = vld [vmem:[#allocation6 + $0x48] sm:$0xff]
    %v3994 = vld [vmem:[#allocation6 + $0x50] sm:$0xff]
    %v3995 = vld [vmem:[#allocation6 + $0x58] sm:$0xff]
    %v3996 = vld [vmem:[#allocation6 + $0x60] sm:$0xff]
    %v3997 = vld [vmem:[#allocation6 + $0x68] sm:$0xff]
    %v3998 = vld [vmem:[#allocation6 + $0x70] sm:$0xff]
    %v3999 = vld [vmem:[#allocation6 + $0x78] sm:$0xff]
    %v4000 = vld [vmem:[#allocation6 + $0x80] sm:$0xff]
    %v4001 = vld [vmem:[#allocation6 + $0x88] sm:$0xff]
    %v4002 = vld [vmem:[#allocation6 + $0x90] sm:$0xff]
    %v4003 = vld [vmem:[#allocation6 + $0x98] sm:$0xff]
    %v4004 = vld [vmem:[#allocation6 + $0xa0] sm:$0xff]
    %v4005 = vld [vmem:[#allocation6 + $0xa8] sm:$0xff]
    %v4006 = vld [vmem:[#allocation6 + $0xb0] sm:$0xff]
    %v4007 = vld [vmem:[#allocation6 + $0xb8] sm:$0xff]
    %v4008 = vld [vmem:[#allocation6 + $0xc0] sm:$0xff]
    %v4009 = vld [vmem:[#allocation6 + $0xc8] sm:$0xff]
    %v4010 = vld [vmem:[#allocation6 + $0xd0] sm:$0xff]
    %v4011 = vld [vmem:[#allocation6 + $0xd8] sm:$0xff]
    %v4012 = vld [vmem:[#allocation6 + $0xe0] sm:$0xff]
    %v4013 = vld [vmem:[#allocation6 + $0xe8] sm:$0xff]
    %v4014 = vld [vmem:[#allocation6 + $0xf0] sm:$0xff]
    %v4015 = vld [vmem:[#allocation6 + $0xf8] sm:$0xff]
    %v4048 = vunpack.c.l.b16 %v3984
    %v4049 = vunpack.c.h.b16 %v3984
    %v4050 = vunpack.c.l.b16 %v3985
    %v4051 = vunpack.c.h.b16 %v3985
    %v4052 = vunpack.c.l.b16 %v3986
    %v4053 = vunpack.c.h.b16 %v3986
    %v4054 = vunpack.c.l.b16 %v3987
    %v4055 = vunpack.c.h.b16 %v3987
    %v4056 = vunpack.c.l.b16 %v3988
    %v4057 = vunpack.c.h.b16 %v3988
    %v4058 = vunpack.c.l.b16 %v3989
    %v4059 = vunpack.c.h.b16 %v3989
    %v4060 = vunpack.c.l.b16 %v3990
    %v4061 = vunpack.c.h.b16 %v3990
    %v4062 = vunpack.c.l.b16 %v3991
    %v4063 = vunpack.c.h.b16 %v3991
    %v4064 = vunpack.c.l.b16 %v3992
    %v4065 = vunpack.c.h.b16 %v3992
    %v4066 = vunpack.c.l.b16 %v3993
    %v4067 = vunpack.c.h.b16 %v3993
    %v4068 = vunpack.c.l.b16 %v3994
    %v4069 = vunpack.c.h.b16 %v3994
    %v4070 = vunpack.c.l.b16 %v3995
    %v4071 = vunpack.c.h.b16 %v3995
    %v4072 = vunpack.c.l.b16 %v3996
    %v4073 = vunpack.c.h.b16 %v3996
    %v4074 = vunpack.c.l.b16 %v3997
    %v4075 = vunpack.c.h.b16 %v3997
    %v4076 = vunpack.c.l.b16 %v3998
    %v4077 = vunpack.c.h.b16 %v3998
    %v4078 = vunpack.c.l.b16 %v3999
    %v4079 = vunpack.c.h.b16 %v3999
    %v4080 = vunpack.c.l.b16 %v4000
    %v4081 = vunpack.c.h.b16 %v4000
    %v4082 = vunpack.c.l.b16 %v4001
    %v4083 = vunpack.c.h.b16 %v4001
    %v4084 = vunpack.c.l.b16 %v4002
    %v4085 = vunpack.c.h.b16 %v4002
    %v4086 = vunpack.c.l.b16 %v4003
    %v4087 = vunpack.c.h.b16 %v4003
    %v4088 = vunpack.c.l.b16 %v4004
    %v4089 = vunpack.c.h.b16 %v4004
    %v4090 = vunpack.c.l.b16 %v4005
    %v4091 = vunpack.c.h.b16 %v4005
    %v4092 = vunpack.c.l.b16 %v4006
    %v4093 = vunpack.c.h.b16 %v4006
    %v4094 = vunpack.c.l.b16 %v4007
    %v4095 = vunpack.c.h.b16 %v4007
    %v4096 = vunpack.c.l.b16 %v4008
    %v4097 = vunpack.c.h.b16 %v4008
    %v4098 = vunpack.c.l.b16 %v4009
    %v4099 = vunpack.c.h.b16 %v4009
    %v4100 = vunpack.c.l.b16 %v4010
    %v4101 = vunpack.c.h.b16 %v4010
    %v4102 = vunpack.c.l.b16 %v4011
    %v4103 = vunpack.c.h.b16 %v4011
    %v4104 = vunpack.c.l.b16 %v4012
    %v4105 = vunpack.c.h.b16 %v4012
    %v4106 = vunpack.c.l.b16 %v4013
    %v4107 = vunpack.c.h.b16 %v4013
    %v4108 = vunpack.c.l.b16 %v4014
    %v4109 = vunpack.c.h.b16 %v4014
    %v4110 = vunpack.c.l.b16 %v4015
    %v4111 = vunpack.c.h.b16 %v4015
    %v4112 = vpack.c.b16 %v4052, %v4048
    %v4113 = vpack.c.b16 %v4053, %v4049
    %v4114 = vpack.c.b16 %v4054, %v4050
    %v4115 = vpack.c.b16 %v4055, %v4051
    %v4116 = vpack.c.b16 %v4060, %v4056
    %v4117 = vpack.c.b16 %v4061, %v4057
    %v4118 = vpack.c.b16 %v4062, %v4058
    %v4119 = vpack.c.b16 %v4063, %v4059
    %v4120 = vpack.c.b16 %v4068, %v4064
    %v4121 = vpack.c.b16 %v4069, %v4065
    %v4122 = vpack.c.b16 %v4070, %v4066
    %v4123 = vpack.c.b16 %v4071, %v4067
    %v4124 = vpack.c.b16 %v4076, %v4072
    %v4125 = vpack.c.b16 %v4077, %v4073
    %v4126 = vpack.c.b16 %v4078, %v4074
    %v4127 = vpack.c.b16 %v4079, %v4075
    %v4128 = vpack.c.b16 %v4084, %v4080
    %v4129 = vpack.c.b16 %v4085, %v4081
    %v4130 = vpack.c.b16 %v4086, %v4082
    %v4131 = vpack.c.b16 %v4087, %v4083
    %v4132 = vpack.c.b16 %v4092, %v4088
    %v4133 = vpack.c.b16 %v4093, %v4089
    %v4134 = vpack.c.b16 %v4094, %v4090
    %v4135 = vpack.c.b16 %v4095, %v4091
    %v4136 = vpack.c.b16 %v4100, %v4096
    %v4137 = vpack.c.b16 %v4101, %v4097
    %v4138 = vpack.c.b16 %v4102, %v4098
    %v4139 = vpack.c.b16 %v4103, %v4099
    %v4140 = vpack.c.b16 %v4108, %v4104
    %v4141 = vpack.c.b16 %v4109, %v4105
    %v4142 = vpack.c.b16 %v4110, %v4106
    %v4143 = vpack.c.b16 %v4111, %v4107
    %4176 = vmatprep.subr.bf16.mxu0 %v4141
    %4177 = vmatpush1.bf16.msra.mxu0 %v4140
    %4178 = vmatprep.subr.bf16.mxu0 %v4137
    %4179 = vmatpush1.bf16.msra.mxu0 %v4136
    %4180 = vmatprep.subr.bf16.mxu0 %v4133
    %4181 = vmatpush1.bf16.msra.mxu0 %v4132
    %4182 = vmatprep.subr.bf16.mxu0 %v4129
    %4183 = vmatpush1.bf16.msra.mxu0 %v4128
    %4184 = vmatprep.subr.bf16.mxu0 %v4125
    %4185 = vmatpush1.bf16.msra.mxu0 %v4124
    %4186 = vmatprep.subr.bf16.mxu0 %v4121
    %4187 = vmatpush1.bf16.msra.mxu0 %v4120
    %4188 = vmatprep.subr.bf16.mxu0 %v4117
    %4189 = vmatpush1.bf16.msra.mxu0 %v4116
    %4190 = vmatprep.subr.bf16.mxu0 %v4113
    %4191 = vmatpush1.bf16.msra.mxu0 %v4112
    %4192 = vmatprep.subr.bf16.mxu0 0
    %4193 = vmatpush2.bf16.msra.mxu0 0
    %4194 = vmatprep.subr.bf16.mxu0 0
    %4195 = vmatpush2.bf16.msra.mxu0 0
    %4196 = vmatprep.subr.bf16.mxu0 0
    %4197 = vmatpush2.bf16.msra.mxu0 0
    %4198 = vmatprep.subr.bf16.mxu0 0
    %4199 = vmatpush2.bf16.msra.mxu0 0
    %4200 = vmatprep.subr.bf16.mxu0 0
    %4201 = vmatpush2.bf16.msra.mxu0 0
    %4202 = vmatprep.subr.bf16.mxu0 0
    %4203 = vmatpush2.bf16.msra.mxu0 0
    %4204 = vmatprep.subr.bf16.mxu0 0
    %4205 = vmatpush2.bf16.msra.mxu0 0
    %4206 = vmatprep.subr.bf16.mxu0 0
    %4207 = vmatpush2.bf16.msra.mxu0 0
    %4208 = vmatprep.mubr.bf16.mxu0 0
    %4209 = vmatmul.mubr.bf16.gmra.mxu0 %v3679
    %v4210 = vpop.f32.mrf.mxu0
    %v4211 = vadd.f32 0.0, %v4210
    %v4212 = vpop.f32.mrf.mxu0
    %v4213 = vadd.f32 0.0, %v4212
    %v4214 = vpop.f32.mrf.mxu0
    %v4215 = vpop.f32.mrf.mxu0
    %4216 = vdwg.mxu0
    %4217 = vmatprep.subr.bf16.mxu0 %v4143
    %4218 = vmatpush1.bf16.msra.mxu0 %v4142
    %4219 = vmatprep.subr.bf16.mxu0 %v4139
    %4220 = vmatpush1.bf16.msra.mxu0 %v4138
    %4221 = vmatprep.subr.bf16.mxu0 %v4135
    %4222 = vmatpush1.bf16.msra.mxu0 %v4134
    %4223 = vmatprep.subr.bf16.mxu0 %v4131
    %4224 = vmatpush1.bf16.msra.mxu0 %v4130
    %4225 = vmatprep.subr.bf16.mxu0 %v4127
    %4226 = vmatpush1.bf16.msra.mxu0 %v4126
    %4227 = vmatprep.subr.bf16.mxu0 %v4123
    %4228 = vmatpush1.bf16.msra.mxu0 %v4122
    %4229 = vmatprep.subr.bf16.mxu0 %v4119
    %4230 = vmatpush1.bf16.msra.mxu0 %v4118
    %4231 = vmatprep.subr.bf16.mxu0 %v4115
    %4232 = vmatpush1.bf16.msra.mxu0 %v4114
    %4233 = vmatprep.subr.bf16.mxu0 0
    %4234 = vmatpush2.bf16.msra.mxu0 0
    %4235 = vmatprep.subr.bf16.mxu0 0
    %4236 = vmatpush2.bf16.msra.mxu0 0
    %4237 = vmatprep.subr.bf16.mxu0 0
    %4238 = vmatpush2.bf16.msra.mxu0 0
    %4239 = vmatprep.subr.bf16.mxu0 0
    %4240 = vmatpush2.bf16.msra.mxu0 0
    %4241 = vmatprep.subr.bf16.mxu0 0
    %4242 = vmatpush2.bf16.msra.mxu0 0
    %4243 = vmatprep.subr.bf16.mxu0 0
    %4244 = vmatpush2.bf16.msra.mxu0 0
    %4245 = vmatprep.subr.bf16.mxu0 0
    %4246 = vmatpush2.bf16.msra.mxu0 0
    %4247 = vmatprep.subr.bf16.mxu0 0
    %4248 = vmatpush2.bf16.msra.mxu0 0
    %4249 = vmatprep.mubr.bf16.mxu0 0
    %4250 = vmatmul.mubr.bf16.gmra.mxu0 %v3679
    %v4251 = vpop.f32.mrf.mxu0
    %v4252 = vadd.f32 0.0, %v4251
    %v4253 = vpop.f32.mrf.mxu0
    %v4254 = vadd.f32 0.0, %v4253
    %v4255 = vpop.f32.mrf.mxu0
    %v4256 = vpop.f32.mrf.mxu0
    %4257 = vdwg.mxu0
    %v4258 = vadd.f32 %v3980, %v4211
    %v4259 = vadd.f32 %v3981, %v4213
    %v4260 = vadd.f32 %v3982, %v4252
    %v4261 = vadd.f32 %v3983, %v4254
    %v4262 = vxor.u32 %v4258, 2147483648
    %v4263 = vmul.f32 %v4262, 1.442695
    %v4264 = vpow.pop %v4263
    %v4265 = vadd.f32 %v4264, 1.0
    %v4266 = vrcp.pop %v4265
    %v4267 = vmul.f32 1.0, %v4266
    %v4268 = vxor.u32 %v4259, 2147483648
    %v4269 = vmul.f32 %v4268, 1.442695
    %v4270 = vpow.pop %v4269
    %v4271 = vadd.f32 %v4270, 1.0
    %v4272 = vrcp.pop %v4271
    %v4273 = vmul.f32 1.0, %v4272
    %v4274 = vtanh.pop %v4260
    %v4275 = vxor.u32 %v4261, 2147483648
    %v4276 = vmul.f32 %v4275, 1.442695
    %v4277 = vpow.pop %v4276
    %v4278 = vadd.f32 %v4277, 1.0
    %v4279 = vrcp.pop %v4278
    %v4280 = vmul.f32 1.0, %v4279
    %v4281 = vmul.f32 %v4273, %v3676
    %v4282 = vmul.f32 %v4267, %v4274
    %v4283 = vadd.f32 %v4281, %v4282
    %v4284 = vtanh.pop %v4283
    %v4285 = vmul.f32 %v4280, %v4284
    %v4286 = vpack.c.bf16 %v4285, %v4285
    %v4287 = vld [vmem:[#allocation8] sm:$0xff]
    %v4288 = vld [vmem:[#allocation8 + $0x8] sm:$0xff]
    %v4289 = vld [vmem:[#allocation8 + $0x10] sm:$0xff]
    %v4290 = vld [vmem:[#allocation8 + $0x18] sm:$0xff]
    %v4291 = vld [vmem:[#allocation8 + $0x20] sm:$0xff]
    %v4292 = vld [vmem:[#allocation8 + $0x28] sm:$0xff]
    %v4293 = vld [vmem:[#allocation8 + $0x30] sm:$0xff]
    %v4294 = vld [vmem:[#allocation8 + $0x38] sm:$0xff]
    %v4295 = vld [vmem:[#allocation8 + $0x40] sm:$0xff]
    %v4296 = vld [vmem:[#allocation8 + $0x48] sm:$0xff]
    %v4297 = vld [vmem:[#allocation8 + $0x50] sm:$0xff]
    %v4298 = vld [vmem:[#allocation8 + $0x58] sm:$0xff]
    %v4299 = vld [vmem:[#allocation8 + $0x60] sm:$0xff]
    %v4300 = vld [vmem:[#allocation8 + $0x68] sm:$0xff]
    %v4301 = vld [vmem:[#allocation8 + $0x70] sm:$0xff]
    %v4302 = vld [vmem:[#allocation8 + $0x78] sm:$0xff]
    %v4303 = vld [vmem:[#allocation8 + $0x80] sm:$0xff]
    %v4304 = vld [vmem:[#allocation8 + $0x88] sm:$0xff]
    %v4305 = vld [vmem:[#allocation8 + $0x90] sm:$0xff]
    %v4306 = vld [vmem:[#allocation8 + $0x98] sm:$0xff]
    %v4307 = vld [vmem:[#allocation8 + $0xa0] sm:$0xff]
    %v4308 = vld [vmem:[#allocation8 + $0xa8] sm:$0xff]
    %v4309 = vld [vmem:[#allocation8 + $0xb0] sm:$0xff]
    %v4310 = vld [vmem:[#allocation8 + $0xb8] sm:$0xff]
    %v4311 = vld [vmem:[#allocation8 + $0xc0] sm:$0xff]
    %v4312 = vld [vmem:[#allocation8 + $0xc8] sm:$0xff]
    %v4313 = vld [vmem:[#allocation8 + $0xd0] sm:$0xff]
    %v4314 = vld [vmem:[#allocation8 + $0xd8] sm:$0xff]
    %v4315 = vld [vmem:[#allocation8 + $0xe0] sm:$0xff]
    %v4316 = vld [vmem:[#allocation8 + $0xe8] sm:$0xff]
    %v4317 = vld [vmem:[#allocation8 + $0xf0] sm:$0xff]
    %v4318 = vld [vmem:[#allocation8 + $0xf8] sm:$0xff]
    %v4319 = vld [vmem:[%s6] sm:$0xf]
    %v4321 = vlaneseq
    %v4322 = vshrl.u32 %v4321, 7
    %v4323 = vsub.s32 0, %v4322
    %v4324 = vrot.slane %v4319, %v4323
    %v4325 = vlaneseq
    %v4326 = vshrl.u32 %v4325, 7
    %v4327 = vsub.s32 1, %v4326
    %v4328 = vrot.slane %v4319, %v4327
    %v4329 = vlaneseq
    %v4330 = vshrl.u32 %v4329, 7
    %v4331 = vsub.s32 2, %v4330
    %v4332 = vrot.slane %v4319, %v4331
    %v4333 = vlaneseq
    %v4334 = vshrl.u32 %v4333, 7
    %v4335 = vsub.s32 3, %v4334
    %v4336 = vrot.slane %v4319, %v4335
    %v4373 = vunpack.c.l.b16 %v4287
    %v4374 = vunpack.c.h.b16 %v4287
    %v4375 = vunpack.c.l.b16 %v4288
    %v4376 = vunpack.c.h.b16 %v4288
    %v4377 = vunpack.c.l.b16 %v4289
    %v4378 = vunpack.c.h.b16 %v4289
    %v4379 = vunpack.c.l.b16 %v4290
    %v4380 = vunpack.c.h.b16 %v4290
    %v4381 = vunpack.c.l.b16 %v4291
    %v4382 = vunpack.c.h.b16 %v4291
    %v4383 = vunpack.c.l.b16 %v4292
    %v4384 = vunpack.c.h.b16 %v4292
    %v4385 = vunpack.c.l.b16 %v4293
    %v4386 = vunpack.c.h.b16 %v4293
    %v4387 = vunpack.c.l.b16 %v4294
    %v4388 = vunpack.c.h.b16 %v4294
    %v4389 = vunpack.c.l.b16 %v4295
    %v4390 = vunpack.c.h.b16 %v4295
    %v4391 = vunpack.c.l.b16 %v4296
    %v4392 = vunpack.c.h.b16 %v4296
    %v4393 = vunpack.c.l.b16 %v4297
    %v4394 = vunpack.c.h.b16 %v4297
    %v4395 = vunpack.c.l.b16 %v4298
    %v4396 = vunpack.c.h.b16 %v4298
    %v4397 = vunpack.c.l.b16 %v4299
    %v4398 = vunpack.c.h.b16 %v4299
    %v4399 = vunpack.c.l.b16 %v4300
    %v4400 = vunpack.c.h.b16 %v4300
    %v4401 = vunpack.c.l.b16 %v4301
    %v4402 = vunpack.c.h.b16 %v4301
    %v4403 = vunpack.c.l.b16 %v4302
    %v4404 = vunpack.c.h.b16 %v4302
    %v4405 = vunpack.c.l.b16 %v4303
    %v4406 = vunpack.c.h.b16 %v4303
    %v4407 = vunpack.c.l.b16 %v4304
    %v4408 = vunpack.c.h.b16 %v4304
    %v4409 = vunpack.c.l.b16 %v4305
    %v4410 = vunpack.c.h.b16 %v4305
    %v4411 = vunpack.c.l.b16 %v4306
    %v4412 = vunpack.c.h.b16 %v4306
    %v4413 = vunpack.c.l.b16 %v4307
    %v4414 = vunpack.c.h.b16 %v4307
    %v4415 = vunpack.c.l.b16 %v4308
    %v4416 = vunpack.c.h.b16 %v4308
    %v4417 = vunpack.c.l.b16 %v4309
    %v4418 = vunpack.c.h.b16 %v4309
    %v4419 = vunpack.c.l.b16 %v4310
    %v4420 = vunpack.c.h.b16 %v4310
    %v4421 = vunpack.c.l.b16 %v4311
    %v4422 = vunpack.c.h.b16 %v4311
    %v4423 = vunpack.c.l.b16 %v4312
    %v4424 = vunpack.c.h.b16 %v4312
    %v4425 = vunpack.c.l.b16 %v4313
    %v4426 = vunpack.c.h.b16 %v4313
    %v4427 = vunpack.c.l.b16 %v4314
    %v4428 = vunpack.c.h.b16 %v4314
    %v4429 = vunpack.c.l.b16 %v4315
    %v4430 = vunpack.c.h.b16 %v4315
    %v4431 = vunpack.c.l.b16 %v4316
    %v4432 = vunpack.c.h.b16 %v4316
    %v4433 = vunpack.c.l.b16 %v4317
    %v4434 = vunpack.c.h.b16 %v4317
    %v4435 = vunpack.c.l.b16 %v4318
    %v4436 = vunpack.c.h.b16 %v4318
    %v4437 = vpack.c.b16 %v4377, %v4373
    %v4438 = vpack.c.b16 %v4378, %v4374
    %v4439 = vpack.c.b16 %v4379, %v4375
    %v4440 = vpack.c.b16 %v4380, %v4376
    %v4441 = vpack.c.b16 %v4385, %v4381
    %v4442 = vpack.c.b16 %v4386, %v4382
    %v4443 = vpack.c.b16 %v4387, %v4383
    %v4444 = vpack.c.b16 %v4388, %v4384
    %v4445 = vpack.c.b16 %v4393, %v4389
    %v4446 = vpack.c.b16 %v4394, %v4390
    %v4447 = vpack.c.b16 %v4395, %v4391
    %v4448 = vpack.c.b16 %v4396, %v4392
    %v4449 = vpack.c.b16 %v4401, %v4397
    %v4450 = vpack.c.b16 %v4402, %v4398
    %v4451 = vpack.c.b16 %v4403, %v4399
    %v4452 = vpack.c.b16 %v4404, %v4400
    %v4453 = vpack.c.b16 %v4409, %v4405
    %v4454 = vpack.c.b16 %v4410, %v4406
    %v4455 = vpack.c.b16 %v4411, %v4407
    %v4456 = vpack.c.b16 %v4412, %v4408
    %v4457 = vpack.c.b16 %v4417, %v4413
    %v4458 = vpack.c.b16 %v4418, %v4414
    %v4459 = vpack.c.b16 %v4419, %v4415
    %v4460 = vpack.c.b16 %v4420, %v4416
    %v4461 = vpack.c.b16 %v4425, %v4421
    %v4462 = vpack.c.b16 %v4426, %v4422
    %v4463 = vpack.c.b16 %v4427, %v4423
    %v4464 = vpack.c.b16 %v4428, %v4424
    %v4465 = vpack.c.b16 %v4433, %v4429
    %v4466 = vpack.c.b16 %v4434, %v4430
    %v4467 = vpack.c.b16 %v4435, %v4431
    %v4468 = vpack.c.b16 %v4436, %v4432
    %4501 = vmatprep.subr.bf16.mxu0 %v4466
    %4502 = vmatpush1.bf16.msra.mxu0 %v4465
    %4503 = vmatprep.subr.bf16.mxu0 %v4462
    %4504 = vmatpush1.bf16.msra.mxu0 %v4461
    %4505 = vmatprep.subr.bf16.mxu0 %v4458
    %4506 = vmatpush1.bf16.msra.mxu0 %v4457
    %4507 = vmatprep.subr.bf16.mxu0 %v4454
    %4508 = vmatpush1.bf16.msra.mxu0 %v4453
    %4509 = vmatprep.subr.bf16.mxu0 %v4450
    %4510 = vmatpush1.bf16.msra.mxu0 %v4449
    %4511 = vmatprep.subr.bf16.mxu0 %v4446
    %4512 = vmatpush1.bf16.msra.mxu0 %v4445
    %4513 = vmatprep.subr.bf16.mxu0 %v4442
    %4514 = vmatpush1.bf16.msra.mxu0 %v4441
    %4515 = vmatprep.subr.bf16.mxu0 %v4438
    %4516 = vmatpush1.bf16.msra.mxu0 %v4437
    %4517 = vmatprep.subr.bf16.mxu0 0
    %4518 = vmatpush2.bf16.msra.mxu0 0
    %4519 = vmatprep.subr.bf16.mxu0 0
    %4520 = vmatpush2.bf16.msra.mxu0 0
    %4521 = vmatprep.subr.bf16.mxu0 0
    %4522 = vmatpush2.bf16.msra.mxu0 0
    %4523 = vmatprep.subr.bf16.mxu0 0
    %4524 = vmatpush2.bf16.msra.mxu0 0
    %4525 = vmatprep.subr.bf16.mxu0 0
    %4526 = vmatpush2.bf16.msra.mxu0 0
    %4527 = vmatprep.subr.bf16.mxu0 0
    %4528 = vmatpush2.bf16.msra.mxu0 0
    %4529 = vmatprep.subr.bf16.mxu0 0
    %4530 = vmatpush2.bf16.msra.mxu0 0
    %4531 = vmatprep.subr.bf16.mxu0 0
    %4532 = vmatpush2.bf16.msra.mxu0 0
    %4533 = vmatprep.mubr.bf16.mxu0 0
    %4534 = vmatmul.mubr.bf16.gmra.mxu0 %v4286
    %v4535 = vpop.f32.mrf.mxu0
    %v4536 = vadd.f32 %v4324, %v4535
    %v4537 = vpop.f32.mrf.mxu0
    %v4538 = vadd.f32 %v4328, %v4537
    %v4539 = vpop.f32.mrf.mxu0
    %v4540 = vpop.f32.mrf.mxu0
    %4541 = vdwg.mxu0
    %4542 = vmatprep.subr.bf16.mxu0 %v4468
    %4543 = vmatpush1.bf16.msra.mxu0 %v4467
    %4544 = vmatprep.subr.bf16.mxu0 %v4464
    %4545 = vmatpush1.bf16.msra.mxu0 %v4463
    %4546 = vmatprep.subr.bf16.mxu0 %v4460
    %4547 = vmatpush1.bf16.msra.mxu0 %v4459
    %4548 = vmatprep.subr.bf16.mxu0 %v4456
    %4549 = vmatpush1.bf16.msra.mxu0 %v4455
    %4550 = vmatprep.subr.bf16.mxu0 %v4452
    %4551 = vmatpush1.bf16.msra.mxu0 %v4451
    %4552 = vmatprep.subr.bf16.mxu0 %v4448
    %4553 = vmatpush1.bf16.msra.mxu0 %v4447
    %4554 = vmatprep.subr.bf16.mxu0 %v4444
    %4555 = vmatpush1.bf16.msra.mxu0 %v4443
    %4556 = vmatprep.subr.bf16.mxu0 %v4440
    %4557 = vmatpush1.bf16.msra.mxu0 %v4439
    %4558 = vmatprep.subr.bf16.mxu0 0
    %4559 = vmatpush2.bf16.msra.mxu0 0
    %4560 = vmatprep.subr.bf16.mxu0 0
    %4561 = vmatpush2.bf16.msra.mxu0 0
    %4562 = vmatprep.subr.bf16.mxu0 0
    %4563 = vmatpush2.bf16.msra.mxu0 0
    %4564 = vmatprep.subr.bf16.mxu0 0
    %4565 = vmatpush2.bf16.msra.mxu0 0
    %4566 = vmatprep.subr.bf16.mxu0 0
    %4567 = vmatpush2.bf16.msra.mxu0 0
    %4568 = vmatprep.subr.bf16.mxu0 0
    %4569 = vmatpush2.bf16.msra.mxu0 0
    %4570 = vmatprep.subr.bf16.mxu0 0
    %4571 = vmatpush2.bf16.msra.mxu0 0
    %4572 = vmatprep.subr.bf16.mxu0 0
    %4573 = vmatpush2.bf16.msra.mxu0 0
    %4574 = vmatprep.mubr.bf16.mxu0 0
    %4575 = vmatmul.mubr.bf16.gmra.mxu0 %v4286
    %v4576 = vpop.f32.mrf.mxu0
    %v4577 = vadd.f32 %v4332, %v4576
    %v4578 = vpop.f32.mrf.mxu0
    %v4579 = vadd.f32 %v4336, %v4578
    %v4580 = vpop.f32.mrf.mxu0
    %v4581 = vpop.f32.mrf.mxu0
    %4582 = vdwg.mxu0
    %4583 = vst [vmem:[#allocation2 + $0xc0] sm:$0xff] %v4536
    %4584 = vst [vmem:[#allocation2 + $0xc8] sm:$0xff] %v4538
    %4585 = vst [vmem:[#allocation2 + $0xd0] sm:$0xff] %v4577
    %4586 = vst [vmem:[#allocation2 + $0xd8] sm:$0xff] %v4579
    %v4587 = vld [vmem:[#allocation2 + $0xe0] sm:$0xff]
    %v4588 = vld [vmem:[#allocation2 + $0xe8] sm:$0xff]
    %v4589 = vld [vmem:[#allocation2 + $0xf0] sm:$0xff]
    %v4590 = vld [vmem:[#allocation2 + $0xf8] sm:$0xff]
    %v4591 = vld [vmem:[#allocation6] sm:$0xff]
    %v4592 = vld [vmem:[#allocation6 + $0x8] sm:$0xff]
    %v4593 = vld [vmem:[#allocation6 + $0x10] sm:$0xff]
    %v4594 = vld [vmem:[#allocation6 + $0x18] sm:$0xff]
    %v4595 = vld [vmem:[#allocation6 + $0x20] sm:$0xff]
    %v4596 = vld [vmem:[#allocation6 + $0x28] sm:$0xff]
    %v4597 = vld [vmem:[#allocation6 + $0x30] sm:$0xff]
    %v4598 = vld [vmem:[#allocation6 + $0x38] sm:$0xff]
    %v4599 = vld [vmem:[#allocation6 + $0x40] sm:$0xff]
    %v4600 = vld [vmem:[#allocation6 + $0x48] sm:$0xff]
    %v4601 = vld [vmem:[#allocation6 + $0x50] sm:$0xff]
    %v4602 = vld [vmem:[#allocation6 + $0x58] sm:$0xff]
    %v4603 = vld [vmem:[#allocation6 + $0x60] sm:$0xff]
    %v4604 = vld [vmem:[#allocation6 + $0x68] sm:$0xff]
    %v4605 = vld [vmem:[#allocation6 + $0x70] sm:$0xff]
    %v4606 = vld [vmem:[#allocation6 + $0x78] sm:$0xff]
    %v4607 = vld [vmem:[#allocation6 + $0x80] sm:$0xff]
    %v4608 = vld [vmem:[#allocation6 + $0x88] sm:$0xff]
    %v4609 = vld [vmem:[#allocation6 + $0x90] sm:$0xff]
    %v4610 = vld [vmem:[#allocation6 + $0x98] sm:$0xff]
    %v4611 = vld [vmem:[#allocation6 + $0xa0] sm:$0xff]
    %v4612 = vld [vmem:[#allocation6 + $0xa8] sm:$0xff]
    %v4613 = vld [vmem:[#allocation6 + $0xb0] sm:$0xff]
    %v4614 = vld [vmem:[#allocation6 + $0xb8] sm:$0xff]
    %v4615 = vld [vmem:[#allocation6 + $0xc0] sm:$0xff]
    %v4616 = vld [vmem:[#allocation6 + $0xc8] sm:$0xff]
    %v4617 = vld [vmem:[#allocation6 + $0xd0] sm:$0xff]
    %v4618 = vld [vmem:[#allocation6 + $0xd8] sm:$0xff]
    %v4619 = vld [vmem:[#allocation6 + $0xe0] sm:$0xff]
    %v4620 = vld [vmem:[#allocation6 + $0xe8] sm:$0xff]
    %v4621 = vld [vmem:[#allocation6 + $0xf0] sm:$0xff]
    %v4622 = vld [vmem:[#allocation6 + $0xf8] sm:$0xff]
    %v4655 = vunpack.c.l.b16 %v4591
    %v4656 = vunpack.c.h.b16 %v4591
    %v4657 = vunpack.c.l.b16 %v4592
    %v4658 = vunpack.c.h.b16 %v4592
    %v4659 = vunpack.c.l.b16 %v4593
    %v4660 = vunpack.c.h.b16 %v4593
    %v4661 = vunpack.c.l.b16 %v4594
    %v4662 = vunpack.c.h.b16 %v4594
    %v4663 = vunpack.c.l.b16 %v4595
    %v4664 = vunpack.c.h.b16 %v4595
    %v4665 = vunpack.c.l.b16 %v4596
    %v4666 = vunpack.c.h.b16 %v4596
    %v4667 = vunpack.c.l.b16 %v4597
    %v4668 = vunpack.c.h.b16 %v4597
    %v4669 = vunpack.c.l.b16 %v4598
    %v4670 = vunpack.c.h.b16 %v4598
    %v4671 = vunpack.c.l.b16 %v4599
    %v4672 = vunpack.c.h.b16 %v4599
    %v4673 = vunpack.c.l.b16 %v4600
    %v4674 = vunpack.c.h.b16 %v4600
    %v4675 = vunpack.c.l.b16 %v4601
    %v4676 = vunpack.c.h.b16 %v4601
    %v4677 = vunpack.c.l.b16 %v4602
    %v4678 = vunpack.c.h.b16 %v4602
    %v4679 = vunpack.c.l.b16 %v4603
    %v4680 = vunpack.c.h.b16 %v4603
    %v4681 = vunpack.c.l.b16 %v4604
    %v4682 = vunpack.c.h.b16 %v4604
    %v4683 = vunpack.c.l.b16 %v4605
    %v4684 = vunpack.c.h.b16 %v4605
    %v4685 = vunpack.c.l.b16 %v4606
    %v4686 = vunpack.c.h.b16 %v4606
    %v4687 = vunpack.c.l.b16 %v4607
    %v4688 = vunpack.c.h.b16 %v4607
    %v4689 = vunpack.c.l.b16 %v4608
    %v4690 = vunpack.c.h.b16 %v4608
    %v4691 = vunpack.c.l.b16 %v4609
    %v4692 = vunpack.c.h.b16 %v4609
    %v4693 = vunpack.c.l.b16 %v4610
    %v4694 = vunpack.c.h.b16 %v4610
    %v4695 = vunpack.c.l.b16 %v4611
    %v4696 = vunpack.c.h.b16 %v4611
    %v4697 = vunpack.c.l.b16 %v4612
    %v4698 = vunpack.c.h.b16 %v4612
    %v4699 = vunpack.c.l.b16 %v4613
    %v4700 = vunpack.c.h.b16 %v4613
    %v4701 = vunpack.c.l.b16 %v4614
    %v4702 = vunpack.c.h.b16 %v4614
    %v4703 = vunpack.c.l.b16 %v4615
    %v4704 = vunpack.c.h.b16 %v4615
    %v4705 = vunpack.c.l.b16 %v4616
    %v4706 = vunpack.c.h.b16 %v4616
    %v4707 = vunpack.c.l.b16 %v4617
    %v4708 = vunpack.c.h.b16 %v4617
    %v4709 = vunpack.c.l.b16 %v4618
    %v4710 = vunpack.c.h.b16 %v4618
    %v4711 = vunpack.c.l.b16 %v4619
    %v4712 = vunpack.c.h.b16 %v4619
    %v4713 = vunpack.c.l.b16 %v4620
    %v4714 = vunpack.c.h.b16 %v4620
    %v4715 = vunpack.c.l.b16 %v4621
    %v4716 = vunpack.c.h.b16 %v4621
    %v4717 = vunpack.c.l.b16 %v4622
    %v4718 = vunpack.c.h.b16 %v4622
    %v4719 = vpack.c.b16 %v4659, %v4655
    %v4720 = vpack.c.b16 %v4660, %v4656
    %v4721 = vpack.c.b16 %v4661, %v4657
    %v4722 = vpack.c.b16 %v4662, %v4658
    %v4723 = vpack.c.b16 %v4667, %v4663
    %v4724 = vpack.c.b16 %v4668, %v4664
    %v4725 = vpack.c.b16 %v4669, %v4665
    %v4726 = vpack.c.b16 %v4670, %v4666
    %v4727 = vpack.c.b16 %v4675, %v4671
    %v4728 = vpack.c.b16 %v4676, %v4672
    %v4729 = vpack.c.b16 %v4677, %v4673
    %v4730 = vpack.c.b16 %v4678, %v4674
    %v4731 = vpack.c.b16 %v4683, %v4679
    %v4732 = vpack.c.b16 %v4684, %v4680
    %v4733 = vpack.c.b16 %v4685, %v4681
    %v4734 = vpack.c.b16 %v4686, %v4682
    %v4735 = vpack.c.b16 %v4691, %v4687
    %v4736 = vpack.c.b16 %v4692, %v4688
    %v4737 = vpack.c.b16 %v4693, %v4689
    %v4738 = vpack.c.b16 %v4694, %v4690
    %v4739 = vpack.c.b16 %v4699, %v4695
    %v4740 = vpack.c.b16 %v4700, %v4696
    %v4741 = vpack.c.b16 %v4701, %v4697
    %v4742 = vpack.c.b16 %v4702, %v4698
    %v4743 = vpack.c.b16 %v4707, %v4703
    %v4744 = vpack.c.b16 %v4708, %v4704
    %v4745 = vpack.c.b16 %v4709, %v4705
    %v4746 = vpack.c.b16 %v4710, %v4706
    %v4747 = vpack.c.b16 %v4715, %v4711
    %v4748 = vpack.c.b16 %v4716, %v4712
    %v4749 = vpack.c.b16 %v4717, %v4713
    %v4750 = vpack.c.b16 %v4718, %v4714
    %4783 = vmatprep.subr.bf16.mxu0 %v4748
    %4784 = vmatpush1.bf16.msra.mxu0 %v4747
    %4785 = vmatprep.subr.bf16.mxu0 %v4744
    %4786 = vmatpush1.bf16.msra.mxu0 %v4743
    %4787 = vmatprep.subr.bf16.mxu0 %v4740
    %4788 = vmatpush1.bf16.msra.mxu0 %v4739
    %4789 = vmatprep.subr.bf16.mxu0 %v4736
    %4790 = vmatpush1.bf16.msra.mxu0 %v4735
    %4791 = vmatprep.subr.bf16.mxu0 %v4732
    %4792 = vmatpush1.bf16.msra.mxu0 %v4731
    %4793 = vmatprep.subr.bf16.mxu0 %v4728
    %4794 = vmatpush1.bf16.msra.mxu0 %v4727
    %4795 = vmatprep.subr.bf16.mxu0 %v4724
    %4796 = vmatpush1.bf16.msra.mxu0 %v4723
    %4797 = vmatprep.subr.bf16.mxu0 %v4720
    %4798 = vmatpush1.bf16.msra.mxu0 %v4719
    %4799 = vmatprep.subr.bf16.mxu0 0
    %4800 = vmatpush2.bf16.msra.mxu0 0
    %4801 = vmatprep.subr.bf16.mxu0 0
    %4802 = vmatpush2.bf16.msra.mxu0 0
    %4803 = vmatprep.subr.bf16.mxu0 0
    %4804 = vmatpush2.bf16.msra.mxu0 0
    %4805 = vmatprep.subr.bf16.mxu0 0
    %4806 = vmatpush2.bf16.msra.mxu0 0
    %4807 = vmatprep.subr.bf16.mxu0 0
    %4808 = vmatpush2.bf16.msra.mxu0 0
    %4809 = vmatprep.subr.bf16.mxu0 0
    %4810 = vmatpush2.bf16.msra.mxu0 0
    %4811 = vmatprep.subr.bf16.mxu0 0
    %4812 = vmatpush2.bf16.msra.mxu0 0
    %4813 = vmatprep.subr.bf16.mxu0 0
    %4814 = vmatpush2.bf16.msra.mxu0 0
    %4815 = vmatprep.mubr.bf16.mxu0 0
    %4816 = vmatmul.mubr.bf16.gmra.mxu0 %v4286
    %v4817 = vpop.f32.mrf.mxu0
    %v4818 = vadd.f32 0.0, %v4817
    %v4819 = vpop.f32.mrf.mxu0
    %v4820 = vadd.f32 0.0, %v4819
    %v4821 = vpop.f32.mrf.mxu0
    %v4822 = vpop.f32.mrf.mxu0
    %4823 = vdwg.mxu0
    %4824 = vmatprep.subr.bf16.mxu0 %v4750
    %4825 = vmatpush1.bf16.msra.mxu0 %v4749
    %4826 = vmatprep.subr.bf16.mxu0 %v4746
    %4827 = vmatpush1.bf16.msra.mxu0 %v4745
    %4828 = vmatprep.subr.bf16.mxu0 %v4742
    %4829 = vmatpush1.bf16.msra.mxu0 %v4741
    %4830 = vmatprep.subr.bf16.mxu0 %v4738
    %4831 = vmatpush1.bf16.msra.mxu0 %v4737
    %4832 = vmatprep.subr.bf16.mxu0 %v4734
    %4833 = vmatpush1.bf16.msra.mxu0 %v4733
    %4834 = vmatprep.subr.bf16.mxu0 %v4730
    %4835 = vmatpush1.bf16.msra.mxu0 %v4729
    %4836 = vmatprep.subr.bf16.mxu0 %v4726
    %4837 = vmatpush1.bf16.msra.mxu0 %v4725
    %4838 = vmatprep.subr.bf16.mxu0 %v4722
    %4839 = vmatpush1.bf16.msra.mxu0 %v4721
    %4840 = vmatprep.subr.bf16.mxu0 0
    %4841 = vmatpush2.bf16.msra.mxu0 0
    %4842 = vmatprep.subr.bf16.mxu0 0
    %4843 = vmatpush2.bf16.msra.mxu0 0
    %4844 = vmatprep.subr.bf16.mxu0 0
    %4845 = vmatpush2.bf16.msra.mxu0 0
    %4846 = vmatprep.subr.bf16.mxu0 0
    %4847 = vmatpush2.bf16.msra.mxu0 0
    %4848 = vmatprep.subr.bf16.mxu0 0
    %4849 = vmatpush2.bf16.msra.mxu0 0
    %4850 = vmatprep.subr.bf16.mxu0 0
    %4851 = vmatpush2.bf16.msra.mxu0 0
    %4852 = vmatprep.subr.bf16.mxu0 0
    %4853 = vmatpush2.bf16.msra.mxu0 0
    %4854 = vmatprep.subr.bf16.mxu0 0
    %4855 = vmatpush2.bf16.msra.mxu0 0
    %4856 = vmatprep.mubr.bf16.mxu0 0
    %4857 = vmatmul.mubr.bf16.gmra.mxu0 %v4286
    %v4858 = vpop.f32.mrf.mxu0
    %v4859 = vadd.f32 0.0, %v4858
    %v4860 = vpop.f32.mrf.mxu0
    %v4861 = vadd.f32 0.0, %v4860
    %v4862 = vpop.f32.mrf.mxu0
    %v4863 = vpop.f32.mrf.mxu0
    %4864 = vdwg.mxu0
    %v4865 = vadd.f32 %v4587, %v4818
    %v4866 = vadd.f32 %v4588, %v4820
    %v4867 = vadd.f32 %v4589, %v4859
    %v4868 = vadd.f32 %v4590, %v4861
    %v4869 = vxor.u32 %v4865, 2147483648
    %v4870 = vmul.f32 %v4869, 1.442695
    %v4871 = vpow.pop %v4870
    %v4872 = vadd.f32 %v4871, 1.0
    %v4873 = vrcp.pop %v4872
    %v4874 = vmul.f32 1.0, %v4873
    %v4875 = vxor.u32 %v4866, 2147483648
    %v4876 = vmul.f32 %v4875, 1.442695
    %v4877 = vpow.pop %v4876
    %v4878 = vadd.f32 %v4877, 1.0
    %v4879 = vrcp.pop %v4878
    %v4880 = vmul.f32 1.0, %v4879
    %v4881 = vtanh.pop %v4867
    %v4882 = vxor.u32 %v4868, 2147483648
    %v4883 = vmul.f32 %v4882, 1.442695
    %v4884 = vpow.pop %v4883
    %v4885 = vadd.f32 %v4884, 1.0
    %v4886 = vrcp.pop %v4885
    %v4887 = vmul.f32 1.0, %v4886
    %v4888 = vmul.f32 %v4880, %v4283
    %v4889 = vmul.f32 %v4874, %v4881
    %v4890 = vadd.f32 %v4888, %v4889
    %v4891 = vtanh.pop %v4890
    %v4892 = vmul.f32 %v4887, %v4891
    %v4893 = vpack.c.bf16 %v4892, %v4892
    %v4894 = vld [vmem:[#allocation8] sm:$0xff]
    %v4895 = vld [vmem:[#allocation8 + $0x8] sm:$0xff]
    %v4896 = vld [vmem:[#allocation8 + $0x10] sm:$0xff]
    %v4897 = vld [vmem:[#allocation8 + $0x18] sm:$0xff]
    %v4898 = vld [vmem:[#allocation8 + $0x20] sm:$0xff]
    %v4899 = vld [vmem:[#allocation8 + $0x28] sm:$0xff]
    %v4900 = vld [vmem:[#allocation8 + $0x30] sm:$0xff]
    %v4901 = vld [vmem:[#allocation8 + $0x38] sm:$0xff]
    %v4902 = vld [vmem:[#allocation8 + $0x40] sm:$0xff]
    %v4903 = vld [vmem:[#allocation8 + $0x48] sm:$0xff]
    %v4904 = vld [vmem:[#allocation8 + $0x50] sm:$0xff]
    %v4905 = vld [vmem:[#allocation8 + $0x58] sm:$0xff]
    %v4906 = vld [vmem:[#allocation8 + $0x60] sm:$0xff]
    %v4907 = vld [vmem:[#allocation8 + $0x68] sm:$0xff]
    %v4908 = vld [vmem:[#allocation8 + $0x70] sm:$0xff]
    %v4909 = vld [vmem:[#allocation8 + $0x78] sm:$0xff]
    %v4910 = vld [vmem:[#allocation8 + $0x80] sm:$0xff]
    %v4911 = vld [vmem:[#allocation8 + $0x88] sm:$0xff]
    %v4912 = vld [vmem:[#allocation8 + $0x90] sm:$0xff]
    %v4913 = vld [vmem:[#allocation8 + $0x98] sm:$0xff]
    %v4914 = vld [vmem:[#allocation8 + $0xa0] sm:$0xff]
    %v4915 = vld [vmem:[#allocation8 + $0xa8] sm:$0xff]
    %v4916 = vld [vmem:[#allocation8 + $0xb0] sm:$0xff]
    %v4917 = vld [vmem:[#allocation8 + $0xb8] sm:$0xff]
    %v4918 = vld [vmem:[#allocation8 + $0xc0] sm:$0xff]
    %v4919 = vld [vmem:[#allocation8 + $0xc8] sm:$0xff]
    %v4920 = vld [vmem:[#allocation8 + $0xd0] sm:$0xff]
    %v4921 = vld [vmem:[#allocation8 + $0xd8] sm:$0xff]
    %v4922 = vld [vmem:[#allocation8 + $0xe0] sm:$0xff]
    %v4923 = vld [vmem:[#allocation8 + $0xe8] sm:$0xff]
    %v4924 = vld [vmem:[#allocation8 + $0xf0] sm:$0xff]
    %v4925 = vld [vmem:[#allocation8 + $0xf8] sm:$0xff]
    %v4926 = vld [vmem:[%s6] sm:$0xf]
    %v4928 = vlaneseq
    %v4929 = vshrl.u32 %v4928, 7
    %v4930 = vsub.s32 0, %v4929
    %v4931 = vrot.slane %v4926, %v4930
    %v4932 = vlaneseq
    %v4933 = vshrl.u32 %v4932, 7
    %v4934 = vsub.s32 1, %v4933
    %v4935 = vrot.slane %v4926, %v4934
    %v4936 = vlaneseq
    %v4937 = vshrl.u32 %v4936, 7
    %v4938 = vsub.s32 2, %v4937
    %v4939 = vrot.slane %v4926, %v4938
    %v4940 = vlaneseq
    %v4941 = vshrl.u32 %v4940, 7
    %v4942 = vsub.s32 3, %v4941
    %v4943 = vrot.slane %v4926, %v4942
    %v4980 = vunpack.c.l.b16 %v4894
    %v4981 = vunpack.c.h.b16 %v4894
    %v4982 = vunpack.c.l.b16 %v4895
    %v4983 = vunpack.c.h.b16 %v4895
    %v4984 = vunpack.c.l.b16 %v4896
    %v4985 = vunpack.c.h.b16 %v4896
    %v4986 = vunpack.c.l.b16 %v4897
    %v4987 = vunpack.c.h.b16 %v4897
    %v4988 = vunpack.c.l.b16 %v4898
    %v4989 = vunpack.c.h.b16 %v4898
    %v4990 = vunpack.c.l.b16 %v4899
    %v4991 = vunpack.c.h.b16 %v4899
    %v4992 = vunpack.c.l.b16 %v4900
    %v4993 = vunpack.c.h.b16 %v4900
    %v4994 = vunpack.c.l.b16 %v4901
    %v4995 = vunpack.c.h.b16 %v4901
    %v4996 = vunpack.c.l.b16 %v4902
    %v4997 = vunpack.c.h.b16 %v4902
    %v4998 = vunpack.c.l.b16 %v4903
    %v4999 = vunpack.c.h.b16 %v4903
    %v5000 = vunpack.c.l.b16 %v4904
    %v5001 = vunpack.c.h.b16 %v4904
    %v5002 = vunpack.c.l.b16 %v4905
    %v5003 = vunpack.c.h.b16 %v4905
    %v5004 = vunpack.c.l.b16 %v4906
    %v5005 = vunpack.c.h.b16 %v4906
    %v5006 = vunpack.c.l.b16 %v4907
    %v5007 = vunpack.c.h.b16 %v4907
    %v5008 = vunpack.c.l.b16 %v4908
    %v5009 = vunpack.c.h.b16 %v4908
    %v5010 = vunpack.c.l.b16 %v4909
    %v5011 = vunpack.c.h.b16 %v4909
    %v5012 = vunpack.c.l.b16 %v4910
    %v5013 = vunpack.c.h.b16 %v4910
    %v5014 = vunpack.c.l.b16 %v4911
    %v5015 = vunpack.c.h.b16 %v4911
    %v5016 = vunpack.c.l.b16 %v4912
    %v5017 = vunpack.c.h.b16 %v4912
    %v5018 = vunpack.c.l.b16 %v4913
    %v5019 = vunpack.c.h.b16 %v4913
    %v5020 = vunpack.c.l.b16 %v4914
    %v5021 = vunpack.c.h.b16 %v4914
    %v5022 = vunpack.c.l.b16 %v4915
    %v5023 = vunpack.c.h.b16 %v4915
    %v5024 = vunpack.c.l.b16 %v4916
    %v5025 = vunpack.c.h.b16 %v4916
    %v5026 = vunpack.c.l.b16 %v4917
    %v5027 = vunpack.c.h.b16 %v4917
    %v5028 = vunpack.c.l.b16 %v4918
    %v5029 = vunpack.c.h.b16 %v4918
    %v5030 = vunpack.c.l.b16 %v4919
    %v5031 = vunpack.c.h.b16 %v4919
    %v5032 = vunpack.c.l.b16 %v4920
    %v5033 = vunpack.c.h.b16 %v4920
    %v5034 = vunpack.c.l.b16 %v4921
    %v5035 = vunpack.c.h.b16 %v4921
    %v5036 = vunpack.c.l.b16 %v4922
    %v5037 = vunpack.c.h.b16 %v4922
    %v5038 = vunpack.c.l.b16 %v4923
    %v5039 = vunpack.c.h.b16 %v4923
    %v5040 = vunpack.c.l.b16 %v4924
    %v5041 = vunpack.c.h.b16 %v4924
    %v5042 = vunpack.c.l.b16 %v4925
    %v5043 = vunpack.c.h.b16 %v4925
    %v5044 = vpack.c.b16 %v4984, %v4980
    %v5045 = vpack.c.b16 %v4985, %v4981
    %v5046 = vpack.c.b16 %v4986, %v4982
    %v5047 = vpack.c.b16 %v4987, %v4983
    %v5048 = vpack.c.b16 %v4992, %v4988
    %v5049 = vpack.c.b16 %v4993, %v4989
    %v5050 = vpack.c.b16 %v4994, %v4990
    %v5051 = vpack.c.b16 %v4995, %v4991
    %v5052 = vpack.c.b16 %v5000, %v4996
    %v5053 = vpack.c.b16 %v5001, %v4997
    %v5054 = vpack.c.b16 %v5002, %v4998
    %v5055 = vpack.c.b16 %v5003, %v4999
    %v5056 = vpack.c.b16 %v5008, %v5004
    %v5057 = vpack.c.b16 %v5009, %v5005
    %v5058 = vpack.c.b16 %v5010, %v5006
    %v5059 = vpack.c.b16 %v5011, %v5007
    %v5060 = vpack.c.b16 %v5016, %v5012
    %v5061 = vpack.c.b16 %v5017, %v5013
    %v5062 = vpack.c.b16 %v5018, %v5014
    %v5063 = vpack.c.b16 %v5019, %v5015
    %v5064 = vpack.c.b16 %v5024, %v5020
    %v5065 = vpack.c.b16 %v5025, %v5021
    %v5066 = vpack.c.b16 %v5026, %v5022
    %v5067 = vpack.c.b16 %v5027, %v5023
    %v5068 = vpack.c.b16 %v5032, %v5028
    %v5069 = vpack.c.b16 %v5033, %v5029
    %v5070 = vpack.c.b16 %v5034, %v5030
    %v5071 = vpack.c.b16 %v5035, %v5031
    %v5072 = vpack.c.b16 %v5040, %v5036
    %v5073 = vpack.c.b16 %v5041, %v5037
    %v5074 = vpack.c.b16 %v5042, %v5038
    %v5075 = vpack.c.b16 %v5043, %v5039
    %5108 = vmatprep.subr.bf16.mxu0 %v5073
    %5109 = vmatpush1.bf16.msra.mxu0 %v5072
    %5110 = vmatprep.subr.bf16.mxu0 %v5069
    %5111 = vmatpush1.bf16.msra.mxu0 %v5068
    %5112 = vmatprep.subr.bf16.mxu0 %v5065
    %5113 = vmatpush1.bf16.msra.mxu0 %v5064
    %5114 = vmatprep.subr.bf16.mxu0 %v5061
    %5115 = vmatpush1.bf16.msra.mxu0 %v5060
    %5116 = vmatprep.subr.bf16.mxu0 %v5057
    %5117 = vmatpush1.bf16.msra.mxu0 %v5056
    %5118 = vmatprep.subr.bf16.mxu0 %v5053
    %5119 = vmatpush1.bf16.msra.mxu0 %v5052
    %5120 = vmatprep.subr.bf16.mxu0 %v5049
    %5121 = vmatpush1.bf16.msra.mxu0 %v5048
    %5122 = vmatprep.subr.bf16.mxu0 %v5045
    %5123 = vmatpush1.bf16.msra.mxu0 %v5044
    %5124 = vmatprep.subr.bf16.mxu0 0
    %5125 = vmatpush2.bf16.msra.mxu0 0
    %5126 = vmatprep.subr.bf16.mxu0 0
    %5127 = vmatpush2.bf16.msra.mxu0 0
    %5128 = vmatprep.subr.bf16.mxu0 0
    %5129 = vmatpush2.bf16.msra.mxu0 0
    %5130 = vmatprep.subr.bf16.mxu0 0
    %5131 = vmatpush2.bf16.msra.mxu0 0
    %5132 = vmatprep.subr.bf16.mxu0 0
    %5133 = vmatpush2.bf16.msra.mxu0 0
    %5134 = vmatprep.subr.bf16.mxu0 0
    %5135 = vmatpush2.bf16.msra.mxu0 0
    %5136 = vmatprep.subr.bf16.mxu0 0
    %5137 = vmatpush2.bf16.msra.mxu0 0
    %5138 = vmatprep.subr.bf16.mxu0 0
    %5139 = vmatpush2.bf16.msra.mxu0 0
    %5140 = vmatprep.mubr.bf16.mxu0 0
    %5141 = vmatmul.mubr.bf16.gmra.mxu0 %v4893
    %v5142 = vpop.f32.mrf.mxu0
    %v5143 = vadd.f32 %v4931, %v5142
    %v5144 = vpop.f32.mrf.mxu0
    %v5145 = vadd.f32 %v4935, %v5144
    %v5146 = vpop.f32.mrf.mxu0
    %v5147 = vpop.f32.mrf.mxu0
    %5148 = vdwg.mxu0
    %5149 = vmatprep.subr.bf16.mxu0 %v5075
    %5150 = vmatpush1.bf16.msra.mxu0 %v5074
    %5151 = vmatprep.subr.bf16.mxu0 %v5071
    %5152 = vmatpush1.bf16.msra.mxu0 %v5070
    %5153 = vmatprep.subr.bf16.mxu0 %v5067
    %5154 = vmatpush1.bf16.msra.mxu0 %v5066
    %5155 = vmatprep.subr.bf16.mxu0 %v5063
    %5156 = vmatpush1.bf16.msra.mxu0 %v5062
    %5157 = vmatprep.subr.bf16.mxu0 %v5059
    %5158 = vmatpush1.bf16.msra.mxu0 %v5058
    %5159 = vmatprep.subr.bf16.mxu0 %v5055
    %5160 = vmatpush1.bf16.msra.mxu0 %v5054
    %5161 = vmatprep.subr.bf16.mxu0 %v5051
    %5162 = vmatpush1.bf16.msra.mxu0 %v5050
    %5163 = vmatprep.subr.bf16.mxu0 %v5047
    %5164 = vmatpush1.bf16.msra.mxu0 %v5046
    %5165 = vmatprep.subr.bf16.mxu0 0
    %5166 = vmatpush2.bf16.msra.mxu0 0
    %5167 = vmatprep.subr.bf16.mxu0 0
    %5168 = vmatpush2.bf16.msra.mxu0 0
    %5169 = vmatprep.subr.bf16.mxu0 0
    %5170 = vmatpush2.bf16.msra.mxu0 0
    %5171 = vmatprep.subr.bf16.mxu0 0
    %5172 = vmatpush2.bf16.msra.mxu0 0
    %5173 = vmatprep.subr.bf16.mxu0 0
    %5174 = vmatpush2.bf16.msra.mxu0 0
    %5175 = vmatprep.subr.bf16.mxu0 0
    %5176 = vmatpush2.bf16.msra.mxu0 0
    %5177 = vmatprep.subr.bf16.mxu0 0
    %5178 = vmatpush2.bf16.msra.mxu0 0
    %5179 = vmatprep.subr.bf16.mxu0 0
    %5180 = vmatpush2.bf16.msra.mxu0 0
    %5181 = vmatprep.mubr.bf16.mxu0 0
    %5182 = vmatmul.mubr.bf16.gmra.mxu0 %v4893
    %v5183 = vpop.f32.mrf.mxu0
    %v5184 = vadd.f32 %v4939, %v5183
    %v5185 = vpop.f32.mrf.mxu0
    %v5186 = vadd.f32 %v4943, %v5185
    %v5187 = vpop.f32.mrf.mxu0
    %v5188 = vpop.f32.mrf.mxu0
    %5189 = vdwg.mxu0
    %5190 = vst [vmem:[#allocation2 + $0xe0] sm:$0xff] %v5143
    %5191 = vst [vmem:[#allocation2 + $0xe8] sm:$0xff] %v5145
    %5192 = vst [vmem:[#allocation2 + $0xf0] sm:$0xff] %v5184
    %5193 = vst [vmem:[#allocation2 + $0xf8] sm:$0xff] %v5186
    %v5194 = vld [vmem:[#allocation2] sm:$0xff]
    %v5195 = vld [vmem:[#allocation2 + $0x8] sm:$0xff]
    %v5196 = vld [vmem:[#allocation2 + $0x10] sm:$0xff]
    %v5197 = vld [vmem:[#allocation2 + $0x18] sm:$0xff]
    %v5198 = vld [vmem:[#allocation9] sm:$0xff]
    %v5199 = vld [vmem:[#allocation9 + $0x8] sm:$0xff]
    %v5200 = vld [vmem:[#allocation9 + $0x10] sm:$0xff]
    %v5201 = vld [vmem:[#allocation9 + $0x18] sm:$0xff]
    %v5202 = vld [vmem:[#allocation9 + $0x20] sm:$0xff]
    %v5203 = vld [vmem:[#allocation9 + $0x28] sm:$0xff]
    %v5204 = vld [vmem:[#allocation9 + $0x30] sm:$0xff]
    %v5205 = vld [vmem:[#allocation9 + $0x38] sm:$0xff]
    %v5206 = vld [vmem:[#allocation9 + $0x40] sm:$0xff]
    %v5207 = vld [vmem:[#allocation9 + $0x48] sm:$0xff]
    %v5208 = vld [vmem:[#allocation9 + $0x50] sm:$0xff]
    %v5209 = vld [vmem:[#allocation9 + $0x58] sm:$0xff]
    %v5210 = vld [vmem:[#allocation9 + $0x60] sm:$0xff]
    %v5211 = vld [vmem:[#allocation9 + $0x68] sm:$0xff]
    %v5212 = vld [vmem:[#allocation9 + $0x70] sm:$0xff]
    %v5213 = vld [vmem:[#allocation9 + $0x78] sm:$0xff]
    %v5214 = vld [vmem:[#allocation9 + $0x80] sm:$0xff]
    %v5215 = vld [vmem:[#allocation9 + $0x88] sm:$0xff]
    %v5216 = vld [vmem:[#allocation9 + $0x90] sm:$0xff]
    %v5217 = vld [vmem:[#allocation9 + $0x98] sm:$0xff]
    %v5218 = vld [vmem:[#allocation9 + $0xa0] sm:$0xff]
    %v5219 = vld [vmem:[#allocation9 + $0xa8] sm:$0xff]
    %v5220 = vld [vmem:[#allocation9 + $0xb0] sm:$0xff]
    %v5221 = vld [vmem:[#allocation9 + $0xb8] sm:$0xff]
    %v5222 = vld [vmem:[#allocation9 + $0xc0] sm:$0xff]
    %v5223 = vld [vmem:[#allocation9 + $0xc8] sm:$0xff]
    %v5224 = vld [vmem:[#allocation9 + $0xd0] sm:$0xff]
    %v5225 = vld [vmem:[#allocation9 + $0xd8] sm:$0xff]
    %v5226 = vld [vmem:[#allocation9 + $0xe0] sm:$0xff]
    %v5227 = vld [vmem:[#allocation9 + $0xe8] sm:$0xff]
    %v5228 = vld [vmem:[#allocation9 + $0xf0] sm:$0xff]
    %v5229 = vld [vmem:[#allocation9 + $0xf8] sm:$0xff]
    %v5262 = vunpack.c.l.b16 %v5198
    %v5263 = vunpack.c.h.b16 %v5198
    %v5264 = vunpack.c.l.b16 %v5199
    %v5265 = vunpack.c.h.b16 %v5199
    %v5266 = vunpack.c.l.b16 %v5200
    %v5267 = vunpack.c.h.b16 %v5200
    %v5268 = vunpack.c.l.b16 %v5201
    %v5269 = vunpack.c.h.b16 %v5201
    %v5270 = vunpack.c.l.b16 %v5202
    %v5271 = vunpack.c.h.b16 %v5202
    %v5272 = vunpack.c.l.b16 %v5203
    %v5273 = vunpack.c.h.b16 %v5203
    %v5274 = vunpack.c.l.b16 %v5204
    %v5275 = vunpack.c.h.b16 %v5204
    %v5276 = vunpack.c.l.b16 %v5205
    %v5277 = vunpack.c.h.b16 %v5205
    %v5278 = vunpack.c.l.b16 %v5206
    %v5279 = vunpack.c.h.b16 %v5206
    %v5280 = vunpack.c.l.b16 %v5207
    %v5281 = vunpack.c.h.b16 %v5207
    %v5282 = vunpack.c.l.b16 %v5208
    %v5283 = vunpack.c.h.b16 %v5208
    %v5284 = vunpack.c.l.b16 %v5209
    %v5285 = vunpack.c.h.b16 %v5209
    %v5286 = vunpack.c.l.b16 %v5210
    %v5287 = vunpack.c.h.b16 %v5210
    %v5288 = vunpack.c.l.b16 %v5211
    %v5289 = vunpack.c.h.b16 %v5211
    %v5290 = vunpack.c.l.b16 %v5212
    %v5291 = vunpack.c.h.b16 %v5212
    %v5292 = vunpack.c.l.b16 %v5213
    %v5293 = vunpack.c.h.b16 %v5213
    %v5294 = vunpack.c.l.b16 %v5214
    %v5295 = vunpack.c.h.b16 %v5214
    %v5296 = vunpack.c.l.b16 %v5215
    %v5297 = vunpack.c.h.b16 %v5215
    %v5298 = vunpack.c.l.b16 %v5216
    %v5299 = vunpack.c.h.b16 %v5216
    %v5300 = vunpack.c.l.b16 %v5217
    %v5301 = vunpack.c.h.b16 %v5217
    %v5302 = vunpack.c.l.b16 %v5218
    %v5303 = vunpack.c.h.b16 %v5218
    %v5304 = vunpack.c.l.b16 %v5219
    %v5305 = vunpack.c.h.b16 %v5219
    %v5306 = vunpack.c.l.b16 %v5220
    %v5307 = vunpack.c.h.b16 %v5220
    %v5308 = vunpack.c.l.b16 %v5221
    %v5309 = vunpack.c.h.b16 %v5221
    %v5310 = vunpack.c.l.b16 %v5222
    %v5311 = vunpack.c.h.b16 %v5222
    %v5312 = vunpack.c.l.b16 %v5223
    %v5313 = vunpack.c.h.b16 %v5223
    %v5314 = vunpack.c.l.b16 %v5224
    %v5315 = vunpack.c.h.b16 %v5224
    %v5316 = vunpack.c.l.b16 %v5225
    %v5317 = vunpack.c.h.b16 %v5225
    %v5318 = vunpack.c.l.b16 %v5226
    %v5319 = vunpack.c.h.b16 %v5226
    %v5320 = vunpack.c.l.b16 %v5227
    %v5321 = vunpack.c.h.b16 %v5227
    %v5322 = vunpack.c.l.b16 %v5228
    %v5323 = vunpack.c.h.b16 %v5228
    %v5324 = vunpack.c.l.b16 %v5229
    %v5325 = vunpack.c.h.b16 %v5229
    %v5326 = vpack.c.b16 %v5266, %v5262
    %v5327 = vpack.c.b16 %v5267, %v5263
    %v5328 = vpack.c.b16 %v5268, %v5264
    %v5329 = vpack.c.b16 %v5269, %v5265
    %v5330 = vpack.c.b16 %v5274, %v5270
    %v5331 = vpack.c.b16 %v5275, %v5271
    %v5332 = vpack.c.b16 %v5276, %v5272
    %v5333 = vpack.c.b16 %v5277, %v5273
    %v5334 = vpack.c.b16 %v5282, %v5278
    %v5335 = vpack.c.b16 %v5283, %v5279
    %v5336 = vpack.c.b16 %v5284, %v5280
    %v5337 = vpack.c.b16 %v5285, %v5281
    %v5338 = vpack.c.b16 %v5290, %v5286
    %v5339 = vpack.c.b16 %v5291, %v5287
    %v5340 = vpack.c.b16 %v5292, %v5288
    %v5341 = vpack.c.b16 %v5293, %v5289
    %v5342 = vpack.c.b16 %v5298, %v5294
    %v5343 = vpack.c.b16 %v5299, %v5295
    %v5344 = vpack.c.b16 %v5300, %v5296
    %v5345 = vpack.c.b16 %v5301, %v5297
    %v5346 = vpack.c.b16 %v5306, %v5302
    %v5347 = vpack.c.b16 %v5307, %v5303
    %v5348 = vpack.c.b16 %v5308, %v5304
    %v5349 = vpack.c.b16 %v5309, %v5305
    %v5350 = vpack.c.b16 %v5314, %v5310
    %v5351 = vpack.c.b16 %v5315, %v5311
    %v5352 = vpack.c.b16 %v5316, %v5312
    %v5353 = vpack.c.b16 %v5317, %v5313
    %v5354 = vpack.c.b16 %v5322, %v5318
    %v5355 = vpack.c.b16 %v5323, %v5319
    %v5356 = vpack.c.b16 %v5324, %v5320
    %v5357 = vpack.c.b16 %v5325, %v5321
    %5390 = vmatprep.subr.bf16.mxu0 %v5355
    %5391 = vmatpush1.bf16.msra.mxu0 %v5354
    %5392 = vmatprep.subr.bf16.mxu0 %v5351
    %5393 = vmatpush1.bf16.msra.mxu0 %v5350
    %5394 = vmatprep.subr.bf16.mxu0 %v5347
    %5395 = vmatpush1.bf16.msra.mxu0 %v5346
    %5396 = vmatprep.subr.bf16.mxu0 %v5343
    %5397 = vmatpush1.bf16.msra.mxu0 %v5342
    %5398 = vmatprep.subr.bf16.mxu0 %v5339
    %5399 = vmatpush1.bf16.msra.mxu0 %v5338
    %5400 = vmatprep.subr.bf16.mxu0 %v5335
    %5401 = vmatpush1.bf16.msra.mxu0 %v5334
    %5402 = vmatprep.subr.bf16.mxu0 %v5331
    %5403 = vmatpush1.bf16.msra.mxu0 %v5330
    %5404 = vmatprep.subr.bf16.mxu0 %v5327
    %5405 = vmatpush1.bf16.msra.mxu0 %v5326
    %5406 = vmatprep.subr.bf16.mxu0 0
    %5407 = vmatpush2.bf16.msra.mxu0 0
    %5408 = vmatprep.subr.bf16.mxu0 0
    %5409 = vmatpush2.bf16.msra.mxu0 0
    %5410 = vmatprep.subr.bf16.mxu0 0
    %5411 = vmatpush2.bf16.msra.mxu0 0
    %5412 = vmatprep.subr.bf16.mxu0 0
    %5413 = vmatpush2.bf16.msra.mxu0 0
    %5414 = vmatprep.subr.bf16.mxu0 0
    %5415 = vmatpush2.bf16.msra.mxu0 0
    %5416 = vmatprep.subr.bf16.mxu0 0
    %5417 = vmatpush2.bf16.msra.mxu0 0
    %5418 = vmatprep.subr.bf16.mxu0 0
    %5419 = vmatpush2.bf16.msra.mxu0 0
    %5420 = vmatprep.subr.bf16.mxu0 0
    %5421 = vmatpush2.bf16.msra.mxu0 0
    %5422 = vmatprep.mubr.bf16.mxu0 0
    %5423 = vmatmul.mubr.bf16.gmra.mxu0 0
    %v5424 = vpop.f32.mrf.mxu0
    %v5425 = vadd.f32 0.0, %v5424
    %v5426 = vpop.f32.mrf.mxu0
    %v5427 = vadd.f32 0.0, %v5426
    %v5428 = vpop.f32.mrf.mxu0
    %v5429 = vpop.f32.mrf.mxu0
    %5430 = vdwg.mxu0
    %5431 = vmatprep.subr.bf16.mxu0 %v5357
    %5432 = vmatpush1.bf16.msra.mxu0 %v5356
    %5433 = vmatprep.subr.bf16.mxu0 %v5353
    %5434 = vmatpush1.bf16.msra.mxu0 %v5352
    %5435 = vmatprep.subr.bf16.mxu0 %v5349
    %5436 = vmatpush1.bf16.msra.mxu0 %v5348
    %5437 = vmatprep.subr.bf16.mxu0 %v5345
    %5438 = vmatpush1.bf16.msra.mxu0 %v5344
    %5439 = vmatprep.subr.bf16.mxu0 %v5341
    %5440 = vmatpush1.bf16.msra.mxu0 %v5340
    %5441 = vmatprep.subr.bf16.mxu0 %v5337
    %5442 = vmatpush1.bf16.msra.mxu0 %v5336
    %5443 = vmatprep.subr.bf16.mxu0 %v5333
    %5444 = vmatpush1.bf16.msra.mxu0 %v5332
    %5445 = vmatprep.subr.bf16.mxu0 %v5329
    %5446 = vmatpush1.bf16.msra.mxu0 %v5328
    %5447 = vmatprep.subr.bf16.mxu0 0
    %5448 = vmatpush2.bf16.msra.mxu0 0
    %5449 = vmatprep.subr.bf16.mxu0 0
    %5450 = vmatpush2.bf16.msra.mxu0 0
    %5451 = vmatprep.subr.bf16.mxu0 0
    %5452 = vmatpush2.bf16.msra.mxu0 0
    %5453 = vmatprep.subr.bf16.mxu0 0
    %5454 = vmatpush2.bf16.msra.mxu0 0
    %5455 = vmatprep.subr.bf16.mxu0 0
    %5456 = vmatpush2.bf16.msra.mxu0 0
    %5457 = vmatprep.subr.bf16.mxu0 0
    %5458 = vmatpush2.bf16.msra.mxu0 0
    %5459 = vmatprep.subr.bf16.mxu0 0
    %5460 = vmatpush2.bf16.msra.mxu0 0
    %5461 = vmatprep.subr.bf16.mxu0 0
    %5462 = vmatpush2.bf16.msra.mxu0 0
    %5463 = vmatprep.mubr.bf16.mxu0 0
    %5464 = vmatmul.mubr.bf16.gmra.mxu0 0
    %v5465 = vpop.f32.mrf.mxu0
    %v5466 = vadd.f32 0.0, %v5465
    %v5467 = vpop.f32.mrf.mxu0
    %v5468 = vadd.f32 0.0, %v5467
    %v5469 = vpop.f32.mrf.mxu0
    %v5470 = vpop.f32.mrf.mxu0
    %5471 = vdwg.mxu0
    %v5472 = vadd.f32 %v5194, %v5425
    %v5473 = vadd.f32 %v5195, %v5427
    %v5474 = vadd.f32 %v5196, %v5466
    %v5475 = vadd.f32 %v5197, %v5468
    %v5476 = vxor.u32 %v5472, 2147483648
    %v5477 = vmul.f32 %v5476, 1.442695
    %v5478 = vpow.pop %v5477
    %v5479 = vadd.f32 %v5478, 1.0
    %v5480 = vrcp.pop %v5479
    %v5481 = vmul.f32 1.0, %v5480
    %v5482 = vxor.u32 %v5473, 2147483648
    %v5483 = vmul.f32 %v5482, 1.442695
    %v5484 = vpow.pop %v5483
    %v5485 = vadd.f32 %v5484, 1.0
    %v5486 = vrcp.pop %v5485
    %v5487 = vmul.f32 1.0, %v5486
    %v5488 = vtanh.pop %v5474
    %v5489 = vxor.u32 %v5475, 2147483648
    %v5490 = vmul.f32 %v5489, 1.442695
    %v5491 = vpow.pop %v5490
    %v5492 = vadd.f32 %v5491, 1.0
    %v5493 = vrcp.pop %v5492
    %v5494 = vmul.f32 1.0, %v5493
    %v5495 = vmul.f32 %v5487, 0.0
    %v5496 = vmul.f32 %v5481, %v5488
    %v5497 = vadd.f32 %v5495, %v5496
    %v5498 = vtanh.pop %v5497
    %v5499 = vmul.f32 %v5494, %v5498
    %v5500 = vld [vmem:[#allocation2 + $0x20] sm:$0xff]
    %v5501 = vld [vmem:[#allocation2 + $0x28] sm:$0xff]
    %v5502 = vld [vmem:[#allocation2 + $0x30] sm:$0xff]
    %v5503 = vld [vmem:[#allocation2 + $0x38] sm:$0xff]
    %v5504 = vpack.c.bf16 %v5499, %v5499
    %5505 = vmatprep.subr.bf16.mxu0 %v5355
    %5506 = vmatpush1.bf16.msra.mxu0 %v5354
    %5507 = vmatprep.subr.bf16.mxu0 %v5351
    %5508 = vmatpush1.bf16.msra.mxu0 %v5350
    %5509 = vmatprep.subr.bf16.mxu0 %v5347
    %5510 = vmatpush1.bf16.msra.mxu0 %v5346
    %5511 = vmatprep.subr.bf16.mxu0 %v5343
    %5512 = vmatpush1.bf16.msra.mxu0 %v5342
    %5513 = vmatprep.subr.bf16.mxu0 %v5339
    %5514 = vmatpush1.bf16.msra.mxu0 %v5338
    %5515 = vmatprep.subr.bf16.mxu0 %v5335
    %5516 = vmatpush1.bf16.msra.mxu0 %v5334
    %5517 = vmatprep.subr.bf16.mxu0 %v5331
    %5518 = vmatpush1.bf16.msra.mxu0 %v5330
    %5519 = vmatprep.subr.bf16.mxu0 %v5327
    %5520 = vmatpush1.bf16.msra.mxu0 %v5326
    %5521 = vmatprep.subr.bf16.mxu0 0
    %5522 = vmatpush2.bf16.msra.mxu0 0
    %5523 = vmatprep.subr.bf16.mxu0 0
    %5524 = vmatpush2.bf16.msra.mxu0 0
    %5525 = vmatprep.subr.bf16.mxu0 0
    %5526 = vmatpush2.bf16.msra.mxu0 0
    %5527 = vmatprep.subr.bf16.mxu0 0
    %5528 = vmatpush2.bf16.msra.mxu0 0
    %5529 = vmatprep.subr.bf16.mxu0 0
    %5530 = vmatpush2.bf16.msra.mxu0 0
    %5531 = vmatprep.subr.bf16.mxu0 0
    %5532 = vmatpush2.bf16.msra.mxu0 0
    %5533 = vmatprep.subr.bf16.mxu0 0
    %5534 = vmatpush2.bf16.msra.mxu0 0
    %5535 = vmatprep.subr.bf16.mxu0 0
    %5536 = vmatpush2.bf16.msra.mxu0 0
    %5537 = vmatprep.mubr.bf16.mxu0 0
    %5538 = vmatmul.mubr.bf16.gmra.mxu0 %v5504
    %v5539 = vpop.f32.mrf.mxu0
    %v5540 = vadd.f32 0.0, %v5539
    %v5541 = vpop.f32.mrf.mxu0
    %v5542 = vadd.f32 0.0, %v5541
    %v5543 = vpop.f32.mrf.mxu0
    %v5544 = vpop.f32.mrf.mxu0
    %5545 = vdwg.mxu0
    %5546 = vmatprep.subr.bf16.mxu0 %v5357
    %5547 = vmatpush1.bf16.msra.mxu0 %v5356
    %5548 = vmatprep.subr.bf16.mxu0 %v5353
    %5549 = vmatpush1.bf16.msra.mxu0 %v5352
    %5550 = vmatprep.subr.bf16.mxu0 %v5349
    %5551 = vmatpush1.bf16.msra.mxu0 %v5348
    %5552 = vmatprep.subr.bf16.mxu0 %v5345
    %5553 = vmatpush1.bf16.msra.mxu0 %v5344
    %5554 = vmatprep.subr.bf16.mxu0 %v5341
    %5555 = vmatpush1.bf16.msra.mxu0 %v5340
    %5556 = vmatprep.subr.bf16.mxu0 %v5337
    %5557 = vmatpush1.bf16.msra.mxu0 %v5336
    %5558 = vmatprep.subr.bf16.mxu0 %v5333
    %5559 = vmatpush1.bf16.msra.mxu0 %v5332
    %5560 = vmatprep.subr.bf16.mxu0 %v5329
    %5561 = vmatpush1.bf16.msra.mxu0 %v5328
    %5562 = vmatprep.subr.bf16.mxu0 0
    %5563 = vmatpush2.bf16.msra.mxu0 0
    %5564 = vmatprep.subr.bf16.mxu0 0
    %5565 = vmatpush2.bf16.msra.mxu0 0
    %5566 = vmatprep.subr.bf16.mxu0 0
    %5567 = vmatpush2.bf16.msra.mxu0 0
    %5568 = vmatprep.subr.bf16.mxu0 0
    %5569 = vmatpush2.bf16.msra.mxu0 0
    %5570 = vmatprep.subr.bf16.mxu0 0
    %5571 = vmatpush2.bf16.msra.mxu0 0
    %5572 = vmatprep.subr.bf16.mxu0 0
    %5573 = vmatpush2.bf16.msra.mxu0 0
    %5574 = vmatprep.subr.bf16.mxu0 0
    %5575 = vmatpush2.bf16.msra.mxu0 0
    %5576 = vmatprep.subr.bf16.mxu0 0
    %5577 = vmatpush2.bf16.msra.mxu0 0
    %5578 = vmatprep.mubr.bf16.mxu0 0
    %5579 = vmatmul.mubr.bf16.gmra.mxu0 %v5504
    %v5580 = vpop.f32.mrf.mxu0
    %v5581 = vadd.f32 0.0, %v5580
    %v5582 = vpop.f32.mrf.mxu0
    %v5583 = vadd.f32 0.0, %v5582
    %v5584 = vpop.f32.mrf.mxu0
    %v5585 = vpop.f32.mrf.mxu0
    %5586 = vdwg.mxu0
    %v5587 = vadd.f32 %v5500, %v5540
    %v5588 = vadd.f32 %v5501, %v5542
    %v5589 = vadd.f32 %v5502, %v5581
    %v5590 = vadd.f32 %v5503, %v5583
    %v5591 = vxor.u32 %v5587, 2147483648
    %v5592 = vmul.f32 %v5591, 1.442695
    %v5593 = vpow.pop %v5592
    %v5594 = vadd.f32 %v5593, 1.0
    %v5595 = vrcp.pop %v5594
    %v5596 = vmul.f32 1.0, %v5595
    %v5597 = vxor.u32 %v5588, 2147483648
    %v5598 = vmul.f32 %v5597, 1.442695
    %v5599 = vpow.pop %v5598
    %v5600 = vadd.f32 %v5599, 1.0
    %v5601 = vrcp.pop %v5600
    %v5602 = vmul.f32 1.0, %v5601
    %v5603 = vtanh.pop %v5589
    %v5604 = vxor.u32 %v5590, 2147483648
    %v5605 = vmul.f32 %v5604, 1.442695
    %v5606 = vpow.pop %v5605
    %v5607 = vadd.f32 %v5606, 1.0
    %v5608 = vrcp.pop %v5607
    %v5609 = vmul.f32 1.0, %v5608
    %v5610 = vmul.f32 %v5602, %v5497
    %v5611 = vmul.f32 %v5596, %v5603
    %v5612 = vadd.f32 %v5610, %v5611
    %v5613 = vtanh.pop %v5612
    %v5614 = vmul.f32 %v5609, %v5613
    %v5615 = vld [vmem:[#allocation2 + $0x40] sm:$0xff]
    %v5616 = vld [vmem:[#allocation2 + $0x48] sm:$0xff]
    %v5617 = vld [vmem:[#allocation2 + $0x50] sm:$0xff]
    %v5618 = vld [vmem:[#allocation2 + $0x58] sm:$0xff]
    %v5619 = vpack.c.bf16 %v5614, %v5614
    %5620 = vmatprep.subr.bf16.mxu0 %v5355
    %5621 = vmatpush1.bf16.msra.mxu0 %v5354
    %5622 = vmatprep.subr.bf16.mxu0 %v5351
    %5623 = vmatpush1.bf16.msra.mxu0 %v5350
    %5624 = vmatprep.subr.bf16.mxu0 %v5347
    %5625 = vmatpush1.bf16.msra.mxu0 %v5346
    %5626 = vmatprep.subr.bf16.mxu0 %v5343
    %5627 = vmatpush1.bf16.msra.mxu0 %v5342
    %5628 = vmatprep.subr.bf16.mxu0 %v5339
    %5629 = vmatpush1.bf16.msra.mxu0 %v5338
    %5630 = vmatprep.subr.bf16.mxu0 %v5335
    %5631 = vmatpush1.bf16.msra.mxu0 %v5334
    %5632 = vmatprep.subr.bf16.mxu0 %v5331
    %5633 = vmatpush1.bf16.msra.mxu0 %v5330
    %5634 = vmatprep.subr.bf16.mxu0 %v5327
    %5635 = vmatpush1.bf16.msra.mxu0 %v5326
    %5636 = vmatprep.subr.bf16.mxu0 0
    %5637 = vmatpush2.bf16.msra.mxu0 0
    %5638 = vmatprep.subr.bf16.mxu0 0
    %5639 = vmatpush2.bf16.msra.mxu0 0
    %5640 = vmatprep.subr.bf16.mxu0 0
    %5641 = vmatpush2.bf16.msra.mxu0 0
    %5642 = vmatprep.subr.bf16.mxu0 0
    %5643 = vmatpush2.bf16.msra.mxu0 0
    %5644 = vmatprep.subr.bf16.mxu0 0
    %5645 = vmatpush2.bf16.msra.mxu0 0
    %5646 = vmatprep.subr.bf16.mxu0 0
    %5647 = vmatpush2.bf16.msra.mxu0 0
    %5648 = vmatprep.subr.bf16.mxu0 0
    %5649 = vmatpush2.bf16.msra.mxu0 0
    %5650 = vmatprep.subr.bf16.mxu0 0
    %5651 = vmatpush2.bf16.msra.mxu0 0
    %5652 = vmatprep.mubr.bf16.mxu0 0
    %5653 = vmatmul.mubr.bf16.gmra.mxu0 %v5619
    %v5654 = vpop.f32.mrf.mxu0
    %v5655 = vadd.f32 0.0, %v5654
    %v5656 = vpop.f32.mrf.mxu0
    %v5657 = vadd.f32 0.0, %v5656
    %v5658 = vpop.f32.mrf.mxu0
    %v5659 = vpop.f32.mrf.mxu0
    %5660 = vdwg.mxu0
    %5661 = vmatprep.subr.bf16.mxu0 %v5357
    %5662 = vmatpush1.bf16.msra.mxu0 %v5356
    %5663 = vmatprep.subr.bf16.mxu0 %v5353
    %5664 = vmatpush1.bf16.msra.mxu0 %v5352
    %5665 = vmatprep.subr.bf16.mxu0 %v5349
    %5666 = vmatpush1.bf16.msra.mxu0 %v5348
    %5667 = vmatprep.subr.bf16.mxu0 %v5345
    %5668 = vmatpush1.bf16.msra.mxu0 %v5344
    %5669 = vmatprep.subr.bf16.mxu0 %v5341
    %5670 = vmatpush1.bf16.msra.mxu0 %v5340
    %5671 = vmatprep.subr.bf16.mxu0 %v5337
    %5672 = vmatpush1.bf16.msra.mxu0 %v5336
    %5673 = vmatprep.subr.bf16.mxu0 %v5333
    %5674 = vmatpush1.bf16.msra.mxu0 %v5332
    %5675 = vmatprep.subr.bf16.mxu0 %v5329
    %5676 = vmatpush1.bf16.msra.mxu0 %v5328
    %5677 = vmatprep.subr.bf16.mxu0 0
    %5678 = vmatpush2.bf16.msra.mxu0 0
    %5679 = vmatprep.subr.bf16.mxu0 0
    %5680 = vmatpush2.bf16.msra.mxu0 0
    %5681 = vmatprep.subr.bf16.mxu0 0
    %5682 = vmatpush2.bf16.msra.mxu0 0
    %5683 = vmatprep.subr.bf16.mxu0 0
    %5684 = vmatpush2.bf16.msra.mxu0 0
    %5685 = vmatprep.subr.bf16.mxu0 0
    %5686 = vmatpush2.bf16.msra.mxu0 0
    %5687 = vmatprep.subr.bf16.mxu0 0
    %5688 = vmatpush2.bf16.msra.mxu0 0
    %5689 = vmatprep.subr.bf16.mxu0 0
    %5690 = vmatpush2.bf16.msra.mxu0 0
    %5691 = vmatprep.subr.bf16.mxu0 0
    %5692 = vmatpush2.bf16.msra.mxu0 0
    %5693 = vmatprep.mubr.bf16.mxu0 0
    %5694 = vmatmul.mubr.bf16.gmra.mxu0 %v5619
    %v5695 = vpop.f32.mrf.mxu0
    %v5696 = vadd.f32 0.0, %v5695
    %v5697 = vpop.f32.mrf.mxu0
    %v5698 = vadd.f32 0.0, %v5697
    %v5699 = vpop.f32.mrf.mxu0
    %v5700 = vpop.f32.mrf.mxu0
    %5701 = vdwg.mxu0
    %v5702 = vadd.f32 %v5615, %v5655
    %v5703 = vadd.f32 %v5616, %v5657
    %v5704 = vadd.f32 %v5617, %v5696
    %v5705 = vadd.f32 %v5618, %v5698
    %v5706 = vxor.u32 %v5702, 2147483648
    %v5707 = vmul.f32 %v5706, 1.442695
    %v5708 = vpow.pop %v5707
    %v5709 = vadd.f32 %v5708, 1.0
    %v5710 = vrcp.pop %v5709
    %v5711 = vmul.f32 1.0, %v5710
    %v5712 = vxor.u32 %v5703, 2147483648
    %v5713 = vmul.f32 %v5712, 1.442695
    %v5714 = vpow.pop %v5713
    %v5715 = vadd.f32 %v5714, 1.0
    %v5716 = vrcp.pop %v5715
    %v5717 = vmul.f32 1.0, %v5716
    %v5718 = vtanh.pop %v5704
    %v5719 = vxor.u32 %v5705, 2147483648
    %v5720 = vmul.f32 %v5719, 1.442695
    %v5721 = vpow.pop %v5720
    %v5722 = vadd.f32 %v5721, 1.0
    %v5723 = vrcp.pop %v5722
    %v5724 = vmul.f32 1.0, %v5723
    %v5725 = vmul.f32 %v5717, %v5612
    %v5726 = vmul.f32 %v5711, %v5718
    %v5727 = vadd.f32 %v5725, %v5726
    %v5728 = vtanh.pop %v5727
    %v5729 = vmul.f32 %v5724, %v5728
    %v5730 = vld [vmem:[#allocation2 + $0x60] sm:$0xff]
    %v5731 = vld [vmem:[#allocation2 + $0x68] sm:$0xff]
    %v5732 = vld [vmem:[#allocation2 + $0x70] sm:$0xff]
    %v5733 = vld [vmem:[#allocation2 + $0x78] sm:$0xff]
    %v5734 = vpack.c.bf16 %v5729, %v5729
    %5735 = vmatprep.subr.bf16.mxu0 %v5355
    %5736 = vmatpush1.bf16.msra.mxu0 %v5354
    %5737 = vmatprep.subr.bf16.mxu0 %v5351
    %5738 = vmatpush1.bf16.msra.mxu0 %v5350
    %5739 = vmatprep.subr.bf16.mxu0 %v5347
    %5740 = vmatpush1.bf16.msra.mxu0 %v5346
    %5741 = vmatprep.subr.bf16.mxu0 %v5343
    %5742 = vmatpush1.bf16.msra.mxu0 %v5342
    %5743 = vmatprep.subr.bf16.mxu0 %v5339
    %5744 = vmatpush1.bf16.msra.mxu0 %v5338
    %5745 = vmatprep.subr.bf16.mxu0 %v5335
    %5746 = vmatpush1.bf16.msra.mxu0 %v5334
    %5747 = vmatprep.subr.bf16.mxu0 %v5331
    %5748 = vmatpush1.bf16.msra.mxu0 %v5330
    %5749 = vmatprep.subr.bf16.mxu0 %v5327
    %5750 = vmatpush1.bf16.msra.mxu0 %v5326
    %5751 = vmatprep.subr.bf16.mxu0 0
    %5752 = vmatpush2.bf16.msra.mxu0 0
    %5753 = vmatprep.subr.bf16.mxu0 0
    %5754 = vmatpush2.bf16.msra.mxu0 0
    %5755 = vmatprep.subr.bf16.mxu0 0
    %5756 = vmatpush2.bf16.msra.mxu0 0
    %5757 = vmatprep.subr.bf16.mxu0 0
    %5758 = vmatpush2.bf16.msra.mxu0 0
    %5759 = vmatprep.subr.bf16.mxu0 0
    %5760 = vmatpush2.bf16.msra.mxu0 0
    %5761 = vmatprep.subr.bf16.mxu0 0
    %5762 = vmatpush2.bf16.msra.mxu0 0
    %5763 = vmatprep.subr.bf16.mxu0 0
    %5764 = vmatpush2.bf16.msra.mxu0 0
    %5765 = vmatprep.subr.bf16.mxu0 0
    %5766 = vmatpush2.bf16.msra.mxu0 0
    %5767 = vmatprep.mubr.bf16.mxu0 0
    %5768 = vmatmul.mubr.bf16.gmra.mxu0 %v5734
    %v5769 = vpop.f32.mrf.mxu0
    %v5770 = vadd.f32 0.0, %v5769
    %v5771 = vpop.f32.mrf.mxu0
    %v5772 = vadd.f32 0.0, %v5771
    %v5773 = vpop.f32.mrf.mxu0
    %v5774 = vpop.f32.mrf.mxu0
    %5775 = vdwg.mxu0
    %5776 = vmatprep.subr.bf16.mxu0 %v5357
    %5777 = vmatpush1.bf16.msra.mxu0 %v5356
    %5778 = vmatprep.subr.bf16.mxu0 %v5353
    %5779 = vmatpush1.bf16.msra.mxu0 %v5352
    %5780 = vmatprep.subr.bf16.mxu0 %v5349
    %5781 = vmatpush1.bf16.msra.mxu0 %v5348
    %5782 = vmatprep.subr.bf16.mxu0 %v5345
    %5783 = vmatpush1.bf16.msra.mxu0 %v5344
    %5784 = vmatprep.subr.bf16.mxu0 %v5341
    %5785 = vmatpush1.bf16.msra.mxu0 %v5340
    %5786 = vmatprep.subr.bf16.mxu0 %v5337
    %5787 = vmatpush1.bf16.msra.mxu0 %v5336
    %5788 = vmatprep.subr.bf16.mxu0 %v5333
    %5789 = vmatpush1.bf16.msra.mxu0 %v5332
    %5790 = vmatprep.subr.bf16.mxu0 %v5329
    %5791 = vmatpush1.bf16.msra.mxu0 %v5328
    %5792 = vmatprep.subr.bf16.mxu0 0
    %5793 = vmatpush2.bf16.msra.mxu0 0
    %5794 = vmatprep.subr.bf16.mxu0 0
    %5795 = vmatpush2.bf16.msra.mxu0 0
    %5796 = vmatprep.subr.bf16.mxu0 0
    %5797 = vmatpush2.bf16.msra.mxu0 0
    %5798 = vmatprep.subr.bf16.mxu0 0
    %5799 = vmatpush2.bf16.msra.mxu0 0
    %5800 = vmatprep.subr.bf16.mxu0 0
    %5801 = vmatpush2.bf16.msra.mxu0 0
    %5802 = vmatprep.subr.bf16.mxu0 0
    %5803 = vmatpush2.bf16.msra.mxu0 0
    %5804 = vmatprep.subr.bf16.mxu0 0
    %5805 = vmatpush2.bf16.msra.mxu0 0
    %5806 = vmatprep.subr.bf16.mxu0 0
    %5807 = vmatpush2.bf16.msra.mxu0 0
    %5808 = vmatprep.mubr.bf16.mxu0 0
    %5809 = vmatmul.mubr.bf16.gmra.mxu0 %v5734
    %v5810 = vpop.f32.mrf.mxu0
    %v5811 = vadd.f32 0.0, %v5810
    %v5812 = vpop.f32.mrf.mxu0
    %v5813 = vadd.f32 0.0, %v5812
    %v5814 = vpop.f32.mrf.mxu0
    %v5815 = vpop.f32.mrf.mxu0
    %5816 = vdwg.mxu0
    %v5817 = vadd.f32 %v5730, %v5770
    %v5818 = vadd.f32 %v5731, %v5772
    %v5819 = vadd.f32 %v5732, %v5811
    %v5820 = vadd.f32 %v5733, %v5813
    %v5821 = vxor.u32 %v5817, 2147483648
    %v5822 = vmul.f32 %v5821, 1.442695
    %v5823 = vpow.pop %v5822
    %v5824 = vadd.f32 %v5823, 1.0
    %v5825 = vrcp.pop %v5824
    %v5826 = vmul.f32 1.0, %v5825
    %v5827 = vxor.u32 %v5818, 2147483648
    %v5828 = vmul.f32 %v5827, 1.442695
    %v5829 = vpow.pop %v5828
    %v5830 = vadd.f32 %v5829, 1.0
    %v5831 = vrcp.pop %v5830
    %v5832 = vmul.f32 1.0, %v5831
    %v5833 = vtanh.pop %v5819
    %v5834 = vxor.u32 %v5820, 2147483648
    %v5835 = vmul.f32 %v5834, 1.442695
    %v5836 = vpow.pop %v5835
    %v5837 = vadd.f32 %v5836, 1.0
    %v5838 = vrcp.pop %v5837
    %v5839 = vmul.f32 1.0, %v5838
    %v5840 = vmul.f32 %v5832, %v5727
    %v5841 = vmul.f32 %v5826, %v5833
    %v5842 = vadd.f32 %v5840, %v5841
    %v5843 = vtanh.pop %v5842
    %v5844 = vmul.f32 %v5839, %v5843
    %v5845 = vld [vmem:[#allocation2 + $0x80] sm:$0xff]
    %v5846 = vld [vmem:[#allocation2 + $0x88] sm:$0xff]
    %v5847 = vld [vmem:[#allocation2 + $0x90] sm:$0xff]
    %v5848 = vld [vmem:[#allocation2 + $0x98] sm:$0xff]
    %v5849 = vpack.c.bf16 %v5844, %v5844
    %5850 = vmatprep.subr.bf16.mxu0 %v5355
    %5851 = vmatpush1.bf16.msra.mxu0 %v5354
    %5852 = vmatprep.subr.bf16.mxu0 %v5351
    %5853 = vmatpush1.bf16.msra.mxu0 %v5350
    %5854 = vmatprep.subr.bf16.mxu0 %v5347
    %5855 = vmatpush1.bf16.msra.mxu0 %v5346
    %5856 = vmatprep.subr.bf16.mxu0 %v5343
    %5857 = vmatpush1.bf16.msra.mxu0 %v5342
    %5858 = vmatprep.subr.bf16.mxu0 %v5339
    %5859 = vmatpush1.bf16.msra.mxu0 %v5338
    %5860 = vmatprep.subr.bf16.mxu0 %v5335
    %5861 = vmatpush1.bf16.msra.mxu0 %v5334
    %5862 = vmatprep.subr.bf16.mxu0 %v5331
    %5863 = vmatpush1.bf16.msra.mxu0 %v5330
    %5864 = vmatprep.subr.bf16.mxu0 %v5327
    %5865 = vmatpush1.bf16.msra.mxu0 %v5326
    %5866 = vmatprep.subr.bf16.mxu0 0
    %5867 = vmatpush2.bf16.msra.mxu0 0
    %5868 = vmatprep.subr.bf16.mxu0 0
    %5869 = vmatpush2.bf16.msra.mxu0 0
    %5870 = vmatprep.subr.bf16.mxu0 0
    %5871 = vmatpush2.bf16.msra.mxu0 0
    %5872 = vmatprep.subr.bf16.mxu0 0
    %5873 = vmatpush2.bf16.msra.mxu0 0
    %5874 = vmatprep.subr.bf16.mxu0 0
    %5875 = vmatpush2.bf16.msra.mxu0 0
    %5876 = vmatprep.subr.bf16.mxu0 0
    %5877 = vmatpush2.bf16.msra.mxu0 0
    %5878 = vmatprep.subr.bf16.mxu0 0
    %5879 = vmatpush2.bf16.msra.mxu0 0
    %5880 = vmatprep.subr.bf16.mxu0 0
    %5881 = vmatpush2.bf16.msra.mxu0 0
    %5882 = vmatprep.mubr.bf16.mxu0 0
    %5883 = vmatmul.mubr.bf16.gmra.mxu0 %v5849
    %v5884 = vpop.f32.mrf.mxu0
    %v5885 = vadd.f32 0.0, %v5884
    %v5886 = vpop.f32.mrf.mxu0
    %v5887 = vadd.f32 0.0, %v5886
    %v5888 = vpop.f32.mrf.mxu0
    %v5889 = vpop.f32.mrf.mxu0
    %5890 = vdwg.mxu0
    %5891 = vmatprep.subr.bf16.mxu0 %v5357
    %5892 = vmatpush1.bf16.msra.mxu0 %v5356
    %5893 = vmatprep.subr.bf16.mxu0 %v5353
    %5894 = vmatpush1.bf16.msra.mxu0 %v5352
    %5895 = vmatprep.subr.bf16.mxu0 %v5349
    %5896 = vmatpush1.bf16.msra.mxu0 %v5348
    %5897 = vmatprep.subr.bf16.mxu0 %v5345
    %5898 = vmatpush1.bf16.msra.mxu0 %v5344
    %5899 = vmatprep.subr.bf16.mxu0 %v5341
    %5900 = vmatpush1.bf16.msra.mxu0 %v5340
    %5901 = vmatprep.subr.bf16.mxu0 %v5337
    %5902 = vmatpush1.bf16.msra.mxu0 %v5336
    %5903 = vmatprep.subr.bf16.mxu0 %v5333
    %5904 = vmatpush1.bf16.msra.mxu0 %v5332
    %5905 = vmatprep.subr.bf16.mxu0 %v5329
    %5906 = vmatpush1.bf16.msra.mxu0 %v5328
    %5907 = vmatprep.subr.bf16.mxu0 0
    %5908 = vmatpush2.bf16.msra.mxu0 0
    %5909 = vmatprep.subr.bf16.mxu0 0
    %5910 = vmatpush2.bf16.msra.mxu0 0
    %5911 = vmatprep.subr.bf16.mxu0 0
    %5912 = vmatpush2.bf16.msra.mxu0 0
    %5913 = vmatprep.subr.bf16.mxu0 0
    %5914 = vmatpush2.bf16.msra.mxu0 0
    %5915 = vmatprep.subr.bf16.mxu0 0
    %5916 = vmatpush2.bf16.msra.mxu0 0
    %5917 = vmatprep.subr.bf16.mxu0 0
    %5918 = vmatpush2.bf16.msra.mxu0 0
    %5919 = vmatprep.subr.bf16.mxu0 0
    %5920 = vmatpush2.bf16.msra.mxu0 0
    %5921 = vmatprep.subr.bf16.mxu0 0
    %5922 = vmatpush2.bf16.msra.mxu0 0
    %5923 = vmatprep.mubr.bf16.mxu0 0
    %5924 = vmatmul.mubr.bf16.gmra.mxu0 %v5849
    %v5925 = vpop.f32.mrf.mxu0
    %v5926 = vadd.f32 0.0, %v5925
    %v5927 = vpop.f32.mrf.mxu0
    %v5928 = vadd.f32 0.0, %v5927
    %v5929 = vpop.f32.mrf.mxu0
    %v5930 = vpop.f32.mrf.mxu0
    %5931 = vdwg.mxu0
    %v5932 = vadd.f32 %v5845, %v5885
    %v5933 = vadd.f32 %v5846, %v5887
    %v5934 = vadd.f32 %v5847, %v5926
    %v5935 = vadd.f32 %v5848, %v5928
    %v5936 = vxor.u32 %v5932, 2147483648
    %v5937 = vmul.f32 %v5936, 1.442695
    %v5938 = vpow.pop %v5937
    %v5939 = vadd.f32 %v5938, 1.0
    %v5940 = vrcp.pop %v5939
    %v5941 = vmul.f32 1.0, %v5940
    %v5942 = vxor.u32 %v5933, 2147483648
    %v5943 = vmul.f32 %v5942, 1.442695
    %v5944 = vpow.pop %v5943
    %v5945 = vadd.f32 %v5944, 1.0
    %v5946 = vrcp.pop %v5945
    %v5947 = vmul.f32 1.0, %v5946
    %v5948 = vtanh.pop %v5934
    %v5949 = vxor.u32 %v5935, 2147483648
    %v5950 = vmul.f32 %v5949, 1.442695
    %v5951 = vpow.pop %v5950
    %v5952 = vadd.f32 %v5951, 1.0
    %v5953 = vrcp.pop %v5952
    %v5954 = vmul.f32 1.0, %v5953
    %v5955 = vmul.f32 %v5947, %v5842
    %v5956 = vmul.f32 %v5941, %v5948
    %v5957 = vadd.f32 %v5955, %v5956
    %v5958 = vtanh.pop %v5957
    %v5959 = vmul.f32 %v5954, %v5958
    %v5960 = vld [vmem:[#allocation2 + $0xa0] sm:$0xff]
    %v5961 = vld [vmem:[#allocation2 + $0xa8] sm:$0xff]
    %v5962 = vld [vmem:[#allocation2 + $0xb0] sm:$0xff]
    %v5963 = vld [vmem:[#allocation2 + $0xb8] sm:$0xff]
    %v5964 = vpack.c.bf16 %v5959, %v5959
    %5965 = vmatprep.subr.bf16.mxu0 %v5355
    %5966 = vmatpush1.bf16.msra.mxu0 %v5354
    %5967 = vmatprep.subr.bf16.mxu0 %v5351
    %5968 = vmatpush1.bf16.msra.mxu0 %v5350
    %5969 = vmatprep.subr.bf16.mxu0 %v5347
    %5970 = vmatpush1.bf16.msra.mxu0 %v5346
    %5971 = vmatprep.subr.bf16.mxu0 %v5343
    %5972 = vmatpush1.bf16.msra.mxu0 %v5342
    %5973 = vmatprep.subr.bf16.mxu0 %v5339
    %5974 = vmatpush1.bf16.msra.mxu0 %v5338
    %5975 = vmatprep.subr.bf16.mxu0 %v5335
    %5976 = vmatpush1.bf16.msra.mxu0 %v5334
    %5977 = vmatprep.subr.bf16.mxu0 %v5331
    %5978 = vmatpush1.bf16.msra.mxu0 %v5330
    %5979 = vmatprep.subr.bf16.mxu0 %v5327
    %5980 = vmatpush1.bf16.msra.mxu0 %v5326
    %5981 = vmatprep.subr.bf16.mxu0 0
    %5982 = vmatpush2.bf16.msra.mxu0 0
    %5983 = vmatprep.subr.bf16.mxu0 0
    %5984 = vmatpush2.bf16.msra.mxu0 0
    %5985 = vmatprep.subr.bf16.mxu0 0
    %5986 = vmatpush2.bf16.msra.mxu0 0
    %5987 = vmatprep.subr.bf16.mxu0 0
    %5988 = vmatpush2.bf16.msra.mxu0 0
    %5989 = vmatprep.subr.bf16.mxu0 0
    %5990 = vmatpush2.bf16.msra.mxu0 0
    %5991 = vmatprep.subr.bf16.mxu0 0
    %5992 = vmatpush2.bf16.msra.mxu0 0
    %5993 = vmatprep.subr.bf16.mxu0 0
    %5994 = vmatpush2.bf16.msra.mxu0 0
    %5995 = vmatprep.subr.bf16.mxu0 0
    %5996 = vmatpush2.bf16.msra.mxu0 0
    %5997 = vmatprep.mubr.bf16.mxu0 0
    %5998 = vmatmul.mubr.bf16.gmra.mxu0 %v5964
    %v5999 = vpop.f32.mrf.mxu0
    %v6000 = vadd.f32 0.0, %v5999
    %v6001 = vpop.f32.mrf.mxu0
    %v6002 = vadd.f32 0.0, %v6001
    %v6003 = vpop.f32.mrf.mxu0
    %v6004 = vpop.f32.mrf.mxu0
    %6005 = vdwg.mxu0
    %6006 = vmatprep.subr.bf16.mxu0 %v5357
    %6007 = vmatpush1.bf16.msra.mxu0 %v5356
    %6008 = vmatprep.subr.bf16.mxu0 %v5353
    %6009 = vmatpush1.bf16.msra.mxu0 %v5352
    %6010 = vmatprep.subr.bf16.mxu0 %v5349
    %6011 = vmatpush1.bf16.msra.mxu0 %v5348
    %6012 = vmatprep.subr.bf16.mxu0 %v5345
    %6013 = vmatpush1.bf16.msra.mxu0 %v5344
    %6014 = vmatprep.subr.bf16.mxu0 %v5341
    %6015 = vmatpush1.bf16.msra.mxu0 %v5340
    %6016 = vmatprep.subr.bf16.mxu0 %v5337
    %6017 = vmatpush1.bf16.msra.mxu0 %v5336
    %6018 = vmatprep.subr.bf16.mxu0 %v5333
    %6019 = vmatpush1.bf16.msra.mxu0 %v5332
    %6020 = vmatprep.subr.bf16.mxu0 %v5329
    %6021 = vmatpush1.bf16.msra.mxu0 %v5328
    %6022 = vmatprep.subr.bf16.mxu0 0
    %6023 = vmatpush2.bf16.msra.mxu0 0
    %6024 = vmatprep.subr.bf16.mxu0 0
    %6025 = vmatpush2.bf16.msra.mxu0 0
    %6026 = vmatprep.subr.bf16.mxu0 0
    %6027 = vmatpush2.bf16.msra.mxu0 0
    %6028 = vmatprep.subr.bf16.mxu0 0
    %6029 = vmatpush2.bf16.msra.mxu0 0
    %6030 = vmatprep.subr.bf16.mxu0 0
    %6031 = vmatpush2.bf16.msra.mxu0 0
    %6032 = vmatprep.subr.bf16.mxu0 0
    %6033 = vmatpush2.bf16.msra.mxu0 0
    %6034 = vmatprep.subr.bf16.mxu0 0
    %6035 = vmatpush2.bf16.msra.mxu0 0
    %6036 = vmatprep.subr.bf16.mxu0 0
    %6037 = vmatpush2.bf16.msra.mxu0 0
    %6038 = vmatprep.mubr.bf16.mxu0 0
    %6039 = vmatmul.mubr.bf16.gmra.mxu0 %v5964
    %v6040 = vpop.f32.mrf.mxu0
    %v6041 = vadd.f32 0.0, %v6040
    %v6042 = vpop.f32.mrf.mxu0
    %v6043 = vadd.f32 0.0, %v6042
    %v6044 = vpop.f32.mrf.mxu0
    %v6045 = vpop.f32.mrf.mxu0
    %6046 = vdwg.mxu0
    %v6047 = vadd.f32 %v5960, %v6000
    %v6048 = vadd.f32 %v5961, %v6002
    %v6049 = vadd.f32 %v5962, %v6041
    %v6050 = vadd.f32 %v5963, %v6043
    %v6051 = vxor.u32 %v6047, 2147483648
    %v6052 = vmul.f32 %v6051, 1.442695
    %v6053 = vpow.pop %v6052
    %v6054 = vadd.f32 %v6053, 1.0
    %v6055 = vrcp.pop %v6054
    %v6056 = vmul.f32 1.0, %v6055
    %v6057 = vxor.u32 %v6048, 2147483648
    %v6058 = vmul.f32 %v6057, 1.442695
    %v6059 = vpow.pop %v6058
    %v6060 = vadd.f32 %v6059, 1.0
    %v6061 = vrcp.pop %v6060
    %v6062 = vmul.f32 1.0, %v6061
    %v6063 = vtanh.pop %v6049
    %v6064 = vxor.u32 %v6050, 2147483648
    %v6065 = vmul.f32 %v6064, 1.442695
    %v6066 = vpow.pop %v6065
    %v6067 = vadd.f32 %v6066, 1.0
    %v6068 = vrcp.pop %v6067
    %v6069 = vmul.f32 1.0, %v6068
    %v6070 = vmul.f32 %v6062, %v5957
    %v6071 = vmul.f32 %v6056, %v6063
    %v6072 = vadd.f32 %v6070, %v6071
    %v6073 = vtanh.pop %v6072
    %v6074 = vmul.f32 %v6069, %v6073
    %v6075 = vld [vmem:[#allocation2 + $0xc0] sm:$0xff]
    %v6076 = vld [vmem:[#allocation2 + $0xc8] sm:$0xff]
    %v6077 = vld [vmem:[#allocation2 + $0xd0] sm:$0xff]
    %v6078 = vld [vmem:[#allocation2 + $0xd8] sm:$0xff]
    %v6079 = vpack.c.bf16 %v6074, %v6074
    %6080 = vmatprep.subr.bf16.mxu0 %v5355
    %6081 = vmatpush1.bf16.msra.mxu0 %v5354
    %6082 = vmatprep.subr.bf16.mxu0 %v5351
    %6083 = vmatpush1.bf16.msra.mxu0 %v5350
    %6084 = vmatprep.subr.bf16.mxu0 %v5347
    %6085 = vmatpush1.bf16.msra.mxu0 %v5346
    %6086 = vmatprep.subr.bf16.mxu0 %v5343
    %6087 = vmatpush1.bf16.msra.mxu0 %v5342
    %6088 = vmatprep.subr.bf16.mxu0 %v5339
    %6089 = vmatpush1.bf16.msra.mxu0 %v5338
    %6090 = vmatprep.subr.bf16.mxu0 %v5335
    %6091 = vmatpush1.bf16.msra.mxu0 %v5334
    %6092 = vmatprep.subr.bf16.mxu0 %v5331
    %6093 = vmatpush1.bf16.msra.mxu0 %v5330
    %6094 = vmatprep.subr.bf16.mxu0 %v5327
    %6095 = vmatpush1.bf16.msra.mxu0 %v5326
    %6096 = vmatprep.subr.bf16.mxu0 0
    %6097 = vmatpush2.bf16.msra.mxu0 0
    %6098 = vmatprep.subr.bf16.mxu0 0
    %6099 = vmatpush2.bf16.msra.mxu0 0
    %6100 = vmatprep.subr.bf16.mxu0 0
    %6101 = vmatpush2.bf16.msra.mxu0 0
    %6102 = vmatprep.subr.bf16.mxu0 0
    %6103 = vmatpush2.bf16.msra.mxu0 0
    %6104 = vmatprep.subr.bf16.mxu0 0
    %6105 = vmatpush2.bf16.msra.mxu0 0
    %6106 = vmatprep.subr.bf16.mxu0 0
    %6107 = vmatpush2.bf16.msra.mxu0 0
    %6108 = vmatprep.subr.bf16.mxu0 0
    %6109 = vmatpush2.bf16.msra.mxu0 0
    %6110 = vmatprep.subr.bf16.mxu0 0
    %6111 = vmatpush2.bf16.msra.mxu0 0
    %6112 = vmatprep.mubr.bf16.mxu0 0
    %6113 = vmatmul.mubr.bf16.gmra.mxu0 %v6079
    %v6114 = vpop.f32.mrf.mxu0
    %v6115 = vadd.f32 0.0, %v6114
    %v6116 = vpop.f32.mrf.mxu0
    %v6117 = vadd.f32 0.0, %v6116
    %v6118 = vpop.f32.mrf.mxu0
    %v6119 = vpop.f32.mrf.mxu0
    %6120 = vdwg.mxu0
    %6121 = vmatprep.subr.bf16.mxu0 %v5357
    %6122 = vmatpush1.bf16.msra.mxu0 %v5356
    %6123 = vmatprep.subr.bf16.mxu0 %v5353
    %6124 = vmatpush1.bf16.msra.mxu0 %v5352
    %6125 = vmatprep.subr.bf16.mxu0 %v5349
    %6126 = vmatpush1.bf16.msra.mxu0 %v5348
    %6127 = vmatprep.subr.bf16.mxu0 %v5345
    %6128 = vmatpush1.bf16.msra.mxu0 %v5344
    %6129 = vmatprep.subr.bf16.mxu0 %v5341
    %6130 = vmatpush1.bf16.msra.mxu0 %v5340
    %6131 = vmatprep.subr.bf16.mxu0 %v5337
    %6132 = vmatpush1.bf16.msra.mxu0 %v5336
    %6133 = vmatprep.subr.bf16.mxu0 %v5333
    %6134 = vmatpush1.bf16.msra.mxu0 %v5332
    %6135 = vmatprep.subr.bf16.mxu0 %v5329
    %6136 = vmatpush1.bf16.msra.mxu0 %v5328
    %6137 = vmatprep.subr.bf16.mxu0 0
    %6138 = vmatpush2.bf16.msra.mxu0 0
    %6139 = vmatprep.subr.bf16.mxu0 0
    %6140 = vmatpush2.bf16.msra.mxu0 0
    %6141 = vmatprep.subr.bf16.mxu0 0
    %6142 = vmatpush2.bf16.msra.mxu0 0
    %6143 = vmatprep.subr.bf16.mxu0 0
    %6144 = vmatpush2.bf16.msra.mxu0 0
    %6145 = vmatprep.subr.bf16.mxu0 0
    %6146 = vmatpush2.bf16.msra.mxu0 0
    %6147 = vmatprep.subr.bf16.mxu0 0
    %6148 = vmatpush2.bf16.msra.mxu0 0
    %6149 = vmatprep.subr.bf16.mxu0 0
    %6150 = vmatpush2.bf16.msra.mxu0 0
    %6151 = vmatprep.subr.bf16.mxu0 0
    %6152 = vmatpush2.bf16.msra.mxu0 0
    %6153 = vmatprep.mubr.bf16.mxu0 0
    %6154 = vmatmul.mubr.bf16.gmra.mxu0 %v6079
    %v6155 = vpop.f32.mrf.mxu0
    %v6156 = vadd.f32 0.0, %v6155
    %v6157 = vpop.f32.mrf.mxu0
    %v6158 = vadd.f32 0.0, %v6157
    %v6159 = vpop.f32.mrf.mxu0
    %v6160 = vpop.f32.mrf.mxu0
    %6161 = vdwg.mxu0
    %v6162 = vadd.f32 %v6075, %v6115
    %v6163 = vadd.f32 %v6076, %v6117
    %v6164 = vadd.f32 %v6077, %v6156
    %v6165 = vadd.f32 %v6078, %v6158
    %v6166 = vxor.u32 %v6162, 2147483648
    %v6167 = vmul.f32 %v6166, 1.442695
    %v6168 = vpow.pop %v6167
    %v6169 = vadd.f32 %v6168, 1.0
    %v6170 = vrcp.pop %v6169
    %v6171 = vmul.f32 1.0, %v6170
    %v6172 = vxor.u32 %v6163, 2147483648
    %v6173 = vmul.f32 %v6172, 1.442695
    %v6174 = vpow.pop %v6173
    %v6175 = vadd.f32 %v6174, 1.0
    %v6176 = vrcp.pop %v6175
    %v6177 = vmul.f32 1.0, %v6176
    %v6178 = vtanh.pop %v6164
    %v6179 = vxor.u32 %v6165, 2147483648
    %v6180 = vmul.f32 %v6179, 1.442695
    %v6181 = vpow.pop %v6180
    %v6182 = vadd.f32 %v6181, 1.0
    %v6183 = vrcp.pop %v6182
    %v6184 = vmul.f32 1.0, %v6183
    %v6185 = vmul.f32 %v6177, %v6072
    %v6186 = vmul.f32 %v6171, %v6178
    %v6187 = vadd.f32 %v6185, %v6186
    %v6188 = vtanh.pop %v6187
    %v6189 = vmul.f32 %v6184, %v6188
    %v6190 = vld [vmem:[#allocation2 + $0xe0] sm:$0xff]
    %v6191 = vld [vmem:[#allocation2 + $0xe8] sm:$0xff]
    %v6192 = vld [vmem:[#allocation2 + $0xf0] sm:$0xff]
    %v6193 = vld [vmem:[#allocation2 + $0xf8] sm:$0xff]
    %v6194 = vpack.c.bf16 %v6189, %v6189
    %6195 = vmatprep.subr.bf16.mxu0 %v5355
    %6196 = vmatpush1.bf16.msra.mxu0 %v5354
    %6197 = vmatprep.subr.bf16.mxu0 %v5351
    %6198 = vmatpush1.bf16.msra.mxu0 %v5350
    %6199 = vmatprep.subr.bf16.mxu0 %v5347
    %6200 = vmatpush1.bf16.msra.mxu0 %v5346
    %6201 = vmatprep.subr.bf16.mxu0 %v5343
    %6202 = vmatpush1.bf16.msra.mxu0 %v5342
    %6203 = vmatprep.subr.bf16.mxu0 %v5339
    %6204 = vmatpush1.bf16.msra.mxu0 %v5338
    %6205 = vmatprep.subr.bf16.mxu0 %v5335
    %6206 = vmatpush1.bf16.msra.mxu0 %v5334
    %6207 = vmatprep.subr.bf16.mxu0 %v5331
    %6208 = vmatpush1.bf16.msra.mxu0 %v5330
    %6209 = vmatprep.subr.bf16.mxu0 %v5327
    %6210 = vmatpush1.bf16.msra.mxu0 %v5326
    %6211 = vmatprep.subr.bf16.mxu0 0
    %6212 = vmatpush2.bf16.msra.mxu0 0
    %6213 = vmatprep.subr.bf16.mxu0 0
    %6214 = vmatpush2.bf16.msra.mxu0 0
    %6215 = vmatprep.subr.bf16.mxu0 0
    %6216 = vmatpush2.bf16.msra.mxu0 0
    %6217 = vmatprep.subr.bf16.mxu0 0
    %6218 = vmatpush2.bf16.msra.mxu0 0
    %6219 = vmatprep.subr.bf16.mxu0 0
    %6220 = vmatpush2.bf16.msra.mxu0 0
    %6221 = vmatprep.subr.bf16.mxu0 0
    %6222 = vmatpush2.bf16.msra.mxu0 0
    %6223 = vmatprep.subr.bf16.mxu0 0
    %6224 = vmatpush2.bf16.msra.mxu0 0
    %6225 = vmatprep.subr.bf16.mxu0 0
    %6226 = vmatpush2.bf16.msra.mxu0 0
    %6227 = vmatprep.mubr.bf16.mxu0 0
    %6228 = vmatmul.mubr.bf16.gmra.mxu0 %v6194
    %v6229 = vpop.f32.mrf.mxu0
    %v6230 = vadd.f32 0.0, %v6229
    %v6231 = vpop.f32.mrf.mxu0
    %v6232 = vadd.f32 0.0, %v6231
    %v6233 = vpop.f32.mrf.mxu0
    %v6234 = vpop.f32.mrf.mxu0
    %6235 = vdwg.mxu0
    %6236 = vmatprep.subr.bf16.mxu0 %v5357
    %6237 = vmatpush1.bf16.msra.mxu0 %v5356
    %6238 = vmatprep.subr.bf16.mxu0 %v5353
    %6239 = vmatpush1.bf16.msra.mxu0 %v5352
    %6240 = vmatprep.subr.bf16.mxu0 %v5349
    %6241 = vmatpush1.bf16.msra.mxu0 %v5348
    %6242 = vmatprep.subr.bf16.mxu0 %v5345
    %6243 = vmatpush1.bf16.msra.mxu0 %v5344
    %6244 = vmatprep.subr.bf16.mxu0 %v5341
    %6245 = vmatpush1.bf16.msra.mxu0 %v5340
    %6246 = vmatprep.subr.bf16.mxu0 %v5337
    %6247 = vmatpush1.bf16.msra.mxu0 %v5336
    %6248 = vmatprep.subr.bf16.mxu0 %v5333
    %6249 = vmatpush1.bf16.msra.mxu0 %v5332
    %6250 = vmatprep.subr.bf16.mxu0 %v5329
    %6251 = vmatpush1.bf16.msra.mxu0 %v5328
    %6252 = vmatprep.subr.bf16.mxu0 0
    %6253 = vmatpush2.bf16.msra.mxu0 0
    %6254 = vmatprep.subr.bf16.mxu0 0
    %6255 = vmatpush2.bf16.msra.mxu0 0
    %6256 = vmatprep.subr.bf16.mxu0 0
    %6257 = vmatpush2.bf16.msra.mxu0 0
    %6258 = vmatprep.subr.bf16.mxu0 0
    %6259 = vmatpush2.bf16.msra.mxu0 0
    %6260 = vmatprep.subr.bf16.mxu0 0
    %6261 = vmatpush2.bf16.msra.mxu0 0
    %6262 = vmatprep.subr.bf16.mxu0 0
    %6263 = vmatpush2.bf16.msra.mxu0 0
    %6264 = vmatprep.subr.bf16.mxu0 0
    %6265 = vmatpush2.bf16.msra.mxu0 0
    %6266 = vmatprep.subr.bf16.mxu0 0
    %6267 = vmatpush2.bf16.msra.mxu0 0
    %6268 = vmatprep.mubr.bf16.mxu0 0
    %6269 = vmatmul.mubr.bf16.gmra.mxu0 %v6194
    %v6270 = vpop.f32.mrf.mxu0
    %v6271 = vadd.f32 0.0, %v6270
    %v6272 = vpop.f32.mrf.mxu0
    %v6273 = vadd.f32 0.0, %v6272
    %v6274 = vpop.f32.mrf.mxu0
    %v6275 = vpop.f32.mrf.mxu0
    %6276 = vdwg.mxu0
    %v6277 = vadd.f32 %v6190, %v6230
    %v6278 = vadd.f32 %v6191, %v6232
    %v6279 = vadd.f32 %v6192, %v6271
    %v6280 = vadd.f32 %v6193, %v6273
    %v6281 = vxor.u32 %v6277, 2147483648
    %v6282 = vmul.f32 %v6281, 1.442695
    %v6283 = vpow.pop %v6282
    %v6284 = vadd.f32 %v6283, 1.0
    %v6285 = vrcp.pop %v6284
    %v6286 = vmul.f32 1.0, %v6285
    %v6287 = vxor.u32 %v6278, 2147483648
    %v6288 = vmul.f32 %v6287, 1.442695
    %v6289 = vpow.pop %v6288
    %v6290 = vadd.f32 %v6289, 1.0
    %v6291 = vrcp.pop %v6290
    %v6292 = vmul.f32 1.0, %v6291
    %v6293 = vtanh.pop %v6279
    %v6294 = vxor.u32 %v6280, 2147483648
    %v6295 = vmul.f32 %v6294, 1.442695
    %v6296 = vpow.pop %v6295
    %v6297 = vadd.f32 %v6296, 1.0
    %v6298 = vrcp.pop %v6297
    %v6299 = vmul.f32 1.0, %v6298
    %v6300 = vmul.f32 %v6292, %v6187
    %v6301 = vmul.f32 %v6286, %v6293
    %v6302 = vadd.f32 %v6300, %v6301
    %v6303 = vtanh.pop %v6302
    %v6304 = vmul.f32 %v6299, %v6303
    %v6305 = vpack.c.bf16 %v6304, %v6304
    %v6306 = vld [vmem:[%s7] sm:$0xf]
    %v6307 = vld [vmem:[%s7 + $0x4] sm:$0xf]
    %v6308 = vld [vmem:[%s7 + $0x8] sm:$0xf]
    %v6309 = vld [vmem:[%s7 + $0xc] sm:$0xf]
    %v6310 = vld [vmem:[%s7 + $0x10] sm:$0xf]
    %v6311 = vld [vmem:[%s7 + $0x14] sm:$0xf]
    %v6312 = vld [vmem:[%s7 + $0x18] sm:$0xf]
    %v6313 = vld [vmem:[%s7 + $0x1c] sm:$0xf]
    %v6314 = vld [vmem:[%s7 + $0x20] sm:$0xf]
    %v6315 = vld [vmem:[%s7 + $0x24] sm:$0xf]
    %v6316 = vld [vmem:[%s7 + $0x28] sm:$0xf]
    %v6317 = vld [vmem:[%s7 + $0x2c] sm:$0xf]
    %v6318 = vld [vmem:[%s7 + $0x30] sm:$0xf]
    %v6319 = vld [vmem:[%s7 + $0x34] sm:$0xf]
    %v6320 = vld [vmem:[%s7 + $0x38] sm:$0xf]
    %v6321 = vld [vmem:[%s7 + $0x3c] sm:$0xf]
    %v6322 = vld [vmem:[%s8] sm:$0x1]
    %v6324 = vlaneseq
    %v6325 = vshrl.u32 %v6324, 7
    %v6326 = vsub.s32 0, %v6325
    %v6327 = vrot.slane %v6322, %v6326
    %v6345 = vunpack.c.l.b16 %v6306
    %v6346 = vunpack.c.l.b16 %v6307
    %v6347 = vunpack.c.l.b16 %v6308
    %v6348 = vunpack.c.l.b16 %v6309
    %v6349 = vunpack.c.l.b16 %v6310
    %v6350 = vunpack.c.l.b16 %v6311
    %v6351 = vunpack.c.l.b16 %v6312
    %v6352 = vunpack.c.l.b16 %v6313
    %v6353 = vunpack.c.l.b16 %v6314
    %v6354 = vunpack.c.l.b16 %v6315
    %v6355 = vunpack.c.l.b16 %v6316
    %v6356 = vunpack.c.l.b16 %v6317
    %v6357 = vunpack.c.l.b16 %v6318
    %v6358 = vunpack.c.l.b16 %v6319
    %v6359 = vunpack.c.l.b16 %v6320
    %v6360 = vunpack.c.l.b16 %v6321
    %v6361 = vpack.c.b16 %v6346, %v6345
    %v6362 = vpack.c.b16 %v6348, %v6347
    %v6363 = vpack.c.b16 %v6350, %v6349
    %v6364 = vpack.c.b16 %v6352, %v6351
    %v6365 = vpack.c.b16 %v6354, %v6353
    %v6366 = vpack.c.b16 %v6356, %v6355
    %v6367 = vpack.c.b16 %v6358, %v6357
    %v6368 = vpack.c.b16 %v6360, %v6359
    %6377 = vmatprep.subr.bf16.mxu0 0
    %6378 = vmatpush1.bf16.msra.mxu0 %v6368
    %6379 = vmatprep.subr.bf16.mxu0 0
    %6380 = vmatpush1.bf16.msra.mxu0 %v6367
    %6381 = vmatprep.subr.bf16.mxu0 0
    %6382 = vmatpush1.bf16.msra.mxu0 %v6366
    %6383 = vmatprep.subr.bf16.mxu0 0
    %6384 = vmatpush1.bf16.msra.mxu0 %v6365
    %6385 = vmatprep.subr.bf16.mxu0 0
    %6386 = vmatpush1.bf16.msra.mxu0 %v6364
    %6387 = vmatprep.subr.bf16.mxu0 0
    %6388 = vmatpush1.bf16.msra.mxu0 %v6363
    %6389 = vmatprep.subr.bf16.mxu0 0
    %6390 = vmatpush1.bf16.msra.mxu0 %v6362
    %6391 = vmatprep.subr.bf16.mxu0 0
    %6392 = vmatpush1.bf16.msra.mxu0 %v6361
    %6393 = vmatprep.subr.bf16.mxu0 0
    %6394 = vmatpush2.bf16.msra.mxu0 0
    %6395 = vmatprep.subr.bf16.mxu0 0
    %6396 = vmatpush2.bf16.msra.mxu0 0
    %6397 = vmatprep.subr.bf16.mxu0 0
    %6398 = vmatpush2.bf16.msra.mxu0 0
    %6399 = vmatprep.subr.bf16.mxu0 0
    %6400 = vmatpush2.bf16.msra.mxu0 0
    %6401 = vmatprep.subr.bf16.mxu0 0
    %6402 = vmatpush2.bf16.msra.mxu0 0
    %6403 = vmatprep.subr.bf16.mxu0 0
    %6404 = vmatpush2.bf16.msra.mxu0 0
    %6405 = vmatprep.subr.bf16.mxu0 0
    %6406 = vmatpush2.bf16.msra.mxu0 0
    %6407 = vmatprep.subr.bf16.mxu0 0
    %6408 = vmatpush2.bf16.msra.mxu0 0
    %6409 = vmatprep.mubr.bf16.mxu0 0
    %6410 = vmatmul.mubr.bf16.gmra.mxu0 %v6305
    %v6411 = vpop.f32.mrf.mxu0
    %v6412 = vadd.f32 %v6327, %v6411
    %v6413 = vpop.f32.mrf.mxu0
    %v6414 = vpop.f32.mrf.mxu0
    %v6415 = vpop.f32.mrf.mxu0
    %6416 = vdwg.mxu0
    %6417 = vst [vmem:[#allocation11] sm:$0xff] %v6412
    // Predicated region
    $region54: #{tpu_custom_call.1} parent=1 // pred_check
      _
    $region55: #{tpu_custom_call.1} parent=1 // pred_check_branch
      %6419 = sbr.rel (0) target = $region57
    $region56: #{tpu_custom_call.1} parent=1 // pred_region
      %s6421 = ssub.s32 128, 128
      %6422 = vsyncadd [#allocation5], %s6421
      %s6424 = sshll.u32 [#allocation11], 4
      %s6425 = int_to_ptr.vmem [resolvable:$true] %s6424
      %6427 = dma.vmem_to_hbm [thread:$0]  %s6425, 128, %s9, [#allocation5]
    $region57: #{tpu_custom_call.1} parent=1 // pred_fallthru
      _
    // Predicated region
    $region58: #{tpu_custom_call.1} parent=1 // pred_check
      _
    $region59: #{tpu_custom_call.1} parent=1 // pred_check_branch
      %6429 = sbr.rel (0) target = $region61
    $region60: #{tpu_custom_call.1} parent=1 // pred_region
      %6430 = dma.done [#allocation5], 128
    $region61: #{tpu_custom_call.1} parent=1 // pred_fallthru
      _
    %6431 = vsyncpa [#allocation4], 1
    %6432 = vsyncpa [#allocation7], 1
    %6433 = vsyncpa [#allocation10], 1
    %6434 = vsyncpa [#allocation5], 1

</llo_original>
